<compile_context>
chip_gen: v5e
topology: v5e:2x2
jax: 0.10.0
libtpu: 0.0.40
codegen_flags: <defaults>
</compile_context>

<pallas_src>
import functools
import math

import jax
import jax.numpy as jnp
from jax import lax
from jax.experimental import pallas as pl
from jax.experimental.pallas import tpu as pltpu

_TILE = 512       # row tile == column chunk (square blocks -> clean symmetry)
_LANES = 128
_SUBLANES = 8


def _device_kind() -> str:
    try:
        return jax.devices()[0].device_kind.lower()
    except Exception:
        return ""


def _bf16_compute_ok() -> bool:
    """bf16 VPU/EUP exists on v6e / v7x; older generations stay in f32."""
    k = _device_kind()
    return ("v6" in k) or ("v7" in k) or ("7x" in k)


def _vmem_limit_bytes():
    """Per-generation scoped-VMEM budget (None -> compiler default)."""
    k = _device_kind()
    if ("v7" in k) or ("7x" in k):
        return 48 * 1024 * 1024      # 64 MiB physical per TC on v7x
    if ("v5" in k) or ("v6" in k):
        return 96 * 1024 * 1024      # 128 MiB physical on v5e / v6e
    return None


def _resident_col_spec(n_tiles: int, tile: int) -> pl.BlockSpec:
    """Fully-resident column operand; constant index_map -> one buffer suffices."""
    index_map = lambda g: (0, 0)
    try:
        return pl.BlockSpec((n_tiles, tile), index_map,
                            pipeline_mode=pl.Buffered(1))
    except TypeError:
        # Older Pallas without pipeline_mode: fall back to default buffering.
        return pl.BlockSpec((n_tiles, tile), index_map)


def _mee_pair_sum_kernel(era_ref, erb_ref, ecol_ref, out_ref, *,
                         n_tiles, tile, n_sub):
    """Grid step g handles row tiles a = g and b = n_tiles-1-g (balanced pairing).

    For a row tile t it computes
        S_t = blocksum(t, t) + 2 * sum_{j > t} blocksum(t, j)
    where blocksum(I, J) = sum over the (tile x tile) block of exp(-(e_i - e_j)^2)
    (errors pre-scaled by 1/(sqrt(2)*sigma) on the host).  S_a + S_b is
    accumulated as an (8, tile) f32 partial, lane-folded to (8, 128), written out.
    """
    g = pl.program_id(0)
    tile_a = g
    tile_b = n_tiles - 1 - g

    def block_accum(er_t, ec8, acc):
        # er_t: (8, n_sub) strip-transposed row values (compute dtype)
        # ec8 : (8, tile) column chunk broadcast over sublanes (compute dtype)
        # acc : (8, tile) f32 accumulator
        # Fully unrolled 8-row strips: everything stays in vregs (no big
        # intermediates), static lane slices only.
        for s in range(n_sub):
            er_s = er_t[:, s:s + 1]            # (8, 1): rows s*8 .. s*8+7
            d = er_s - ec8                     # (8, tile), fused in registers
            k = jnp.exp(-(d * d))              # EUP; packed bf16 on v6e/v7x
            acc = acc + k.astype(jnp.float32)  # f32 accumulation
        return acc

    def load_chunk(j):
        ec = ecol_ref[pl.ds(j, 1), :]                      # (1, tile)
        return jnp.broadcast_to(ec, (_SUBLANES, tile))     # hoisted, once/chunk

    def row_tile_sum(er_t, t):
        zeros = jnp.zeros((_SUBLANES, tile), jnp.float32)

        def off_body(j, acc):                  # off-diagonal chunks j > t
            return block_accum(er_t, load_chunk(j), acc)

        acc_off = lax.fori_loop(t + 1, n_tiles, off_body, zeros)
        acc_diag = block_accum(er_t, load_chunk(t), zeros)   # peeled diagonal
        return acc_diag + 2.0 * acc_off

    partial = (row_tile_sum(era_ref[0], tile_a)
               + row_tile_sum(erb_ref[0], tile_b))

    # Lane fold (8, tile) -> (8, 128) with vreg-aligned static slices.
    res = partial[:, 0:_LANES]
    for t in range(1, tile // _LANES):
        res = res + partial[:, t * _LANES:(t + 1) * _LANES]
    out_ref[...] = res[jnp.newaxis]


def _mee_pair_sum(e: jax.Array, sigma: float, *,
                  tile: int = _TILE,
                  compute_dtype=jnp.float32) -> jax.Array:
    """sum_{i,j} exp(-(e_i - e_j)^2 / (2 sigma^2)) for a 1-D error vector e."""
    n = e.shape[0]
    n_tiles = int(pl.cdiv(n, tile))
    if n_tiles % 2:
        n_tiles += 1                      # even -> perfect (g, n_tiles-1-g) pairing
    n_tiles = max(n_tiles, 2)
    n_steps = n_tiles // 2
    n_pad = n_tiles * tile
    pad = n_pad - n
    n_sub = tile // _SUBLANES

    # Pre-scale so the kernel computes exp(-(d)^2) directly (no in-kernel scale).
    scale = 1.0 / (math.sqrt(2.0) * float(sigma))
    e = e.astype(jnp.float32) * jnp.float32(scale)

    # Sentinel padding: pad-valid pairs have scaled squared distance >= 256, so
    # exp underflows to exactly 0 in both f32 and bf16; pad-pad pairs give
    # exp(0) = 1 and are subtracted analytically below.
    sentinel = jnp.max(jnp.abs(e)) + jnp.float32(16.0)
    e_p = jnp.concatenate([e, jnp.broadcast_to(sentinel, (pad,))])

    # Lane-dense resident column: (n_tiles, tile).
    e_col = e_p.reshape(n_tiles, tile).astype(compute_dtype)
    # Strip-transposed dense row layout: [i, r, s] = e_p[i*tile + s*8 + r],
    # i.e. strip s of tile i sits in lane s across the 8 sublanes.
    e_rowT = (e_p.reshape(n_tiles, n_sub, _SUBLANES)
                 .transpose(0, 2, 1)
                 .astype(compute_dtype))

    kernel = functools.partial(_mee_pair_sum_kernel,
                               n_tiles=n_tiles, tile=tile, n_sub=n_sub)

    partials = pl.pallas_call(
        kernel,
        out_shape=jax.ShapeDtypeStruct((n_steps, _SUBLANES, _LANES), jnp.float32),
        grid_spec=pltpu.PrefetchScalarGridSpec(
            num_scalar_prefetch=0,
            grid=(n_steps,),
            in_specs=[
                pl.BlockSpec((1, _SUBLANES, n_sub), lambda g: (g, 0, 0)),
                pl.BlockSpec((1, _SUBLANES, n_sub),
                             lambda g: (n_tiles - 1 - g, 0, 0)),
                _resident_col_spec(n_tiles, tile),
            ],
            out_specs=pl.BlockSpec((1, _SUBLANES, _LANES), lambda g: (g, 0, 0)),
        ),
        compiler_params=pltpu.CompilerParams(
            dimension_semantics=("parallel",),
            vmem_limit_bytes=_vmem_limit_bytes(),
        ),
    )(e_rowT, e_rowT, e_col)

    # Triangular-weighted block sum == full padded pairwise sum; remove the
    # exact pad-pad contribution (pad^2 terms of exp(0) = 1).
    return jnp.sum(partials) - jnp.float32(pad * pad)


@functools.partial(jax.jit, static_argnames=("reduction", "sigma"))
def meeloss(inputs: jax.Array, target: jax.Array,
            reduction: str = "mean", sigma: float = 1.0) -> jax.Array:
    """Minimum Error Entropy loss (Renyi quadratic entropy of the errors)."""
    e = (inputs.astype(jnp.float32) - target.astype(jnp.float32)).reshape(-1)
    n = e.shape[0]
    compute_dtype = jnp.bfloat16 if _bf16_compute_ok() else jnp.float32
    pair_sum = _mee_pair_sum(e, sigma, compute_dtype=compute_dtype)
    gauss_norm = 1.0 / (math.sqrt(2.0 * math.pi) * float(sigma))
    if reduction == "mean":
        ip = pair_sum * gauss_norm / (n * n)
    elif reduction == "sum":
        ip = pair_sum * gauss_norm
    else:
        raise NotImplementedError(
            "reduction='none' has no per-element meaning for pairwise MEE")
    return -jnp.log(ip + 1e-12)


class MEELoss1:
    """JAX/Pallas port of the PyTorch MEELoss1 module."""

    def __init__(self, size_average=None, reduce=None, reduction: str = "mean"):
        # legacy size_average/reduce handling collapses to 'mean'/'sum'/'none'
        if size_average is not None or reduce is not None:
            reduce = True if reduce is None else reduce
            size_average = True if size_average is None else size_average
            if not reduce:
                reduction = "none"
            else:
                reduction = "mean" if size_average else "sum"
        self.reduction = reduction

    def __call__(self, inputs: jax.Array, target: jax.Array) -> jax.Array:
        return meeloss(inputs, target, reduction=self.reduction)


def _reference_meeloss(inputs, target, reduction="mean", sigma=1.0):
    """Pure-JAX reference for correctness check."""
    e = (inputs.astype(jnp.float32) - target.astype(jnp.float32)).reshape(-1)
    n = e.shape[0]
    diff = e[:, None] - e[None, :]
    k = jnp.exp(-(diff * diff) / (2.0 * sigma * sigma))
    gauss_norm = 1.0 / (math.sqrt(2.0 * math.pi) * sigma)
    s = jnp.sum(k) * gauss_norm
    ip = s / (n * n) if reduction == "mean" else s
    return -jnp.log(ip + 1e-12)


if __name__ == "__main__":
    key = jax.random.PRNGKey(0)
    k1, k2, k3, k4 = jax.random.split(key, 4)
    # layout: NCHW inputs, flattened to N = B*C*H*W inside the loss.
    x = jax.random.normal(k1, (2, 4, 16, 16), dtype=jnp.float32)
    y = jax.random.normal(k2, (2, 4, 16, 16), dtype=jnp.float32)

    # bf16 operand path (v6e/v7x) needs a looser tolerance than the f32 path.
    tol = 2e-2 if _bf16_compute_ok() else 1e-4

    loss = jax.block_until_ready(MEELoss1(reduction="mean")(x, y))
    ref = jax.block_until_ready(_reference_meeloss(x, y, reduction="mean"))
    assert jnp.allclose(loss, ref, rtol=tol, atol=tol), (loss, ref)

    loss_s = jax.block_until_ready(MEELoss1(reduction="sum")(x, y))
    ref_s = jax.block_until_ready(_reference_meeloss(x, y, reduction="sum"))
    assert jnp.allclose(loss_s, ref_s, rtol=tol, atol=tol), (loss_s, ref_s)

    # Non-multiple-of-tile element count exercises the sentinel-padding path.
    xo = jax.random.normal(k3, (3, 5, 7, 11), dtype=jnp.float32)
    yo = jax.random.normal(k4, (3, 5, 7, 11), dtype=jnp.float32)
    loss_o = jax.block_until_ready(MEELoss1(reduction="mean")(xo, yo))
    ref_o = jax.block_until_ready(_reference_meeloss(xo, yo, reduction="mean"))
    assert jnp.allclose(loss_o, ref_o, rtol=tol, atol=tol), (loss_o, ref_o)

    print("KERNEL_OK")
</pallas_src>

<mosaic_0001>
module attributes {stable_mosaic.version = 11 : i64} {
  func.func @_mee_pair_sum_kernel(%arg0: i32, %arg1: memref<1x8x64xf32, #tpu.memory_space<vmem>>, %arg2: memref<1x8x64xf32, #tpu.memory_space<vmem>>, %arg3: memref<4x512xf32, #tpu.memory_space<vmem>>, %arg4: memref<1x8x128xf32, #tpu.memory_space<vmem>>) attributes {dimension_semantics = [#tpu.dimension_semantics<parallel>], iteration_bounds = array<i64: 2>, scalar_prefetch = 0 : i64, scratch_operands = 0 : i64, tpu.core_type = #tpu.core_type<tc>, window_params = [{transform_indices = @transform_0, window_bounds = array<i64: 1, 8, 64>}, {transform_indices = @transform_1, window_bounds = array<i64: 1, 8, 64>}, {pipeline_mode = #tpu.pipeline_mode<synchronous>, transform_indices = @transform_2, window_bounds = array<i64: 4, 512>}, {transform_indices = @transform_3, window_bounds = array<i64: 1, 8, 128>}]} {
    %c3_i32 = arith.constant 3 : i32
    %0 = arith.subi %c3_i32, %arg0 : i32
    %c0 = arith.constant 0 : index
    %c0_0 = arith.constant 0 : index
    %c0_1 = arith.constant 0 : index
    %1 = vector.load %arg1[%c0, %c0_0, %c0_1] : memref<1x8x64xf32, #tpu.memory_space<vmem>>, vector<1x8x64xf32>
    %2 = vector.shape_cast %1 : vector<1x8x64xf32> to vector<8x64xf32>
    %cst = arith.constant 0.000000e+00 : f32
    %3 = vector.broadcast %cst : f32 to vector<8x512xf32>
    %c1_i32 = arith.constant 1 : i32
    %4 = arith.addi %arg0, %c1_i32 : i32
    %c4_i32 = arith.constant 4 : i32
    %5 = arith.subi %c4_i32, %4 : i32
    %6 = arith.addi %4, %5 : i32
    %c1_i32_2 = arith.constant 1 : i32
    %7 = scf.for %arg5 = %4 to %6 step %c1_i32_2 iter_args(%arg6 = %3) -> (vector<8x512xf32>)  : i32 {
      %1063 = arith.index_cast %arg5 : i32 to index
      %c0_145 = arith.constant 0 : index
      %1064 = vector.load %arg3[%1063, %c0_145] : memref<4x512xf32, #tpu.memory_space<vmem>>, vector<1x512xf32>
      %1065 = vector.shape_cast %1064 : vector<1x512xf32> to vector<1x512xf32>
      %1066 = vector.broadcast %1065 : vector<1x512xf32> to vector<8x512xf32>
      %1067 = vector.extract_strided_slice %2 {offsets = [0, 0], sizes = [8, 1], strides = [1, 1]} : vector<8x64xf32> to vector<8x1xf32>
      %1068 = vector.broadcast %1067 : vector<8x1xf32> to vector<8x512xf32>
      %1069 = arith.subf %1068, %1066 : vector<8x512xf32>
      %1070 = arith.mulf %1069, %1069 : vector<8x512xf32>
      %cst_146 = arith.constant 0.000000e+00 : f32
      %1071 = vector.broadcast %cst_146 : f32 to vector<8x512xf32>
      %1072 = arith.subf %1071, %1070 : vector<8x512xf32>
      %1073 = math.exp %1072 : vector<8x512xf32>
      %1074 = arith.addf %arg6, %1073 : vector<8x512xf32>
      %1075 = vector.extract_strided_slice %2 {offsets = [0, 1], sizes = [8, 1], strides = [1, 1]} : vector<8x64xf32> to vector<8x1xf32>
      %1076 = vector.broadcast %1075 : vector<8x1xf32> to vector<8x512xf32>
      %1077 = arith.subf %1076, %1066 : vector<8x512xf32>
      %1078 = arith.mulf %1077, %1077 : vector<8x512xf32>
      %cst_147 = arith.constant 0.000000e+00 : f32
      %1079 = vector.broadcast %cst_147 : f32 to vector<8x512xf32>
      %1080 = arith.subf %1079, %1078 : vector<8x512xf32>
      %1081 = math.exp %1080 : vector<8x512xf32>
      %1082 = arith.addf %1074, %1081 : vector<8x512xf32>
      %1083 = vector.extract_strided_slice %2 {offsets = [0, 2], sizes = [8, 1], strides = [1, 1]} : vector<8x64xf32> to vector<8x1xf32>
      %1084 = vector.broadcast %1083 : vector<8x1xf32> to vector<8x512xf32>
      %1085 = arith.subf %1084, %1066 : vector<8x512xf32>
      %1086 = arith.mulf %1085, %1085 : vector<8x512xf32>
      %cst_148 = arith.constant 0.000000e+00 : f32
      %1087 = vector.broadcast %cst_148 : f32 to vector<8x512xf32>
      %1088 = arith.subf %1087, %1086 : vector<8x512xf32>
      %1089 = math.exp %1088 : vector<8x512xf32>
      %1090 = arith.addf %1082, %1089 : vector<8x512xf32>
      %1091 = vector.extract_strided_slice %2 {offsets = [0, 3], sizes = [8, 1], strides = [1, 1]} : vector<8x64xf32> to vector<8x1xf32>
      %1092 = vector.broadcast %1091 : vector<8x1xf32> to vector<8x512xf32>
      %1093 = arith.subf %1092, %1066 : vector<8x512xf32>
      %1094 = arith.mulf %1093, %1093 : vector<8x512xf32>
      %cst_149 = arith.constant 0.000000e+00 : f32
      %1095 = vector.broadcast %cst_149 : f32 to vector<8x512xf32>
      %1096 = arith.subf %1095, %1094 : vector<8x512xf32>
      %1097 = math.exp %1096 : vector<8x512xf32>
      %1098 = arith.addf %1090, %1097 : vector<8x512xf32>
      %1099 = vector.extract_strided_slice %2 {offsets = [0, 4], sizes = [8, 1], strides = [1, 1]} : vector<8x64xf32> to vector<8x1xf32>
      %1100 = vector.broadcast %1099 : vector<8x1xf32> to vector<8x512xf32>
      %1101 = arith.subf %1100, %1066 : vector<8x512xf32>
      %1102 = arith.mulf %1101, %1101 : vector<8x512xf32>
      %cst_150 = arith.constant 0.000000e+00 : f32
      %1103 = vector.broadcast %cst_150 : f32 to vector<8x512xf32>
      %1104 = arith.subf %1103, %1102 : vector<8x512xf32>
      %1105 = math.exp %1104 : vector<8x512xf32>
      %1106 = arith.addf %1098, %1105 : vector<8x512xf32>
      %1107 = vector.extract_strided_slice %2 {offsets = [0, 5], sizes = [8, 1], strides = [1, 1]} : vector<8x64xf32> to vector<8x1xf32>
      %1108 = vector.broadcast %1107 : vector<8x1xf32> to vector<8x512xf32>
      %1109 = arith.subf %1108, %1066 : vector<8x512xf32>
      %1110 = arith.mulf %1109, %1109 : vector<8x512xf32>
      %cst_151 = arith.constant 0.000000e+00 : f32
      %1111 = vector.broadcast %cst_151 : f32 to vector<8x512xf32>
      %1112 = arith.subf %1111, %1110 : vector<8x512xf32>
      %1113 = math.exp %1112 : vector<8x512xf32>
      %1114 = arith.addf %1106, %1113 : vector<8x512xf32>
      %1115 = vector.extract_strided_slice %2 {offsets = [0, 6], sizes = [8, 1], strides = [1, 1]} : vector<8x64xf32> to vector<8x1xf32>
      %1116 = vector.broadcast %1115 : vector<8x1xf32> to vector<8x512xf32>
      %1117 = arith.subf %1116, %1066 : vector<8x512xf32>
      %1118 = arith.mulf %1117, %1117 : vector<8x512xf32>
      %cst_152 = arith.constant 0.000000e+00 : f32
      %1119 = vector.broadcast %cst_152 : f32 to vector<8x512xf32>
      %1120 = arith.subf %1119, %1118 : vector<8x512xf32>
      %1121 = math.exp %1120 : vector<8x512xf32>
      %1122 = arith.addf %1114, %1121 : vector<8x512xf32>
      %1123 = vector.extract_strided_slice %2 {offsets = [0, 7], sizes = [8, 1], strides = [1, 1]} : vector<8x64xf32> to vector<8x1xf32>
      %1124 = vector.broadcast %1123 : vector<8x1xf32> to vector<8x512xf32>
      %1125 = arith.subf %1124, %1066 : vector<8x512xf32>
      %1126 = arith.mulf %1125, %1125 : vector<8x512xf32>
      %cst_153 = arith.constant 0.000000e+00 : f32
      %1127 = vector.broadcast %cst_153 : f32 to vector<8x512xf32>
      %1128 = arith.subf %1127, %1126 : vector<8x512xf32>
      %1129 = math.exp %1128 : vector<8x512xf32>
      %1130 = arith.addf %1122, %1129 : vector<8x512xf32>
      %1131 = vector.extract_strided_slice %2 {offsets = [0, 8], sizes = [8, 1], strides = [1, 1]} : vector<8x64xf32> to vector<8x1xf32>
      %1132 = vector.broadcast %1131 : vector<8x1xf32> to vector<8x512xf32>
      %1133 = arith.subf %1132, %1066 : vector<8x512xf32>
      %1134 = arith.mulf %1133, %1133 : vector<8x512xf32>
      %cst_154 = arith.constant 0.000000e+00 : f32
      %1135 = vector.broadcast %cst_154 : f32 to vector<8x512xf32>
      %1136 = arith.subf %1135, %1134 : vector<8x512xf32>
      %1137 = math.exp %1136 : vector<8x512xf32>
      %1138 = arith.addf %1130, %1137 : vector<8x512xf32>
      %1139 = vector.extract_strided_slice %2 {offsets = [0, 9], sizes = [8, 1], strides = [1, 1]} : vector<8x64xf32> to vector<8x1xf32>
      %1140 = vector.broadcast %1139 : vector<8x1xf32> to vector<8x512xf32>
      %1141 = arith.subf %1140, %1066 : vector<8x512xf32>
      %1142 = arith.mulf %1141, %1141 : vector<8x512xf32>
      %cst_155 = arith.constant 0.000000e+00 : f32
      %1143 = vector.broadcast %cst_155 : f32 to vector<8x512xf32>
      %1144 = arith.subf %1143, %1142 : vector<8x512xf32>
      %1145 = math.exp %1144 : vector<8x512xf32>
      %1146 = arith.addf %1138, %1145 : vector<8x512xf32>
      %1147 = vector.extract_strided_slice %2 {offsets = [0, 10], sizes = [8, 1], strides = [1, 1]} : vector<8x64xf32> to vector<8x1xf32>
      %1148 = vector.broadcast %1147 : vector<8x1xf32> to vector<8x512xf32>
      %1149 = arith.subf %1148, %1066 : vector<8x512xf32>
      %1150 = arith.mulf %1149, %1149 : vector<8x512xf32>
      %cst_156 = arith.constant 0.000000e+00 : f32
      %1151 = vector.broadcast %cst_156 : f32 to vector<8x512xf32>
      %1152 = arith.subf %1151, %1150 : vector<8x512xf32>
      %1153 = math.exp %1152 : vector<8x512xf32>
      %1154 = arith.addf %1146, %1153 : vector<8x512xf32>
      %1155 = vector.extract_strided_slice %2 {offsets = [0, 11], sizes = [8, 1], strides = [1, 1]} : vector<8x64xf32> to vector<8x1xf32>
      %1156 = vector.broadcast %1155 : vector<8x1xf32> to vector<8x512xf32>
      %1157 = arith.subf %1156, %1066 : vector<8x512xf32>
      %1158 = arith.mulf %1157, %1157 : vector<8x512xf32>
      %cst_157 = arith.constant 0.000000e+00 : f32
      %1159 = vector.broadcast %cst_157 : f32 to vector<8x512xf32>
      %1160 = arith.subf %1159, %1158 : vector<8x512xf32>
      %1161 = math.exp %1160 : vector<8x512xf32>
      %1162 = arith.addf %1154, %1161 : vector<8x512xf32>
      %1163 = vector.extract_strided_slice %2 {offsets = [0, 12], sizes = [8, 1], strides = [1, 1]} : vector<8x64xf32> to vector<8x1xf32>
      %1164 = vector.broadcast %1163 : vector<8x1xf32> to vector<8x512xf32>
      %1165 = arith.subf %1164, %1066 : vector<8x512xf32>
      %1166 = arith.mulf %1165, %1165 : vector<8x512xf32>
      %cst_158 = arith.constant 0.000000e+00 : f32
      %1167 = vector.broadcast %cst_158 : f32 to vector<8x512xf32>
      %1168 = arith.subf %1167, %1166 : vector<8x512xf32>
      %1169 = math.exp %1168 : vector<8x512xf32>
      %1170 = arith.addf %1162, %1169 : vector<8x512xf32>
      %1171 = vector.extract_strided_slice %2 {offsets = [0, 13], sizes = [8, 1], strides = [1, 1]} : vector<8x64xf32> to vector<8x1xf32>
      %1172 = vector.broadcast %1171 : vector<8x1xf32> to vector<8x512xf32>
      %1173 = arith.subf %1172, %1066 : vector<8x512xf32>
      %1174 = arith.mulf %1173, %1173 : vector<8x512xf32>
      %cst_159 = arith.constant 0.000000e+00 : f32
      %1175 = vector.broadcast %cst_159 : f32 to vector<8x512xf32>
      %1176 = arith.subf %1175, %1174 : vector<8x512xf32>
      %1177 = math.exp %1176 : vector<8x512xf32>
      %1178 = arith.addf %1170, %1177 : vector<8x512xf32>
      %1179 = vector.extract_strided_slice %2 {offsets = [0, 14], sizes = [8, 1], strides = [1, 1]} : vector<8x64xf32> to vector<8x1xf32>
      %1180 = vector.broadcast %1179 : vector<8x1xf32> to vector<8x512xf32>
      %1181 = arith.subf %1180, %1066 : vector<8x512xf32>
      %1182 = arith.mulf %1181, %1181 : vector<8x512xf32>
      %cst_160 = arith.constant 0.000000e+00 : f32
      %1183 = vector.broadcast %cst_160 : f32 to vector<8x512xf32>
      %1184 = arith.subf %1183, %1182 : vector<8x512xf32>
      %1185 = math.exp %1184 : vector<8x512xf32>
      %1186 = arith.addf %1178, %1185 : vector<8x512xf32>
      %1187 = vector.extract_strided_slice %2 {offsets = [0, 15], sizes = [8, 1], strides = [1, 1]} : vector<8x64xf32> to vector<8x1xf32>
      %1188 = vector.broadcast %1187 : vector<8x1xf32> to vector<8x512xf32>
      %1189 = arith.subf %1188, %1066 : vector<8x512xf32>
      %1190 = arith.mulf %1189, %1189 : vector<8x512xf32>
      %cst_161 = arith.constant 0.000000e+00 : f32
      %1191 = vector.broadcast %cst_161 : f32 to vector<8x512xf32>
      %1192 = arith.subf %1191, %1190 : vector<8x512xf32>
      %1193 = math.exp %1192 : vector<8x512xf32>
      %1194 = arith.addf %1186, %1193 : vector<8x512xf32>
      %1195 = vector.extract_strided_slice %2 {offsets = [0, 16], sizes = [8, 1], strides = [1, 1]} : vector<8x64xf32> to vector<8x1xf32>
      %1196 = vector.broadcast %1195 : vector<8x1xf32> to vector<8x512xf32>
      %1197 = arith.subf %1196, %1066 : vector<8x512xf32>
      %1198 = arith.mulf %1197, %1197 : vector<8x512xf32>
      %cst_162 = arith.constant 0.000000e+00 : f32
      %1199 = vector.broadcast %cst_162 : f32 to vector<8x512xf32>
      %1200 = arith.subf %1199, %1198 : vector<8x512xf32>
      %1201 = math.exp %1200 : vector<8x512xf32>
      %1202 = arith.addf %1194, %1201 : vector<8x512xf32>
      %1203 = vector.extract_strided_slice %2 {offsets = [0, 17], sizes = [8, 1], strides = [1, 1]} : vector<8x64xf32> to vector<8x1xf32>
      %1204 = vector.broadcast %1203 : vector<8x1xf32> to vector<8x512xf32>
      %1205 = arith.subf %1204, %1066 : vector<8x512xf32>
      %1206 = arith.mulf %1205, %1205 : vector<8x512xf32>
      %cst_163 = arith.constant 0.000000e+00 : f32
      %1207 = vector.broadcast %cst_163 : f32 to vector<8x512xf32>
      %1208 = arith.subf %1207, %1206 : vector<8x512xf32>
      %1209 = math.exp %1208 : vector<8x512xf32>
      %1210 = arith.addf %1202, %1209 : vector<8x512xf32>
      %1211 = vector.extract_strided_slice %2 {offsets = [0, 18], sizes = [8, 1], strides = [1, 1]} : vector<8x64xf32> to vector<8x1xf32>
      %1212 = vector.broadcast %1211 : vector<8x1xf32> to vector<8x512xf32>
      %1213 = arith.subf %1212, %1066 : vector<8x512xf32>
      %1214 = arith.mulf %1213, %1213 : vector<8x512xf32>
      %cst_164 = arith.constant 0.000000e+00 : f32
      %1215 = vector.broadcast %cst_164 : f32 to vector<8x512xf32>
      %1216 = arith.subf %1215, %1214 : vector<8x512xf32>
      %1217 = math.exp %1216 : vector<8x512xf32>
      %1218 = arith.addf %1210, %1217 : vector<8x512xf32>
      %1219 = vector.extract_strided_slice %2 {offsets = [0, 19], sizes = [8, 1], strides = [1, 1]} : vector<8x64xf32> to vector<8x1xf32>
      %1220 = vector.broadcast %1219 : vector<8x1xf32> to vector<8x512xf32>
      %1221 = arith.subf %1220, %1066 : vector<8x512xf32>
      %1222 = arith.mulf %1221, %1221 : vector<8x512xf32>
      %cst_165 = arith.constant 0.000000e+00 : f32
      %1223 = vector.broadcast %cst_165 : f32 to vector<8x512xf32>
      %1224 = arith.subf %1223, %1222 : vector<8x512xf32>
      %1225 = math.exp %1224 : vector<8x512xf32>
      %1226 = arith.addf %1218, %1225 : vector<8x512xf32>
      %1227 = vector.extract_strided_slice %2 {offsets = [0, 20], sizes = [8, 1], strides = [1, 1]} : vector<8x64xf32> to vector<8x1xf32>
      %1228 = vector.broadcast %1227 : vector<8x1xf32> to vector<8x512xf32>
      %1229 = arith.subf %1228, %1066 : vector<8x512xf32>
      %1230 = arith.mulf %1229, %1229 : vector<8x512xf32>
      %cst_166 = arith.constant 0.000000e+00 : f32
      %1231 = vector.broadcast %cst_166 : f32 to vector<8x512xf32>
      %1232 = arith.subf %1231, %1230 : vector<8x512xf32>
      %1233 = math.exp %1232 : vector<8x512xf32>
      %1234 = arith.addf %1226, %1233 : vector<8x512xf32>
      %1235 = vector.extract_strided_slice %2 {offsets = [0, 21], sizes = [8, 1], strides = [1, 1]} : vector<8x64xf32> to vector<8x1xf32>
      %1236 = vector.broadcast %1235 : vector<8x1xf32> to vector<8x512xf32>
      %1237 = arith.subf %1236, %1066 : vector<8x512xf32>
      %1238 = arith.mulf %1237, %1237 : vector<8x512xf32>
      %cst_167 = arith.constant 0.000000e+00 : f32
      %1239 = vector.broadcast %cst_167 : f32 to vector<8x512xf32>
      %1240 = arith.subf %1239, %1238 : vector<8x512xf32>
      %1241 = math.exp %1240 : vector<8x512xf32>
      %1242 = arith.addf %1234, %1241 : vector<8x512xf32>
      %1243 = vector.extract_strided_slice %2 {offsets = [0, 22], sizes = [8, 1], strides = [1, 1]} : vector<8x64xf32> to vector<8x1xf32>
      %1244 = vector.broadcast %1243 : vector<8x1xf32> to vector<8x512xf32>
      %1245 = arith.subf %1244, %1066 : vector<8x512xf32>
      %1246 = arith.mulf %1245, %1245 : vector<8x512xf32>
      %cst_168 = arith.constant 0.000000e+00 : f32
      %1247 = vector.broadcast %cst_168 : f32 to vector<8x512xf32>
      %1248 = arith.subf %1247, %1246 : vector<8x512xf32>
      %1249 = math.exp %1248 : vector<8x512xf32>
      %1250 = arith.addf %1242, %1249 : vector<8x512xf32>
      %1251 = vector.extract_strided_slice %2 {offsets = [0, 23], sizes = [8, 1], strides = [1, 1]} : vector<8x64xf32> to vector<8x1xf32>
      %1252 = vector.broadcast %1251 : vector<8x1xf32> to vector<8x512xf32>
      %1253 = arith.subf %1252, %1066 : vector<8x512xf32>
      %1254 = arith.mulf %1253, %1253 : vector<8x512xf32>
      %cst_169 = arith.constant 0.000000e+00 : f32
      %1255 = vector.broadcast %cst_169 : f32 to vector<8x512xf32>
      %1256 = arith.subf %1255, %1254 : vector<8x512xf32>
      %1257 = math.exp %1256 : vector<8x512xf32>
      %1258 = arith.addf %1250, %1257 : vector<8x512xf32>
      %1259 = vector.extract_strided_slice %2 {offsets = [0, 24], sizes = [8, 1], strides = [1, 1]} : vector<8x64xf32> to vector<8x1xf32>
      %1260 = vector.broadcast %1259 : vector<8x1xf32> to vector<8x512xf32>
      %1261 = arith.subf %1260, %1066 : vector<8x512xf32>
      %1262 = arith.mulf %1261, %1261 : vector<8x512xf32>
      %cst_170 = arith.constant 0.000000e+00 : f32
      %1263 = vector.broadcast %cst_170 : f32 to vector<8x512xf32>
      %1264 = arith.subf %1263, %1262 : vector<8x512xf32>
      %1265 = math.exp %1264 : vector<8x512xf32>
      %1266 = arith.addf %1258, %1265 : vector<8x512xf32>
      %1267 = vector.extract_strided_slice %2 {offsets = [0, 25], sizes = [8, 1], strides = [1, 1]} : vector<8x64xf32> to vector<8x1xf32>
      %1268 = vector.broadcast %1267 : vector<8x1xf32> to vector<8x512xf32>
      %1269 = arith.subf %1268, %1066 : vector<8x512xf32>
      %1270 = arith.mulf %1269, %1269 : vector<8x512xf32>
      %cst_171 = arith.constant 0.000000e+00 : f32
      %1271 = vector.broadcast %cst_171 : f32 to vector<8x512xf32>
      %1272 = arith.subf %1271, %1270 : vector<8x512xf32>
      %1273 = math.exp %1272 : vector<8x512xf32>
      %1274 = arith.addf %1266, %1273 : vector<8x512xf32>
      %1275 = vector.extract_strided_slice %2 {offsets = [0, 26], sizes = [8, 1], strides = [1, 1]} : vector<8x64xf32> to vector<8x1xf32>
      %1276 = vector.broadcast %1275 : vector<8x1xf32> to vector<8x512xf32>
      %1277 = arith.subf %1276, %1066 : vector<8x512xf32>
      %1278 = arith.mulf %1277, %1277 : vector<8x512xf32>
      %cst_172 = arith.constant 0.000000e+00 : f32
      %1279 = vector.broadcast %cst_172 : f32 to vector<8x512xf32>
      %1280 = arith.subf %1279, %1278 : vector<8x512xf32>
      %1281 = math.exp %1280 : vector<8x512xf32>
      %1282 = arith.addf %1274, %1281 : vector<8x512xf32>
      %1283 = vector.extract_strided_slice %2 {offsets = [0, 27], sizes = [8, 1], strides = [1, 1]} : vector<8x64xf32> to vector<8x1xf32>
      %1284 = vector.broadcast %1283 : vector<8x1xf32> to vector<8x512xf32>
      %1285 = arith.subf %1284, %1066 : vector<8x512xf32>
      %1286 = arith.mulf %1285, %1285 : vector<8x512xf32>
      %cst_173 = arith.constant 0.000000e+00 : f32
      %1287 = vector.broadcast %cst_173 : f32 to vector<8x512xf32>
      %1288 = arith.subf %1287, %1286 : vector<8x512xf32>
      %1289 = math.exp %1288 : vector<8x512xf32>
      %1290 = arith.addf %1282, %1289 : vector<8x512xf32>
      %1291 = vector.extract_strided_slice %2 {offsets = [0, 28], sizes = [8, 1], strides = [1, 1]} : vector<8x64xf32> to vector<8x1xf32>
      %1292 = vector.broadcast %1291 : vector<8x1xf32> to vector<8x512xf32>
      %1293 = arith.subf %1292, %1066 : vector<8x512xf32>
      %1294 = arith.mulf %1293, %1293 : vector<8x512xf32>
      %cst_174 = arith.constant 0.000000e+00 : f32
      %1295 = vector.broadcast %cst_174 : f32 to vector<8x512xf32>
      %1296 = arith.subf %1295, %1294 : vector<8x512xf32>
      %1297 = math.exp %1296 : vector<8x512xf32>
      %1298 = arith.addf %1290, %1297 : vector<8x512xf32>
      %1299 = vector.extract_strided_slice %2 {offsets = [0, 29], sizes = [8, 1], strides = [1, 1]} : vector<8x64xf32> to vector<8x1xf32>
      %1300 = vector.broadcast %1299 : vector<8x1xf32> to vector<8x512xf32>
      %1301 = arith.subf %1300, %1066 : vector<8x512xf32>
      %1302 = arith.mulf %1301, %1301 : vector<8x512xf32>
      %cst_175 = arith.constant 0.000000e+00 : f32
      %1303 = vector.broadcast %cst_175 : f32 to vector<8x512xf32>
      %1304 = arith.subf %1303, %1302 : vector<8x512xf32>
      %1305 = math.exp %1304 : vector<8x512xf32>
      %1306 = arith.addf %1298, %1305 : vector<8x512xf32>
      %1307 = vector.extract_strided_slice %2 {offsets = [0, 30], sizes = [8, 1], strides = [1, 1]} : vector<8x64xf32> to vector<8x1xf32>
      %1308 = vector.broadcast %1307 : vector<8x1xf32> to vector<8x512xf32>
      %1309 = arith.subf %1308, %1066 : vector<8x512xf32>
      %1310 = arith.mulf %1309, %1309 : vector<8x512xf32>
      %cst_176 = arith.constant 0.000000e+00 : f32
      %1311 = vector.broadcast %cst_176 : f32 to vector<8x512xf32>
      %1312 = arith.subf %1311, %1310 : vector<8x512xf32>
      %1313 = math.exp %1312 : vector<8x512xf32>
      %1314 = arith.addf %1306, %1313 : vector<8x512xf32>
      %1315 = vector.extract_strided_slice %2 {offsets = [0, 31], sizes = [8, 1], strides = [1, 1]} : vector<8x64xf32> to vector<8x1xf32>
      %1316 = vector.broadcast %1315 : vector<8x1xf32> to vector<8x512xf32>
      %1317 = arith.subf %1316, %1066 : vector<8x512xf32>
      %1318 = arith.mulf %1317, %1317 : vector<8x512xf32>
      %cst_177 = arith.constant 0.000000e+00 : f32
      %1319 = vector.broadcast %cst_177 : f32 to vector<8x512xf32>
      %1320 = arith.subf %1319, %1318 : vector<8x512xf32>
      %1321 = math.exp %1320 : vector<8x512xf32>
      %1322 = arith.addf %1314, %1321 : vector<8x512xf32>
      %1323 = vector.extract_strided_slice %2 {offsets = [0, 32], sizes = [8, 1], strides = [1, 1]} : vector<8x64xf32> to vector<8x1xf32>
      %1324 = vector.broadcast %1323 : vector<8x1xf32> to vector<8x512xf32>
      %1325 = arith.subf %1324, %1066 : vector<8x512xf32>
      %1326 = arith.mulf %1325, %1325 : vector<8x512xf32>
      %cst_178 = arith.constant 0.000000e+00 : f32
      %1327 = vector.broadcast %cst_178 : f32 to vector<8x512xf32>
      %1328 = arith.subf %1327, %1326 : vector<8x512xf32>
      %1329 = math.exp %1328 : vector<8x512xf32>
      %1330 = arith.addf %1322, %1329 : vector<8x512xf32>
      %1331 = vector.extract_strided_slice %2 {offsets = [0, 33], sizes = [8, 1], strides = [1, 1]} : vector<8x64xf32> to vector<8x1xf32>
      %1332 = vector.broadcast %1331 : vector<8x1xf32> to vector<8x512xf32>
      %1333 = arith.subf %1332, %1066 : vector<8x512xf32>
      %1334 = arith.mulf %1333, %1333 : vector<8x512xf32>
      %cst_179 = arith.constant 0.000000e+00 : f32
      %1335 = vector.broadcast %cst_179 : f32 to vector<8x512xf32>
      %1336 = arith.subf %1335, %1334 : vector<8x512xf32>
      %1337 = math.exp %1336 : vector<8x512xf32>
      %1338 = arith.addf %1330, %1337 : vector<8x512xf32>
      %1339 = vector.extract_strided_slice %2 {offsets = [0, 34], sizes = [8, 1], strides = [1, 1]} : vector<8x64xf32> to vector<8x1xf32>
      %1340 = vector.broadcast %1339 : vector<8x1xf32> to vector<8x512xf32>
      %1341 = arith.subf %1340, %1066 : vector<8x512xf32>
      %1342 = arith.mulf %1341, %1341 : vector<8x512xf32>
      %cst_180 = arith.constant 0.000000e+00 : f32
      %1343 = vector.broadcast %cst_180 : f32 to vector<8x512xf32>
      %1344 = arith.subf %1343, %1342 : vector<8x512xf32>
      %1345 = math.exp %1344 : vector<8x512xf32>
      %1346 = arith.addf %1338, %1345 : vector<8x512xf32>
      %1347 = vector.extract_strided_slice %2 {offsets = [0, 35], sizes = [8, 1], strides = [1, 1]} : vector<8x64xf32> to vector<8x1xf32>
      %1348 = vector.broadcast %1347 : vector<8x1xf32> to vector<8x512xf32>
      %1349 = arith.subf %1348, %1066 : vector<8x512xf32>
      %1350 = arith.mulf %1349, %1349 : vector<8x512xf32>
      %cst_181 = arith.constant 0.000000e+00 : f32
      %1351 = vector.broadcast %cst_181 : f32 to vector<8x512xf32>
      %1352 = arith.subf %1351, %1350 : vector<8x512xf32>
      %1353 = math.exp %1352 : vector<8x512xf32>
      %1354 = arith.addf %1346, %1353 : vector<8x512xf32>
      %1355 = vector.extract_strided_slice %2 {offsets = [0, 36], sizes = [8, 1], strides = [1, 1]} : vector<8x64xf32> to vector<8x1xf32>
      %1356 = vector.broadcast %1355 : vector<8x1xf32> to vector<8x512xf32>
      %1357 = arith.subf %1356, %1066 : vector<8x512xf32>
      %1358 = arith.mulf %1357, %1357 : vector<8x512xf32>
      %cst_182 = arith.constant 0.000000e+00 : f32
      %1359 = vector.broadcast %cst_182 : f32 to vector<8x512xf32>
      %1360 = arith.subf %1359, %1358 : vector<8x512xf32>
      %1361 = math.exp %1360 : vector<8x512xf32>
      %1362 = arith.addf %1354, %1361 : vector<8x512xf32>
      %1363 = vector.extract_strided_slice %2 {offsets = [0, 37], sizes = [8, 1], strides = [1, 1]} : vector<8x64xf32> to vector<8x1xf32>
      %1364 = vector.broadcast %1363 : vector<8x1xf32> to vector<8x512xf32>
      %1365 = arith.subf %1364, %1066 : vector<8x512xf32>
      %1366 = arith.mulf %1365, %1365 : vector<8x512xf32>
      %cst_183 = arith.constant 0.000000e+00 : f32
      %1367 = vector.broadcast %cst_183 : f32 to vector<8x512xf32>
      %1368 = arith.subf %1367, %1366 : vector<8x512xf32>
      %1369 = math.exp %1368 : vector<8x512xf32>
      %1370 = arith.addf %1362, %1369 : vector<8x512xf32>
      %1371 = vector.extract_strided_slice %2 {offsets = [0, 38], sizes = [8, 1], strides = [1, 1]} : vector<8x64xf32> to vector<8x1xf32>
      %1372 = vector.broadcast %1371 : vector<8x1xf32> to vector<8x512xf32>
      %1373 = arith.subf %1372, %1066 : vector<8x512xf32>
      %1374 = arith.mulf %1373, %1373 : vector<8x512xf32>
      %cst_184 = arith.constant 0.000000e+00 : f32
      %1375 = vector.broadcast %cst_184 : f32 to vector<8x512xf32>
      %1376 = arith.subf %1375, %1374 : vector<8x512xf32>
      %1377 = math.exp %1376 : vector<8x512xf32>
      %1378 = arith.addf %1370, %1377 : vector<8x512xf32>
      %1379 = vector.extract_strided_slice %2 {offsets = [0, 39], sizes = [8, 1], strides = [1, 1]} : vector<8x64xf32> to vector<8x1xf32>
      %1380 = vector.broadcast %1379 : vector<8x1xf32> to vector<8x512xf32>
      %1381 = arith.subf %1380, %1066 : vector<8x512xf32>
      %1382 = arith.mulf %1381, %1381 : vector<8x512xf32>
      %cst_185 = arith.constant 0.000000e+00 : f32
      %1383 = vector.broadcast %cst_185 : f32 to vector<8x512xf32>
      %1384 = arith.subf %1383, %1382 : vector<8x512xf32>
      %1385 = math.exp %1384 : vector<8x512xf32>
      %1386 = arith.addf %1378, %1385 : vector<8x512xf32>
      %1387 = vector.extract_strided_slice %2 {offsets = [0, 40], sizes = [8, 1], strides = [1, 1]} : vector<8x64xf32> to vector<8x1xf32>
      %1388 = vector.broadcast %1387 : vector<8x1xf32> to vector<8x512xf32>
      %1389 = arith.subf %1388, %1066 : vector<8x512xf32>
      %1390 = arith.mulf %1389, %1389 : vector<8x512xf32>
      %cst_186 = arith.constant 0.000000e+00 : f32
      %1391 = vector.broadcast %cst_186 : f32 to vector<8x512xf32>
      %1392 = arith.subf %1391, %1390 : vector<8x512xf32>
      %1393 = math.exp %1392 : vector<8x512xf32>
      %1394 = arith.addf %1386, %1393 : vector<8x512xf32>
      %1395 = vector.extract_strided_slice %2 {offsets = [0, 41], sizes = [8, 1], strides = [1, 1]} : vector<8x64xf32> to vector<8x1xf32>
      %1396 = vector.broadcast %1395 : vector<8x1xf32> to vector<8x512xf32>
      %1397 = arith.subf %1396, %1066 : vector<8x512xf32>
      %1398 = arith.mulf %1397, %1397 : vector<8x512xf32>
      %cst_187 = arith.constant 0.000000e+00 : f32
      %1399 = vector.broadcast %cst_187 : f32 to vector<8x512xf32>
      %1400 = arith.subf %1399, %1398 : vector<8x512xf32>
      %1401 = math.exp %1400 : vector<8x512xf32>
      %1402 = arith.addf %1394, %1401 : vector<8x512xf32>
      %1403 = vector.extract_strided_slice %2 {offsets = [0, 42], sizes = [8, 1], strides = [1, 1]} : vector<8x64xf32> to vector<8x1xf32>
      %1404 = vector.broadcast %1403 : vector<8x1xf32> to vector<8x512xf32>
      %1405 = arith.subf %1404, %1066 : vector<8x512xf32>
      %1406 = arith.mulf %1405, %1405 : vector<8x512xf32>
      %cst_188 = arith.constant 0.000000e+00 : f32
      %1407 = vector.broadcast %cst_188 : f32 to vector<8x512xf32>
      %1408 = arith.subf %1407, %1406 : vector<8x512xf32>
      %1409 = math.exp %1408 : vector<8x512xf32>
      %1410 = arith.addf %1402, %1409 : vector<8x512xf32>
      %1411 = vector.extract_strided_slice %2 {offsets = [0, 43], sizes = [8, 1], strides = [1, 1]} : vector<8x64xf32> to vector<8x1xf32>
      %1412 = vector.broadcast %1411 : vector<8x1xf32> to vector<8x512xf32>
      %1413 = arith.subf %1412, %1066 : vector<8x512xf32>
      %1414 = arith.mulf %1413, %1413 : vector<8x512xf32>
      %cst_189 = arith.constant 0.000000e+00 : f32
      %1415 = vector.broadcast %cst_189 : f32 to vector<8x512xf32>
      %1416 = arith.subf %1415, %1414 : vector<8x512xf32>
      %1417 = math.exp %1416 : vector<8x512xf32>
      %1418 = arith.addf %1410, %1417 : vector<8x512xf32>
      %1419 = vector.extract_strided_slice %2 {offsets = [0, 44], sizes = [8, 1], strides = [1, 1]} : vector<8x64xf32> to vector<8x1xf32>
      %1420 = vector.broadcast %1419 : vector<8x1xf32> to vector<8x512xf32>
      %1421 = arith.subf %1420, %1066 : vector<8x512xf32>
      %1422 = arith.mulf %1421, %1421 : vector<8x512xf32>
      %cst_190 = arith.constant 0.000000e+00 : f32
      %1423 = vector.broadcast %cst_190 : f32 to vector<8x512xf32>
      %1424 = arith.subf %1423, %1422 : vector<8x512xf32>
      %1425 = math.exp %1424 : vector<8x512xf32>
      %1426 = arith.addf %1418, %1425 : vector<8x512xf32>
      %1427 = vector.extract_strided_slice %2 {offsets = [0, 45], sizes = [8, 1], strides = [1, 1]} : vector<8x64xf32> to vector<8x1xf32>
      %1428 = vector.broadcast %1427 : vector<8x1xf32> to vector<8x512xf32>
      %1429 = arith.subf %1428, %1066 : vector<8x512xf32>
      %1430 = arith.mulf %1429, %1429 : vector<8x512xf32>
      %cst_191 = arith.constant 0.000000e+00 : f32
      %1431 = vector.broadcast %cst_191 : f32 to vector<8x512xf32>
      %1432 = arith.subf %1431, %1430 : vector<8x512xf32>
      %1433 = math.exp %1432 : vector<8x512xf32>
      %1434 = arith.addf %1426, %1433 : vector<8x512xf32>
      %1435 = vector.extract_strided_slice %2 {offsets = [0, 46], sizes = [8, 1], strides = [1, 1]} : vector<8x64xf32> to vector<8x1xf32>
      %1436 = vector.broadcast %1435 : vector<8x1xf32> to vector<8x512xf32>
      %1437 = arith.subf %1436, %1066 : vector<8x512xf32>
      %1438 = arith.mulf %1437, %1437 : vector<8x512xf32>
      %cst_192 = arith.constant 0.000000e+00 : f32
      %1439 = vector.broadcast %cst_192 : f32 to vector<8x512xf32>
      %1440 = arith.subf %1439, %1438 : vector<8x512xf32>
      %1441 = math.exp %1440 : vector<8x512xf32>
      %1442 = arith.addf %1434, %1441 : vector<8x512xf32>
      %1443 = vector.extract_strided_slice %2 {offsets = [0, 47], sizes = [8, 1], strides = [1, 1]} : vector<8x64xf32> to vector<8x1xf32>
      %1444 = vector.broadcast %1443 : vector<8x1xf32> to vector<8x512xf32>
      %1445 = arith.subf %1444, %1066 : vector<8x512xf32>
      %1446 = arith.mulf %1445, %1445 : vector<8x512xf32>
      %cst_193 = arith.constant 0.000000e+00 : f32
      %1447 = vector.broadcast %cst_193 : f32 to vector<8x512xf32>
      %1448 = arith.subf %1447, %1446 : vector<8x512xf32>
      %1449 = math.exp %1448 : vector<8x512xf32>
      %1450 = arith.addf %1442, %1449 : vector<8x512xf32>
      %1451 = vector.extract_strided_slice %2 {offsets = [0, 48], sizes = [8, 1], strides = [1, 1]} : vector<8x64xf32> to vector<8x1xf32>
      %1452 = vector.broadcast %1451 : vector<8x1xf32> to vector<8x512xf32>
      %1453 = arith.subf %1452, %1066 : vector<8x512xf32>
      %1454 = arith.mulf %1453, %1453 : vector<8x512xf32>
      %cst_194 = arith.constant 0.000000e+00 : f32
      %1455 = vector.broadcast %cst_194 : f32 to vector<8x512xf32>
      %1456 = arith.subf %1455, %1454 : vector<8x512xf32>
      %1457 = math.exp %1456 : vector<8x512xf32>
      %1458 = arith.addf %1450, %1457 : vector<8x512xf32>
      %1459 = vector.extract_strided_slice %2 {offsets = [0, 49], sizes = [8, 1], strides = [1, 1]} : vector<8x64xf32> to vector<8x1xf32>
      %1460 = vector.broadcast %1459 : vector<8x1xf32> to vector<8x512xf32>
      %1461 = arith.subf %1460, %1066 : vector<8x512xf32>
      %1462 = arith.mulf %1461, %1461 : vector<8x512xf32>
      %cst_195 = arith.constant 0.000000e+00 : f32
      %1463 = vector.broadcast %cst_195 : f32 to vector<8x512xf32>
      %1464 = arith.subf %1463, %1462 : vector<8x512xf32>
      %1465 = math.exp %1464 : vector<8x512xf32>
      %1466 = arith.addf %1458, %1465 : vector<8x512xf32>
      %1467 = vector.extract_strided_slice %2 {offsets = [0, 50], sizes = [8, 1], strides = [1, 1]} : vector<8x64xf32> to vector<8x1xf32>
      %1468 = vector.broadcast %1467 : vector<8x1xf32> to vector<8x512xf32>
      %1469 = arith.subf %1468, %1066 : vector<8x512xf32>
      %1470 = arith.mulf %1469, %1469 : vector<8x512xf32>
      %cst_196 = arith.constant 0.000000e+00 : f32
      %1471 = vector.broadcast %cst_196 : f32 to vector<8x512xf32>
      %1472 = arith.subf %1471, %1470 : vector<8x512xf32>
      %1473 = math.exp %1472 : vector<8x512xf32>
      %1474 = arith.addf %1466, %1473 : vector<8x512xf32>
      %1475 = vector.extract_strided_slice %2 {offsets = [0, 51], sizes = [8, 1], strides = [1, 1]} : vector<8x64xf32> to vector<8x1xf32>
      %1476 = vector.broadcast %1475 : vector<8x1xf32> to vector<8x512xf32>
      %1477 = arith.subf %1476, %1066 : vector<8x512xf32>
      %1478 = arith.mulf %1477, %1477 : vector<8x512xf32>
      %cst_197 = arith.constant 0.000000e+00 : f32
      %1479 = vector.broadcast %cst_197 : f32 to vector<8x512xf32>
      %1480 = arith.subf %1479, %1478 : vector<8x512xf32>
      %1481 = math.exp %1480 : vector<8x512xf32>
      %1482 = arith.addf %1474, %1481 : vector<8x512xf32>
      %1483 = vector.extract_strided_slice %2 {offsets = [0, 52], sizes = [8, 1], strides = [1, 1]} : vector<8x64xf32> to vector<8x1xf32>
      %1484 = vector.broadcast %1483 : vector<8x1xf32> to vector<8x512xf32>
      %1485 = arith.subf %1484, %1066 : vector<8x512xf32>
      %1486 = arith.mulf %1485, %1485 : vector<8x512xf32>
      %cst_198 = arith.constant 0.000000e+00 : f32
      %1487 = vector.broadcast %cst_198 : f32 to vector<8x512xf32>
      %1488 = arith.subf %1487, %1486 : vector<8x512xf32>
      %1489 = math.exp %1488 : vector<8x512xf32>
      %1490 = arith.addf %1482, %1489 : vector<8x512xf32>
      %1491 = vector.extract_strided_slice %2 {offsets = [0, 53], sizes = [8, 1], strides = [1, 1]} : vector<8x64xf32> to vector<8x1xf32>
      %1492 = vector.broadcast %1491 : vector<8x1xf32> to vector<8x512xf32>
      %1493 = arith.subf %1492, %1066 : vector<8x512xf32>
      %1494 = arith.mulf %1493, %1493 : vector<8x512xf32>
      %cst_199 = arith.constant 0.000000e+00 : f32
      %1495 = vector.broadcast %cst_199 : f32 to vector<8x512xf32>
      %1496 = arith.subf %1495, %1494 : vector<8x512xf32>
      %1497 = math.exp %1496 : vector<8x512xf32>
      %1498 = arith.addf %1490, %1497 : vector<8x512xf32>
      %1499 = vector.extract_strided_slice %2 {offsets = [0, 54], sizes = [8, 1], strides = [1, 1]} : vector<8x64xf32> to vector<8x1xf32>
      %1500 = vector.broadcast %1499 : vector<8x1xf32> to vector<8x512xf32>
      %1501 = arith.subf %1500, %1066 : vector<8x512xf32>
      %1502 = arith.mulf %1501, %1501 : vector<8x512xf32>
      %cst_200 = arith.constant 0.000000e+00 : f32
      %1503 = vector.broadcast %cst_200 : f32 to vector<8x512xf32>
      %1504 = arith.subf %1503, %1502 : vector<8x512xf32>
      %1505 = math.exp %1504 : vector<8x512xf32>
      %1506 = arith.addf %1498, %1505 : vector<8x512xf32>
      %1507 = vector.extract_strided_slice %2 {offsets = [0, 55], sizes = [8, 1], strides = [1, 1]} : vector<8x64xf32> to vector<8x1xf32>
      %1508 = vector.broadcast %1507 : vector<8x1xf32> to vector<8x512xf32>
      %1509 = arith.subf %1508, %1066 : vector<8x512xf32>
      %1510 = arith.mulf %1509, %1509 : vector<8x512xf32>
      %cst_201 = arith.constant 0.000000e+00 : f32
      %1511 = vector.broadcast %cst_201 : f32 to vector<8x512xf32>
      %1512 = arith.subf %1511, %1510 : vector<8x512xf32>
      %1513 = math.exp %1512 : vector<8x512xf32>
      %1514 = arith.addf %1506, %1513 : vector<8x512xf32>
      %1515 = vector.extract_strided_slice %2 {offsets = [0, 56], sizes = [8, 1], strides = [1, 1]} : vector<8x64xf32> to vector<8x1xf32>
      %1516 = vector.broadcast %1515 : vector<8x1xf32> to vector<8x512xf32>
      %1517 = arith.subf %1516, %1066 : vector<8x512xf32>
      %1518 = arith.mulf %1517, %1517 : vector<8x512xf32>
      %cst_202 = arith.constant 0.000000e+00 : f32
      %1519 = vector.broadcast %cst_202 : f32 to vector<8x512xf32>
      %1520 = arith.subf %1519, %1518 : vector<8x512xf32>
      %1521 = math.exp %1520 : vector<8x512xf32>
      %1522 = arith.addf %1514, %1521 : vector<8x512xf32>
      %1523 = vector.extract_strided_slice %2 {offsets = [0, 57], sizes = [8, 1], strides = [1, 1]} : vector<8x64xf32> to vector<8x1xf32>
      %1524 = vector.broadcast %1523 : vector<8x1xf32> to vector<8x512xf32>
      %1525 = arith.subf %1524, %1066 : vector<8x512xf32>
      %1526 = arith.mulf %1525, %1525 : vector<8x512xf32>
      %cst_203 = arith.constant 0.000000e+00 : f32
      %1527 = vector.broadcast %cst_203 : f32 to vector<8x512xf32>
      %1528 = arith.subf %1527, %1526 : vector<8x512xf32>
      %1529 = math.exp %1528 : vector<8x512xf32>
      %1530 = arith.addf %1522, %1529 : vector<8x512xf32>
      %1531 = vector.extract_strided_slice %2 {offsets = [0, 58], sizes = [8, 1], strides = [1, 1]} : vector<8x64xf32> to vector<8x1xf32>
      %1532 = vector.broadcast %1531 : vector<8x1xf32> to vector<8x512xf32>
      %1533 = arith.subf %1532, %1066 : vector<8x512xf32>
      %1534 = arith.mulf %1533, %1533 : vector<8x512xf32>
      %cst_204 = arith.constant 0.000000e+00 : f32
      %1535 = vector.broadcast %cst_204 : f32 to vector<8x512xf32>
      %1536 = arith.subf %1535, %1534 : vector<8x512xf32>
      %1537 = math.exp %1536 : vector<8x512xf32>
      %1538 = arith.addf %1530, %1537 : vector<8x512xf32>
      %1539 = vector.extract_strided_slice %2 {offsets = [0, 59], sizes = [8, 1], strides = [1, 1]} : vector<8x64xf32> to vector<8x1xf32>
      %1540 = vector.broadcast %1539 : vector<8x1xf32> to vector<8x512xf32>
      %1541 = arith.subf %1540, %1066 : vector<8x512xf32>
      %1542 = arith.mulf %1541, %1541 : vector<8x512xf32>
      %cst_205 = arith.constant 0.000000e+00 : f32
      %1543 = vector.broadcast %cst_205 : f32 to vector<8x512xf32>
      %1544 = arith.subf %1543, %1542 : vector<8x512xf32>
      %1545 = math.exp %1544 : vector<8x512xf32>
      %1546 = arith.addf %1538, %1545 : vector<8x512xf32>
      %1547 = vector.extract_strided_slice %2 {offsets = [0, 60], sizes = [8, 1], strides = [1, 1]} : vector<8x64xf32> to vector<8x1xf32>
      %1548 = vector.broadcast %1547 : vector<8x1xf32> to vector<8x512xf32>
      %1549 = arith.subf %1548, %1066 : vector<8x512xf32>
      %1550 = arith.mulf %1549, %1549 : vector<8x512xf32>
      %cst_206 = arith.constant 0.000000e+00 : f32
      %1551 = vector.broadcast %cst_206 : f32 to vector<8x512xf32>
      %1552 = arith.subf %1551, %1550 : vector<8x512xf32>
      %1553 = math.exp %1552 : vector<8x512xf32>
      %1554 = arith.addf %1546, %1553 : vector<8x512xf32>
      %1555 = vector.extract_strided_slice %2 {offsets = [0, 61], sizes = [8, 1], strides = [1, 1]} : vector<8x64xf32> to vector<8x1xf32>
      %1556 = vector.broadcast %1555 : vector<8x1xf32> to vector<8x512xf32>
      %1557 = arith.subf %1556, %1066 : vector<8x512xf32>
      %1558 = arith.mulf %1557, %1557 : vector<8x512xf32>
      %cst_207 = arith.constant 0.000000e+00 : f32
      %1559 = vector.broadcast %cst_207 : f32 to vector<8x512xf32>
      %1560 = arith.subf %1559, %1558 : vector<8x512xf32>
      %1561 = math.exp %1560 : vector<8x512xf32>
      %1562 = arith.addf %1554, %1561 : vector<8x512xf32>
      %1563 = vector.extract_strided_slice %2 {offsets = [0, 62], sizes = [8, 1], strides = [1, 1]} : vector<8x64xf32> to vector<8x1xf32>
      %1564 = vector.broadcast %1563 : vector<8x1xf32> to vector<8x512xf32>
      %1565 = arith.subf %1564, %1066 : vector<8x512xf32>
      %1566 = arith.mulf %1565, %1565 : vector<8x512xf32>
      %cst_208 = arith.constant 0.000000e+00 : f32
      %1567 = vector.broadcast %cst_208 : f32 to vector<8x512xf32>
      %1568 = arith.subf %1567, %1566 : vector<8x512xf32>
      %1569 = math.exp %1568 : vector<8x512xf32>
      %1570 = arith.addf %1562, %1569 : vector<8x512xf32>
      %1571 = vector.extract_strided_slice %2 {offsets = [0, 63], sizes = [8, 1], strides = [1, 1]} : vector<8x64xf32> to vector<8x1xf32>
      %1572 = vector.broadcast %1571 : vector<8x1xf32> to vector<8x512xf32>
      %1573 = arith.subf %1572, %1066 : vector<8x512xf32>
      %1574 = arith.mulf %1573, %1573 : vector<8x512xf32>
      %cst_209 = arith.constant 0.000000e+00 : f32
      %1575 = vector.broadcast %cst_209 : f32 to vector<8x512xf32>
      %1576 = arith.subf %1575, %1574 : vector<8x512xf32>
      %1577 = math.exp %1576 : vector<8x512xf32>
      %1578 = arith.addf %1570, %1577 : vector<8x512xf32>
      scf.yield %1578 : vector<8x512xf32>
    }
    %8 = arith.index_cast %arg0 : i32 to index
    %c0_3 = arith.constant 0 : index
    %9 = vector.load %arg3[%8, %c0_3] : memref<4x512xf32, #tpu.memory_space<vmem>>, vector<1x512xf32>
    %10 = vector.shape_cast %9 : vector<1x512xf32> to vector<1x512xf32>
    %11 = vector.broadcast %10 : vector<1x512xf32> to vector<8x512xf32>
    %12 = vector.extract_strided_slice %2 {offsets = [0, 0], sizes = [8, 1], strides = [1, 1]} : vector<8x64xf32> to vector<8x1xf32>
    %13 = vector.broadcast %12 : vector<8x1xf32> to vector<8x512xf32>
    %14 = arith.subf %13, %11 : vector<8x512xf32>
    %15 = arith.mulf %14, %14 : vector<8x512xf32>
    %cst_4 = arith.constant 0.000000e+00 : f32
    %16 = vector.broadcast %cst_4 : f32 to vector<8x512xf32>
    %17 = arith.subf %16, %15 : vector<8x512xf32>
    %18 = math.exp %17 : vector<8x512xf32>
    %19 = arith.addf %3, %18 : vector<8x512xf32>
    %20 = vector.extract_strided_slice %2 {offsets = [0, 1], sizes = [8, 1], strides = [1, 1]} : vector<8x64xf32> to vector<8x1xf32>
    %21 = vector.broadcast %20 : vector<8x1xf32> to vector<8x512xf32>
    %22 = arith.subf %21, %11 : vector<8x512xf32>
    %23 = arith.mulf %22, %22 : vector<8x512xf32>
    %cst_5 = arith.constant 0.000000e+00 : f32
    %24 = vector.broadcast %cst_5 : f32 to vector<8x512xf32>
    %25 = arith.subf %24, %23 : vector<8x512xf32>
    %26 = math.exp %25 : vector<8x512xf32>
    %27 = arith.addf %19, %26 : vector<8x512xf32>
    %28 = vector.extract_strided_slice %2 {offsets = [0, 2], sizes = [8, 1], strides = [1, 1]} : vector<8x64xf32> to vector<8x1xf32>
    %29 = vector.broadcast %28 : vector<8x1xf32> to vector<8x512xf32>
    %30 = arith.subf %29, %11 : vector<8x512xf32>
    %31 = arith.mulf %30, %30 : vector<8x512xf32>
    %cst_6 = arith.constant 0.000000e+00 : f32
    %32 = vector.broadcast %cst_6 : f32 to vector<8x512xf32>
    %33 = arith.subf %32, %31 : vector<8x512xf32>
    %34 = math.exp %33 : vector<8x512xf32>
    %35 = arith.addf %27, %34 : vector<8x512xf32>
    %36 = vector.extract_strided_slice %2 {offsets = [0, 3], sizes = [8, 1], strides = [1, 1]} : vector<8x64xf32> to vector<8x1xf32>
    %37 = vector.broadcast %36 : vector<8x1xf32> to vector<8x512xf32>
    %38 = arith.subf %37, %11 : vector<8x512xf32>
    %39 = arith.mulf %38, %38 : vector<8x512xf32>
    %cst_7 = arith.constant 0.000000e+00 : f32
    %40 = vector.broadcast %cst_7 : f32 to vector<8x512xf32>
    %41 = arith.subf %40, %39 : vector<8x512xf32>
    %42 = math.exp %41 : vector<8x512xf32>
    %43 = arith.addf %35, %42 : vector<8x512xf32>
    %44 = vector.extract_strided_slice %2 {offsets = [0, 4], sizes = [8, 1], strides = [1, 1]} : vector<8x64xf32> to vector<8x1xf32>
    %45 = vector.broadcast %44 : vector<8x1xf32> to vector<8x512xf32>
    %46 = arith.subf %45, %11 : vector<8x512xf32>
    %47 = arith.mulf %46, %46 : vector<8x512xf32>
    %cst_8 = arith.constant 0.000000e+00 : f32
    %48 = vector.broadcast %cst_8 : f32 to vector<8x512xf32>
    %49 = arith.subf %48, %47 : vector<8x512xf32>
    %50 = math.exp %49 : vector<8x512xf32>
    %51 = arith.addf %43, %50 : vector<8x512xf32>
    %52 = vector.extract_strided_slice %2 {offsets = [0, 5], sizes = [8, 1], strides = [1, 1]} : vector<8x64xf32> to vector<8x1xf32>
    %53 = vector.broadcast %52 : vector<8x1xf32> to vector<8x512xf32>
    %54 = arith.subf %53, %11 : vector<8x512xf32>
    %55 = arith.mulf %54, %54 : vector<8x512xf32>
    %cst_9 = arith.constant 0.000000e+00 : f32
    %56 = vector.broadcast %cst_9 : f32 to vector<8x512xf32>
    %57 = arith.subf %56, %55 : vector<8x512xf32>
    %58 = math.exp %57 : vector<8x512xf32>
    %59 = arith.addf %51, %58 : vector<8x512xf32>
    %60 = vector.extract_strided_slice %2 {offsets = [0, 6], sizes = [8, 1], strides = [1, 1]} : vector<8x64xf32> to vector<8x1xf32>
    %61 = vector.broadcast %60 : vector<8x1xf32> to vector<8x512xf32>
    %62 = arith.subf %61, %11 : vector<8x512xf32>
    %63 = arith.mulf %62, %62 : vector<8x512xf32>
    %cst_10 = arith.constant 0.000000e+00 : f32
    %64 = vector.broadcast %cst_10 : f32 to vector<8x512xf32>
    %65 = arith.subf %64, %63 : vector<8x512xf32>
    %66 = math.exp %65 : vector<8x512xf32>
    %67 = arith.addf %59, %66 : vector<8x512xf32>
    %68 = vector.extract_strided_slice %2 {offsets = [0, 7], sizes = [8, 1], strides = [1, 1]} : vector<8x64xf32> to vector<8x1xf32>
    %69 = vector.broadcast %68 : vector<8x1xf32> to vector<8x512xf32>
    %70 = arith.subf %69, %11 : vector<8x512xf32>
    %71 = arith.mulf %70, %70 : vector<8x512xf32>
    %cst_11 = arith.constant 0.000000e+00 : f32
    %72 = vector.broadcast %cst_11 : f32 to vector<8x512xf32>
    %73 = arith.subf %72, %71 : vector<8x512xf32>
    %74 = math.exp %73 : vector<8x512xf32>
    %75 = arith.addf %67, %74 : vector<8x512xf32>
    %76 = vector.extract_strided_slice %2 {offsets = [0, 8], sizes = [8, 1], strides = [1, 1]} : vector<8x64xf32> to vector<8x1xf32>
    %77 = vector.broadcast %76 : vector<8x1xf32> to vector<8x512xf32>
    %78 = arith.subf %77, %11 : vector<8x512xf32>
    %79 = arith.mulf %78, %78 : vector<8x512xf32>
    %cst_12 = arith.constant 0.000000e+00 : f32
    %80 = vector.broadcast %cst_12 : f32 to vector<8x512xf32>
    %81 = arith.subf %80, %79 : vector<8x512xf32>
    %82 = math.exp %81 : vector<8x512xf32>
    %83 = arith.addf %75, %82 : vector<8x512xf32>
    %84 = vector.extract_strided_slice %2 {offsets = [0, 9], sizes = [8, 1], strides = [1, 1]} : vector<8x64xf32> to vector<8x1xf32>
    %85 = vector.broadcast %84 : vector<8x1xf32> to vector<8x512xf32>
    %86 = arith.subf %85, %11 : vector<8x512xf32>
    %87 = arith.mulf %86, %86 : vector<8x512xf32>
    %cst_13 = arith.constant 0.000000e+00 : f32
    %88 = vector.broadcast %cst_13 : f32 to vector<8x512xf32>
    %89 = arith.subf %88, %87 : vector<8x512xf32>
    %90 = math.exp %89 : vector<8x512xf32>
    %91 = arith.addf %83, %90 : vector<8x512xf32>
    %92 = vector.extract_strided_slice %2 {offsets = [0, 10], sizes = [8, 1], strides = [1, 1]} : vector<8x64xf32> to vector<8x1xf32>
    %93 = vector.broadcast %92 : vector<8x1xf32> to vector<8x512xf32>
    %94 = arith.subf %93, %11 : vector<8x512xf32>
    %95 = arith.mulf %94, %94 : vector<8x512xf32>
    %cst_14 = arith.constant 0.000000e+00 : f32
    %96 = vector.broadcast %cst_14 : f32 to vector<8x512xf32>
    %97 = arith.subf %96, %95 : vector<8x512xf32>
    %98 = math.exp %97 : vector<8x512xf32>
    %99 = arith.addf %91, %98 : vector<8x512xf32>
    %100 = vector.extract_strided_slice %2 {offsets = [0, 11], sizes = [8, 1], strides = [1, 1]} : vector<8x64xf32> to vector<8x1xf32>
    %101 = vector.broadcast %100 : vector<8x1xf32> to vector<8x512xf32>
    %102 = arith.subf %101, %11 : vector<8x512xf32>
    %103 = arith.mulf %102, %102 : vector<8x512xf32>
    %cst_15 = arith.constant 0.000000e+00 : f32
    %104 = vector.broadcast %cst_15 : f32 to vector<8x512xf32>
    %105 = arith.subf %104, %103 : vector<8x512xf32>
    %106 = math.exp %105 : vector<8x512xf32>
    %107 = arith.addf %99, %106 : vector<8x512xf32>
    %108 = vector.extract_strided_slice %2 {offsets = [0, 12], sizes = [8, 1], strides = [1, 1]} : vector<8x64xf32> to vector<8x1xf32>
    %109 = vector.broadcast %108 : vector<8x1xf32> to vector<8x512xf32>
    %110 = arith.subf %109, %11 : vector<8x512xf32>
    %111 = arith.mulf %110, %110 : vector<8x512xf32>
    %cst_16 = arith.constant 0.000000e+00 : f32
    %112 = vector.broadcast %cst_16 : f32 to vector<8x512xf32>
    %113 = arith.subf %112, %111 : vector<8x512xf32>
    %114 = math.exp %113 : vector<8x512xf32>
    %115 = arith.addf %107, %114 : vector<8x512xf32>
    %116 = vector.extract_strided_slice %2 {offsets = [0, 13], sizes = [8, 1], strides = [1, 1]} : vector<8x64xf32> to vector<8x1xf32>
    %117 = vector.broadcast %116 : vector<8x1xf32> to vector<8x512xf32>
    %118 = arith.subf %117, %11 : vector<8x512xf32>
    %119 = arith.mulf %118, %118 : vector<8x512xf32>
    %cst_17 = arith.constant 0.000000e+00 : f32
    %120 = vector.broadcast %cst_17 : f32 to vector<8x512xf32>
    %121 = arith.subf %120, %119 : vector<8x512xf32>
    %122 = math.exp %121 : vector<8x512xf32>
    %123 = arith.addf %115, %122 : vector<8x512xf32>
    %124 = vector.extract_strided_slice %2 {offsets = [0, 14], sizes = [8, 1], strides = [1, 1]} : vector<8x64xf32> to vector<8x1xf32>
    %125 = vector.broadcast %124 : vector<8x1xf32> to vector<8x512xf32>
    %126 = arith.subf %125, %11 : vector<8x512xf32>
    %127 = arith.mulf %126, %126 : vector<8x512xf32>
    %cst_18 = arith.constant 0.000000e+00 : f32
    %128 = vector.broadcast %cst_18 : f32 to vector<8x512xf32>
    %129 = arith.subf %128, %127 : vector<8x512xf32>
    %130 = math.exp %129 : vector<8x512xf32>
    %131 = arith.addf %123, %130 : vector<8x512xf32>
    %132 = vector.extract_strided_slice %2 {offsets = [0, 15], sizes = [8, 1], strides = [1, 1]} : vector<8x64xf32> to vector<8x1xf32>
    %133 = vector.broadcast %132 : vector<8x1xf32> to vector<8x512xf32>
    %134 = arith.subf %133, %11 : vector<8x512xf32>
    %135 = arith.mulf %134, %134 : vector<8x512xf32>
    %cst_19 = arith.constant 0.000000e+00 : f32
    %136 = vector.broadcast %cst_19 : f32 to vector<8x512xf32>
    %137 = arith.subf %136, %135 : vector<8x512xf32>
    %138 = math.exp %137 : vector<8x512xf32>
    %139 = arith.addf %131, %138 : vector<8x512xf32>
    %140 = vector.extract_strided_slice %2 {offsets = [0, 16], sizes = [8, 1], strides = [1, 1]} : vector<8x64xf32> to vector<8x1xf32>
    %141 = vector.broadcast %140 : vector<8x1xf32> to vector<8x512xf32>
    %142 = arith.subf %141, %11 : vector<8x512xf32>
    %143 = arith.mulf %142, %142 : vector<8x512xf32>
    %cst_20 = arith.constant 0.000000e+00 : f32
    %144 = vector.broadcast %cst_20 : f32 to vector<8x512xf32>
    %145 = arith.subf %144, %143 : vector<8x512xf32>
    %146 = math.exp %145 : vector<8x512xf32>
    %147 = arith.addf %139, %146 : vector<8x512xf32>
    %148 = vector.extract_strided_slice %2 {offsets = [0, 17], sizes = [8, 1], strides = [1, 1]} : vector<8x64xf32> to vector<8x1xf32>
    %149 = vector.broadcast %148 : vector<8x1xf32> to vector<8x512xf32>
    %150 = arith.subf %149, %11 : vector<8x512xf32>
    %151 = arith.mulf %150, %150 : vector<8x512xf32>
    %cst_21 = arith.constant 0.000000e+00 : f32
    %152 = vector.broadcast %cst_21 : f32 to vector<8x512xf32>
    %153 = arith.subf %152, %151 : vector<8x512xf32>
    %154 = math.exp %153 : vector<8x512xf32>
    %155 = arith.addf %147, %154 : vector<8x512xf32>
    %156 = vector.extract_strided_slice %2 {offsets = [0, 18], sizes = [8, 1], strides = [1, 1]} : vector<8x64xf32> to vector<8x1xf32>
    %157 = vector.broadcast %156 : vector<8x1xf32> to vector<8x512xf32>
    %158 = arith.subf %157, %11 : vector<8x512xf32>
    %159 = arith.mulf %158, %158 : vector<8x512xf32>
    %cst_22 = arith.constant 0.000000e+00 : f32
    %160 = vector.broadcast %cst_22 : f32 to vector<8x512xf32>
    %161 = arith.subf %160, %159 : vector<8x512xf32>
    %162 = math.exp %161 : vector<8x512xf32>
    %163 = arith.addf %155, %162 : vector<8x512xf32>
    %164 = vector.extract_strided_slice %2 {offsets = [0, 19], sizes = [8, 1], strides = [1, 1]} : vector<8x64xf32> to vector<8x1xf32>
    %165 = vector.broadcast %164 : vector<8x1xf32> to vector<8x512xf32>
    %166 = arith.subf %165, %11 : vector<8x512xf32>
    %167 = arith.mulf %166, %166 : vector<8x512xf32>
    %cst_23 = arith.constant 0.000000e+00 : f32
    %168 = vector.broadcast %cst_23 : f32 to vector<8x512xf32>
    %169 = arith.subf %168, %167 : vector<8x512xf32>
    %170 = math.exp %169 : vector<8x512xf32>
    %171 = arith.addf %163, %170 : vector<8x512xf32>
    %172 = vector.extract_strided_slice %2 {offsets = [0, 20], sizes = [8, 1], strides = [1, 1]} : vector<8x64xf32> to vector<8x1xf32>
    %173 = vector.broadcast %172 : vector<8x1xf32> to vector<8x512xf32>
    %174 = arith.subf %173, %11 : vector<8x512xf32>
    %175 = arith.mulf %174, %174 : vector<8x512xf32>
    %cst_24 = arith.constant 0.000000e+00 : f32
    %176 = vector.broadcast %cst_24 : f32 to vector<8x512xf32>
    %177 = arith.subf %176, %175 : vector<8x512xf32>
    %178 = math.exp %177 : vector<8x512xf32>
    %179 = arith.addf %171, %178 : vector<8x512xf32>
    %180 = vector.extract_strided_slice %2 {offsets = [0, 21], sizes = [8, 1], strides = [1, 1]} : vector<8x64xf32> to vector<8x1xf32>
    %181 = vector.broadcast %180 : vector<8x1xf32> to vector<8x512xf32>
    %182 = arith.subf %181, %11 : vector<8x512xf32>
    %183 = arith.mulf %182, %182 : vector<8x512xf32>
    %cst_25 = arith.constant 0.000000e+00 : f32
    %184 = vector.broadcast %cst_25 : f32 to vector<8x512xf32>
    %185 = arith.subf %184, %183 : vector<8x512xf32>
    %186 = math.exp %185 : vector<8x512xf32>
    %187 = arith.addf %179, %186 : vector<8x512xf32>
    %188 = vector.extract_strided_slice %2 {offsets = [0, 22], sizes = [8, 1], strides = [1, 1]} : vector<8x64xf32> to vector<8x1xf32>
    %189 = vector.broadcast %188 : vector<8x1xf32> to vector<8x512xf32>
    %190 = arith.subf %189, %11 : vector<8x512xf32>
    %191 = arith.mulf %190, %190 : vector<8x512xf32>
    %cst_26 = arith.constant 0.000000e+00 : f32
    %192 = vector.broadcast %cst_26 : f32 to vector<8x512xf32>
    %193 = arith.subf %192, %191 : vector<8x512xf32>
    %194 = math.exp %193 : vector<8x512xf32>
    %195 = arith.addf %187, %194 : vector<8x512xf32>
    %196 = vector.extract_strided_slice %2 {offsets = [0, 23], sizes = [8, 1], strides = [1, 1]} : vector<8x64xf32> to vector<8x1xf32>
    %197 = vector.broadcast %196 : vector<8x1xf32> to vector<8x512xf32>
    %198 = arith.subf %197, %11 : vector<8x512xf32>
    %199 = arith.mulf %198, %198 : vector<8x512xf32>
    %cst_27 = arith.constant 0.000000e+00 : f32
    %200 = vector.broadcast %cst_27 : f32 to vector<8x512xf32>
    %201 = arith.subf %200, %199 : vector<8x512xf32>
    %202 = math.exp %201 : vector<8x512xf32>
    %203 = arith.addf %195, %202 : vector<8x512xf32>
    %204 = vector.extract_strided_slice %2 {offsets = [0, 24], sizes = [8, 1], strides = [1, 1]} : vector<8x64xf32> to vector<8x1xf32>
    %205 = vector.broadcast %204 : vector<8x1xf32> to vector<8x512xf32>
    %206 = arith.subf %205, %11 : vector<8x512xf32>
    %207 = arith.mulf %206, %206 : vector<8x512xf32>
    %cst_28 = arith.constant 0.000000e+00 : f32
    %208 = vector.broadcast %cst_28 : f32 to vector<8x512xf32>
    %209 = arith.subf %208, %207 : vector<8x512xf32>
    %210 = math.exp %209 : vector<8x512xf32>
    %211 = arith.addf %203, %210 : vector<8x512xf32>
    %212 = vector.extract_strided_slice %2 {offsets = [0, 25], sizes = [8, 1], strides = [1, 1]} : vector<8x64xf32> to vector<8x1xf32>
    %213 = vector.broadcast %212 : vector<8x1xf32> to vector<8x512xf32>
    %214 = arith.subf %213, %11 : vector<8x512xf32>
    %215 = arith.mulf %214, %214 : vector<8x512xf32>
    %cst_29 = arith.constant 0.000000e+00 : f32
    %216 = vector.broadcast %cst_29 : f32 to vector<8x512xf32>
    %217 = arith.subf %216, %215 : vector<8x512xf32>
    %218 = math.exp %217 : vector<8x512xf32>
    %219 = arith.addf %211, %218 : vector<8x512xf32>
    %220 = vector.extract_strided_slice %2 {offsets = [0, 26], sizes = [8, 1], strides = [1, 1]} : vector<8x64xf32> to vector<8x1xf32>
    %221 = vector.broadcast %220 : vector<8x1xf32> to vector<8x512xf32>
    %222 = arith.subf %221, %11 : vector<8x512xf32>
    %223 = arith.mulf %222, %222 : vector<8x512xf32>
    %cst_30 = arith.constant 0.000000e+00 : f32
    %224 = vector.broadcast %cst_30 : f32 to vector<8x512xf32>
    %225 = arith.subf %224, %223 : vector<8x512xf32>
    %226 = math.exp %225 : vector<8x512xf32>
    %227 = arith.addf %219, %226 : vector<8x512xf32>
    %228 = vector.extract_strided_slice %2 {offsets = [0, 27], sizes = [8, 1], strides = [1, 1]} : vector<8x64xf32> to vector<8x1xf32>
    %229 = vector.broadcast %228 : vector<8x1xf32> to vector<8x512xf32>
    %230 = arith.subf %229, %11 : vector<8x512xf32>
    %231 = arith.mulf %230, %230 : vector<8x512xf32>
    %cst_31 = arith.constant 0.000000e+00 : f32
    %232 = vector.broadcast %cst_31 : f32 to vector<8x512xf32>
    %233 = arith.subf %232, %231 : vector<8x512xf32>
    %234 = math.exp %233 : vector<8x512xf32>
    %235 = arith.addf %227, %234 : vector<8x512xf32>
    %236 = vector.extract_strided_slice %2 {offsets = [0, 28], sizes = [8, 1], strides = [1, 1]} : vector<8x64xf32> to vector<8x1xf32>
    %237 = vector.broadcast %236 : vector<8x1xf32> to vector<8x512xf32>
    %238 = arith.subf %237, %11 : vector<8x512xf32>
    %239 = arith.mulf %238, %238 : vector<8x512xf32>
    %cst_32 = arith.constant 0.000000e+00 : f32
    %240 = vector.broadcast %cst_32 : f32 to vector<8x512xf32>
    %241 = arith.subf %240, %239 : vector<8x512xf32>
    %242 = math.exp %241 : vector<8x512xf32>
    %243 = arith.addf %235, %242 : vector<8x512xf32>
    %244 = vector.extract_strided_slice %2 {offsets = [0, 29], sizes = [8, 1], strides = [1, 1]} : vector<8x64xf32> to vector<8x1xf32>
    %245 = vector.broadcast %244 : vector<8x1xf32> to vector<8x512xf32>
    %246 = arith.subf %245, %11 : vector<8x512xf32>
    %247 = arith.mulf %246, %246 : vector<8x512xf32>
    %cst_33 = arith.constant 0.000000e+00 : f32
    %248 = vector.broadcast %cst_33 : f32 to vector<8x512xf32>
    %249 = arith.subf %248, %247 : vector<8x512xf32>
    %250 = math.exp %249 : vector<8x512xf32>
    %251 = arith.addf %243, %250 : vector<8x512xf32>
    %252 = vector.extract_strided_slice %2 {offsets = [0, 30], sizes = [8, 1], strides = [1, 1]} : vector<8x64xf32> to vector<8x1xf32>
    %253 = vector.broadcast %252 : vector<8x1xf32> to vector<8x512xf32>
    %254 = arith.subf %253, %11 : vector<8x512xf32>
    %255 = arith.mulf %254, %254 : vector<8x512xf32>
    %cst_34 = arith.constant 0.000000e+00 : f32
    %256 = vector.broadcast %cst_34 : f32 to vector<8x512xf32>
    %257 = arith.subf %256, %255 : vector<8x512xf32>
    %258 = math.exp %257 : vector<8x512xf32>
    %259 = arith.addf %251, %258 : vector<8x512xf32>
    %260 = vector.extract_strided_slice %2 {offsets = [0, 31], sizes = [8, 1], strides = [1, 1]} : vector<8x64xf32> to vector<8x1xf32>
    %261 = vector.broadcast %260 : vector<8x1xf32> to vector<8x512xf32>
    %262 = arith.subf %261, %11 : vector<8x512xf32>
    %263 = arith.mulf %262, %262 : vector<8x512xf32>
    %cst_35 = arith.constant 0.000000e+00 : f32
    %264 = vector.broadcast %cst_35 : f32 to vector<8x512xf32>
    %265 = arith.subf %264, %263 : vector<8x512xf32>
    %266 = math.exp %265 : vector<8x512xf32>
    %267 = arith.addf %259, %266 : vector<8x512xf32>
    %268 = vector.extract_strided_slice %2 {offsets = [0, 32], sizes = [8, 1], strides = [1, 1]} : vector<8x64xf32> to vector<8x1xf32>
    %269 = vector.broadcast %268 : vector<8x1xf32> to vector<8x512xf32>
    %270 = arith.subf %269, %11 : vector<8x512xf32>
    %271 = arith.mulf %270, %270 : vector<8x512xf32>
    %cst_36 = arith.constant 0.000000e+00 : f32
    %272 = vector.broadcast %cst_36 : f32 to vector<8x512xf32>
    %273 = arith.subf %272, %271 : vector<8x512xf32>
    %274 = math.exp %273 : vector<8x512xf32>
    %275 = arith.addf %267, %274 : vector<8x512xf32>
    %276 = vector.extract_strided_slice %2 {offsets = [0, 33], sizes = [8, 1], strides = [1, 1]} : vector<8x64xf32> to vector<8x1xf32>
    %277 = vector.broadcast %276 : vector<8x1xf32> to vector<8x512xf32>
    %278 = arith.subf %277, %11 : vector<8x512xf32>
    %279 = arith.mulf %278, %278 : vector<8x512xf32>
    %cst_37 = arith.constant 0.000000e+00 : f32
    %280 = vector.broadcast %cst_37 : f32 to vector<8x512xf32>
    %281 = arith.subf %280, %279 : vector<8x512xf32>
    %282 = math.exp %281 : vector<8x512xf32>
    %283 = arith.addf %275, %282 : vector<8x512xf32>
    %284 = vector.extract_strided_slice %2 {offsets = [0, 34], sizes = [8, 1], strides = [1, 1]} : vector<8x64xf32> to vector<8x1xf32>
    %285 = vector.broadcast %284 : vector<8x1xf32> to vector<8x512xf32>
    %286 = arith.subf %285, %11 : vector<8x512xf32>
    %287 = arith.mulf %286, %286 : vector<8x512xf32>
    %cst_38 = arith.constant 0.000000e+00 : f32
    %288 = vector.broadcast %cst_38 : f32 to vector<8x512xf32>
    %289 = arith.subf %288, %287 : vector<8x512xf32>
    %290 = math.exp %289 : vector<8x512xf32>
    %291 = arith.addf %283, %290 : vector<8x512xf32>
    %292 = vector.extract_strided_slice %2 {offsets = [0, 35], sizes = [8, 1], strides = [1, 1]} : vector<8x64xf32> to vector<8x1xf32>
    %293 = vector.broadcast %292 : vector<8x1xf32> to vector<8x512xf32>
    %294 = arith.subf %293, %11 : vector<8x512xf32>
    %295 = arith.mulf %294, %294 : vector<8x512xf32>
    %cst_39 = arith.constant 0.000000e+00 : f32
    %296 = vector.broadcast %cst_39 : f32 to vector<8x512xf32>
    %297 = arith.subf %296, %295 : vector<8x512xf32>
    %298 = math.exp %297 : vector<8x512xf32>
    %299 = arith.addf %291, %298 : vector<8x512xf32>
    %300 = vector.extract_strided_slice %2 {offsets = [0, 36], sizes = [8, 1], strides = [1, 1]} : vector<8x64xf32> to vector<8x1xf32>
    %301 = vector.broadcast %300 : vector<8x1xf32> to vector<8x512xf32>
    %302 = arith.subf %301, %11 : vector<8x512xf32>
    %303 = arith.mulf %302, %302 : vector<8x512xf32>
    %cst_40 = arith.constant 0.000000e+00 : f32
    %304 = vector.broadcast %cst_40 : f32 to vector<8x512xf32>
    %305 = arith.subf %304, %303 : vector<8x512xf32>
    %306 = math.exp %305 : vector<8x512xf32>
    %307 = arith.addf %299, %306 : vector<8x512xf32>
    %308 = vector.extract_strided_slice %2 {offsets = [0, 37], sizes = [8, 1], strides = [1, 1]} : vector<8x64xf32> to vector<8x1xf32>
    %309 = vector.broadcast %308 : vector<8x1xf32> to vector<8x512xf32>
    %310 = arith.subf %309, %11 : vector<8x512xf32>
    %311 = arith.mulf %310, %310 : vector<8x512xf32>
    %cst_41 = arith.constant 0.000000e+00 : f32
    %312 = vector.broadcast %cst_41 : f32 to vector<8x512xf32>
    %313 = arith.subf %312, %311 : vector<8x512xf32>
    %314 = math.exp %313 : vector<8x512xf32>
    %315 = arith.addf %307, %314 : vector<8x512xf32>
    %316 = vector.extract_strided_slice %2 {offsets = [0, 38], sizes = [8, 1], strides = [1, 1]} : vector<8x64xf32> to vector<8x1xf32>
    %317 = vector.broadcast %316 : vector<8x1xf32> to vector<8x512xf32>
    %318 = arith.subf %317, %11 : vector<8x512xf32>
    %319 = arith.mulf %318, %318 : vector<8x512xf32>
    %cst_42 = arith.constant 0.000000e+00 : f32
    %320 = vector.broadcast %cst_42 : f32 to vector<8x512xf32>
    %321 = arith.subf %320, %319 : vector<8x512xf32>
    %322 = math.exp %321 : vector<8x512xf32>
    %323 = arith.addf %315, %322 : vector<8x512xf32>
    %324 = vector.extract_strided_slice %2 {offsets = [0, 39], sizes = [8, 1], strides = [1, 1]} : vector<8x64xf32> to vector<8x1xf32>
    %325 = vector.broadcast %324 : vector<8x1xf32> to vector<8x512xf32>
    %326 = arith.subf %325, %11 : vector<8x512xf32>
    %327 = arith.mulf %326, %326 : vector<8x512xf32>
    %cst_43 = arith.constant 0.000000e+00 : f32
    %328 = vector.broadcast %cst_43 : f32 to vector<8x512xf32>
    %329 = arith.subf %328, %327 : vector<8x512xf32>
    %330 = math.exp %329 : vector<8x512xf32>
    %331 = arith.addf %323, %330 : vector<8x512xf32>
    %332 = vector.extract_strided_slice %2 {offsets = [0, 40], sizes = [8, 1], strides = [1, 1]} : vector<8x64xf32> to vector<8x1xf32>
    %333 = vector.broadcast %332 : vector<8x1xf32> to vector<8x512xf32>
    %334 = arith.subf %333, %11 : vector<8x512xf32>
    %335 = arith.mulf %334, %334 : vector<8x512xf32>
    %cst_44 = arith.constant 0.000000e+00 : f32
    %336 = vector.broadcast %cst_44 : f32 to vector<8x512xf32>
    %337 = arith.subf %336, %335 : vector<8x512xf32>
    %338 = math.exp %337 : vector<8x512xf32>
    %339 = arith.addf %331, %338 : vector<8x512xf32>
    %340 = vector.extract_strided_slice %2 {offsets = [0, 41], sizes = [8, 1], strides = [1, 1]} : vector<8x64xf32> to vector<8x1xf32>
    %341 = vector.broadcast %340 : vector<8x1xf32> to vector<8x512xf32>
    %342 = arith.subf %341, %11 : vector<8x512xf32>
    %343 = arith.mulf %342, %342 : vector<8x512xf32>
    %cst_45 = arith.constant 0.000000e+00 : f32
    %344 = vector.broadcast %cst_45 : f32 to vector<8x512xf32>
    %345 = arith.subf %344, %343 : vector<8x512xf32>
    %346 = math.exp %345 : vector<8x512xf32>
    %347 = arith.addf %339, %346 : vector<8x512xf32>
    %348 = vector.extract_strided_slice %2 {offsets = [0, 42], sizes = [8, 1], strides = [1, 1]} : vector<8x64xf32> to vector<8x1xf32>
    %349 = vector.broadcast %348 : vector<8x1xf32> to vector<8x512xf32>
    %350 = arith.subf %349, %11 : vector<8x512xf32>
    %351 = arith.mulf %350, %350 : vector<8x512xf32>
    %cst_46 = arith.constant 0.000000e+00 : f32
    %352 = vector.broadcast %cst_46 : f32 to vector<8x512xf32>
    %353 = arith.subf %352, %351 : vector<8x512xf32>
    %354 = math.exp %353 : vector<8x512xf32>
    %355 = arith.addf %347, %354 : vector<8x512xf32>
    %356 = vector.extract_strided_slice %2 {offsets = [0, 43], sizes = [8, 1], strides = [1, 1]} : vector<8x64xf32> to vector<8x1xf32>
    %357 = vector.broadcast %356 : vector<8x1xf32> to vector<8x512xf32>
    %358 = arith.subf %357, %11 : vector<8x512xf32>
    %359 = arith.mulf %358, %358 : vector<8x512xf32>
    %cst_47 = arith.constant 0.000000e+00 : f32
    %360 = vector.broadcast %cst_47 : f32 to vector<8x512xf32>
    %361 = arith.subf %360, %359 : vector<8x512xf32>
    %362 = math.exp %361 : vector<8x512xf32>
    %363 = arith.addf %355, %362 : vector<8x512xf32>
    %364 = vector.extract_strided_slice %2 {offsets = [0, 44], sizes = [8, 1], strides = [1, 1]} : vector<8x64xf32> to vector<8x1xf32>
    %365 = vector.broadcast %364 : vector<8x1xf32> to vector<8x512xf32>
    %366 = arith.subf %365, %11 : vector<8x512xf32>
    %367 = arith.mulf %366, %366 : vector<8x512xf32>
    %cst_48 = arith.constant 0.000000e+00 : f32
    %368 = vector.broadcast %cst_48 : f32 to vector<8x512xf32>
    %369 = arith.subf %368, %367 : vector<8x512xf32>
    %370 = math.exp %369 : vector<8x512xf32>
    %371 = arith.addf %363, %370 : vector<8x512xf32>
    %372 = vector.extract_strided_slice %2 {offsets = [0, 45], sizes = [8, 1], strides = [1, 1]} : vector<8x64xf32> to vector<8x1xf32>
    %373 = vector.broadcast %372 : vector<8x1xf32> to vector<8x512xf32>
    %374 = arith.subf %373, %11 : vector<8x512xf32>
    %375 = arith.mulf %374, %374 : vector<8x512xf32>
    %cst_49 = arith.constant 0.000000e+00 : f32
    %376 = vector.broadcast %cst_49 : f32 to vector<8x512xf32>
    %377 = arith.subf %376, %375 : vector<8x512xf32>
    %378 = math.exp %377 : vector<8x512xf32>
    %379 = arith.addf %371, %378 : vector<8x512xf32>
    %380 = vector.extract_strided_slice %2 {offsets = [0, 46], sizes = [8, 1], strides = [1, 1]} : vector<8x64xf32> to vector<8x1xf32>
    %381 = vector.broadcast %380 : vector<8x1xf32> to vector<8x512xf32>
    %382 = arith.subf %381, %11 : vector<8x512xf32>
    %383 = arith.mulf %382, %382 : vector<8x512xf32>
    %cst_50 = arith.constant 0.000000e+00 : f32
    %384 = vector.broadcast %cst_50 : f32 to vector<8x512xf32>
    %385 = arith.subf %384, %383 : vector<8x512xf32>
    %386 = math.exp %385 : vector<8x512xf32>
    %387 = arith.addf %379, %386 : vector<8x512xf32>
    %388 = vector.extract_strided_slice %2 {offsets = [0, 47], sizes = [8, 1], strides = [1, 1]} : vector<8x64xf32> to vector<8x1xf32>
    %389 = vector.broadcast %388 : vector<8x1xf32> to vector<8x512xf32>
    %390 = arith.subf %389, %11 : vector<8x512xf32>
    %391 = arith.mulf %390, %390 : vector<8x512xf32>
    %cst_51 = arith.constant 0.000000e+00 : f32
    %392 = vector.broadcast %cst_51 : f32 to vector<8x512xf32>
    %393 = arith.subf %392, %391 : vector<8x512xf32>
    %394 = math.exp %393 : vector<8x512xf32>
    %395 = arith.addf %387, %394 : vector<8x512xf32>
    %396 = vector.extract_strided_slice %2 {offsets = [0, 48], sizes = [8, 1], strides = [1, 1]} : vector<8x64xf32> to vector<8x1xf32>
    %397 = vector.broadcast %396 : vector<8x1xf32> to vector<8x512xf32>
    %398 = arith.subf %397, %11 : vector<8x512xf32>
    %399 = arith.mulf %398, %398 : vector<8x512xf32>
    %cst_52 = arith.constant 0.000000e+00 : f32
    %400 = vector.broadcast %cst_52 : f32 to vector<8x512xf32>
    %401 = arith.subf %400, %399 : vector<8x512xf32>
    %402 = math.exp %401 : vector<8x512xf32>
    %403 = arith.addf %395, %402 : vector<8x512xf32>
    %404 = vector.extract_strided_slice %2 {offsets = [0, 49], sizes = [8, 1], strides = [1, 1]} : vector<8x64xf32> to vector<8x1xf32>
    %405 = vector.broadcast %404 : vector<8x1xf32> to vector<8x512xf32>
    %406 = arith.subf %405, %11 : vector<8x512xf32>
    %407 = arith.mulf %406, %406 : vector<8x512xf32>
    %cst_53 = arith.constant 0.000000e+00 : f32
    %408 = vector.broadcast %cst_53 : f32 to vector<8x512xf32>
    %409 = arith.subf %408, %407 : vector<8x512xf32>
    %410 = math.exp %409 : vector<8x512xf32>
    %411 = arith.addf %403, %410 : vector<8x512xf32>
    %412 = vector.extract_strided_slice %2 {offsets = [0, 50], sizes = [8, 1], strides = [1, 1]} : vector<8x64xf32> to vector<8x1xf32>
    %413 = vector.broadcast %412 : vector<8x1xf32> to vector<8x512xf32>
    %414 = arith.subf %413, %11 : vector<8x512xf32>
    %415 = arith.mulf %414, %414 : vector<8x512xf32>
    %cst_54 = arith.constant 0.000000e+00 : f32
    %416 = vector.broadcast %cst_54 : f32 to vector<8x512xf32>
    %417 = arith.subf %416, %415 : vector<8x512xf32>
    %418 = math.exp %417 : vector<8x512xf32>
    %419 = arith.addf %411, %418 : vector<8x512xf32>
    %420 = vector.extract_strided_slice %2 {offsets = [0, 51], sizes = [8, 1], strides = [1, 1]} : vector<8x64xf32> to vector<8x1xf32>
    %421 = vector.broadcast %420 : vector<8x1xf32> to vector<8x512xf32>
    %422 = arith.subf %421, %11 : vector<8x512xf32>
    %423 = arith.mulf %422, %422 : vector<8x512xf32>
    %cst_55 = arith.constant 0.000000e+00 : f32
    %424 = vector.broadcast %cst_55 : f32 to vector<8x512xf32>
    %425 = arith.subf %424, %423 : vector<8x512xf32>
    %426 = math.exp %425 : vector<8x512xf32>
    %427 = arith.addf %419, %426 : vector<8x512xf32>
    %428 = vector.extract_strided_slice %2 {offsets = [0, 52], sizes = [8, 1], strides = [1, 1]} : vector<8x64xf32> to vector<8x1xf32>
    %429 = vector.broadcast %428 : vector<8x1xf32> to vector<8x512xf32>
    %430 = arith.subf %429, %11 : vector<8x512xf32>
    %431 = arith.mulf %430, %430 : vector<8x512xf32>
    %cst_56 = arith.constant 0.000000e+00 : f32
    %432 = vector.broadcast %cst_56 : f32 to vector<8x512xf32>
    %433 = arith.subf %432, %431 : vector<8x512xf32>
    %434 = math.exp %433 : vector<8x512xf32>
    %435 = arith.addf %427, %434 : vector<8x512xf32>
    %436 = vector.extract_strided_slice %2 {offsets = [0, 53], sizes = [8, 1], strides = [1, 1]} : vector<8x64xf32> to vector<8x1xf32>
    %437 = vector.broadcast %436 : vector<8x1xf32> to vector<8x512xf32>
    %438 = arith.subf %437, %11 : vector<8x512xf32>
    %439 = arith.mulf %438, %438 : vector<8x512xf32>
    %cst_57 = arith.constant 0.000000e+00 : f32
    %440 = vector.broadcast %cst_57 : f32 to vector<8x512xf32>
    %441 = arith.subf %440, %439 : vector<8x512xf32>
    %442 = math.exp %441 : vector<8x512xf32>
    %443 = arith.addf %435, %442 : vector<8x512xf32>
    %444 = vector.extract_strided_slice %2 {offsets = [0, 54], sizes = [8, 1], strides = [1, 1]} : vector<8x64xf32> to vector<8x1xf32>
    %445 = vector.broadcast %444 : vector<8x1xf32> to vector<8x512xf32>
    %446 = arith.subf %445, %11 : vector<8x512xf32>
    %447 = arith.mulf %446, %446 : vector<8x512xf32>
    %cst_58 = arith.constant 0.000000e+00 : f32
    %448 = vector.broadcast %cst_58 : f32 to vector<8x512xf32>
    %449 = arith.subf %448, %447 : vector<8x512xf32>
    %450 = math.exp %449 : vector<8x512xf32>
    %451 = arith.addf %443, %450 : vector<8x512xf32>
    %452 = vector.extract_strided_slice %2 {offsets = [0, 55], sizes = [8, 1], strides = [1, 1]} : vector<8x64xf32> to vector<8x1xf32>
    %453 = vector.broadcast %452 : vector<8x1xf32> to vector<8x512xf32>
    %454 = arith.subf %453, %11 : vector<8x512xf32>
    %455 = arith.mulf %454, %454 : vector<8x512xf32>
    %cst_59 = arith.constant 0.000000e+00 : f32
    %456 = vector.broadcast %cst_59 : f32 to vector<8x512xf32>
    %457 = arith.subf %456, %455 : vector<8x512xf32>
    %458 = math.exp %457 : vector<8x512xf32>
    %459 = arith.addf %451, %458 : vector<8x512xf32>
    %460 = vector.extract_strided_slice %2 {offsets = [0, 56], sizes = [8, 1], strides = [1, 1]} : vector<8x64xf32> to vector<8x1xf32>
    %461 = vector.broadcast %460 : vector<8x1xf32> to vector<8x512xf32>
    %462 = arith.subf %461, %11 : vector<8x512xf32>
    %463 = arith.mulf %462, %462 : vector<8x512xf32>
    %cst_60 = arith.constant 0.000000e+00 : f32
    %464 = vector.broadcast %cst_60 : f32 to vector<8x512xf32>
    %465 = arith.subf %464, %463 : vector<8x512xf32>
    %466 = math.exp %465 : vector<8x512xf32>
    %467 = arith.addf %459, %466 : vector<8x512xf32>
    %468 = vector.extract_strided_slice %2 {offsets = [0, 57], sizes = [8, 1], strides = [1, 1]} : vector<8x64xf32> to vector<8x1xf32>
    %469 = vector.broadcast %468 : vector<8x1xf32> to vector<8x512xf32>
    %470 = arith.subf %469, %11 : vector<8x512xf32>
    %471 = arith.mulf %470, %470 : vector<8x512xf32>
    %cst_61 = arith.constant 0.000000e+00 : f32
    %472 = vector.broadcast %cst_61 : f32 to vector<8x512xf32>
    %473 = arith.subf %472, %471 : vector<8x512xf32>
    %474 = math.exp %473 : vector<8x512xf32>
    %475 = arith.addf %467, %474 : vector<8x512xf32>
    %476 = vector.extract_strided_slice %2 {offsets = [0, 58], sizes = [8, 1], strides = [1, 1]} : vector<8x64xf32> to vector<8x1xf32>
    %477 = vector.broadcast %476 : vector<8x1xf32> to vector<8x512xf32>
    %478 = arith.subf %477, %11 : vector<8x512xf32>
    %479 = arith.mulf %478, %478 : vector<8x512xf32>
    %cst_62 = arith.constant 0.000000e+00 : f32
    %480 = vector.broadcast %cst_62 : f32 to vector<8x512xf32>
    %481 = arith.subf %480, %479 : vector<8x512xf32>
    %482 = math.exp %481 : vector<8x512xf32>
    %483 = arith.addf %475, %482 : vector<8x512xf32>
    %484 = vector.extract_strided_slice %2 {offsets = [0, 59], sizes = [8, 1], strides = [1, 1]} : vector<8x64xf32> to vector<8x1xf32>
    %485 = vector.broadcast %484 : vector<8x1xf32> to vector<8x512xf32>
    %486 = arith.subf %485, %11 : vector<8x512xf32>
    %487 = arith.mulf %486, %486 : vector<8x512xf32>
    %cst_63 = arith.constant 0.000000e+00 : f32
    %488 = vector.broadcast %cst_63 : f32 to vector<8x512xf32>
    %489 = arith.subf %488, %487 : vector<8x512xf32>
    %490 = math.exp %489 : vector<8x512xf32>
    %491 = arith.addf %483, %490 : vector<8x512xf32>
    %492 = vector.extract_strided_slice %2 {offsets = [0, 60], sizes = [8, 1], strides = [1, 1]} : vector<8x64xf32> to vector<8x1xf32>
    %493 = vector.broadcast %492 : vector<8x1xf32> to vector<8x512xf32>
    %494 = arith.subf %493, %11 : vector<8x512xf32>
    %495 = arith.mulf %494, %494 : vector<8x512xf32>
    %cst_64 = arith.constant 0.000000e+00 : f32
    %496 = vector.broadcast %cst_64 : f32 to vector<8x512xf32>
    %497 = arith.subf %496, %495 : vector<8x512xf32>
    %498 = math.exp %497 : vector<8x512xf32>
    %499 = arith.addf %491, %498 : vector<8x512xf32>
    %500 = vector.extract_strided_slice %2 {offsets = [0, 61], sizes = [8, 1], strides = [1, 1]} : vector<8x64xf32> to vector<8x1xf32>
    %501 = vector.broadcast %500 : vector<8x1xf32> to vector<8x512xf32>
    %502 = arith.subf %501, %11 : vector<8x512xf32>
    %503 = arith.mulf %502, %502 : vector<8x512xf32>
    %cst_65 = arith.constant 0.000000e+00 : f32
    %504 = vector.broadcast %cst_65 : f32 to vector<8x512xf32>
    %505 = arith.subf %504, %503 : vector<8x512xf32>
    %506 = math.exp %505 : vector<8x512xf32>
    %507 = arith.addf %499, %506 : vector<8x512xf32>
    %508 = vector.extract_strided_slice %2 {offsets = [0, 62], sizes = [8, 1], strides = [1, 1]} : vector<8x64xf32> to vector<8x1xf32>
    %509 = vector.broadcast %508 : vector<8x1xf32> to vector<8x512xf32>
    %510 = arith.subf %509, %11 : vector<8x512xf32>
    %511 = arith.mulf %510, %510 : vector<8x512xf32>
    %cst_66 = arith.constant 0.000000e+00 : f32
    %512 = vector.broadcast %cst_66 : f32 to vector<8x512xf32>
    %513 = arith.subf %512, %511 : vector<8x512xf32>
    %514 = math.exp %513 : vector<8x512xf32>
    %515 = arith.addf %507, %514 : vector<8x512xf32>
    %516 = vector.extract_strided_slice %2 {offsets = [0, 63], sizes = [8, 1], strides = [1, 1]} : vector<8x64xf32> to vector<8x1xf32>
    %517 = vector.broadcast %516 : vector<8x1xf32> to vector<8x512xf32>
    %518 = arith.subf %517, %11 : vector<8x512xf32>
    %519 = arith.mulf %518, %518 : vector<8x512xf32>
    %cst_67 = arith.constant 0.000000e+00 : f32
    %520 = vector.broadcast %cst_67 : f32 to vector<8x512xf32>
    %521 = arith.subf %520, %519 : vector<8x512xf32>
    %522 = math.exp %521 : vector<8x512xf32>
    %523 = arith.addf %515, %522 : vector<8x512xf32>
    %cst_68 = arith.constant 2.000000e+00 : f32
    %524 = vector.broadcast %cst_68 : f32 to vector<8x512xf32>
    %525 = arith.mulf %524, %7 : vector<8x512xf32>
    %526 = arith.addf %523, %525 : vector<8x512xf32>
    %c0_69 = arith.constant 0 : index
    %c0_70 = arith.constant 0 : index
    %c0_71 = arith.constant 0 : index
    %527 = vector.load %arg2[%c0_69, %c0_70, %c0_71] : memref<1x8x64xf32, #tpu.memory_space<vmem>>, vector<1x8x64xf32>
    %528 = vector.shape_cast %527 : vector<1x8x64xf32> to vector<8x64xf32>
    %cst_72 = arith.constant 0.000000e+00 : f32
    %529 = vector.broadcast %cst_72 : f32 to vector<8x512xf32>
    %c1_i32_73 = arith.constant 1 : i32
    %530 = arith.addi %0, %c1_i32_73 : i32
    %c4_i32_74 = arith.constant 4 : i32
    %531 = arith.subi %c4_i32_74, %530 : i32
    %532 = arith.addi %530, %531 : i32
    %c1_i32_75 = arith.constant 1 : i32
    %533 = scf.for %arg5 = %530 to %532 step %c1_i32_75 iter_args(%arg6 = %529) -> (vector<8x512xf32>)  : i32 {
      %1063 = arith.index_cast %arg5 : i32 to index
      %c0_145 = arith.constant 0 : index
      %1064 = vector.load %arg3[%1063, %c0_145] : memref<4x512xf32, #tpu.memory_space<vmem>>, vector<1x512xf32>
      %1065 = vector.shape_cast %1064 : vector<1x512xf32> to vector<1x512xf32>
      %1066 = vector.broadcast %1065 : vector<1x512xf32> to vector<8x512xf32>
      %1067 = vector.extract_strided_slice %528 {offsets = [0, 0], sizes = [8, 1], strides = [1, 1]} : vector<8x64xf32> to vector<8x1xf32>
      %1068 = vector.broadcast %1067 : vector<8x1xf32> to vector<8x512xf32>
      %1069 = arith.subf %1068, %1066 : vector<8x512xf32>
      %1070 = arith.mulf %1069, %1069 : vector<8x512xf32>
      %cst_146 = arith.constant 0.000000e+00 : f32
      %1071 = vector.broadcast %cst_146 : f32 to vector<8x512xf32>
      %1072 = arith.subf %1071, %1070 : vector<8x512xf32>
      %1073 = math.exp %1072 : vector<8x512xf32>
      %1074 = arith.addf %arg6, %1073 : vector<8x512xf32>
      %1075 = vector.extract_strided_slice %528 {offsets = [0, 1], sizes = [8, 1], strides = [1, 1]} : vector<8x64xf32> to vector<8x1xf32>
      %1076 = vector.broadcast %1075 : vector<8x1xf32> to vector<8x512xf32>
      %1077 = arith.subf %1076, %1066 : vector<8x512xf32>
      %1078 = arith.mulf %1077, %1077 : vector<8x512xf32>
      %cst_147 = arith.constant 0.000000e+00 : f32
      %1079 = vector.broadcast %cst_147 : f32 to vector<8x512xf32>
      %1080 = arith.subf %1079, %1078 : vector<8x512xf32>
      %1081 = math.exp %1080 : vector<8x512xf32>
      %1082 = arith.addf %1074, %1081 : vector<8x512xf32>
      %1083 = vector.extract_strided_slice %528 {offsets = [0, 2], sizes = [8, 1], strides = [1, 1]} : vector<8x64xf32> to vector<8x1xf32>
      %1084 = vector.broadcast %1083 : vector<8x1xf32> to vector<8x512xf32>
      %1085 = arith.subf %1084, %1066 : vector<8x512xf32>
      %1086 = arith.mulf %1085, %1085 : vector<8x512xf32>
      %cst_148 = arith.constant 0.000000e+00 : f32
      %1087 = vector.broadcast %cst_148 : f32 to vector<8x512xf32>
      %1088 = arith.subf %1087, %1086 : vector<8x512xf32>
      %1089 = math.exp %1088 : vector<8x512xf32>
      %1090 = arith.addf %1082, %1089 : vector<8x512xf32>
      %1091 = vector.extract_strided_slice %528 {offsets = [0, 3], sizes = [8, 1], strides = [1, 1]} : vector<8x64xf32> to vector<8x1xf32>
      %1092 = vector.broadcast %1091 : vector<8x1xf32> to vector<8x512xf32>
      %1093 = arith.subf %1092, %1066 : vector<8x512xf32>
      %1094 = arith.mulf %1093, %1093 : vector<8x512xf32>
      %cst_149 = arith.constant 0.000000e+00 : f32
      %1095 = vector.broadcast %cst_149 : f32 to vector<8x512xf32>
      %1096 = arith.subf %1095, %1094 : vector<8x512xf32>
      %1097 = math.exp %1096 : vector<8x512xf32>
      %1098 = arith.addf %1090, %1097 : vector<8x512xf32>
      %1099 = vector.extract_strided_slice %528 {offsets = [0, 4], sizes = [8, 1], strides = [1, 1]} : vector<8x64xf32> to vector<8x1xf32>
      %1100 = vector.broadcast %1099 : vector<8x1xf32> to vector<8x512xf32>
      %1101 = arith.subf %1100, %1066 : vector<8x512xf32>
      %1102 = arith.mulf %1101, %1101 : vector<8x512xf32>
      %cst_150 = arith.constant 0.000000e+00 : f32
      %1103 = vector.broadcast %cst_150 : f32 to vector<8x512xf32>
      %1104 = arith.subf %1103, %1102 : vector<8x512xf32>
      %1105 = math.exp %1104 : vector<8x512xf32>
      %1106 = arith.addf %1098, %1105 : vector<8x512xf32>
      %1107 = vector.extract_strided_slice %528 {offsets = [0, 5], sizes = [8, 1], strides = [1, 1]} : vector<8x64xf32> to vector<8x1xf32>
      %1108 = vector.broadcast %1107 : vector<8x1xf32> to vector<8x512xf32>
      %1109 = arith.subf %1108, %1066 : vector<8x512xf32>
      %1110 = arith.mulf %1109, %1109 : vector<8x512xf32>
      %cst_151 = arith.constant 0.000000e+00 : f32
      %1111 = vector.broadcast %cst_151 : f32 to vector<8x512xf32>
      %1112 = arith.subf %1111, %1110 : vector<8x512xf32>
      %1113 = math.exp %1112 : vector<8x512xf32>
      %1114 = arith.addf %1106, %1113 : vector<8x512xf32>
      %1115 = vector.extract_strided_slice %528 {offsets = [0, 6], sizes = [8, 1], strides = [1, 1]} : vector<8x64xf32> to vector<8x1xf32>
      %1116 = vector.broadcast %1115 : vector<8x1xf32> to vector<8x512xf32>
      %1117 = arith.subf %1116, %1066 : vector<8x512xf32>
      %1118 = arith.mulf %1117, %1117 : vector<8x512xf32>
      %cst_152 = arith.constant 0.000000e+00 : f32
      %1119 = vector.broadcast %cst_152 : f32 to vector<8x512xf32>
      %1120 = arith.subf %1119, %1118 : vector<8x512xf32>
      %1121 = math.exp %1120 : vector<8x512xf32>
      %1122 = arith.addf %1114, %1121 : vector<8x512xf32>
      %1123 = vector.extract_strided_slice %528 {offsets = [0, 7], sizes = [8, 1], strides = [1, 1]} : vector<8x64xf32> to vector<8x1xf32>
      %1124 = vector.broadcast %1123 : vector<8x1xf32> to vector<8x512xf32>
      %1125 = arith.subf %1124, %1066 : vector<8x512xf32>
      %1126 = arith.mulf %1125, %1125 : vector<8x512xf32>
      %cst_153 = arith.constant 0.000000e+00 : f32
      %1127 = vector.broadcast %cst_153 : f32 to vector<8x512xf32>
      %1128 = arith.subf %1127, %1126 : vector<8x512xf32>
      %1129 = math.exp %1128 : vector<8x512xf32>
      %1130 = arith.addf %1122, %1129 : vector<8x512xf32>
      %1131 = vector.extract_strided_slice %528 {offsets = [0, 8], sizes = [8, 1], strides = [1, 1]} : vector<8x64xf32> to vector<8x1xf32>
      %1132 = vector.broadcast %1131 : vector<8x1xf32> to vector<8x512xf32>
      %1133 = arith.subf %1132, %1066 : vector<8x512xf32>
      %1134 = arith.mulf %1133, %1133 : vector<8x512xf32>
      %cst_154 = arith.constant 0.000000e+00 : f32
      %1135 = vector.broadcast %cst_154 : f32 to vector<8x512xf32>
      %1136 = arith.subf %1135, %1134 : vector<8x512xf32>
      %1137 = math.exp %1136 : vector<8x512xf32>
      %1138 = arith.addf %1130, %1137 : vector<8x512xf32>
      %1139 = vector.extract_strided_slice %528 {offsets = [0, 9], sizes = [8, 1], strides = [1, 1]} : vector<8x64xf32> to vector<8x1xf32>
      %1140 = vector.broadcast %1139 : vector<8x1xf32> to vector<8x512xf32>
      %1141 = arith.subf %1140, %1066 : vector<8x512xf32>
      %1142 = arith.mulf %1141, %1141 : vector<8x512xf32>
      %cst_155 = arith.constant 0.000000e+00 : f32
      %1143 = vector.broadcast %cst_155 : f32 to vector<8x512xf32>
      %1144 = arith.subf %1143, %1142 : vector<8x512xf32>
      %1145 = math.exp %1144 : vector<8x512xf32>
      %1146 = arith.addf %1138, %1145 : vector<8x512xf32>
      %1147 = vector.extract_strided_slice %528 {offsets = [0, 10], sizes = [8, 1], strides = [1, 1]} : vector<8x64xf32> to vector<8x1xf32>
      %1148 = vector.broadcast %1147 : vector<8x1xf32> to vector<8x512xf32>
      %1149 = arith.subf %1148, %1066 : vector<8x512xf32>
      %1150 = arith.mulf %1149, %1149 : vector<8x512xf32>
      %cst_156 = arith.constant 0.000000e+00 : f32
      %1151 = vector.broadcast %cst_156 : f32 to vector<8x512xf32>
      %1152 = arith.subf %1151, %1150 : vector<8x512xf32>
      %1153 = math.exp %1152 : vector<8x512xf32>
      %1154 = arith.addf %1146, %1153 : vector<8x512xf32>
      %1155 = vector.extract_strided_slice %528 {offsets = [0, 11], sizes = [8, 1], strides = [1, 1]} : vector<8x64xf32> to vector<8x1xf32>
      %1156 = vector.broadcast %1155 : vector<8x1xf32> to vector<8x512xf32>
      %1157 = arith.subf %1156, %1066 : vector<8x512xf32>
      %1158 = arith.mulf %1157, %1157 : vector<8x512xf32>
      %cst_157 = arith.constant 0.000000e+00 : f32
      %1159 = vector.broadcast %cst_157 : f32 to vector<8x512xf32>
      %1160 = arith.subf %1159, %1158 : vector<8x512xf32>
      %1161 = math.exp %1160 : vector<8x512xf32>
      %1162 = arith.addf %1154, %1161 : vector<8x512xf32>
      %1163 = vector.extract_strided_slice %528 {offsets = [0, 12], sizes = [8, 1], strides = [1, 1]} : vector<8x64xf32> to vector<8x1xf32>
      %1164 = vector.broadcast %1163 : vector<8x1xf32> to vector<8x512xf32>
      %1165 = arith.subf %1164, %1066 : vector<8x512xf32>
      %1166 = arith.mulf %1165, %1165 : vector<8x512xf32>
      %cst_158 = arith.constant 0.000000e+00 : f32
      %1167 = vector.broadcast %cst_158 : f32 to vector<8x512xf32>
      %1168 = arith.subf %1167, %1166 : vector<8x512xf32>
      %1169 = math.exp %1168 : vector<8x512xf32>
      %1170 = arith.addf %1162, %1169 : vector<8x512xf32>
      %1171 = vector.extract_strided_slice %528 {offsets = [0, 13], sizes = [8, 1], strides = [1, 1]} : vector<8x64xf32> to vector<8x1xf32>
      %1172 = vector.broadcast %1171 : vector<8x1xf32> to vector<8x512xf32>
      %1173 = arith.subf %1172, %1066 : vector<8x512xf32>
      %1174 = arith.mulf %1173, %1173 : vector<8x512xf32>
      %cst_159 = arith.constant 0.000000e+00 : f32
      %1175 = vector.broadcast %cst_159 : f32 to vector<8x512xf32>
      %1176 = arith.subf %1175, %1174 : vector<8x512xf32>
      %1177 = math.exp %1176 : vector<8x512xf32>
      %1178 = arith.addf %1170, %1177 : vector<8x512xf32>
      %1179 = vector.extract_strided_slice %528 {offsets = [0, 14], sizes = [8, 1], strides = [1, 1]} : vector<8x64xf32> to vector<8x1xf32>
      %1180 = vector.broadcast %1179 : vector<8x1xf32> to vector<8x512xf32>
      %1181 = arith.subf %1180, %1066 : vector<8x512xf32>
      %1182 = arith.mulf %1181, %1181 : vector<8x512xf32>
      %cst_160 = arith.constant 0.000000e+00 : f32
      %1183 = vector.broadcast %cst_160 : f32 to vector<8x512xf32>
      %1184 = arith.subf %1183, %1182 : vector<8x512xf32>
      %1185 = math.exp %1184 : vector<8x512xf32>
      %1186 = arith.addf %1178, %1185 : vector<8x512xf32>
      %1187 = vector.extract_strided_slice %528 {offsets = [0, 15], sizes = [8, 1], strides = [1, 1]} : vector<8x64xf32> to vector<8x1xf32>
      %1188 = vector.broadcast %1187 : vector<8x1xf32> to vector<8x512xf32>
      %1189 = arith.subf %1188, %1066 : vector<8x512xf32>
      %1190 = arith.mulf %1189, %1189 : vector<8x512xf32>
      %cst_161 = arith.constant 0.000000e+00 : f32
      %1191 = vector.broadcast %cst_161 : f32 to vector<8x512xf32>
      %1192 = arith.subf %1191, %1190 : vector<8x512xf32>
      %1193 = math.exp %1192 : vector<8x512xf32>
      %1194 = arith.addf %1186, %1193 : vector<8x512xf32>
      %1195 = vector.extract_strided_slice %528 {offsets = [0, 16], sizes = [8, 1], strides = [1, 1]} : vector<8x64xf32> to vector<8x1xf32>
      %1196 = vector.broadcast %1195 : vector<8x1xf32> to vector<8x512xf32>
      %1197 = arith.subf %1196, %1066 : vector<8x512xf32>
      %1198 = arith.mulf %1197, %1197 : vector<8x512xf32>
      %cst_162 = arith.constant 0.000000e+00 : f32
      %1199 = vector.broadcast %cst_162 : f32 to vector<8x512xf32>
      %1200 = arith.subf %1199, %1198 : vector<8x512xf32>
      %1201 = math.exp %1200 : vector<8x512xf32>
      %1202 = arith.addf %1194, %1201 : vector<8x512xf32>
      %1203 = vector.extract_strided_slice %528 {offsets = [0, 17], sizes = [8, 1], strides = [1, 1]} : vector<8x64xf32> to vector<8x1xf32>
      %1204 = vector.broadcast %1203 : vector<8x1xf32> to vector<8x512xf32>
      %1205 = arith.subf %1204, %1066 : vector<8x512xf32>
      %1206 = arith.mulf %1205, %1205 : vector<8x512xf32>
      %cst_163 = arith.constant 0.000000e+00 : f32
      %1207 = vector.broadcast %cst_163 : f32 to vector<8x512xf32>
      %1208 = arith.subf %1207, %1206 : vector<8x512xf32>
      %1209 = math.exp %1208 : vector<8x512xf32>
      %1210 = arith.addf %1202, %1209 : vector<8x512xf32>
      %1211 = vector.extract_strided_slice %528 {offsets = [0, 18], sizes = [8, 1], strides = [1, 1]} : vector<8x64xf32> to vector<8x1xf32>
      %1212 = vector.broadcast %1211 : vector<8x1xf32> to vector<8x512xf32>
      %1213 = arith.subf %1212, %1066 : vector<8x512xf32>
      %1214 = arith.mulf %1213, %1213 : vector<8x512xf32>
      %cst_164 = arith.constant 0.000000e+00 : f32
      %1215 = vector.broadcast %cst_164 : f32 to vector<8x512xf32>
      %1216 = arith.subf %1215, %1214 : vector<8x512xf32>
      %1217 = math.exp %1216 : vector<8x512xf32>
      %1218 = arith.addf %1210, %1217 : vector<8x512xf32>
      %1219 = vector.extract_strided_slice %528 {offsets = [0, 19], sizes = [8, 1], strides = [1, 1]} : vector<8x64xf32> to vector<8x1xf32>
      %1220 = vector.broadcast %1219 : vector<8x1xf32> to vector<8x512xf32>
      %1221 = arith.subf %1220, %1066 : vector<8x512xf32>
      %1222 = arith.mulf %1221, %1221 : vector<8x512xf32>
      %cst_165 = arith.constant 0.000000e+00 : f32
      %1223 = vector.broadcast %cst_165 : f32 to vector<8x512xf32>
      %1224 = arith.subf %1223, %1222 : vector<8x512xf32>
      %1225 = math.exp %1224 : vector<8x512xf32>
      %1226 = arith.addf %1218, %1225 : vector<8x512xf32>
      %1227 = vector.extract_strided_slice %528 {offsets = [0, 20], sizes = [8, 1], strides = [1, 1]} : vector<8x64xf32> to vector<8x1xf32>
      %1228 = vector.broadcast %1227 : vector<8x1xf32> to vector<8x512xf32>
      %1229 = arith.subf %1228, %1066 : vector<8x512xf32>
      %1230 = arith.mulf %1229, %1229 : vector<8x512xf32>
      %cst_166 = arith.constant 0.000000e+00 : f32
      %1231 = vector.broadcast %cst_166 : f32 to vector<8x512xf32>
      %1232 = arith.subf %1231, %1230 : vector<8x512xf32>
      %1233 = math.exp %1232 : vector<8x512xf32>
      %1234 = arith.addf %1226, %1233 : vector<8x512xf32>
      %1235 = vector.extract_strided_slice %528 {offsets = [0, 21], sizes = [8, 1], strides = [1, 1]} : vector<8x64xf32> to vector<8x1xf32>
      %1236 = vector.broadcast %1235 : vector<8x1xf32> to vector<8x512xf32>
      %1237 = arith.subf %1236, %1066 : vector<8x512xf32>
      %1238 = arith.mulf %1237, %1237 : vector<8x512xf32>
      %cst_167 = arith.constant 0.000000e+00 : f32
      %1239 = vector.broadcast %cst_167 : f32 to vector<8x512xf32>
      %1240 = arith.subf %1239, %1238 : vector<8x512xf32>
      %1241 = math.exp %1240 : vector<8x512xf32>
      %1242 = arith.addf %1234, %1241 : vector<8x512xf32>
      %1243 = vector.extract_strided_slice %528 {offsets = [0, 22], sizes = [8, 1], strides = [1, 1]} : vector<8x64xf32> to vector<8x1xf32>
      %1244 = vector.broadcast %1243 : vector<8x1xf32> to vector<8x512xf32>
      %1245 = arith.subf %1244, %1066 : vector<8x512xf32>
      %1246 = arith.mulf %1245, %1245 : vector<8x512xf32>
      %cst_168 = arith.constant 0.000000e+00 : f32
      %1247 = vector.broadcast %cst_168 : f32 to vector<8x512xf32>
      %1248 = arith.subf %1247, %1246 : vector<8x512xf32>
      %1249 = math.exp %1248 : vector<8x512xf32>
      %1250 = arith.addf %1242, %1249 : vector<8x512xf32>
      %1251 = vector.extract_strided_slice %528 {offsets = [0, 23], sizes = [8, 1], strides = [1, 1]} : vector<8x64xf32> to vector<8x1xf32>
      %1252 = vector.broadcast %1251 : vector<8x1xf32> to vector<8x512xf32>
      %1253 = arith.subf %1252, %1066 : vector<8x512xf32>
      %1254 = arith.mulf %1253, %1253 : vector<8x512xf32>
      %cst_169 = arith.constant 0.000000e+00 : f32
      %1255 = vector.broadcast %cst_169 : f32 to vector<8x512xf32>
      %1256 = arith.subf %1255, %1254 : vector<8x512xf32>
      %1257 = math.exp %1256 : vector<8x512xf32>
      %1258 = arith.addf %1250, %1257 : vector<8x512xf32>
      %1259 = vector.extract_strided_slice %528 {offsets = [0, 24], sizes = [8, 1], strides = [1, 1]} : vector<8x64xf32> to vector<8x1xf32>
      %1260 = vector.broadcast %1259 : vector<8x1xf32> to vector<8x512xf32>
      %1261 = arith.subf %1260, %1066 : vector<8x512xf32>
      %1262 = arith.mulf %1261, %1261 : vector<8x512xf32>
      %cst_170 = arith.constant 0.000000e+00 : f32
      %1263 = vector.broadcast %cst_170 : f32 to vector<8x512xf32>
      %1264 = arith.subf %1263, %1262 : vector<8x512xf32>
      %1265 = math.exp %1264 : vector<8x512xf32>
      %1266 = arith.addf %1258, %1265 : vector<8x512xf32>
      %1267 = vector.extract_strided_slice %528 {offsets = [0, 25], sizes = [8, 1], strides = [1, 1]} : vector<8x64xf32> to vector<8x1xf32>
      %1268 = vector.broadcast %1267 : vector<8x1xf32> to vector<8x512xf32>
      %1269 = arith.subf %1268, %1066 : vector<8x512xf32>
      %1270 = arith.mulf %1269, %1269 : vector<8x512xf32>
      %cst_171 = arith.constant 0.000000e+00 : f32
      %1271 = vector.broadcast %cst_171 : f32 to vector<8x512xf32>
      %1272 = arith.subf %1271, %1270 : vector<8x512xf32>
      %1273 = math.exp %1272 : vector<8x512xf32>
      %1274 = arith.addf %1266, %1273 : vector<8x512xf32>
      %1275 = vector.extract_strided_slice %528 {offsets = [0, 26], sizes = [8, 1], strides = [1, 1]} : vector<8x64xf32> to vector<8x1xf32>
      %1276 = vector.broadcast %1275 : vector<8x1xf32> to vector<8x512xf32>
      %1277 = arith.subf %1276, %1066 : vector<8x512xf32>
      %1278 = arith.mulf %1277, %1277 : vector<8x512xf32>
      %cst_172 = arith.constant 0.000000e+00 : f32
      %1279 = vector.broadcast %cst_172 : f32 to vector<8x512xf32>
      %1280 = arith.subf %1279, %1278 : vector<8x512xf32>
      %1281 = math.exp %1280 : vector<8x512xf32>
      %1282 = arith.addf %1274, %1281 : vector<8x512xf32>
      %1283 = vector.extract_strided_slice %528 {offsets = [0, 27], sizes = [8, 1], strides = [1, 1]} : vector<8x64xf32> to vector<8x1xf32>
      %1284 = vector.broadcast %1283 : vector<8x1xf32> to vector<8x512xf32>
      %1285 = arith.subf %1284, %1066 : vector<8x512xf32>
      %1286 = arith.mulf %1285, %1285 : vector<8x512xf32>
      %cst_173 = arith.constant 0.000000e+00 : f32
      %1287 = vector.broadcast %cst_173 : f32 to vector<8x512xf32>
      %1288 = arith.subf %1287, %1286 : vector<8x512xf32>
      %1289 = math.exp %1288 : vector<8x512xf32>
      %1290 = arith.addf %1282, %1289 : vector<8x512xf32>
      %1291 = vector.extract_strided_slice %528 {offsets = [0, 28], sizes = [8, 1], strides = [1, 1]} : vector<8x64xf32> to vector<8x1xf32>
      %1292 = vector.broadcast %1291 : vector<8x1xf32> to vector<8x512xf32>
      %1293 = arith.subf %1292, %1066 : vector<8x512xf32>
      %1294 = arith.mulf %1293, %1293 : vector<8x512xf32>
      %cst_174 = arith.constant 0.000000e+00 : f32
      %1295 = vector.broadcast %cst_174 : f32 to vector<8x512xf32>
      %1296 = arith.subf %1295, %1294 : vector<8x512xf32>
      %1297 = math.exp %1296 : vector<8x512xf32>
      %1298 = arith.addf %1290, %1297 : vector<8x512xf32>
      %1299 = vector.extract_strided_slice %528 {offsets = [0, 29], sizes = [8, 1], strides = [1, 1]} : vector<8x64xf32> to vector<8x1xf32>
      %1300 = vector.broadcast %1299 : vector<8x1xf32> to vector<8x512xf32>
      %1301 = arith.subf %1300, %1066 : vector<8x512xf32>
      %1302 = arith.mulf %1301, %1301 : vector<8x512xf32>
      %cst_175 = arith.constant 0.000000e+00 : f32
      %1303 = vector.broadcast %cst_175 : f32 to vector<8x512xf32>
      %1304 = arith.subf %1303, %1302 : vector<8x512xf32>
      %1305 = math.exp %1304 : vector<8x512xf32>
      %1306 = arith.addf %1298, %1305 : vector<8x512xf32>
      %1307 = vector.extract_strided_slice %528 {offsets = [0, 30], sizes = [8, 1], strides = [1, 1]} : vector<8x64xf32> to vector<8x1xf32>
      %1308 = vector.broadcast %1307 : vector<8x1xf32> to vector<8x512xf32>
      %1309 = arith.subf %1308, %1066 : vector<8x512xf32>
      %1310 = arith.mulf %1309, %1309 : vector<8x512xf32>
      %cst_176 = arith.constant 0.000000e+00 : f32
      %1311 = vector.broadcast %cst_176 : f32 to vector<8x512xf32>
      %1312 = arith.subf %1311, %1310 : vector<8x512xf32>
      %1313 = math.exp %1312 : vector<8x512xf32>
      %1314 = arith.addf %1306, %1313 : vector<8x512xf32>
      %1315 = vector.extract_strided_slice %528 {offsets = [0, 31], sizes = [8, 1], strides = [1, 1]} : vector<8x64xf32> to vector<8x1xf32>
      %1316 = vector.broadcast %1315 : vector<8x1xf32> to vector<8x512xf32>
      %1317 = arith.subf %1316, %1066 : vector<8x512xf32>
      %1318 = arith.mulf %1317, %1317 : vector<8x512xf32>
      %cst_177 = arith.constant 0.000000e+00 : f32
      %1319 = vector.broadcast %cst_177 : f32 to vector<8x512xf32>
      %1320 = arith.subf %1319, %1318 : vector<8x512xf32>
      %1321 = math.exp %1320 : vector<8x512xf32>
      %1322 = arith.addf %1314, %1321 : vector<8x512xf32>
      %1323 = vector.extract_strided_slice %528 {offsets = [0, 32], sizes = [8, 1], strides = [1, 1]} : vector<8x64xf32> to vector<8x1xf32>
      %1324 = vector.broadcast %1323 : vector<8x1xf32> to vector<8x512xf32>
      %1325 = arith.subf %1324, %1066 : vector<8x512xf32>
      %1326 = arith.mulf %1325, %1325 : vector<8x512xf32>
      %cst_178 = arith.constant 0.000000e+00 : f32
      %1327 = vector.broadcast %cst_178 : f32 to vector<8x512xf32>
      %1328 = arith.subf %1327, %1326 : vector<8x512xf32>
      %1329 = math.exp %1328 : vector<8x512xf32>
      %1330 = arith.addf %1322, %1329 : vector<8x512xf32>
      %1331 = vector.extract_strided_slice %528 {offsets = [0, 33], sizes = [8, 1], strides = [1, 1]} : vector<8x64xf32> to vector<8x1xf32>
      %1332 = vector.broadcast %1331 : vector<8x1xf32> to vector<8x512xf32>
      %1333 = arith.subf %1332, %1066 : vector<8x512xf32>
      %1334 = arith.mulf %1333, %1333 : vector<8x512xf32>
      %cst_179 = arith.constant 0.000000e+00 : f32
      %1335 = vector.broadcast %cst_179 : f32 to vector<8x512xf32>
      %1336 = arith.subf %1335, %1334 : vector<8x512xf32>
      %1337 = math.exp %1336 : vector<8x512xf32>
      %1338 = arith.addf %1330, %1337 : vector<8x512xf32>
      %1339 = vector.extract_strided_slice %528 {offsets = [0, 34], sizes = [8, 1], strides = [1, 1]} : vector<8x64xf32> to vector<8x1xf32>
      %1340 = vector.broadcast %1339 : vector<8x1xf32> to vector<8x512xf32>
      %1341 = arith.subf %1340, %1066 : vector<8x512xf32>
      %1342 = arith.mulf %1341, %1341 : vector<8x512xf32>
      %cst_180 = arith.constant 0.000000e+00 : f32
      %1343 = vector.broadcast %cst_180 : f32 to vector<8x512xf32>
      %1344 = arith.subf %1343, %1342 : vector<8x512xf32>
      %1345 = math.exp %1344 : vector<8x512xf32>
      %1346 = arith.addf %1338, %1345 : vector<8x512xf32>
      %1347 = vector.extract_strided_slice %528 {offsets = [0, 35], sizes = [8, 1], strides = [1, 1]} : vector<8x64xf32> to vector<8x1xf32>
      %1348 = vector.broadcast %1347 : vector<8x1xf32> to vector<8x512xf32>
      %1349 = arith.subf %1348, %1066 : vector<8x512xf32>
      %1350 = arith.mulf %1349, %1349 : vector<8x512xf32>
      %cst_181 = arith.constant 0.000000e+00 : f32
      %1351 = vector.broadcast %cst_181 : f32 to vector<8x512xf32>
      %1352 = arith.subf %1351, %1350 : vector<8x512xf32>
      %1353 = math.exp %1352 : vector<8x512xf32>
      %1354 = arith.addf %1346, %1353 : vector<8x512xf32>
      %1355 = vector.extract_strided_slice %528 {offsets = [0, 36], sizes = [8, 1], strides = [1, 1]} : vector<8x64xf32> to vector<8x1xf32>
      %1356 = vector.broadcast %1355 : vector<8x1xf32> to vector<8x512xf32>
      %1357 = arith.subf %1356, %1066 : vector<8x512xf32>
      %1358 = arith.mulf %1357, %1357 : vector<8x512xf32>
      %cst_182 = arith.constant 0.000000e+00 : f32
      %1359 = vector.broadcast %cst_182 : f32 to vector<8x512xf32>
      %1360 = arith.subf %1359, %1358 : vector<8x512xf32>
      %1361 = math.exp %1360 : vector<8x512xf32>
      %1362 = arith.addf %1354, %1361 : vector<8x512xf32>
      %1363 = vector.extract_strided_slice %528 {offsets = [0, 37], sizes = [8, 1], strides = [1, 1]} : vector<8x64xf32> to vector<8x1xf32>
      %1364 = vector.broadcast %1363 : vector<8x1xf32> to vector<8x512xf32>
      %1365 = arith.subf %1364, %1066 : vector<8x512xf32>
      %1366 = arith.mulf %1365, %1365 : vector<8x512xf32>
      %cst_183 = arith.constant 0.000000e+00 : f32
      %1367 = vector.broadcast %cst_183 : f32 to vector<8x512xf32>
      %1368 = arith.subf %1367, %1366 : vector<8x512xf32>
      %1369 = math.exp %1368 : vector<8x512xf32>
      %1370 = arith.addf %1362, %1369 : vector<8x512xf32>
      %1371 = vector.extract_strided_slice %528 {offsets = [0, 38], sizes = [8, 1], strides = [1, 1]} : vector<8x64xf32> to vector<8x1xf32>
      %1372 = vector.broadcast %1371 : vector<8x1xf32> to vector<8x512xf32>
      %1373 = arith.subf %1372, %1066 : vector<8x512xf32>
      %1374 = arith.mulf %1373, %1373 : vector<8x512xf32>
      %cst_184 = arith.constant 0.000000e+00 : f32
      %1375 = vector.broadcast %cst_184 : f32 to vector<8x512xf32>
      %1376 = arith.subf %1375, %1374 : vector<8x512xf32>
      %1377 = math.exp %1376 : vector<8x512xf32>
      %1378 = arith.addf %1370, %1377 : vector<8x512xf32>
      %1379 = vector.extract_strided_slice %528 {offsets = [0, 39], sizes = [8, 1], strides = [1, 1]} : vector<8x64xf32> to vector<8x1xf32>
      %1380 = vector.broadcast %1379 : vector<8x1xf32> to vector<8x512xf32>
      %1381 = arith.subf %1380, %1066 : vector<8x512xf32>
      %1382 = arith.mulf %1381, %1381 : vector<8x512xf32>
      %cst_185 = arith.constant 0.000000e+00 : f32
      %1383 = vector.broadcast %cst_185 : f32 to vector<8x512xf32>
      %1384 = arith.subf %1383, %1382 : vector<8x512xf32>
      %1385 = math.exp %1384 : vector<8x512xf32>
      %1386 = arith.addf %1378, %1385 : vector<8x512xf32>
      %1387 = vector.extract_strided_slice %528 {offsets = [0, 40], sizes = [8, 1], strides = [1, 1]} : vector<8x64xf32> to vector<8x1xf32>
      %1388 = vector.broadcast %1387 : vector<8x1xf32> to vector<8x512xf32>
      %1389 = arith.subf %1388, %1066 : vector<8x512xf32>
      %1390 = arith.mulf %1389, %1389 : vector<8x512xf32>
      %cst_186 = arith.constant 0.000000e+00 : f32
      %1391 = vector.broadcast %cst_186 : f32 to vector<8x512xf32>
      %1392 = arith.subf %1391, %1390 : vector<8x512xf32>
      %1393 = math.exp %1392 : vector<8x512xf32>
      %1394 = arith.addf %1386, %1393 : vector<8x512xf32>
      %1395 = vector.extract_strided_slice %528 {offsets = [0, 41], sizes = [8, 1], strides = [1, 1]} : vector<8x64xf32> to vector<8x1xf32>
      %1396 = vector.broadcast %1395 : vector<8x1xf32> to vector<8x512xf32>
      %1397 = arith.subf %1396, %1066 : vector<8x512xf32>
      %1398 = arith.mulf %1397, %1397 : vector<8x512xf32>
      %cst_187 = arith.constant 0.000000e+00 : f32
      %1399 = vector.broadcast %cst_187 : f32 to vector<8x512xf32>
      %1400 = arith.subf %1399, %1398 : vector<8x512xf32>
      %1401 = math.exp %1400 : vector<8x512xf32>
      %1402 = arith.addf %1394, %1401 : vector<8x512xf32>
      %1403 = vector.extract_strided_slice %528 {offsets = [0, 42], sizes = [8, 1], strides = [1, 1]} : vector<8x64xf32> to vector<8x1xf32>
      %1404 = vector.broadcast %1403 : vector<8x1xf32> to vector<8x512xf32>
      %1405 = arith.subf %1404, %1066 : vector<8x512xf32>
      %1406 = arith.mulf %1405, %1405 : vector<8x512xf32>
      %cst_188 = arith.constant 0.000000e+00 : f32
      %1407 = vector.broadcast %cst_188 : f32 to vector<8x512xf32>
      %1408 = arith.subf %1407, %1406 : vector<8x512xf32>
      %1409 = math.exp %1408 : vector<8x512xf32>
      %1410 = arith.addf %1402, %1409 : vector<8x512xf32>
      %1411 = vector.extract_strided_slice %528 {offsets = [0, 43], sizes = [8, 1], strides = [1, 1]} : vector<8x64xf32> to vector<8x1xf32>
      %1412 = vector.broadcast %1411 : vector<8x1xf32> to vector<8x512xf32>
      %1413 = arith.subf %1412, %1066 : vector<8x512xf32>
      %1414 = arith.mulf %1413, %1413 : vector<8x512xf32>
      %cst_189 = arith.constant 0.000000e+00 : f32
      %1415 = vector.broadcast %cst_189 : f32 to vector<8x512xf32>
      %1416 = arith.subf %1415, %1414 : vector<8x512xf32>
      %1417 = math.exp %1416 : vector<8x512xf32>
      %1418 = arith.addf %1410, %1417 : vector<8x512xf32>
      %1419 = vector.extract_strided_slice %528 {offsets = [0, 44], sizes = [8, 1], strides = [1, 1]} : vector<8x64xf32> to vector<8x1xf32>
      %1420 = vector.broadcast %1419 : vector<8x1xf32> to vector<8x512xf32>
      %1421 = arith.subf %1420, %1066 : vector<8x512xf32>
      %1422 = arith.mulf %1421, %1421 : vector<8x512xf32>
      %cst_190 = arith.constant 0.000000e+00 : f32
      %1423 = vector.broadcast %cst_190 : f32 to vector<8x512xf32>
      %1424 = arith.subf %1423, %1422 : vector<8x512xf32>
      %1425 = math.exp %1424 : vector<8x512xf32>
      %1426 = arith.addf %1418, %1425 : vector<8x512xf32>
      %1427 = vector.extract_strided_slice %528 {offsets = [0, 45], sizes = [8, 1], strides = [1, 1]} : vector<8x64xf32> to vector<8x1xf32>
      %1428 = vector.broadcast %1427 : vector<8x1xf32> to vector<8x512xf32>
      %1429 = arith.subf %1428, %1066 : vector<8x512xf32>
      %1430 = arith.mulf %1429, %1429 : vector<8x512xf32>
      %cst_191 = arith.constant 0.000000e+00 : f32
      %1431 = vector.broadcast %cst_191 : f32 to vector<8x512xf32>
      %1432 = arith.subf %1431, %1430 : vector<8x512xf32>
      %1433 = math.exp %1432 : vector<8x512xf32>
      %1434 = arith.addf %1426, %1433 : vector<8x512xf32>
      %1435 = vector.extract_strided_slice %528 {offsets = [0, 46], sizes = [8, 1], strides = [1, 1]} : vector<8x64xf32> to vector<8x1xf32>
      %1436 = vector.broadcast %1435 : vector<8x1xf32> to vector<8x512xf32>
      %1437 = arith.subf %1436, %1066 : vector<8x512xf32>
      %1438 = arith.mulf %1437, %1437 : vector<8x512xf32>
      %cst_192 = arith.constant 0.000000e+00 : f32
      %1439 = vector.broadcast %cst_192 : f32 to vector<8x512xf32>
      %1440 = arith.subf %1439, %1438 : vector<8x512xf32>
      %1441 = math.exp %1440 : vector<8x512xf32>
      %1442 = arith.addf %1434, %1441 : vector<8x512xf32>
      %1443 = vector.extract_strided_slice %528 {offsets = [0, 47], sizes = [8, 1], strides = [1, 1]} : vector<8x64xf32> to vector<8x1xf32>
      %1444 = vector.broadcast %1443 : vector<8x1xf32> to vector<8x512xf32>
      %1445 = arith.subf %1444, %1066 : vector<8x512xf32>
      %1446 = arith.mulf %1445, %1445 : vector<8x512xf32>
      %cst_193 = arith.constant 0.000000e+00 : f32
      %1447 = vector.broadcast %cst_193 : f32 to vector<8x512xf32>
      %1448 = arith.subf %1447, %1446 : vector<8x512xf32>
      %1449 = math.exp %1448 : vector<8x512xf32>
      %1450 = arith.addf %1442, %1449 : vector<8x512xf32>
      %1451 = vector.extract_strided_slice %528 {offsets = [0, 48], sizes = [8, 1], strides = [1, 1]} : vector<8x64xf32> to vector<8x1xf32>
      %1452 = vector.broadcast %1451 : vector<8x1xf32> to vector<8x512xf32>
      %1453 = arith.subf %1452, %1066 : vector<8x512xf32>
      %1454 = arith.mulf %1453, %1453 : vector<8x512xf32>
      %cst_194 = arith.constant 0.000000e+00 : f32
      %1455 = vector.broadcast %cst_194 : f32 to vector<8x512xf32>
      %1456 = arith.subf %1455, %1454 : vector<8x512xf32>
      %1457 = math.exp %1456 : vector<8x512xf32>
      %1458 = arith.addf %1450, %1457 : vector<8x512xf32>
      %1459 = vector.extract_strided_slice %528 {offsets = [0, 49], sizes = [8, 1], strides = [1, 1]} : vector<8x64xf32> to vector<8x1xf32>
      %1460 = vector.broadcast %1459 : vector<8x1xf32> to vector<8x512xf32>
      %1461 = arith.subf %1460, %1066 : vector<8x512xf32>
      %1462 = arith.mulf %1461, %1461 : vector<8x512xf32>
      %cst_195 = arith.constant 0.000000e+00 : f32
      %1463 = vector.broadcast %cst_195 : f32 to vector<8x512xf32>
      %1464 = arith.subf %1463, %1462 : vector<8x512xf32>
      %1465 = math.exp %1464 : vector<8x512xf32>
      %1466 = arith.addf %1458, %1465 : vector<8x512xf32>
      %1467 = vector.extract_strided_slice %528 {offsets = [0, 50], sizes = [8, 1], strides = [1, 1]} : vector<8x64xf32> to vector<8x1xf32>
      %1468 = vector.broadcast %1467 : vector<8x1xf32> to vector<8x512xf32>
      %1469 = arith.subf %1468, %1066 : vector<8x512xf32>
      %1470 = arith.mulf %1469, %1469 : vector<8x512xf32>
      %cst_196 = arith.constant 0.000000e+00 : f32
      %1471 = vector.broadcast %cst_196 : f32 to vector<8x512xf32>
      %1472 = arith.subf %1471, %1470 : vector<8x512xf32>
      %1473 = math.exp %1472 : vector<8x512xf32>
      %1474 = arith.addf %1466, %1473 : vector<8x512xf32>
      %1475 = vector.extract_strided_slice %528 {offsets = [0, 51], sizes = [8, 1], strides = [1, 1]} : vector<8x64xf32> to vector<8x1xf32>
      %1476 = vector.broadcast %1475 : vector<8x1xf32> to vector<8x512xf32>
      %1477 = arith.subf %1476, %1066 : vector<8x512xf32>
      %1478 = arith.mulf %1477, %1477 : vector<8x512xf32>
      %cst_197 = arith.constant 0.000000e+00 : f32
      %1479 = vector.broadcast %cst_197 : f32 to vector<8x512xf32>
      %1480 = arith.subf %1479, %1478 : vector<8x512xf32>
      %1481 = math.exp %1480 : vector<8x512xf32>
      %1482 = arith.addf %1474, %1481 : vector<8x512xf32>
      %1483 = vector.extract_strided_slice %528 {offsets = [0, 52], sizes = [8, 1], strides = [1, 1]} : vector<8x64xf32> to vector<8x1xf32>
      %1484 = vector.broadcast %1483 : vector<8x1xf32> to vector<8x512xf32>
      %1485 = arith.subf %1484, %1066 : vector<8x512xf32>
      %1486 = arith.mulf %1485, %1485 : vector<8x512xf32>
      %cst_198 = arith.constant 0.000000e+00 : f32
      %1487 = vector.broadcast %cst_198 : f32 to vector<8x512xf32>
      %1488 = arith.subf %1487, %1486 : vector<8x512xf32>
      %1489 = math.exp %1488 : vector<8x512xf32>
      %1490 = arith.addf %1482, %1489 : vector<8x512xf32>
      %1491 = vector.extract_strided_slice %528 {offsets = [0, 53], sizes = [8, 1], strides = [1, 1]} : vector<8x64xf32> to vector<8x1xf32>
      %1492 = vector.broadcast %1491 : vector<8x1xf32> to vector<8x512xf32>
      %1493 = arith.subf %1492, %1066 : vector<8x512xf32>
      %1494 = arith.mulf %1493, %1493 : vector<8x512xf32>
      %cst_199 = arith.constant 0.000000e+00 : f32
      %1495 = vector.broadcast %cst_199 : f32 to vector<8x512xf32>
      %1496 = arith.subf %1495, %1494 : vector<8x512xf32>
      %1497 = math.exp %1496 : vector<8x512xf32>
      %1498 = arith.addf %1490, %1497 : vector<8x512xf32>
      %1499 = vector.extract_strided_slice %528 {offsets = [0, 54], sizes = [8, 1], strides = [1, 1]} : vector<8x64xf32> to vector<8x1xf32>
      %1500 = vector.broadcast %1499 : vector<8x1xf32> to vector<8x512xf32>
      %1501 = arith.subf %1500, %1066 : vector<8x512xf32>
      %1502 = arith.mulf %1501, %1501 : vector<8x512xf32>
      %cst_200 = arith.constant 0.000000e+00 : f32
      %1503 = vector.broadcast %cst_200 : f32 to vector<8x512xf32>
      %1504 = arith.subf %1503, %1502 : vector<8x512xf32>
      %1505 = math.exp %1504 : vector<8x512xf32>
      %1506 = arith.addf %1498, %1505 : vector<8x512xf32>
      %1507 = vector.extract_strided_slice %528 {offsets = [0, 55], sizes = [8, 1], strides = [1, 1]} : vector<8x64xf32> to vector<8x1xf32>
      %1508 = vector.broadcast %1507 : vector<8x1xf32> to vector<8x512xf32>
      %1509 = arith.subf %1508, %1066 : vector<8x512xf32>
      %1510 = arith.mulf %1509, %1509 : vector<8x512xf32>
      %cst_201 = arith.constant 0.000000e+00 : f32
      %1511 = vector.broadcast %cst_201 : f32 to vector<8x512xf32>
      %1512 = arith.subf %1511, %1510 : vector<8x512xf32>
      %1513 = math.exp %1512 : vector<8x512xf32>
      %1514 = arith.addf %1506, %1513 : vector<8x512xf32>
      %1515 = vector.extract_strided_slice %528 {offsets = [0, 56], sizes = [8, 1], strides = [1, 1]} : vector<8x64xf32> to vector<8x1xf32>
      %1516 = vector.broadcast %1515 : vector<8x1xf32> to vector<8x512xf32>
      %1517 = arith.subf %1516, %1066 : vector<8x512xf32>
      %1518 = arith.mulf %1517, %1517 : vector<8x512xf32>
      %cst_202 = arith.constant 0.000000e+00 : f32
      %1519 = vector.broadcast %cst_202 : f32 to vector<8x512xf32>
      %1520 = arith.subf %1519, %1518 : vector<8x512xf32>
      %1521 = math.exp %1520 : vector<8x512xf32>
      %1522 = arith.addf %1514, %1521 : vector<8x512xf32>
      %1523 = vector.extract_strided_slice %528 {offsets = [0, 57], sizes = [8, 1], strides = [1, 1]} : vector<8x64xf32> to vector<8x1xf32>
      %1524 = vector.broadcast %1523 : vector<8x1xf32> to vector<8x512xf32>
      %1525 = arith.subf %1524, %1066 : vector<8x512xf32>
      %1526 = arith.mulf %1525, %1525 : vector<8x512xf32>
      %cst_203 = arith.constant 0.000000e+00 : f32
      %1527 = vector.broadcast %cst_203 : f32 to vector<8x512xf32>
      %1528 = arith.subf %1527, %1526 : vector<8x512xf32>
      %1529 = math.exp %1528 : vector<8x512xf32>
      %1530 = arith.addf %1522, %1529 : vector<8x512xf32>
      %1531 = vector.extract_strided_slice %528 {offsets = [0, 58], sizes = [8, 1], strides = [1, 1]} : vector<8x64xf32> to vector<8x1xf32>
      %1532 = vector.broadcast %1531 : vector<8x1xf32> to vector<8x512xf32>
      %1533 = arith.subf %1532, %1066 : vector<8x512xf32>
      %1534 = arith.mulf %1533, %1533 : vector<8x512xf32>
      %cst_204 = arith.constant 0.000000e+00 : f32
      %1535 = vector.broadcast %cst_204 : f32 to vector<8x512xf32>
      %1536 = arith.subf %1535, %1534 : vector<8x512xf32>
      %1537 = math.exp %1536 : vector<8x512xf32>
      %1538 = arith.addf %1530, %1537 : vector<8x512xf32>
      %1539 = vector.extract_strided_slice %528 {offsets = [0, 59], sizes = [8, 1], strides = [1, 1]} : vector<8x64xf32> to vector<8x1xf32>
      %1540 = vector.broadcast %1539 : vector<8x1xf32> to vector<8x512xf32>
      %1541 = arith.subf %1540, %1066 : vector<8x512xf32>
      %1542 = arith.mulf %1541, %1541 : vector<8x512xf32>
      %cst_205 = arith.constant 0.000000e+00 : f32
      %1543 = vector.broadcast %cst_205 : f32 to vector<8x512xf32>
      %1544 = arith.subf %1543, %1542 : vector<8x512xf32>
      %1545 = math.exp %1544 : vector<8x512xf32>
      %1546 = arith.addf %1538, %1545 : vector<8x512xf32>
      %1547 = vector.extract_strided_slice %528 {offsets = [0, 60], sizes = [8, 1], strides = [1, 1]} : vector<8x64xf32> to vector<8x1xf32>
      %1548 = vector.broadcast %1547 : vector<8x1xf32> to vector<8x512xf32>
      %1549 = arith.subf %1548, %1066 : vector<8x512xf32>
      %1550 = arith.mulf %1549, %1549 : vector<8x512xf32>
      %cst_206 = arith.constant 0.000000e+00 : f32
      %1551 = vector.broadcast %cst_206 : f32 to vector<8x512xf32>
      %1552 = arith.subf %1551, %1550 : vector<8x512xf32>
      %1553 = math.exp %1552 : vector<8x512xf32>
      %1554 = arith.addf %1546, %1553 : vector<8x512xf32>
      %1555 = vector.extract_strided_slice %528 {offsets = [0, 61], sizes = [8, 1], strides = [1, 1]} : vector<8x64xf32> to vector<8x1xf32>
      %1556 = vector.broadcast %1555 : vector<8x1xf32> to vector<8x512xf32>
      %1557 = arith.subf %1556, %1066 : vector<8x512xf32>
      %1558 = arith.mulf %1557, %1557 : vector<8x512xf32>
      %cst_207 = arith.constant 0.000000e+00 : f32
      %1559 = vector.broadcast %cst_207 : f32 to vector<8x512xf32>
      %1560 = arith.subf %1559, %1558 : vector<8x512xf32>
      %1561 = math.exp %1560 : vector<8x512xf32>
      %1562 = arith.addf %1554, %1561 : vector<8x512xf32>
      %1563 = vector.extract_strided_slice %528 {offsets = [0, 62], sizes = [8, 1], strides = [1, 1]} : vector<8x64xf32> to vector<8x1xf32>
      %1564 = vector.broadcast %1563 : vector<8x1xf32> to vector<8x512xf32>
      %1565 = arith.subf %1564, %1066 : vector<8x512xf32>
      %1566 = arith.mulf %1565, %1565 : vector<8x512xf32>
      %cst_208 = arith.constant 0.000000e+00 : f32
      %1567 = vector.broadcast %cst_208 : f32 to vector<8x512xf32>
      %1568 = arith.subf %1567, %1566 : vector<8x512xf32>
      %1569 = math.exp %1568 : vector<8x512xf32>
      %1570 = arith.addf %1562, %1569 : vector<8x512xf32>
      %1571 = vector.extract_strided_slice %528 {offsets = [0, 63], sizes = [8, 1], strides = [1, 1]} : vector<8x64xf32> to vector<8x1xf32>
      %1572 = vector.broadcast %1571 : vector<8x1xf32> to vector<8x512xf32>
      %1573 = arith.subf %1572, %1066 : vector<8x512xf32>
      %1574 = arith.mulf %1573, %1573 : vector<8x512xf32>
      %cst_209 = arith.constant 0.000000e+00 : f32
      %1575 = vector.broadcast %cst_209 : f32 to vector<8x512xf32>
      %1576 = arith.subf %1575, %1574 : vector<8x512xf32>
      %1577 = math.exp %1576 : vector<8x512xf32>
      %1578 = arith.addf %1570, %1577 : vector<8x512xf32>
      scf.yield %1578 : vector<8x512xf32>
    }
    %534 = arith.index_cast %0 : i32 to index
    %c0_76 = arith.constant 0 : index
    %535 = vector.load %arg3[%534, %c0_76] : memref<4x512xf32, #tpu.memory_space<vmem>>, vector<1x512xf32>
    %536 = vector.shape_cast %535 : vector<1x512xf32> to vector<1x512xf32>
    %537 = vector.broadcast %536 : vector<1x512xf32> to vector<8x512xf32>
    %538 = vector.extract_strided_slice %528 {offsets = [0, 0], sizes = [8, 1], strides = [1, 1]} : vector<8x64xf32> to vector<8x1xf32>
    %539 = vector.broadcast %538 : vector<8x1xf32> to vector<8x512xf32>
    %540 = arith.subf %539, %537 : vector<8x512xf32>
    %541 = arith.mulf %540, %540 : vector<8x512xf32>
    %cst_77 = arith.constant 0.000000e+00 : f32
    %542 = vector.broadcast %cst_77 : f32 to vector<8x512xf32>
    %543 = arith.subf %542, %541 : vector<8x512xf32>
    %544 = math.exp %543 : vector<8x512xf32>
    %545 = arith.addf %529, %544 : vector<8x512xf32>
    %546 = vector.extract_strided_slice %528 {offsets = [0, 1], sizes = [8, 1], strides = [1, 1]} : vector<8x64xf32> to vector<8x1xf32>
    %547 = vector.broadcast %546 : vector<8x1xf32> to vector<8x512xf32>
    %548 = arith.subf %547, %537 : vector<8x512xf32>
    %549 = arith.mulf %548, %548 : vector<8x512xf32>
    %cst_78 = arith.constant 0.000000e+00 : f32
    %550 = vector.broadcast %cst_78 : f32 to vector<8x512xf32>
    %551 = arith.subf %550, %549 : vector<8x512xf32>
    %552 = math.exp %551 : vector<8x512xf32>
    %553 = arith.addf %545, %552 : vector<8x512xf32>
    %554 = vector.extract_strided_slice %528 {offsets = [0, 2], sizes = [8, 1], strides = [1, 1]} : vector<8x64xf32> to vector<8x1xf32>
    %555 = vector.broadcast %554 : vector<8x1xf32> to vector<8x512xf32>
    %556 = arith.subf %555, %537 : vector<8x512xf32>
    %557 = arith.mulf %556, %556 : vector<8x512xf32>
    %cst_79 = arith.constant 0.000000e+00 : f32
    %558 = vector.broadcast %cst_79 : f32 to vector<8x512xf32>
    %559 = arith.subf %558, %557 : vector<8x512xf32>
    %560 = math.exp %559 : vector<8x512xf32>
    %561 = arith.addf %553, %560 : vector<8x512xf32>
    %562 = vector.extract_strided_slice %528 {offsets = [0, 3], sizes = [8, 1], strides = [1, 1]} : vector<8x64xf32> to vector<8x1xf32>
    %563 = vector.broadcast %562 : vector<8x1xf32> to vector<8x512xf32>
    %564 = arith.subf %563, %537 : vector<8x512xf32>
    %565 = arith.mulf %564, %564 : vector<8x512xf32>
    %cst_80 = arith.constant 0.000000e+00 : f32
    %566 = vector.broadcast %cst_80 : f32 to vector<8x512xf32>
    %567 = arith.subf %566, %565 : vector<8x512xf32>
    %568 = math.exp %567 : vector<8x512xf32>
    %569 = arith.addf %561, %568 : vector<8x512xf32>
    %570 = vector.extract_strided_slice %528 {offsets = [0, 4], sizes = [8, 1], strides = [1, 1]} : vector<8x64xf32> to vector<8x1xf32>
    %571 = vector.broadcast %570 : vector<8x1xf32> to vector<8x512xf32>
    %572 = arith.subf %571, %537 : vector<8x512xf32>
    %573 = arith.mulf %572, %572 : vector<8x512xf32>
    %cst_81 = arith.constant 0.000000e+00 : f32
    %574 = vector.broadcast %cst_81 : f32 to vector<8x512xf32>
    %575 = arith.subf %574, %573 : vector<8x512xf32>
    %576 = math.exp %575 : vector<8x512xf32>
    %577 = arith.addf %569, %576 : vector<8x512xf32>
    %578 = vector.extract_strided_slice %528 {offsets = [0, 5], sizes = [8, 1], strides = [1, 1]} : vector<8x64xf32> to vector<8x1xf32>
    %579 = vector.broadcast %578 : vector<8x1xf32> to vector<8x512xf32>
    %580 = arith.subf %579, %537 : vector<8x512xf32>
    %581 = arith.mulf %580, %580 : vector<8x512xf32>
    %cst_82 = arith.constant 0.000000e+00 : f32
    %582 = vector.broadcast %cst_82 : f32 to vector<8x512xf32>
    %583 = arith.subf %582, %581 : vector<8x512xf32>
    %584 = math.exp %583 : vector<8x512xf32>
    %585 = arith.addf %577, %584 : vector<8x512xf32>
    %586 = vector.extract_strided_slice %528 {offsets = [0, 6], sizes = [8, 1], strides = [1, 1]} : vector<8x64xf32> to vector<8x1xf32>
    %587 = vector.broadcast %586 : vector<8x1xf32> to vector<8x512xf32>
    %588 = arith.subf %587, %537 : vector<8x512xf32>
    %589 = arith.mulf %588, %588 : vector<8x512xf32>
    %cst_83 = arith.constant 0.000000e+00 : f32
    %590 = vector.broadcast %cst_83 : f32 to vector<8x512xf32>
    %591 = arith.subf %590, %589 : vector<8x512xf32>
    %592 = math.exp %591 : vector<8x512xf32>
    %593 = arith.addf %585, %592 : vector<8x512xf32>
    %594 = vector.extract_strided_slice %528 {offsets = [0, 7], sizes = [8, 1], strides = [1, 1]} : vector<8x64xf32> to vector<8x1xf32>
    %595 = vector.broadcast %594 : vector<8x1xf32> to vector<8x512xf32>
    %596 = arith.subf %595, %537 : vector<8x512xf32>
    %597 = arith.mulf %596, %596 : vector<8x512xf32>
    %cst_84 = arith.constant 0.000000e+00 : f32
    %598 = vector.broadcast %cst_84 : f32 to vector<8x512xf32>
    %599 = arith.subf %598, %597 : vector<8x512xf32>
    %600 = math.exp %599 : vector<8x512xf32>
    %601 = arith.addf %593, %600 : vector<8x512xf32>
    %602 = vector.extract_strided_slice %528 {offsets = [0, 8], sizes = [8, 1], strides = [1, 1]} : vector<8x64xf32> to vector<8x1xf32>
    %603 = vector.broadcast %602 : vector<8x1xf32> to vector<8x512xf32>
    %604 = arith.subf %603, %537 : vector<8x512xf32>
    %605 = arith.mulf %604, %604 : vector<8x512xf32>
    %cst_85 = arith.constant 0.000000e+00 : f32
    %606 = vector.broadcast %cst_85 : f32 to vector<8x512xf32>
    %607 = arith.subf %606, %605 : vector<8x512xf32>
    %608 = math.exp %607 : vector<8x512xf32>
    %609 = arith.addf %601, %608 : vector<8x512xf32>
    %610 = vector.extract_strided_slice %528 {offsets = [0, 9], sizes = [8, 1], strides = [1, 1]} : vector<8x64xf32> to vector<8x1xf32>
    %611 = vector.broadcast %610 : vector<8x1xf32> to vector<8x512xf32>
    %612 = arith.subf %611, %537 : vector<8x512xf32>
    %613 = arith.mulf %612, %612 : vector<8x512xf32>
    %cst_86 = arith.constant 0.000000e+00 : f32
    %614 = vector.broadcast %cst_86 : f32 to vector<8x512xf32>
    %615 = arith.subf %614, %613 : vector<8x512xf32>
    %616 = math.exp %615 : vector<8x512xf32>
    %617 = arith.addf %609, %616 : vector<8x512xf32>
    %618 = vector.extract_strided_slice %528 {offsets = [0, 10], sizes = [8, 1], strides = [1, 1]} : vector<8x64xf32> to vector<8x1xf32>
    %619 = vector.broadcast %618 : vector<8x1xf32> to vector<8x512xf32>
    %620 = arith.subf %619, %537 : vector<8x512xf32>
    %621 = arith.mulf %620, %620 : vector<8x512xf32>
    %cst_87 = arith.constant 0.000000e+00 : f32
    %622 = vector.broadcast %cst_87 : f32 to vector<8x512xf32>
    %623 = arith.subf %622, %621 : vector<8x512xf32>
    %624 = math.exp %623 : vector<8x512xf32>
    %625 = arith.addf %617, %624 : vector<8x512xf32>
    %626 = vector.extract_strided_slice %528 {offsets = [0, 11], sizes = [8, 1], strides = [1, 1]} : vector<8x64xf32> to vector<8x1xf32>
    %627 = vector.broadcast %626 : vector<8x1xf32> to vector<8x512xf32>
    %628 = arith.subf %627, %537 : vector<8x512xf32>
    %629 = arith.mulf %628, %628 : vector<8x512xf32>
    %cst_88 = arith.constant 0.000000e+00 : f32
    %630 = vector.broadcast %cst_88 : f32 to vector<8x512xf32>
    %631 = arith.subf %630, %629 : vector<8x512xf32>
    %632 = math.exp %631 : vector<8x512xf32>
    %633 = arith.addf %625, %632 : vector<8x512xf32>
    %634 = vector.extract_strided_slice %528 {offsets = [0, 12], sizes = [8, 1], strides = [1, 1]} : vector<8x64xf32> to vector<8x1xf32>
    %635 = vector.broadcast %634 : vector<8x1xf32> to vector<8x512xf32>
    %636 = arith.subf %635, %537 : vector<8x512xf32>
    %637 = arith.mulf %636, %636 : vector<8x512xf32>
    %cst_89 = arith.constant 0.000000e+00 : f32
    %638 = vector.broadcast %cst_89 : f32 to vector<8x512xf32>
    %639 = arith.subf %638, %637 : vector<8x512xf32>
    %640 = math.exp %639 : vector<8x512xf32>
    %641 = arith.addf %633, %640 : vector<8x512xf32>
    %642 = vector.extract_strided_slice %528 {offsets = [0, 13], sizes = [8, 1], strides = [1, 1]} : vector<8x64xf32> to vector<8x1xf32>
    %643 = vector.broadcast %642 : vector<8x1xf32> to vector<8x512xf32>
    %644 = arith.subf %643, %537 : vector<8x512xf32>
    %645 = arith.mulf %644, %644 : vector<8x512xf32>
    %cst_90 = arith.constant 0.000000e+00 : f32
    %646 = vector.broadcast %cst_90 : f32 to vector<8x512xf32>
    %647 = arith.subf %646, %645 : vector<8x512xf32>
    %648 = math.exp %647 : vector<8x512xf32>
    %649 = arith.addf %641, %648 : vector<8x512xf32>
    %650 = vector.extract_strided_slice %528 {offsets = [0, 14], sizes = [8, 1], strides = [1, 1]} : vector<8x64xf32> to vector<8x1xf32>
    %651 = vector.broadcast %650 : vector<8x1xf32> to vector<8x512xf32>
    %652 = arith.subf %651, %537 : vector<8x512xf32>
    %653 = arith.mulf %652, %652 : vector<8x512xf32>
    %cst_91 = arith.constant 0.000000e+00 : f32
    %654 = vector.broadcast %cst_91 : f32 to vector<8x512xf32>
    %655 = arith.subf %654, %653 : vector<8x512xf32>
    %656 = math.exp %655 : vector<8x512xf32>
    %657 = arith.addf %649, %656 : vector<8x512xf32>
    %658 = vector.extract_strided_slice %528 {offsets = [0, 15], sizes = [8, 1], strides = [1, 1]} : vector<8x64xf32> to vector<8x1xf32>
    %659 = vector.broadcast %658 : vector<8x1xf32> to vector<8x512xf32>
    %660 = arith.subf %659, %537 : vector<8x512xf32>
    %661 = arith.mulf %660, %660 : vector<8x512xf32>
    %cst_92 = arith.constant 0.000000e+00 : f32
    %662 = vector.broadcast %cst_92 : f32 to vector<8x512xf32>
    %663 = arith.subf %662, %661 : vector<8x512xf32>
    %664 = math.exp %663 : vector<8x512xf32>
    %665 = arith.addf %657, %664 : vector<8x512xf32>
    %666 = vector.extract_strided_slice %528 {offsets = [0, 16], sizes = [8, 1], strides = [1, 1]} : vector<8x64xf32> to vector<8x1xf32>
    %667 = vector.broadcast %666 : vector<8x1xf32> to vector<8x512xf32>
    %668 = arith.subf %667, %537 : vector<8x512xf32>
    %669 = arith.mulf %668, %668 : vector<8x512xf32>
    %cst_93 = arith.constant 0.000000e+00 : f32
    %670 = vector.broadcast %cst_93 : f32 to vector<8x512xf32>
    %671 = arith.subf %670, %669 : vector<8x512xf32>
    %672 = math.exp %671 : vector<8x512xf32>
    %673 = arith.addf %665, %672 : vector<8x512xf32>
    %674 = vector.extract_strided_slice %528 {offsets = [0, 17], sizes = [8, 1], strides = [1, 1]} : vector<8x64xf32> to vector<8x1xf32>
    %675 = vector.broadcast %674 : vector<8x1xf32> to vector<8x512xf32>
    %676 = arith.subf %675, %537 : vector<8x512xf32>
    %677 = arith.mulf %676, %676 : vector<8x512xf32>
    %cst_94 = arith.constant 0.000000e+00 : f32
    %678 = vector.broadcast %cst_94 : f32 to vector<8x512xf32>
    %679 = arith.subf %678, %677 : vector<8x512xf32>
    %680 = math.exp %679 : vector<8x512xf32>
    %681 = arith.addf %673, %680 : vector<8x512xf32>
    %682 = vector.extract_strided_slice %528 {offsets = [0, 18], sizes = [8, 1], strides = [1, 1]} : vector<8x64xf32> to vector<8x1xf32>
    %683 = vector.broadcast %682 : vector<8x1xf32> to vector<8x512xf32>
    %684 = arith.subf %683, %537 : vector<8x512xf32>
    %685 = arith.mulf %684, %684 : vector<8x512xf32>
    %cst_95 = arith.constant 0.000000e+00 : f32
    %686 = vector.broadcast %cst_95 : f32 to vector<8x512xf32>
    %687 = arith.subf %686, %685 : vector<8x512xf32>
    %688 = math.exp %687 : vector<8x512xf32>
    %689 = arith.addf %681, %688 : vector<8x512xf32>
    %690 = vector.extract_strided_slice %528 {offsets = [0, 19], sizes = [8, 1], strides = [1, 1]} : vector<8x64xf32> to vector<8x1xf32>
    %691 = vector.broadcast %690 : vector<8x1xf32> to vector<8x512xf32>
    %692 = arith.subf %691, %537 : vector<8x512xf32>
    %693 = arith.mulf %692, %692 : vector<8x512xf32>
    %cst_96 = arith.constant 0.000000e+00 : f32
    %694 = vector.broadcast %cst_96 : f32 to vector<8x512xf32>
    %695 = arith.subf %694, %693 : vector<8x512xf32>
    %696 = math.exp %695 : vector<8x512xf32>
    %697 = arith.addf %689, %696 : vector<8x512xf32>
    %698 = vector.extract_strided_slice %528 {offsets = [0, 20], sizes = [8, 1], strides = [1, 1]} : vector<8x64xf32> to vector<8x1xf32>
    %699 = vector.broadcast %698 : vector<8x1xf32> to vector<8x512xf32>
    %700 = arith.subf %699, %537 : vector<8x512xf32>
    %701 = arith.mulf %700, %700 : vector<8x512xf32>
    %cst_97 = arith.constant 0.000000e+00 : f32
    %702 = vector.broadcast %cst_97 : f32 to vector<8x512xf32>
    %703 = arith.subf %702, %701 : vector<8x512xf32>
    %704 = math.exp %703 : vector<8x512xf32>
    %705 = arith.addf %697, %704 : vector<8x512xf32>
    %706 = vector.extract_strided_slice %528 {offsets = [0, 21], sizes = [8, 1], strides = [1, 1]} : vector<8x64xf32> to vector<8x1xf32>
    %707 = vector.broadcast %706 : vector<8x1xf32> to vector<8x512xf32>
    %708 = arith.subf %707, %537 : vector<8x512xf32>
    %709 = arith.mulf %708, %708 : vector<8x512xf32>
    %cst_98 = arith.constant 0.000000e+00 : f32
    %710 = vector.broadcast %cst_98 : f32 to vector<8x512xf32>
    %711 = arith.subf %710, %709 : vector<8x512xf32>
    %712 = math.exp %711 : vector<8x512xf32>
    %713 = arith.addf %705, %712 : vector<8x512xf32>
    %714 = vector.extract_strided_slice %528 {offsets = [0, 22], sizes = [8, 1], strides = [1, 1]} : vector<8x64xf32> to vector<8x1xf32>
    %715 = vector.broadcast %714 : vector<8x1xf32> to vector<8x512xf32>
    %716 = arith.subf %715, %537 : vector<8x512xf32>
    %717 = arith.mulf %716, %716 : vector<8x512xf32>
    %cst_99 = arith.constant 0.000000e+00 : f32
    %718 = vector.broadcast %cst_99 : f32 to vector<8x512xf32>
    %719 = arith.subf %718, %717 : vector<8x512xf32>
    %720 = math.exp %719 : vector<8x512xf32>
    %721 = arith.addf %713, %720 : vector<8x512xf32>
    %722 = vector.extract_strided_slice %528 {offsets = [0, 23], sizes = [8, 1], strides = [1, 1]} : vector<8x64xf32> to vector<8x1xf32>
    %723 = vector.broadcast %722 : vector<8x1xf32> to vector<8x512xf32>
    %724 = arith.subf %723, %537 : vector<8x512xf32>
    %725 = arith.mulf %724, %724 : vector<8x512xf32>
    %cst_100 = arith.constant 0.000000e+00 : f32
    %726 = vector.broadcast %cst_100 : f32 to vector<8x512xf32>
    %727 = arith.subf %726, %725 : vector<8x512xf32>
    %728 = math.exp %727 : vector<8x512xf32>
    %729 = arith.addf %721, %728 : vector<8x512xf32>
    %730 = vector.extract_strided_slice %528 {offsets = [0, 24], sizes = [8, 1], strides = [1, 1]} : vector<8x64xf32> to vector<8x1xf32>
    %731 = vector.broadcast %730 : vector<8x1xf32> to vector<8x512xf32>
    %732 = arith.subf %731, %537 : vector<8x512xf32>
    %733 = arith.mulf %732, %732 : vector<8x512xf32>
    %cst_101 = arith.constant 0.000000e+00 : f32
    %734 = vector.broadcast %cst_101 : f32 to vector<8x512xf32>
    %735 = arith.subf %734, %733 : vector<8x512xf32>
    %736 = math.exp %735 : vector<8x512xf32>
    %737 = arith.addf %729, %736 : vector<8x512xf32>
    %738 = vector.extract_strided_slice %528 {offsets = [0, 25], sizes = [8, 1], strides = [1, 1]} : vector<8x64xf32> to vector<8x1xf32>
    %739 = vector.broadcast %738 : vector<8x1xf32> to vector<8x512xf32>
    %740 = arith.subf %739, %537 : vector<8x512xf32>
    %741 = arith.mulf %740, %740 : vector<8x512xf32>
    %cst_102 = arith.constant 0.000000e+00 : f32
    %742 = vector.broadcast %cst_102 : f32 to vector<8x512xf32>
    %743 = arith.subf %742, %741 : vector<8x512xf32>
    %744 = math.exp %743 : vector<8x512xf32>
    %745 = arith.addf %737, %744 : vector<8x512xf32>
    %746 = vector.extract_strided_slice %528 {offsets = [0, 26], sizes = [8, 1], strides = [1, 1]} : vector<8x64xf32> to vector<8x1xf32>
    %747 = vector.broadcast %746 : vector<8x1xf32> to vector<8x512xf32>
    %748 = arith.subf %747, %537 : vector<8x512xf32>
    %749 = arith.mulf %748, %748 : vector<8x512xf32>
    %cst_103 = arith.constant 0.000000e+00 : f32
    %750 = vector.broadcast %cst_103 : f32 to vector<8x512xf32>
    %751 = arith.subf %750, %749 : vector<8x512xf32>
    %752 = math.exp %751 : vector<8x512xf32>
    %753 = arith.addf %745, %752 : vector<8x512xf32>
    %754 = vector.extract_strided_slice %528 {offsets = [0, 27], sizes = [8, 1], strides = [1, 1]} : vector<8x64xf32> to vector<8x1xf32>
    %755 = vector.broadcast %754 : vector<8x1xf32> to vector<8x512xf32>
    %756 = arith.subf %755, %537 : vector<8x512xf32>
    %757 = arith.mulf %756, %756 : vector<8x512xf32>
    %cst_104 = arith.constant 0.000000e+00 : f32
    %758 = vector.broadcast %cst_104 : f32 to vector<8x512xf32>
    %759 = arith.subf %758, %757 : vector<8x512xf32>
    %760 = math.exp %759 : vector<8x512xf32>
    %761 = arith.addf %753, %760 : vector<8x512xf32>
    %762 = vector.extract_strided_slice %528 {offsets = [0, 28], sizes = [8, 1], strides = [1, 1]} : vector<8x64xf32> to vector<8x1xf32>
    %763 = vector.broadcast %762 : vector<8x1xf32> to vector<8x512xf32>
    %764 = arith.subf %763, %537 : vector<8x512xf32>
    %765 = arith.mulf %764, %764 : vector<8x512xf32>
    %cst_105 = arith.constant 0.000000e+00 : f32
    %766 = vector.broadcast %cst_105 : f32 to vector<8x512xf32>
    %767 = arith.subf %766, %765 : vector<8x512xf32>
    %768 = math.exp %767 : vector<8x512xf32>
    %769 = arith.addf %761, %768 : vector<8x512xf32>
    %770 = vector.extract_strided_slice %528 {offsets = [0, 29], sizes = [8, 1], strides = [1, 1]} : vector<8x64xf32> to vector<8x1xf32>
    %771 = vector.broadcast %770 : vector<8x1xf32> to vector<8x512xf32>
    %772 = arith.subf %771, %537 : vector<8x512xf32>
    %773 = arith.mulf %772, %772 : vector<8x512xf32>
    %cst_106 = arith.constant 0.000000e+00 : f32
    %774 = vector.broadcast %cst_106 : f32 to vector<8x512xf32>
    %775 = arith.subf %774, %773 : vector<8x512xf32>
    %776 = math.exp %775 : vector<8x512xf32>
    %777 = arith.addf %769, %776 : vector<8x512xf32>
    %778 = vector.extract_strided_slice %528 {offsets = [0, 30], sizes = [8, 1], strides = [1, 1]} : vector<8x64xf32> to vector<8x1xf32>
    %779 = vector.broadcast %778 : vector<8x1xf32> to vector<8x512xf32>
    %780 = arith.subf %779, %537 : vector<8x512xf32>
    %781 = arith.mulf %780, %780 : vector<8x512xf32>
    %cst_107 = arith.constant 0.000000e+00 : f32
    %782 = vector.broadcast %cst_107 : f32 to vector<8x512xf32>
    %783 = arith.subf %782, %781 : vector<8x512xf32>
    %784 = math.exp %783 : vector<8x512xf32>
    %785 = arith.addf %777, %784 : vector<8x512xf32>
    %786 = vector.extract_strided_slice %528 {offsets = [0, 31], sizes = [8, 1], strides = [1, 1]} : vector<8x64xf32> to vector<8x1xf32>
    %787 = vector.broadcast %786 : vector<8x1xf32> to vector<8x512xf32>
    %788 = arith.subf %787, %537 : vector<8x512xf32>
    %789 = arith.mulf %788, %788 : vector<8x512xf32>
    %cst_108 = arith.constant 0.000000e+00 : f32
    %790 = vector.broadcast %cst_108 : f32 to vector<8x512xf32>
    %791 = arith.subf %790, %789 : vector<8x512xf32>
    %792 = math.exp %791 : vector<8x512xf32>
    %793 = arith.addf %785, %792 : vector<8x512xf32>
    %794 = vector.extract_strided_slice %528 {offsets = [0, 32], sizes = [8, 1], strides = [1, 1]} : vector<8x64xf32> to vector<8x1xf32>
    %795 = vector.broadcast %794 : vector<8x1xf32> to vector<8x512xf32>
    %796 = arith.subf %795, %537 : vector<8x512xf32>
    %797 = arith.mulf %796, %796 : vector<8x512xf32>
    %cst_109 = arith.constant 0.000000e+00 : f32
    %798 = vector.broadcast %cst_109 : f32 to vector<8x512xf32>
    %799 = arith.subf %798, %797 : vector<8x512xf32>
    %800 = math.exp %799 : vector<8x512xf32>
    %801 = arith.addf %793, %800 : vector<8x512xf32>
    %802 = vector.extract_strided_slice %528 {offsets = [0, 33], sizes = [8, 1], strides = [1, 1]} : vector<8x64xf32> to vector<8x1xf32>
    %803 = vector.broadcast %802 : vector<8x1xf32> to vector<8x512xf32>
    %804 = arith.subf %803, %537 : vector<8x512xf32>
    %805 = arith.mulf %804, %804 : vector<8x512xf32>
    %cst_110 = arith.constant 0.000000e+00 : f32
    %806 = vector.broadcast %cst_110 : f32 to vector<8x512xf32>
    %807 = arith.subf %806, %805 : vector<8x512xf32>
    %808 = math.exp %807 : vector<8x512xf32>
    %809 = arith.addf %801, %808 : vector<8x512xf32>
    %810 = vector.extract_strided_slice %528 {offsets = [0, 34], sizes = [8, 1], strides = [1, 1]} : vector<8x64xf32> to vector<8x1xf32>
    %811 = vector.broadcast %810 : vector<8x1xf32> to vector<8x512xf32>
    %812 = arith.subf %811, %537 : vector<8x512xf32>
    %813 = arith.mulf %812, %812 : vector<8x512xf32>
    %cst_111 = arith.constant 0.000000e+00 : f32
    %814 = vector.broadcast %cst_111 : f32 to vector<8x512xf32>
    %815 = arith.subf %814, %813 : vector<8x512xf32>
    %816 = math.exp %815 : vector<8x512xf32>
    %817 = arith.addf %809, %816 : vector<8x512xf32>
    %818 = vector.extract_strided_slice %528 {offsets = [0, 35], sizes = [8, 1], strides = [1, 1]} : vector<8x64xf32> to vector<8x1xf32>
    %819 = vector.broadcast %818 : vector<8x1xf32> to vector<8x512xf32>
    %820 = arith.subf %819, %537 : vector<8x512xf32>
    %821 = arith.mulf %820, %820 : vector<8x512xf32>
    %cst_112 = arith.constant 0.000000e+00 : f32
    %822 = vector.broadcast %cst_112 : f32 to vector<8x512xf32>
    %823 = arith.subf %822, %821 : vector<8x512xf32>
    %824 = math.exp %823 : vector<8x512xf32>
    %825 = arith.addf %817, %824 : vector<8x512xf32>
    %826 = vector.extract_strided_slice %528 {offsets = [0, 36], sizes = [8, 1], strides = [1, 1]} : vector<8x64xf32> to vector<8x1xf32>
    %827 = vector.broadcast %826 : vector<8x1xf32> to vector<8x512xf32>
    %828 = arith.subf %827, %537 : vector<8x512xf32>
    %829 = arith.mulf %828, %828 : vector<8x512xf32>
    %cst_113 = arith.constant 0.000000e+00 : f32
    %830 = vector.broadcast %cst_113 : f32 to vector<8x512xf32>
    %831 = arith.subf %830, %829 : vector<8x512xf32>
    %832 = math.exp %831 : vector<8x512xf32>
    %833 = arith.addf %825, %832 : vector<8x512xf32>
    %834 = vector.extract_strided_slice %528 {offsets = [0, 37], sizes = [8, 1], strides = [1, 1]} : vector<8x64xf32> to vector<8x1xf32>
    %835 = vector.broadcast %834 : vector<8x1xf32> to vector<8x512xf32>
    %836 = arith.subf %835, %537 : vector<8x512xf32>
    %837 = arith.mulf %836, %836 : vector<8x512xf32>
    %cst_114 = arith.constant 0.000000e+00 : f32
    %838 = vector.broadcast %cst_114 : f32 to vector<8x512xf32>
    %839 = arith.subf %838, %837 : vector<8x512xf32>
    %840 = math.exp %839 : vector<8x512xf32>
    %841 = arith.addf %833, %840 : vector<8x512xf32>
    %842 = vector.extract_strided_slice %528 {offsets = [0, 38], sizes = [8, 1], strides = [1, 1]} : vector<8x64xf32> to vector<8x1xf32>
    %843 = vector.broadcast %842 : vector<8x1xf32> to vector<8x512xf32>
    %844 = arith.subf %843, %537 : vector<8x512xf32>
    %845 = arith.mulf %844, %844 : vector<8x512xf32>
    %cst_115 = arith.constant 0.000000e+00 : f32
    %846 = vector.broadcast %cst_115 : f32 to vector<8x512xf32>
    %847 = arith.subf %846, %845 : vector<8x512xf32>
    %848 = math.exp %847 : vector<8x512xf32>
    %849 = arith.addf %841, %848 : vector<8x512xf32>
    %850 = vector.extract_strided_slice %528 {offsets = [0, 39], sizes = [8, 1], strides = [1, 1]} : vector<8x64xf32> to vector<8x1xf32>
    %851 = vector.broadcast %850 : vector<8x1xf32> to vector<8x512xf32>
    %852 = arith.subf %851, %537 : vector<8x512xf32>
    %853 = arith.mulf %852, %852 : vector<8x512xf32>
    %cst_116 = arith.constant 0.000000e+00 : f32
    %854 = vector.broadcast %cst_116 : f32 to vector<8x512xf32>
    %855 = arith.subf %854, %853 : vector<8x512xf32>
    %856 = math.exp %855 : vector<8x512xf32>
    %857 = arith.addf %849, %856 : vector<8x512xf32>
    %858 = vector.extract_strided_slice %528 {offsets = [0, 40], sizes = [8, 1], strides = [1, 1]} : vector<8x64xf32> to vector<8x1xf32>
    %859 = vector.broadcast %858 : vector<8x1xf32> to vector<8x512xf32>
    %860 = arith.subf %859, %537 : vector<8x512xf32>
    %861 = arith.mulf %860, %860 : vector<8x512xf32>
    %cst_117 = arith.constant 0.000000e+00 : f32
    %862 = vector.broadcast %cst_117 : f32 to vector<8x512xf32>
    %863 = arith.subf %862, %861 : vector<8x512xf32>
    %864 = math.exp %863 : vector<8x512xf32>
    %865 = arith.addf %857, %864 : vector<8x512xf32>
    %866 = vector.extract_strided_slice %528 {offsets = [0, 41], sizes = [8, 1], strides = [1, 1]} : vector<8x64xf32> to vector<8x1xf32>
    %867 = vector.broadcast %866 : vector<8x1xf32> to vector<8x512xf32>
    %868 = arith.subf %867, %537 : vector<8x512xf32>
    %869 = arith.mulf %868, %868 : vector<8x512xf32>
    %cst_118 = arith.constant 0.000000e+00 : f32
    %870 = vector.broadcast %cst_118 : f32 to vector<8x512xf32>
    %871 = arith.subf %870, %869 : vector<8x512xf32>
    %872 = math.exp %871 : vector<8x512xf32>
    %873 = arith.addf %865, %872 : vector<8x512xf32>
    %874 = vector.extract_strided_slice %528 {offsets = [0, 42], sizes = [8, 1], strides = [1, 1]} : vector<8x64xf32> to vector<8x1xf32>
    %875 = vector.broadcast %874 : vector<8x1xf32> to vector<8x512xf32>
    %876 = arith.subf %875, %537 : vector<8x512xf32>
    %877 = arith.mulf %876, %876 : vector<8x512xf32>
    %cst_119 = arith.constant 0.000000e+00 : f32
    %878 = vector.broadcast %cst_119 : f32 to vector<8x512xf32>
    %879 = arith.subf %878, %877 : vector<8x512xf32>
    %880 = math.exp %879 : vector<8x512xf32>
    %881 = arith.addf %873, %880 : vector<8x512xf32>
    %882 = vector.extract_strided_slice %528 {offsets = [0, 43], sizes = [8, 1], strides = [1, 1]} : vector<8x64xf32> to vector<8x1xf32>
    %883 = vector.broadcast %882 : vector<8x1xf32> to vector<8x512xf32>
    %884 = arith.subf %883, %537 : vector<8x512xf32>
    %885 = arith.mulf %884, %884 : vector<8x512xf32>
    %cst_120 = arith.constant 0.000000e+00 : f32
    %886 = vector.broadcast %cst_120 : f32 to vector<8x512xf32>
    %887 = arith.subf %886, %885 : vector<8x512xf32>
    %888 = math.exp %887 : vector<8x512xf32>
    %889 = arith.addf %881, %888 : vector<8x512xf32>
    %890 = vector.extract_strided_slice %528 {offsets = [0, 44], sizes = [8, 1], strides = [1, 1]} : vector<8x64xf32> to vector<8x1xf32>
    %891 = vector.broadcast %890 : vector<8x1xf32> to vector<8x512xf32>
    %892 = arith.subf %891, %537 : vector<8x512xf32>
    %893 = arith.mulf %892, %892 : vector<8x512xf32>
    %cst_121 = arith.constant 0.000000e+00 : f32
    %894 = vector.broadcast %cst_121 : f32 to vector<8x512xf32>
    %895 = arith.subf %894, %893 : vector<8x512xf32>
    %896 = math.exp %895 : vector<8x512xf32>
    %897 = arith.addf %889, %896 : vector<8x512xf32>
    %898 = vector.extract_strided_slice %528 {offsets = [0, 45], sizes = [8, 1], strides = [1, 1]} : vector<8x64xf32> to vector<8x1xf32>
    %899 = vector.broadcast %898 : vector<8x1xf32> to vector<8x512xf32>
    %900 = arith.subf %899, %537 : vector<8x512xf32>
    %901 = arith.mulf %900, %900 : vector<8x512xf32>
    %cst_122 = arith.constant 0.000000e+00 : f32
    %902 = vector.broadcast %cst_122 : f32 to vector<8x512xf32>
    %903 = arith.subf %902, %901 : vector<8x512xf32>
    %904 = math.exp %903 : vector<8x512xf32>
    %905 = arith.addf %897, %904 : vector<8x512xf32>
    %906 = vector.extract_strided_slice %528 {offsets = [0, 46], sizes = [8, 1], strides = [1, 1]} : vector<8x64xf32> to vector<8x1xf32>
    %907 = vector.broadcast %906 : vector<8x1xf32> to vector<8x512xf32>
    %908 = arith.subf %907, %537 : vector<8x512xf32>
    %909 = arith.mulf %908, %908 : vector<8x512xf32>
    %cst_123 = arith.constant 0.000000e+00 : f32
    %910 = vector.broadcast %cst_123 : f32 to vector<8x512xf32>
    %911 = arith.subf %910, %909 : vector<8x512xf32>
    %912 = math.exp %911 : vector<8x512xf32>
    %913 = arith.addf %905, %912 : vector<8x512xf32>
    %914 = vector.extract_strided_slice %528 {offsets = [0, 47], sizes = [8, 1], strides = [1, 1]} : vector<8x64xf32> to vector<8x1xf32>
    %915 = vector.broadcast %914 : vector<8x1xf32> to vector<8x512xf32>
    %916 = arith.subf %915, %537 : vector<8x512xf32>
    %917 = arith.mulf %916, %916 : vector<8x512xf32>
    %cst_124 = arith.constant 0.000000e+00 : f32
    %918 = vector.broadcast %cst_124 : f32 to vector<8x512xf32>
    %919 = arith.subf %918, %917 : vector<8x512xf32>
    %920 = math.exp %919 : vector<8x512xf32>
    %921 = arith.addf %913, %920 : vector<8x512xf32>
    %922 = vector.extract_strided_slice %528 {offsets = [0, 48], sizes = [8, 1], strides = [1, 1]} : vector<8x64xf32> to vector<8x1xf32>
    %923 = vector.broadcast %922 : vector<8x1xf32> to vector<8x512xf32>
    %924 = arith.subf %923, %537 : vector<8x512xf32>
    %925 = arith.mulf %924, %924 : vector<8x512xf32>
    %cst_125 = arith.constant 0.000000e+00 : f32
    %926 = vector.broadcast %cst_125 : f32 to vector<8x512xf32>
    %927 = arith.subf %926, %925 : vector<8x512xf32>
    %928 = math.exp %927 : vector<8x512xf32>
    %929 = arith.addf %921, %928 : vector<8x512xf32>
    %930 = vector.extract_strided_slice %528 {offsets = [0, 49], sizes = [8, 1], strides = [1, 1]} : vector<8x64xf32> to vector<8x1xf32>
    %931 = vector.broadcast %930 : vector<8x1xf32> to vector<8x512xf32>
    %932 = arith.subf %931, %537 : vector<8x512xf32>
    %933 = arith.mulf %932, %932 : vector<8x512xf32>
    %cst_126 = arith.constant 0.000000e+00 : f32
    %934 = vector.broadcast %cst_126 : f32 to vector<8x512xf32>
    %935 = arith.subf %934, %933 : vector<8x512xf32>
    %936 = math.exp %935 : vector<8x512xf32>
    %937 = arith.addf %929, %936 : vector<8x512xf32>
    %938 = vector.extract_strided_slice %528 {offsets = [0, 50], sizes = [8, 1], strides = [1, 1]} : vector<8x64xf32> to vector<8x1xf32>
    %939 = vector.broadcast %938 : vector<8x1xf32> to vector<8x512xf32>
    %940 = arith.subf %939, %537 : vector<8x512xf32>
    %941 = arith.mulf %940, %940 : vector<8x512xf32>
    %cst_127 = arith.constant 0.000000e+00 : f32
    %942 = vector.broadcast %cst_127 : f32 to vector<8x512xf32>
    %943 = arith.subf %942, %941 : vector<8x512xf32>
    %944 = math.exp %943 : vector<8x512xf32>
    %945 = arith.addf %937, %944 : vector<8x512xf32>
    %946 = vector.extract_strided_slice %528 {offsets = [0, 51], sizes = [8, 1], strides = [1, 1]} : vector<8x64xf32> to vector<8x1xf32>
    %947 = vector.broadcast %946 : vector<8x1xf32> to vector<8x512xf32>
    %948 = arith.subf %947, %537 : vector<8x512xf32>
    %949 = arith.mulf %948, %948 : vector<8x512xf32>
    %cst_128 = arith.constant 0.000000e+00 : f32
    %950 = vector.broadcast %cst_128 : f32 to vector<8x512xf32>
    %951 = arith.subf %950, %949 : vector<8x512xf32>
    %952 = math.exp %951 : vector<8x512xf32>
    %953 = arith.addf %945, %952 : vector<8x512xf32>
    %954 = vector.extract_strided_slice %528 {offsets = [0, 52], sizes = [8, 1], strides = [1, 1]} : vector<8x64xf32> to vector<8x1xf32>
    %955 = vector.broadcast %954 : vector<8x1xf32> to vector<8x512xf32>
    %956 = arith.subf %955, %537 : vector<8x512xf32>
    %957 = arith.mulf %956, %956 : vector<8x512xf32>
    %cst_129 = arith.constant 0.000000e+00 : f32
    %958 = vector.broadcast %cst_129 : f32 to vector<8x512xf32>
    %959 = arith.subf %958, %957 : vector<8x512xf32>
    %960 = math.exp %959 : vector<8x512xf32>
    %961 = arith.addf %953, %960 : vector<8x512xf32>
    %962 = vector.extract_strided_slice %528 {offsets = [0, 53], sizes = [8, 1], strides = [1, 1]} : vector<8x64xf32> to vector<8x1xf32>
    %963 = vector.broadcast %962 : vector<8x1xf32> to vector<8x512xf32>
    %964 = arith.subf %963, %537 : vector<8x512xf32>
    %965 = arith.mulf %964, %964 : vector<8x512xf32>
    %cst_130 = arith.constant 0.000000e+00 : f32
    %966 = vector.broadcast %cst_130 : f32 to vector<8x512xf32>
    %967 = arith.subf %966, %965 : vector<8x512xf32>
    %968 = math.exp %967 : vector<8x512xf32>
    %969 = arith.addf %961, %968 : vector<8x512xf32>
    %970 = vector.extract_strided_slice %528 {offsets = [0, 54], sizes = [8, 1], strides = [1, 1]} : vector<8x64xf32> to vector<8x1xf32>
    %971 = vector.broadcast %970 : vector<8x1xf32> to vector<8x512xf32>
    %972 = arith.subf %971, %537 : vector<8x512xf32>
    %973 = arith.mulf %972, %972 : vector<8x512xf32>
    %cst_131 = arith.constant 0.000000e+00 : f32
    %974 = vector.broadcast %cst_131 : f32 to vector<8x512xf32>
    %975 = arith.subf %974, %973 : vector<8x512xf32>
    %976 = math.exp %975 : vector<8x512xf32>
    %977 = arith.addf %969, %976 : vector<8x512xf32>
    %978 = vector.extract_strided_slice %528 {offsets = [0, 55], sizes = [8, 1], strides = [1, 1]} : vector<8x64xf32> to vector<8x1xf32>
    %979 = vector.broadcast %978 : vector<8x1xf32> to vector<8x512xf32>
    %980 = arith.subf %979, %537 : vector<8x512xf32>
    %981 = arith.mulf %980, %980 : vector<8x512xf32>
    %cst_132 = arith.constant 0.000000e+00 : f32
    %982 = vector.broadcast %cst_132 : f32 to vector<8x512xf32>
    %983 = arith.subf %982, %981 : vector<8x512xf32>
    %984 = math.exp %983 : vector<8x512xf32>
    %985 = arith.addf %977, %984 : vector<8x512xf32>
    %986 = vector.extract_strided_slice %528 {offsets = [0, 56], sizes = [8, 1], strides = [1, 1]} : vector<8x64xf32> to vector<8x1xf32>
    %987 = vector.broadcast %986 : vector<8x1xf32> to vector<8x512xf32>
    %988 = arith.subf %987, %537 : vector<8x512xf32>
    %989 = arith.mulf %988, %988 : vector<8x512xf32>
    %cst_133 = arith.constant 0.000000e+00 : f32
    %990 = vector.broadcast %cst_133 : f32 to vector<8x512xf32>
    %991 = arith.subf %990, %989 : vector<8x512xf32>
    %992 = math.exp %991 : vector<8x512xf32>
    %993 = arith.addf %985, %992 : vector<8x512xf32>
    %994 = vector.extract_strided_slice %528 {offsets = [0, 57], sizes = [8, 1], strides = [1, 1]} : vector<8x64xf32> to vector<8x1xf32>
    %995 = vector.broadcast %994 : vector<8x1xf32> to vector<8x512xf32>
    %996 = arith.subf %995, %537 : vector<8x512xf32>
    %997 = arith.mulf %996, %996 : vector<8x512xf32>
    %cst_134 = arith.constant 0.000000e+00 : f32
    %998 = vector.broadcast %cst_134 : f32 to vector<8x512xf32>
    %999 = arith.subf %998, %997 : vector<8x512xf32>
    %1000 = math.exp %999 : vector<8x512xf32>
    %1001 = arith.addf %993, %1000 : vector<8x512xf32>
    %1002 = vector.extract_strided_slice %528 {offsets = [0, 58], sizes = [8, 1], strides = [1, 1]} : vector<8x64xf32> to vector<8x1xf32>
    %1003 = vector.broadcast %1002 : vector<8x1xf32> to vector<8x512xf32>
    %1004 = arith.subf %1003, %537 : vector<8x512xf32>
    %1005 = arith.mulf %1004, %1004 : vector<8x512xf32>
    %cst_135 = arith.constant 0.000000e+00 : f32
    %1006 = vector.broadcast %cst_135 : f32 to vector<8x512xf32>
    %1007 = arith.subf %1006, %1005 : vector<8x512xf32>
    %1008 = math.exp %1007 : vector<8x512xf32>
    %1009 = arith.addf %1001, %1008 : vector<8x512xf32>
    %1010 = vector.extract_strided_slice %528 {offsets = [0, 59], sizes = [8, 1], strides = [1, 1]} : vector<8x64xf32> to vector<8x1xf32>
    %1011 = vector.broadcast %1010 : vector<8x1xf32> to vector<8x512xf32>
    %1012 = arith.subf %1011, %537 : vector<8x512xf32>
    %1013 = arith.mulf %1012, %1012 : vector<8x512xf32>
    %cst_136 = arith.constant 0.000000e+00 : f32
    %1014 = vector.broadcast %cst_136 : f32 to vector<8x512xf32>
    %1015 = arith.subf %1014, %1013 : vector<8x512xf32>
    %1016 = math.exp %1015 : vector<8x512xf32>
    %1017 = arith.addf %1009, %1016 : vector<8x512xf32>
    %1018 = vector.extract_strided_slice %528 {offsets = [0, 60], sizes = [8, 1], strides = [1, 1]} : vector<8x64xf32> to vector<8x1xf32>
    %1019 = vector.broadcast %1018 : vector<8x1xf32> to vector<8x512xf32>
    %1020 = arith.subf %1019, %537 : vector<8x512xf32>
    %1021 = arith.mulf %1020, %1020 : vector<8x512xf32>
    %cst_137 = arith.constant 0.000000e+00 : f32
    %1022 = vector.broadcast %cst_137 : f32 to vector<8x512xf32>
    %1023 = arith.subf %1022, %1021 : vector<8x512xf32>
    %1024 = math.exp %1023 : vector<8x512xf32>
    %1025 = arith.addf %1017, %1024 : vector<8x512xf32>
    %1026 = vector.extract_strided_slice %528 {offsets = [0, 61], sizes = [8, 1], strides = [1, 1]} : vector<8x64xf32> to vector<8x1xf32>
    %1027 = vector.broadcast %1026 : vector<8x1xf32> to vector<8x512xf32>
    %1028 = arith.subf %1027, %537 : vector<8x512xf32>
    %1029 = arith.mulf %1028, %1028 : vector<8x512xf32>
    %cst_138 = arith.constant 0.000000e+00 : f32
    %1030 = vector.broadcast %cst_138 : f32 to vector<8x512xf32>
    %1031 = arith.subf %1030, %1029 : vector<8x512xf32>
    %1032 = math.exp %1031 : vector<8x512xf32>
    %1033 = arith.addf %1025, %1032 : vector<8x512xf32>
    %1034 = vector.extract_strided_slice %528 {offsets = [0, 62], sizes = [8, 1], strides = [1, 1]} : vector<8x64xf32> to vector<8x1xf32>
    %1035 = vector.broadcast %1034 : vector<8x1xf32> to vector<8x512xf32>
    %1036 = arith.subf %1035, %537 : vector<8x512xf32>
    %1037 = arith.mulf %1036, %1036 : vector<8x512xf32>
    %cst_139 = arith.constant 0.000000e+00 : f32
    %1038 = vector.broadcast %cst_139 : f32 to vector<8x512xf32>
    %1039 = arith.subf %1038, %1037 : vector<8x512xf32>
    %1040 = math.exp %1039 : vector<8x512xf32>
    %1041 = arith.addf %1033, %1040 : vector<8x512xf32>
    %1042 = vector.extract_strided_slice %528 {offsets = [0, 63], sizes = [8, 1], strides = [1, 1]} : vector<8x64xf32> to vector<8x1xf32>
    %1043 = vector.broadcast %1042 : vector<8x1xf32> to vector<8x512xf32>
    %1044 = arith.subf %1043, %537 : vector<8x512xf32>
    %1045 = arith.mulf %1044, %1044 : vector<8x512xf32>
    %cst_140 = arith.constant 0.000000e+00 : f32
    %1046 = vector.broadcast %cst_140 : f32 to vector<8x512xf32>
    %1047 = arith.subf %1046, %1045 : vector<8x512xf32>
    %1048 = math.exp %1047 : vector<8x512xf32>
    %1049 = arith.addf %1041, %1048 : vector<8x512xf32>
    %cst_141 = arith.constant 2.000000e+00 : f32
    %1050 = vector.broadcast %cst_141 : f32 to vector<8x512xf32>
    %1051 = arith.mulf %1050, %533 : vector<8x512xf32>
    %1052 = arith.addf %1049, %1051 : vector<8x512xf32>
    %1053 = arith.addf %526, %1052 : vector<8x512xf32>
    %1054 = vector.extract_strided_slice %1053 {offsets = [0, 0], sizes = [8, 128], strides = [1, 1]} : vector<8x512xf32> to vector<8x128xf32>
    %1055 = vector.extract_strided_slice %1053 {offsets = [0, 128], sizes = [8, 128], strides = [1, 1]} : vector<8x512xf32> to vector<8x128xf32>
    %1056 = arith.addf %1054, %1055 : vector<8x128xf32>
    %1057 = vector.extract_strided_slice %1053 {offsets = [0, 256], sizes = [8, 128], strides = [1, 1]} : vector<8x512xf32> to vector<8x128xf32>
    %1058 = arith.addf %1056, %1057 : vector<8x128xf32>
    %1059 = vector.extract_strided_slice %1053 {offsets = [0, 384], sizes = [8, 128], strides = [1, 1]} : vector<8x512xf32> to vector<8x128xf32>
    %1060 = arith.addf %1058, %1059 : vector<8x128xf32>
    %1061 = vector.shape_cast %1060 : vector<8x128xf32> to vector<1x8x128xf32>
    %c0_142 = arith.constant 0 : index
    %c0_143 = arith.constant 0 : index
    %c0_144 = arith.constant 0 : index
    %1062 = vector.load %arg4[%c0_142, %c0_143, %c0_144] : memref<1x8x128xf32, #tpu.memory_space<vmem>>, vector<1x8x128xf32>
    tpu.vector_store %arg4[%c0_142, %c0_143, %c0_144], %1061 {strides = array<i32>} : memref<1x8x128xf32, #tpu.memory_space<vmem>>, vector<1x8x128xf32>,
    return
  }
  func.func @transform_0(%arg0: i32) -> (i32, i32, i32) {
    %c0_i32 = arith.constant 0 : i32
    %c0_i32_0 = arith.constant 0 : i32
    %c0_i32_1 = arith.constant 0 : i32
    return %arg0, %c0_i32, %c0_i32_0 : i32, i32, i32
  }
  func.func @transform_1(%arg0: i32) -> (i32, i32, i32) {
    %c3_i32 = arith.constant 3 : i32
    %0 = arith.subi %c3_i32, %arg0 : i32
    %c0_i32 = arith.constant 0 : i32
    %c0_i32_0 = arith.constant 0 : i32
    %c0_i32_1 = arith.constant 0 : i32
    return %0, %c0_i32, %c0_i32_0 : i32, i32, i32
  }
  func.func @transform_2(%arg0: i32) -> (i32, i32) {
    %c0_i32 = arith.constant 0 : i32
    %c0_i32_0 = arith.constant 0 : i32
    %c0_i32_1 = arith.constant 0 : i32
    return %c0_i32, %c0_i32_0 : i32, i32
  }
  func.func @transform_3(%arg0: i32) -> (i32, i32, i32) {
    %c0_i32 = arith.constant 0 : i32
    %c0_i32_0 = arith.constant 0 : i32
    %c0_i32_1 = arith.constant 0 : i32
    return %arg0, %c0_i32, %c0_i32_0 : i32, i32, i32
  }
}

</mosaic_0001>

<llo_original>
// kernel: meeloss.1
$region0: #{meeloss.1}
  #allocation0 [shape = 'u32[]', space=smem, size = 0x4, offset = 0x4, fixed_abs, tag = 'smem constant byte address 0x4 - core index']
  #allocation1 [shape = 'u32[72,128]{1,0:T(1,128)}', space=vmem, size = 0x9000, scoped, tag = 'internal scratch']
  %s0 = inlined_call_operand.vmem [shape: f32[4,8,64], index: 0, kind: input, shape index: {}, may-alias: {0,1}]
  %s1 = inlined_call_operand.vmem [shape: f32[4,8,64], index: 1, kind: input, shape index: {}, may-alias: {0,1}]
  %s2 = inlined_call_operand.vmem [shape: f32[4,512], index: 2, kind: input, shape index: {}]
  %s3 = inlined_call_operand.vmem [shape: f32[2,8,128], index: 3, kind: output, shape index: {}]
  %s4 = sld [smem:[#allocation0]]
  $region59: #{meeloss.1} parent=0
    _
  %s6 = ssub.s32 1, %s4
  %s7 = scalar_select 0, %s6, %s4
  loop: start=0, step=1, limit=4
  $region2: #{meeloss.1} parent=0 // loop_pre_header
    _
  $region3: #{meeloss.1} parent=0 // loop_header
    %s9 = sphi 0, %s13
    %p10 = scmp.ge.s32.totalorder %s9, 4
    %s19 = sphi 0, %s21
    %s22 = sphi 0, %s19
    %s23 = sphi 0, %s22
    %s39 = sphi 0, %s23
    %s47 = sphi 0, %s49
    %s50 = sphi 0, %s47
    %s51 = sphi 0, %s50
    %s67 = sphi 0, %s51
    %s71 = sphi 0, %s71
    %s73 = sphi 0, %s71
    %s74 = sphi 0, %s73
    %s88 = sphi 0, %s74
    %s94 = sphi 0, %s96
    %s97 = sphi 0, %s94
    %s98 = sphi 0, %s97
    %s114 = sphi 0, %s98
  $region4: #{meeloss.1} parent=0 // loop_header_branch
    %12 = sbr.rel (%p10) target = $region8
  $region5: #{meeloss.1} parent=0 // loop_body
    %s14 = ssub.s32 %s9, 1
    %s15 = ssub.s32 %s9, 2
    %s16 = sadd.s32 %s9, 1
    %s17 = ssub.s32 %s9, %s16
    %p18 = scmp.eq.s32.totalorder %s17, 0
    %s20 = sadd.s32 %s19, 1
    %s21 = scalar_select %p18, %s19, %s20
    %p24 = pneg %p18
    %p25 = scmp.eq.s32.totalorder %s9, 1
    %p26 = por %p24, %p25
    %p27 = scmp.ne.s32.totalorder %s19, %s22
    %p28 = scmp.eq.s32.totalorder %s9, 0
    %p29 = por %p27, %p28
    %p30 = scmp.ne.s32.totalorder %s19, %s22
    %p31 = scmp.eq.s32.totalorder %s14, 1
    %p32 = por %p30, %p31
    %p33 = scmp.ne.s32.totalorder %s22, %s23
    %p34 = scmp.eq.s32.totalorder %s14, 0
    %p35 = por %p33, %p34
    %p36 = scmp.ne.s32.totalorder %s22, %s23
    %p37 = scmp.eq.s32.totalorder %s15, 1
    %p38 = por %p36, %p37
    %p40 = scmp.ne.s32.totalorder %s23, %s39
    %p41 = scmp.eq.s32.totalorder %s15, 0
    %p42 = por %p40, %p41
    %s43 = ssub.s32 3, %s9
    %s44 = ssub.s32 3, %s16
    %s45 = ssub.s32 %s43, %s44
    %p46 = scmp.eq.s32.totalorder %s45, 0
    %s48 = sadd.s32 %s47, 1
    %s49 = scalar_select %p46, %s47, %s48
    %p52 = pneg %p46
    %p53 = scmp.eq.s32.totalorder %s9, 1
    %p54 = por %p52, %p53
    %p55 = scmp.ne.s32.totalorder %s47, %s50
    %p56 = scmp.eq.s32.totalorder %s9, 0
    %p57 = por %p55, %p56
    %p58 = scmp.ne.s32.totalorder %s47, %s50
    %p59 = scmp.eq.s32.totalorder %s14, 1
    %p60 = por %p58, %p59
    %p61 = scmp.ne.s32.totalorder %s50, %s51
    %p62 = scmp.eq.s32.totalorder %s14, 0
    %p63 = por %p61, %p62
    %p64 = scmp.ne.s32.totalorder %s50, %s51
    %p65 = scmp.eq.s32.totalorder %s15, 1
    %p66 = por %p64, %p65
    %p68 = scmp.ne.s32.totalorder %s51, %s67
    %p69 = scmp.eq.s32.totalorder %s15, 0
    %p70 = por %p68, %p69
    %s72 = sadd.s32 %s71, 1
    %p75 = scmp.eq.s32.totalorder %s9, 1
    %p76 = scmp.ne.s32.totalorder %s71, %s73
    %p77 = scmp.eq.s32.totalorder %s9, 0
    %p78 = por %p76, %p77
    %p79 = scmp.ne.s32.totalorder %s71, %s73
    %p80 = scmp.eq.s32.totalorder %s14, 1
    %p81 = por %p79, %p80
    %p82 = scmp.ne.s32.totalorder %s73, %s74
    %p83 = scmp.eq.s32.totalorder %s14, 0
    %p84 = por %p82, %p83
    %p85 = scmp.ne.s32.totalorder %s73, %s74
    %p86 = scmp.eq.s32.totalorder %s15, 1
    %p87 = por %p85, %p86
    %p89 = scmp.ne.s32.totalorder %s74, %s88
    %p90 = scmp.eq.s32.totalorder %s15, 0
    %p91 = por %p89, %p90
    %s92 = ssub.s32 %s9, %s16
    %p93 = scmp.eq.s32.totalorder %s92, 0
    %s95 = sadd.s32 %s94, 1
    %s96 = scalar_select %p93, %s94, %s95
    %p99 = pneg %p93
    %p100 = scmp.eq.s32.totalorder %s9, 1
    %p101 = por %p99, %p100
    %p102 = scmp.ne.s32.totalorder %s94, %s97
    %p103 = scmp.eq.s32.totalorder %s9, 0
    %p104 = por %p102, %p103
    %p105 = scmp.ne.s32.totalorder %s94, %s97
    %p106 = scmp.eq.s32.totalorder %s14, 1
    %p107 = por %p105, %p106
    %p108 = scmp.ne.s32.totalorder %s97, %s98
    %p109 = scmp.eq.s32.totalorder %s14, 0
    %p110 = por %p108, %p109
    %p111 = scmp.ne.s32.totalorder %s97, %s98
    %p112 = scmp.eq.s32.totalorder %s15, 1
    %p113 = por %p111, %p112
    %p115 = scmp.ne.s32.totalorder %s98, %s114
    %p116 = scmp.eq.s32.totalorder %s15, 0
    %p117 = por %p115, %p116
    %p118 = scmp.le.s32.totalorder 1, %s9
    %p119 = scmp.lt.s32.totalorder %s9, 3
    %p120 = pnand %p118, %p119
    %p121 = pneg %p120
    // Predicated region
    $region9: #{meeloss.1} parent=5 // pred_check
      _
    $region10: #{meeloss.1} parent=5 // pred_check_branch
      %123 = sbr.rel (%p120) target = $region12
    $region11: #{meeloss.1} parent=5 // pred_region
      %s124 = ssub.s32 %s9, 1
      // Predicated region
      $region13: #{meeloss.1} parent=11 // pred_check
        %p125 = pneg %p84
      $region14: #{meeloss.1} parent=11 // pred_check_branch
        %127 = sbr.rel (%p125) target = $region16
      $region15: #{meeloss.1} parent=11 // pred_region
        _
      $region16: #{meeloss.1} parent=11 // pred_fallthru
        _
    $region12: #{meeloss.1} parent=5 // pred_fallthru
      _
    %p128 = scmp.lt.s32.totalorder %s9, 2
    // Predicated region
    $region17: #{meeloss.1} parent=5 // pred_check
      %p129 = pneg %p128
    $region18: #{meeloss.1} parent=5 // pred_check_branch
      %131 = sbr.rel (%p129) target = $region20
    $region19: #{meeloss.1} parent=5 // pred_region
      // Predicated region
      $region21: #{meeloss.1} parent=19 // pred_check
        %p132 = pneg %p29
      $region22: #{meeloss.1} parent=19 // pred_check_branch
        %134 = sbr.rel (%p132) target = $region24
      $region23: #{meeloss.1} parent=19 // pred_region
        %p135 = scmp.lt.s32.totalorder %s9, 3
        %s136 = scalar_select %p135, %s9, 3
        %s137 = smul.addr %s136, 8
        %s138 = scalar_lea.vmem %s0, %s137
      $region24: #{meeloss.1} parent=19 // pred_fallthru
        _
      // Predicated region
      $region25: #{meeloss.1} parent=19 // pred_check
        %p139 = pneg %p57
      $region26: #{meeloss.1} parent=19 // pred_check_branch
        %141 = sbr.rel (%p139) target = $region28
      $region27: #{meeloss.1} parent=19 // pred_region
        %s142 = ssub.s32 3, %s9
        %p143 = scmp.lt.s32.totalorder %s142, 3
        %s144 = scalar_select %p143, %s142, 3
        %s145 = smul.addr %s144, 8
        %s146 = scalar_lea.vmem %s1, %s145
        %s147 = ssub.s32 3, %s9
      $region28: #{meeloss.1} parent=19 // pred_fallthru
        _
    $region20: #{meeloss.1} parent=5 // pred_fallthru
      _
    %p148 = scmp.le.s32.totalorder 1, %s9
    %p149 = scmp.lt.s32.totalorder %s9, 3
    %p150 = pnand %p148, %p149
    %p151 = pneg %p150
    // Predicated region
    $region29: #{meeloss.1} parent=5 // pred_check
      _
    $region30: #{meeloss.1} parent=5 // pred_check_branch
      %153 = sbr.rel (%p150) target = $region32
    $region31: #{meeloss.1} parent=5 // pred_region
      %s154 = ssub.s32 %s9, 1
      %p155 = scmp.lt.s32.totalorder %s14, 3
      %s156 = scalar_select %p155, %s14, 3
      %s157 = smul.addr %s156, 8
      %s158 = scalar_lea.vmem %s0, %s157
      %p159 = pneg %p35
      %p160 = pneg %p32
      %s161 = ssub.s32 3, %s14
      %p162 = scmp.lt.s32.totalorder %s161, 3
      %s163 = scalar_select %p162, %s161, 3
      %s164 = smul.addr %s163, 8
      %s165 = scalar_lea.vmem %s1, %s164
      %p166 = pneg %p63
      %p167 = pneg %p60
      %p168 = pneg %p84
      %p169 = pneg %p81
      %p170 = pneg %p110
      %p171 = pneg %p107
      %p172 = scmp.lt.s32.totalorder %s14, 1
      %s173 = scalar_select %p172, %s14, 1
      %s174 = smul.addr %s173, 8
      %s175 = scalar_lea.vmem %s3, %s174
      %p176 = scmp.lt.s32.totalorder %s14, 3
      %s177 = scalar_select %p176, %s14, 3
      %s178 = smul.addr %s177, 8
      %s179 = scalar_lea.vmem %s0, %s178
      %s180 = ssub.s32 3, %s14
      %p181 = scmp.lt.s32.totalorder %s180, 3
      %s182 = scalar_select %p181, %s180, 3
      %s183 = smul.addr %s182, 8
      %s184 = scalar_lea.vmem %s1, %s183
      %s185 = ssub.s32 3, %s14
      %p186 = scmp.lt.s32.totalorder %s14, 1
      %s187 = scalar_select %p186, %s14, 1
      %s188 = smul.addr %s187, 8
      %s189 = scalar_lea.vmem %s3, %s188
      %s190 = ssub.s32 3, %s14
      %v191 = vld [vmem:[%s179] sm:$0xff]
      %s192 = sadd.s32 %s14, 1
      // While loop
      $region33: #{meeloss.1} parent=31 // loop_pre_header
        _
      $region34: #{meeloss.1} parent=31 // loop_header
        %s194 = sphi %s192, %s196
        %p195 = scmp.ge.s32.totalorder %s194, 4
        %v199 = vphi 0.0, %v2010
        %v200 = vphi 0.0, %v2011
        %v201 = vphi 0.0, %v2012
        %v202 = vphi 0.0, %v2013
      $region35: #{meeloss.1} parent=31 // loop_header_branch
        %198 = sbr.rel (%p195) target = $region39
      $region36: #{meeloss.1} parent=31 // loop_body
        %s203 = sshra.s32 %s194, 2
        %s204 = sand.u32 %s194, 3
        %s205 = sshra.s32 %s194, 2
        %s206 = sand.u32 %s194, 3
        %s207 = smul.u32 %s203, 4
        %s208 = smul.u32 %s207, 4
        %s209 = sadd.s32 %s208, %s206
        %s210 = scalar_lea.vmem %s2, %s209
        %v211 = vld [vmem:[%s210] ss:$4 sm:$0xf]
        %v213 = vperm.slane %v211, 0
        %v214 = vperm.slane %v211, 1
        %v215 = vperm.slane %v211, 2
        %v216 = vperm.slane %v211, 3
        %222 = vset.pattern.permute.xlu0 0
        %223 = vperm.xlu0 %222, %v191
        %v224 = vpop.permute.xlu0 %223
        %v226 = vsub.f32 %v224, %v213
        %v227 = vsub.f32 %v224, %v214
        %v228 = vsub.f32 %v224, %v215
        %v229 = vsub.f32 %v224, %v216
        %v230 = vmul.f32 %v226, %v226
        %v231 = vmul.f32 %v227, %v227
        %v232 = vmul.f32 %v228, %v228
        %v233 = vmul.f32 %v229, %v229
        %v234 = vsub.f32 0.0, %v230
        %v235 = vsub.f32 0.0, %v231
        %v236 = vsub.f32 0.0, %v232
        %v237 = vsub.f32 0.0, %v233
        %v238 = vmul.f32 %v234, 1.442695
        %v239 = vpow.pop %v238
        %v240 = vmul.f32 %v235, 1.442695
        %v241 = vpow.pop %v240
        %v242 = vmul.f32 %v236, 1.442695
        %v243 = vpow.pop %v242
        %v244 = vmul.f32 %v237, 1.442695
        %v245 = vpow.pop %v244
        %v246 = vadd.f32 %v199, %v239
        %v247 = vadd.f32 %v200, %v241
        %v248 = vadd.f32 %v201, %v243
        %v249 = vadd.f32 %v202, %v245
        %250 = vset.pattern.permute.xlu0 1
        %251 = vperm.xlu0 %250, %v191
        %v252 = vpop.permute.xlu0 %251
        %v254 = vsub.f32 %v252, %v213
        %v255 = vsub.f32 %v252, %v214
        %v256 = vsub.f32 %v252, %v215
        %v257 = vsub.f32 %v252, %v216
        %v258 = vmul.f32 %v254, %v254
        %v259 = vmul.f32 %v255, %v255
        %v260 = vmul.f32 %v256, %v256
        %v261 = vmul.f32 %v257, %v257
        %v262 = vsub.f32 0.0, %v258
        %v263 = vsub.f32 0.0, %v259
        %v264 = vsub.f32 0.0, %v260
        %v265 = vsub.f32 0.0, %v261
        %v266 = vmul.f32 %v262, 1.442695
        %v267 = vpow.pop %v266
        %v268 = vmul.f32 %v263, 1.442695
        %v269 = vpow.pop %v268
        %v270 = vmul.f32 %v264, 1.442695
        %v271 = vpow.pop %v270
        %v272 = vmul.f32 %v265, 1.442695
        %v273 = vpow.pop %v272
        %v274 = vadd.f32 %v246, %v267
        %v275 = vadd.f32 %v247, %v269
        %v276 = vadd.f32 %v248, %v271
        %v277 = vadd.f32 %v249, %v273
        %278 = vset.pattern.permute.xlu0 2
        %279 = vperm.xlu0 %278, %v191
        %v280 = vpop.permute.xlu0 %279
        %v282 = vsub.f32 %v280, %v213
        %v283 = vsub.f32 %v280, %v214
        %v284 = vsub.f32 %v280, %v215
        %v285 = vsub.f32 %v280, %v216
        %v286 = vmul.f32 %v282, %v282
        %v287 = vmul.f32 %v283, %v283
        %v288 = vmul.f32 %v284, %v284
        %v289 = vmul.f32 %v285, %v285
        %v290 = vsub.f32 0.0, %v286
        %v291 = vsub.f32 0.0, %v287
        %v292 = vsub.f32 0.0, %v288
        %v293 = vsub.f32 0.0, %v289
        %v294 = vmul.f32 %v290, 1.442695
        %v295 = vpow.pop %v294
        %v296 = vmul.f32 %v291, 1.442695
        %v297 = vpow.pop %v296
        %v298 = vmul.f32 %v292, 1.442695
        %v299 = vpow.pop %v298
        %v300 = vmul.f32 %v293, 1.442695
        %v301 = vpow.pop %v300
        %v302 = vadd.f32 %v274, %v295
        %v303 = vadd.f32 %v275, %v297
        %v304 = vadd.f32 %v276, %v299
        %v305 = vadd.f32 %v277, %v301
        %306 = vset.pattern.permute.xlu0 3
        %307 = vperm.xlu0 %306, %v191
        %v308 = vpop.permute.xlu0 %307
        %v310 = vsub.f32 %v308, %v213
        %v311 = vsub.f32 %v308, %v214
        %v312 = vsub.f32 %v308, %v215
        %v313 = vsub.f32 %v308, %v216
        %v314 = vmul.f32 %v310, %v310
        %v315 = vmul.f32 %v311, %v311
        %v316 = vmul.f32 %v312, %v312
        %v317 = vmul.f32 %v313, %v313
        %v318 = vsub.f32 0.0, %v314
        %v319 = vsub.f32 0.0, %v315
        %v320 = vsub.f32 0.0, %v316
        %v321 = vsub.f32 0.0, %v317
        %v322 = vmul.f32 %v318, 1.442695
        %v323 = vpow.pop %v322
        %v324 = vmul.f32 %v319, 1.442695
        %v325 = vpow.pop %v324
        %v326 = vmul.f32 %v320, 1.442695
        %v327 = vpow.pop %v326
        %v328 = vmul.f32 %v321, 1.442695
        %v329 = vpow.pop %v328
        %v330 = vadd.f32 %v302, %v323
        %v331 = vadd.f32 %v303, %v325
        %v332 = vadd.f32 %v304, %v327
        %v333 = vadd.f32 %v305, %v329
        %334 = vset.pattern.permute.xlu0 4
        %335 = vperm.xlu0 %334, %v191
        %v336 = vpop.permute.xlu0 %335
        %v338 = vsub.f32 %v336, %v213
        %v339 = vsub.f32 %v336, %v214
        %v340 = vsub.f32 %v336, %v215
        %v341 = vsub.f32 %v336, %v216
        %v342 = vmul.f32 %v338, %v338
        %v343 = vmul.f32 %v339, %v339
        %v344 = vmul.f32 %v340, %v340
        %v345 = vmul.f32 %v341, %v341
        %v346 = vsub.f32 0.0, %v342
        %v347 = vsub.f32 0.0, %v343
        %v348 = vsub.f32 0.0, %v344
        %v349 = vsub.f32 0.0, %v345
        %v350 = vmul.f32 %v346, 1.442695
        %v351 = vpow.pop %v350
        %v352 = vmul.f32 %v347, 1.442695
        %v353 = vpow.pop %v352
        %v354 = vmul.f32 %v348, 1.442695
        %v355 = vpow.pop %v354
        %v356 = vmul.f32 %v349, 1.442695
        %v357 = vpow.pop %v356
        %v358 = vadd.f32 %v330, %v351
        %v359 = vadd.f32 %v331, %v353
        %v360 = vadd.f32 %v332, %v355
        %v361 = vadd.f32 %v333, %v357
        %362 = vset.pattern.permute.xlu0 5
        %363 = vperm.xlu0 %362, %v191
        %v364 = vpop.permute.xlu0 %363
        %v366 = vsub.f32 %v364, %v213
        %v367 = vsub.f32 %v364, %v214
        %v368 = vsub.f32 %v364, %v215
        %v369 = vsub.f32 %v364, %v216
        %v370 = vmul.f32 %v366, %v366
        %v371 = vmul.f32 %v367, %v367
        %v372 = vmul.f32 %v368, %v368
        %v373 = vmul.f32 %v369, %v369
        %v374 = vsub.f32 0.0, %v370
        %v375 = vsub.f32 0.0, %v371
        %v376 = vsub.f32 0.0, %v372
        %v377 = vsub.f32 0.0, %v373
        %v378 = vmul.f32 %v374, 1.442695
        %v379 = vpow.pop %v378
        %v380 = vmul.f32 %v375, 1.442695
        %v381 = vpow.pop %v380
        %v382 = vmul.f32 %v376, 1.442695
        %v383 = vpow.pop %v382
        %v384 = vmul.f32 %v377, 1.442695
        %v385 = vpow.pop %v384
        %v386 = vadd.f32 %v358, %v379
        %v387 = vadd.f32 %v359, %v381
        %v388 = vadd.f32 %v360, %v383
        %v389 = vadd.f32 %v361, %v385
        %390 = vset.pattern.permute.xlu0 6
        %391 = vperm.xlu0 %390, %v191
        %v392 = vpop.permute.xlu0 %391
        %v394 = vsub.f32 %v392, %v213
        %v395 = vsub.f32 %v392, %v214
        %v396 = vsub.f32 %v392, %v215
        %v397 = vsub.f32 %v392, %v216
        %v398 = vmul.f32 %v394, %v394
        %v399 = vmul.f32 %v395, %v395
        %v400 = vmul.f32 %v396, %v396
        %v401 = vmul.f32 %v397, %v397
        %v402 = vsub.f32 0.0, %v398
        %v403 = vsub.f32 0.0, %v399
        %v404 = vsub.f32 0.0, %v400
        %v405 = vsub.f32 0.0, %v401
        %v406 = vmul.f32 %v402, 1.442695
        %v407 = vpow.pop %v406
        %v408 = vmul.f32 %v403, 1.442695
        %v409 = vpow.pop %v408
        %v410 = vmul.f32 %v404, 1.442695
        %v411 = vpow.pop %v410
        %v412 = vmul.f32 %v405, 1.442695
        %v413 = vpow.pop %v412
        %v414 = vadd.f32 %v386, %v407
        %v415 = vadd.f32 %v387, %v409
        %v416 = vadd.f32 %v388, %v411
        %v417 = vadd.f32 %v389, %v413
        %418 = vset.pattern.permute.xlu0 7
        %419 = vperm.xlu0 %418, %v191
        %v420 = vpop.permute.xlu0 %419
        %v422 = vsub.f32 %v420, %v213
        %v423 = vsub.f32 %v420, %v214
        %v424 = vsub.f32 %v420, %v215
        %v425 = vsub.f32 %v420, %v216
        %v426 = vmul.f32 %v422, %v422
        %v427 = vmul.f32 %v423, %v423
        %v428 = vmul.f32 %v424, %v424
        %v429 = vmul.f32 %v425, %v425
        %v430 = vsub.f32 0.0, %v426
        %v431 = vsub.f32 0.0, %v427
        %v432 = vsub.f32 0.0, %v428
        %v433 = vsub.f32 0.0, %v429
        %v434 = vmul.f32 %v430, 1.442695
        %v435 = vpow.pop %v434
        %v436 = vmul.f32 %v431, 1.442695
        %v437 = vpow.pop %v436
        %v438 = vmul.f32 %v432, 1.442695
        %v439 = vpow.pop %v438
        %v440 = vmul.f32 %v433, 1.442695
        %v441 = vpow.pop %v440
        %v442 = vadd.f32 %v414, %v435
        %v443 = vadd.f32 %v415, %v437
        %v444 = vadd.f32 %v416, %v439
        %v445 = vadd.f32 %v417, %v441
        %446 = vset.pattern.permute.xlu0 8
        %447 = vperm.xlu0 %446, %v191
        %v448 = vpop.permute.xlu0 %447
        %v450 = vsub.f32 %v448, %v213
        %v451 = vsub.f32 %v448, %v214
        %v452 = vsub.f32 %v448, %v215
        %v453 = vsub.f32 %v448, %v216
        %v454 = vmul.f32 %v450, %v450
        %v455 = vmul.f32 %v451, %v451
        %v456 = vmul.f32 %v452, %v452
        %v457 = vmul.f32 %v453, %v453
        %v458 = vsub.f32 0.0, %v454
        %v459 = vsub.f32 0.0, %v455
        %v460 = vsub.f32 0.0, %v456
        %v461 = vsub.f32 0.0, %v457
        %v462 = vmul.f32 %v458, 1.442695
        %v463 = vpow.pop %v462
        %v464 = vmul.f32 %v459, 1.442695
        %v465 = vpow.pop %v464
        %v466 = vmul.f32 %v460, 1.442695
        %v467 = vpow.pop %v466
        %v468 = vmul.f32 %v461, 1.442695
        %v469 = vpow.pop %v468
        %v470 = vadd.f32 %v442, %v463
        %v471 = vadd.f32 %v443, %v465
        %v472 = vadd.f32 %v444, %v467
        %v473 = vadd.f32 %v445, %v469
        %474 = vset.pattern.permute.xlu0 9
        %475 = vperm.xlu0 %474, %v191
        %v476 = vpop.permute.xlu0 %475
        %v478 = vsub.f32 %v476, %v213
        %v479 = vsub.f32 %v476, %v214
        %v480 = vsub.f32 %v476, %v215
        %v481 = vsub.f32 %v476, %v216
        %v482 = vmul.f32 %v478, %v478
        %v483 = vmul.f32 %v479, %v479
        %v484 = vmul.f32 %v480, %v480
        %v485 = vmul.f32 %v481, %v481
        %v486 = vsub.f32 0.0, %v482
        %v487 = vsub.f32 0.0, %v483
        %v488 = vsub.f32 0.0, %v484
        %v489 = vsub.f32 0.0, %v485
        %v490 = vmul.f32 %v486, 1.442695
        %v491 = vpow.pop %v490
        %v492 = vmul.f32 %v487, 1.442695
        %v493 = vpow.pop %v492
        %v494 = vmul.f32 %v488, 1.442695
        %v495 = vpow.pop %v494
        %v496 = vmul.f32 %v489, 1.442695
        %v497 = vpow.pop %v496
        %v498 = vadd.f32 %v470, %v491
        %v499 = vadd.f32 %v471, %v493
        %v500 = vadd.f32 %v472, %v495
        %v501 = vadd.f32 %v473, %v497
        %502 = vset.pattern.permute.xlu0 10
        %503 = vperm.xlu0 %502, %v191
        %v504 = vpop.permute.xlu0 %503
        %v506 = vsub.f32 %v504, %v213
        %v507 = vsub.f32 %v504, %v214
        %v508 = vsub.f32 %v504, %v215
        %v509 = vsub.f32 %v504, %v216
        %v510 = vmul.f32 %v506, %v506
        %v511 = vmul.f32 %v507, %v507
        %v512 = vmul.f32 %v508, %v508
        %v513 = vmul.f32 %v509, %v509
        %v514 = vsub.f32 0.0, %v510
        %v515 = vsub.f32 0.0, %v511
        %v516 = vsub.f32 0.0, %v512
        %v517 = vsub.f32 0.0, %v513
        %v518 = vmul.f32 %v514, 1.442695
        %v519 = vpow.pop %v518
        %v520 = vmul.f32 %v515, 1.442695
        %v521 = vpow.pop %v520
        %v522 = vmul.f32 %v516, 1.442695
        %v523 = vpow.pop %v522
        %v524 = vmul.f32 %v517, 1.442695
        %v525 = vpow.pop %v524
        %v526 = vadd.f32 %v498, %v519
        %v527 = vadd.f32 %v499, %v521
        %v528 = vadd.f32 %v500, %v523
        %v529 = vadd.f32 %v501, %v525
        %530 = vset.pattern.permute.xlu0 11
        %531 = vperm.xlu0 %530, %v191
        %v532 = vpop.permute.xlu0 %531
        %v534 = vsub.f32 %v532, %v213
        %v535 = vsub.f32 %v532, %v214
        %v536 = vsub.f32 %v532, %v215
        %v537 = vsub.f32 %v532, %v216
        %v538 = vmul.f32 %v534, %v534
        %v539 = vmul.f32 %v535, %v535
        %v540 = vmul.f32 %v536, %v536
        %v541 = vmul.f32 %v537, %v537
        %v542 = vsub.f32 0.0, %v538
        %v543 = vsub.f32 0.0, %v539
        %v544 = vsub.f32 0.0, %v540
        %v545 = vsub.f32 0.0, %v541
        %v546 = vmul.f32 %v542, 1.442695
        %v547 = vpow.pop %v546
        %v548 = vmul.f32 %v543, 1.442695
        %v549 = vpow.pop %v548
        %v550 = vmul.f32 %v544, 1.442695
        %v551 = vpow.pop %v550
        %v552 = vmul.f32 %v545, 1.442695
        %v553 = vpow.pop %v552
        %v554 = vadd.f32 %v526, %v547
        %v555 = vadd.f32 %v527, %v549
        %v556 = vadd.f32 %v528, %v551
        %v557 = vadd.f32 %v529, %v553
        %558 = vset.pattern.permute.xlu0 12
        %559 = vperm.xlu0 %558, %v191
        %v560 = vpop.permute.xlu0 %559
        %v562 = vsub.f32 %v560, %v213
        %v563 = vsub.f32 %v560, %v214
        %v564 = vsub.f32 %v560, %v215
        %v565 = vsub.f32 %v560, %v216
        %v566 = vmul.f32 %v562, %v562
        %v567 = vmul.f32 %v563, %v563
        %v568 = vmul.f32 %v564, %v564
        %v569 = vmul.f32 %v565, %v565
        %v570 = vsub.f32 0.0, %v566
        %v571 = vsub.f32 0.0, %v567
        %v572 = vsub.f32 0.0, %v568
        %v573 = vsub.f32 0.0, %v569
        %v574 = vmul.f32 %v570, 1.442695
        %v575 = vpow.pop %v574
        %v576 = vmul.f32 %v571, 1.442695
        %v577 = vpow.pop %v576
        %v578 = vmul.f32 %v572, 1.442695
        %v579 = vpow.pop %v578
        %v580 = vmul.f32 %v573, 1.442695
        %v581 = vpow.pop %v580
        %v582 = vadd.f32 %v554, %v575
        %v583 = vadd.f32 %v555, %v577
        %v584 = vadd.f32 %v556, %v579
        %v585 = vadd.f32 %v557, %v581
        %586 = vset.pattern.permute.xlu0 13
        %587 = vperm.xlu0 %586, %v191
        %v588 = vpop.permute.xlu0 %587
        %v590 = vsub.f32 %v588, %v213
        %v591 = vsub.f32 %v588, %v214
        %v592 = vsub.f32 %v588, %v215
        %v593 = vsub.f32 %v588, %v216
        %v594 = vmul.f32 %v590, %v590
        %v595 = vmul.f32 %v591, %v591
        %v596 = vmul.f32 %v592, %v592
        %v597 = vmul.f32 %v593, %v593
        %v598 = vsub.f32 0.0, %v594
        %v599 = vsub.f32 0.0, %v595
        %v600 = vsub.f32 0.0, %v596
        %v601 = vsub.f32 0.0, %v597
        %v602 = vmul.f32 %v598, 1.442695
        %v603 = vpow.pop %v602
        %v604 = vmul.f32 %v599, 1.442695
        %v605 = vpow.pop %v604
        %v606 = vmul.f32 %v600, 1.442695
        %v607 = vpow.pop %v606
        %v608 = vmul.f32 %v601, 1.442695
        %v609 = vpow.pop %v608
        %v610 = vadd.f32 %v582, %v603
        %v611 = vadd.f32 %v583, %v605
        %v612 = vadd.f32 %v584, %v607
        %v613 = vadd.f32 %v585, %v609
        %614 = vset.pattern.permute.xlu0 14
        %615 = vperm.xlu0 %614, %v191
        %v616 = vpop.permute.xlu0 %615
        %v618 = vsub.f32 %v616, %v213
        %v619 = vsub.f32 %v616, %v214
        %v620 = vsub.f32 %v616, %v215
        %v621 = vsub.f32 %v616, %v216
        %v622 = vmul.f32 %v618, %v618
        %v623 = vmul.f32 %v619, %v619
        %v624 = vmul.f32 %v620, %v620
        %v625 = vmul.f32 %v621, %v621
        %v626 = vsub.f32 0.0, %v622
        %v627 = vsub.f32 0.0, %v623
        %v628 = vsub.f32 0.0, %v624
        %v629 = vsub.f32 0.0, %v625
        %v630 = vmul.f32 %v626, 1.442695
        %v631 = vpow.pop %v630
        %v632 = vmul.f32 %v627, 1.442695
        %v633 = vpow.pop %v632
        %v634 = vmul.f32 %v628, 1.442695
        %v635 = vpow.pop %v634
        %v636 = vmul.f32 %v629, 1.442695
        %v637 = vpow.pop %v636
        %v638 = vadd.f32 %v610, %v631
        %v639 = vadd.f32 %v611, %v633
        %v640 = vadd.f32 %v612, %v635
        %v641 = vadd.f32 %v613, %v637
        %642 = vset.pattern.permute.xlu0 15
        %643 = vperm.xlu0 %642, %v191
        %v644 = vpop.permute.xlu0 %643
        %v646 = vsub.f32 %v644, %v213
        %v647 = vsub.f32 %v644, %v214
        %v648 = vsub.f32 %v644, %v215
        %v649 = vsub.f32 %v644, %v216
        %v650 = vmul.f32 %v646, %v646
        %v651 = vmul.f32 %v647, %v647
        %v652 = vmul.f32 %v648, %v648
        %v653 = vmul.f32 %v649, %v649
        %v654 = vsub.f32 0.0, %v650
        %v655 = vsub.f32 0.0, %v651
        %v656 = vsub.f32 0.0, %v652
        %v657 = vsub.f32 0.0, %v653
        %v658 = vmul.f32 %v654, 1.442695
        %v659 = vpow.pop %v658
        %v660 = vmul.f32 %v655, 1.442695
        %v661 = vpow.pop %v660
        %v662 = vmul.f32 %v656, 1.442695
        %v663 = vpow.pop %v662
        %v664 = vmul.f32 %v657, 1.442695
        %v665 = vpow.pop %v664
        %v666 = vadd.f32 %v638, %v659
        %v667 = vadd.f32 %v639, %v661
        %v668 = vadd.f32 %v640, %v663
        %v669 = vadd.f32 %v641, %v665
        %670 = vset.pattern.permute.xlu0 16
        %671 = vperm.xlu0 %670, %v191
        %v672 = vpop.permute.xlu0 %671
        %v674 = vsub.f32 %v672, %v213
        %v675 = vsub.f32 %v672, %v214
        %v676 = vsub.f32 %v672, %v215
        %v677 = vsub.f32 %v672, %v216
        %v678 = vmul.f32 %v674, %v674
        %v679 = vmul.f32 %v675, %v675
        %v680 = vmul.f32 %v676, %v676
        %v681 = vmul.f32 %v677, %v677
        %v682 = vsub.f32 0.0, %v678
        %v683 = vsub.f32 0.0, %v679
        %v684 = vsub.f32 0.0, %v680
        %v685 = vsub.f32 0.0, %v681
        %v686 = vmul.f32 %v682, 1.442695
        %v687 = vpow.pop %v686
        %v688 = vmul.f32 %v683, 1.442695
        %v689 = vpow.pop %v688
        %v690 = vmul.f32 %v684, 1.442695
        %v691 = vpow.pop %v690
        %v692 = vmul.f32 %v685, 1.442695
        %v693 = vpow.pop %v692
        %v694 = vadd.f32 %v666, %v687
        %v695 = vadd.f32 %v667, %v689
        %v696 = vadd.f32 %v668, %v691
        %v697 = vadd.f32 %v669, %v693
        %698 = vset.pattern.permute.xlu0 17
        %699 = vperm.xlu0 %698, %v191
        %v700 = vpop.permute.xlu0 %699
        %v702 = vsub.f32 %v700, %v213
        %v703 = vsub.f32 %v700, %v214
        %v704 = vsub.f32 %v700, %v215
        %v705 = vsub.f32 %v700, %v216
        %v706 = vmul.f32 %v702, %v702
        %v707 = vmul.f32 %v703, %v703
        %v708 = vmul.f32 %v704, %v704
        %v709 = vmul.f32 %v705, %v705
        %v710 = vsub.f32 0.0, %v706
        %v711 = vsub.f32 0.0, %v707
        %v712 = vsub.f32 0.0, %v708
        %v713 = vsub.f32 0.0, %v709
        %v714 = vmul.f32 %v710, 1.442695
        %v715 = vpow.pop %v714
        %v716 = vmul.f32 %v711, 1.442695
        %v717 = vpow.pop %v716
        %v718 = vmul.f32 %v712, 1.442695
        %v719 = vpow.pop %v718
        %v720 = vmul.f32 %v713, 1.442695
        %v721 = vpow.pop %v720
        %v722 = vadd.f32 %v694, %v715
        %v723 = vadd.f32 %v695, %v717
        %v724 = vadd.f32 %v696, %v719
        %v725 = vadd.f32 %v697, %v721
        %726 = vset.pattern.permute.xlu0 18
        %727 = vperm.xlu0 %726, %v191
        %v728 = vpop.permute.xlu0 %727
        %v730 = vsub.f32 %v728, %v213
        %v731 = vsub.f32 %v728, %v214
        %v732 = vsub.f32 %v728, %v215
        %v733 = vsub.f32 %v728, %v216
        %v734 = vmul.f32 %v730, %v730
        %v735 = vmul.f32 %v731, %v731
        %v736 = vmul.f32 %v732, %v732
        %v737 = vmul.f32 %v733, %v733
        %v738 = vsub.f32 0.0, %v734
        %v739 = vsub.f32 0.0, %v735
        %v740 = vsub.f32 0.0, %v736
        %v741 = vsub.f32 0.0, %v737
        %v742 = vmul.f32 %v738, 1.442695
        %v743 = vpow.pop %v742
        %v744 = vmul.f32 %v739, 1.442695
        %v745 = vpow.pop %v744
        %v746 = vmul.f32 %v740, 1.442695
        %v747 = vpow.pop %v746
        %v748 = vmul.f32 %v741, 1.442695
        %v749 = vpow.pop %v748
        %v750 = vadd.f32 %v722, %v743
        %v751 = vadd.f32 %v723, %v745
        %v752 = vadd.f32 %v724, %v747
        %v753 = vadd.f32 %v725, %v749
        %754 = vset.pattern.permute.xlu0 19
        %755 = vperm.xlu0 %754, %v191
        %v756 = vpop.permute.xlu0 %755
        %v758 = vsub.f32 %v756, %v213
        %v759 = vsub.f32 %v756, %v214
        %v760 = vsub.f32 %v756, %v215
        %v761 = vsub.f32 %v756, %v216
        %v762 = vmul.f32 %v758, %v758
        %v763 = vmul.f32 %v759, %v759
        %v764 = vmul.f32 %v760, %v760
        %v765 = vmul.f32 %v761, %v761
        %v766 = vsub.f32 0.0, %v762
        %v767 = vsub.f32 0.0, %v763
        %v768 = vsub.f32 0.0, %v764
        %v769 = vsub.f32 0.0, %v765
        %v770 = vmul.f32 %v766, 1.442695
        %v771 = vpow.pop %v770
        %v772 = vmul.f32 %v767, 1.442695
        %v773 = vpow.pop %v772
        %v774 = vmul.f32 %v768, 1.442695
        %v775 = vpow.pop %v774
        %v776 = vmul.f32 %v769, 1.442695
        %v777 = vpow.pop %v776
        %v778 = vadd.f32 %v750, %v771
        %v779 = vadd.f32 %v751, %v773
        %v780 = vadd.f32 %v752, %v775
        %v781 = vadd.f32 %v753, %v777
        %782 = vset.pattern.permute.xlu0 20
        %783 = vperm.xlu0 %782, %v191
        %v784 = vpop.permute.xlu0 %783
        %v786 = vsub.f32 %v784, %v213
        %v787 = vsub.f32 %v784, %v214
        %v788 = vsub.f32 %v784, %v215
        %v789 = vsub.f32 %v784, %v216
        %v790 = vmul.f32 %v786, %v786
        %v791 = vmul.f32 %v787, %v787
        %v792 = vmul.f32 %v788, %v788
        %v793 = vmul.f32 %v789, %v789
        %v794 = vsub.f32 0.0, %v790
        %v795 = vsub.f32 0.0, %v791
        %v796 = vsub.f32 0.0, %v792
        %v797 = vsub.f32 0.0, %v793
        %v798 = vmul.f32 %v794, 1.442695
        %v799 = vpow.pop %v798
        %v800 = vmul.f32 %v795, 1.442695
        %v801 = vpow.pop %v800
        %v802 = vmul.f32 %v796, 1.442695
        %v803 = vpow.pop %v802
        %v804 = vmul.f32 %v797, 1.442695
        %v805 = vpow.pop %v804
        %v806 = vadd.f32 %v778, %v799
        %v807 = vadd.f32 %v779, %v801
        %v808 = vadd.f32 %v780, %v803
        %v809 = vadd.f32 %v781, %v805
        %810 = vset.pattern.permute.xlu0 21
        %811 = vperm.xlu0 %810, %v191
        %v812 = vpop.permute.xlu0 %811
        %v814 = vsub.f32 %v812, %v213
        %v815 = vsub.f32 %v812, %v214
        %v816 = vsub.f32 %v812, %v215
        %v817 = vsub.f32 %v812, %v216
        %v818 = vmul.f32 %v814, %v814
        %v819 = vmul.f32 %v815, %v815
        %v820 = vmul.f32 %v816, %v816
        %v821 = vmul.f32 %v817, %v817
        %v822 = vsub.f32 0.0, %v818
        %v823 = vsub.f32 0.0, %v819
        %v824 = vsub.f32 0.0, %v820
        %v825 = vsub.f32 0.0, %v821
        %v826 = vmul.f32 %v822, 1.442695
        %v827 = vpow.pop %v826
        %v828 = vmul.f32 %v823, 1.442695
        %v829 = vpow.pop %v828
        %v830 = vmul.f32 %v824, 1.442695
        %v831 = vpow.pop %v830
        %v832 = vmul.f32 %v825, 1.442695
        %v833 = vpow.pop %v832
        %v834 = vadd.f32 %v806, %v827
        %v835 = vadd.f32 %v807, %v829
        %v836 = vadd.f32 %v808, %v831
        %v837 = vadd.f32 %v809, %v833
        %838 = vset.pattern.permute.xlu0 22
        %839 = vperm.xlu0 %838, %v191
        %v840 = vpop.permute.xlu0 %839
        %v842 = vsub.f32 %v840, %v213
        %v843 = vsub.f32 %v840, %v214
        %v844 = vsub.f32 %v840, %v215
        %v845 = vsub.f32 %v840, %v216
        %v846 = vmul.f32 %v842, %v842
        %v847 = vmul.f32 %v843, %v843
        %v848 = vmul.f32 %v844, %v844
        %v849 = vmul.f32 %v845, %v845
        %v850 = vsub.f32 0.0, %v846
        %v851 = vsub.f32 0.0, %v847
        %v852 = vsub.f32 0.0, %v848
        %v853 = vsub.f32 0.0, %v849
        %v854 = vmul.f32 %v850, 1.442695
        %v855 = vpow.pop %v854
        %v856 = vmul.f32 %v851, 1.442695
        %v857 = vpow.pop %v856
        %v858 = vmul.f32 %v852, 1.442695
        %v859 = vpow.pop %v858
        %v860 = vmul.f32 %v853, 1.442695
        %v861 = vpow.pop %v860
        %v862 = vadd.f32 %v834, %v855
        %v863 = vadd.f32 %v835, %v857
        %v864 = vadd.f32 %v836, %v859
        %v865 = vadd.f32 %v837, %v861
        %866 = vset.pattern.permute.xlu0 23
        %867 = vperm.xlu0 %866, %v191
        %v868 = vpop.permute.xlu0 %867
        %v870 = vsub.f32 %v868, %v213
        %v871 = vsub.f32 %v868, %v214
        %v872 = vsub.f32 %v868, %v215
        %v873 = vsub.f32 %v868, %v216
        %v874 = vmul.f32 %v870, %v870
        %v875 = vmul.f32 %v871, %v871
        %v876 = vmul.f32 %v872, %v872
        %v877 = vmul.f32 %v873, %v873
        %v878 = vsub.f32 0.0, %v874
        %v879 = vsub.f32 0.0, %v875
        %v880 = vsub.f32 0.0, %v876
        %v881 = vsub.f32 0.0, %v877
        %v882 = vmul.f32 %v878, 1.442695
        %v883 = vpow.pop %v882
        %v884 = vmul.f32 %v879, 1.442695
        %v885 = vpow.pop %v884
        %v886 = vmul.f32 %v880, 1.442695
        %v887 = vpow.pop %v886
        %v888 = vmul.f32 %v881, 1.442695
        %v889 = vpow.pop %v888
        %v890 = vadd.f32 %v862, %v883
        %v891 = vadd.f32 %v863, %v885
        %v892 = vadd.f32 %v864, %v887
        %v893 = vadd.f32 %v865, %v889
        %894 = vset.pattern.permute.xlu0 24
        %895 = vperm.xlu0 %894, %v191
        %v896 = vpop.permute.xlu0 %895
        %v898 = vsub.f32 %v896, %v213
        %v899 = vsub.f32 %v896, %v214
        %v900 = vsub.f32 %v896, %v215
        %v901 = vsub.f32 %v896, %v216
        %v902 = vmul.f32 %v898, %v898
        %v903 = vmul.f32 %v899, %v899
        %v904 = vmul.f32 %v900, %v900
        %v905 = vmul.f32 %v901, %v901
        %v906 = vsub.f32 0.0, %v902
        %v907 = vsub.f32 0.0, %v903
        %v908 = vsub.f32 0.0, %v904
        %v909 = vsub.f32 0.0, %v905
        %v910 = vmul.f32 %v906, 1.442695
        %v911 = vpow.pop %v910
        %v912 = vmul.f32 %v907, 1.442695
        %v913 = vpow.pop %v912
        %v914 = vmul.f32 %v908, 1.442695
        %v915 = vpow.pop %v914
        %v916 = vmul.f32 %v909, 1.442695
        %v917 = vpow.pop %v916
        %v918 = vadd.f32 %v890, %v911
        %v919 = vadd.f32 %v891, %v913
        %v920 = vadd.f32 %v892, %v915
        %v921 = vadd.f32 %v893, %v917
        %922 = vset.pattern.permute.xlu0 25
        %923 = vperm.xlu0 %922, %v191
        %v924 = vpop.permute.xlu0 %923
        %v926 = vsub.f32 %v924, %v213
        %v927 = vsub.f32 %v924, %v214
        %v928 = vsub.f32 %v924, %v215
        %v929 = vsub.f32 %v924, %v216
        %v930 = vmul.f32 %v926, %v926
        %v931 = vmul.f32 %v927, %v927
        %v932 = vmul.f32 %v928, %v928
        %v933 = vmul.f32 %v929, %v929
        %v934 = vsub.f32 0.0, %v930
        %v935 = vsub.f32 0.0, %v931
        %v936 = vsub.f32 0.0, %v932
        %v937 = vsub.f32 0.0, %v933
        %v938 = vmul.f32 %v934, 1.442695
        %v939 = vpow.pop %v938
        %v940 = vmul.f32 %v935, 1.442695
        %v941 = vpow.pop %v940
        %v942 = vmul.f32 %v936, 1.442695
        %v943 = vpow.pop %v942
        %v944 = vmul.f32 %v937, 1.442695
        %v945 = vpow.pop %v944
        %v946 = vadd.f32 %v918, %v939
        %v947 = vadd.f32 %v919, %v941
        %v948 = vadd.f32 %v920, %v943
        %v949 = vadd.f32 %v921, %v945
        %950 = vset.pattern.permute.xlu0 26
        %951 = vperm.xlu0 %950, %v191
        %v952 = vpop.permute.xlu0 %951
        %v954 = vsub.f32 %v952, %v213
        %v955 = vsub.f32 %v952, %v214
        %v956 = vsub.f32 %v952, %v215
        %v957 = vsub.f32 %v952, %v216
        %v958 = vmul.f32 %v954, %v954
        %v959 = vmul.f32 %v955, %v955
        %v960 = vmul.f32 %v956, %v956
        %v961 = vmul.f32 %v957, %v957
        %v962 = vsub.f32 0.0, %v958
        %v963 = vsub.f32 0.0, %v959
        %v964 = vsub.f32 0.0, %v960
        %v965 = vsub.f32 0.0, %v961
        %v966 = vmul.f32 %v962, 1.442695
        %v967 = vpow.pop %v966
        %v968 = vmul.f32 %v963, 1.442695
        %v969 = vpow.pop %v968
        %v970 = vmul.f32 %v964, 1.442695
        %v971 = vpow.pop %v970
        %v972 = vmul.f32 %v965, 1.442695
        %v973 = vpow.pop %v972
        %v974 = vadd.f32 %v946, %v967
        %v975 = vadd.f32 %v947, %v969
        %v976 = vadd.f32 %v948, %v971
        %v977 = vadd.f32 %v949, %v973
        %978 = vset.pattern.permute.xlu0 27
        %979 = vperm.xlu0 %978, %v191
        %v980 = vpop.permute.xlu0 %979
        %v982 = vsub.f32 %v980, %v213
        %v983 = vsub.f32 %v980, %v214
        %v984 = vsub.f32 %v980, %v215
        %v985 = vsub.f32 %v980, %v216
        %v986 = vmul.f32 %v982, %v982
        %v987 = vmul.f32 %v983, %v983
        %v988 = vmul.f32 %v984, %v984
        %v989 = vmul.f32 %v985, %v985
        %v990 = vsub.f32 0.0, %v986
        %v991 = vsub.f32 0.0, %v987
        %v992 = vsub.f32 0.0, %v988
        %v993 = vsub.f32 0.0, %v989
        %v994 = vmul.f32 %v990, 1.442695
        %v995 = vpow.pop %v994
        %v996 = vmul.f32 %v991, 1.442695
        %v997 = vpow.pop %v996
        %v998 = vmul.f32 %v992, 1.442695
        %v999 = vpow.pop %v998
        %v1000 = vmul.f32 %v993, 1.442695
        %v1001 = vpow.pop %v1000
        %v1002 = vadd.f32 %v974, %v995
        %v1003 = vadd.f32 %v975, %v997
        %v1004 = vadd.f32 %v976, %v999
        %v1005 = vadd.f32 %v977, %v1001
        %1006 = vset.pattern.permute.xlu0 28
        %1007 = vperm.xlu0 %1006, %v191
        %v1008 = vpop.permute.xlu0 %1007
        %v1010 = vsub.f32 %v1008, %v213
        %v1011 = vsub.f32 %v1008, %v214
        %v1012 = vsub.f32 %v1008, %v215
        %v1013 = vsub.f32 %v1008, %v216
        %v1014 = vmul.f32 %v1010, %v1010
        %v1015 = vmul.f32 %v1011, %v1011
        %v1016 = vmul.f32 %v1012, %v1012
        %v1017 = vmul.f32 %v1013, %v1013
        %v1018 = vsub.f32 0.0, %v1014
        %v1019 = vsub.f32 0.0, %v1015
        %v1020 = vsub.f32 0.0, %v1016
        %v1021 = vsub.f32 0.0, %v1017
        %v1022 = vmul.f32 %v1018, 1.442695
        %v1023 = vpow.pop %v1022
        %v1024 = vmul.f32 %v1019, 1.442695
        %v1025 = vpow.pop %v1024
        %v1026 = vmul.f32 %v1020, 1.442695
        %v1027 = vpow.pop %v1026
        %v1028 = vmul.f32 %v1021, 1.442695
        %v1029 = vpow.pop %v1028
        %v1030 = vadd.f32 %v1002, %v1023
        %v1031 = vadd.f32 %v1003, %v1025
        %v1032 = vadd.f32 %v1004, %v1027
        %v1033 = vadd.f32 %v1005, %v1029
        %1034 = vset.pattern.permute.xlu0 29
        %1035 = vperm.xlu0 %1034, %v191
        %v1036 = vpop.permute.xlu0 %1035
        %v1038 = vsub.f32 %v1036, %v213
        %v1039 = vsub.f32 %v1036, %v214
        %v1040 = vsub.f32 %v1036, %v215
        %v1041 = vsub.f32 %v1036, %v216
        %v1042 = vmul.f32 %v1038, %v1038
        %v1043 = vmul.f32 %v1039, %v1039
        %v1044 = vmul.f32 %v1040, %v1040
        %v1045 = vmul.f32 %v1041, %v1041
        %v1046 = vsub.f32 0.0, %v1042
        %v1047 = vsub.f32 0.0, %v1043
        %v1048 = vsub.f32 0.0, %v1044
        %v1049 = vsub.f32 0.0, %v1045
        %v1050 = vmul.f32 %v1046, 1.442695
        %v1051 = vpow.pop %v1050
        %v1052 = vmul.f32 %v1047, 1.442695
        %v1053 = vpow.pop %v1052
        %v1054 = vmul.f32 %v1048, 1.442695
        %v1055 = vpow.pop %v1054
        %v1056 = vmul.f32 %v1049, 1.442695
        %v1057 = vpow.pop %v1056
        %v1058 = vadd.f32 %v1030, %v1051
        %v1059 = vadd.f32 %v1031, %v1053
        %v1060 = vadd.f32 %v1032, %v1055
        %v1061 = vadd.f32 %v1033, %v1057
        %1062 = vset.pattern.permute.xlu0 30
        %1063 = vperm.xlu0 %1062, %v191
        %v1064 = vpop.permute.xlu0 %1063
        %v1066 = vsub.f32 %v1064, %v213
        %v1067 = vsub.f32 %v1064, %v214
        %v1068 = vsub.f32 %v1064, %v215
        %v1069 = vsub.f32 %v1064, %v216
        %v1070 = vmul.f32 %v1066, %v1066
        %v1071 = vmul.f32 %v1067, %v1067
        %v1072 = vmul.f32 %v1068, %v1068
        %v1073 = vmul.f32 %v1069, %v1069
        %v1074 = vsub.f32 0.0, %v1070
        %v1075 = vsub.f32 0.0, %v1071
        %v1076 = vsub.f32 0.0, %v1072
        %v1077 = vsub.f32 0.0, %v1073
        %v1078 = vmul.f32 %v1074, 1.442695
        %v1079 = vpow.pop %v1078
        %v1080 = vmul.f32 %v1075, 1.442695
        %v1081 = vpow.pop %v1080
        %v1082 = vmul.f32 %v1076, 1.442695
        %v1083 = vpow.pop %v1082
        %v1084 = vmul.f32 %v1077, 1.442695
        %v1085 = vpow.pop %v1084
        %v1086 = vadd.f32 %v1058, %v1079
        %v1087 = vadd.f32 %v1059, %v1081
        %v1088 = vadd.f32 %v1060, %v1083
        %v1089 = vadd.f32 %v1061, %v1085
        %1090 = vset.pattern.permute.xlu0 31
        %1091 = vperm.xlu0 %1090, %v191
        %v1092 = vpop.permute.xlu0 %1091
        %v1094 = vsub.f32 %v1092, %v213
        %v1095 = vsub.f32 %v1092, %v214
        %v1096 = vsub.f32 %v1092, %v215
        %v1097 = vsub.f32 %v1092, %v216
        %v1098 = vmul.f32 %v1094, %v1094
        %v1099 = vmul.f32 %v1095, %v1095
        %v1100 = vmul.f32 %v1096, %v1096
        %v1101 = vmul.f32 %v1097, %v1097
        %v1102 = vsub.f32 0.0, %v1098
        %v1103 = vsub.f32 0.0, %v1099
        %v1104 = vsub.f32 0.0, %v1100
        %v1105 = vsub.f32 0.0, %v1101
        %v1106 = vmul.f32 %v1102, 1.442695
        %v1107 = vpow.pop %v1106
        %v1108 = vmul.f32 %v1103, 1.442695
        %v1109 = vpow.pop %v1108
        %v1110 = vmul.f32 %v1104, 1.442695
        %v1111 = vpow.pop %v1110
        %v1112 = vmul.f32 %v1105, 1.442695
        %v1113 = vpow.pop %v1112
        %v1114 = vadd.f32 %v1086, %v1107
        %v1115 = vadd.f32 %v1087, %v1109
        %v1116 = vadd.f32 %v1088, %v1111
        %v1117 = vadd.f32 %v1089, %v1113
        %1118 = vset.pattern.permute.xlu0 32
        %1119 = vperm.xlu0 %1118, %v191
        %v1120 = vpop.permute.xlu0 %1119
        %v1122 = vsub.f32 %v1120, %v213
        %v1123 = vsub.f32 %v1120, %v214
        %v1124 = vsub.f32 %v1120, %v215
        %v1125 = vsub.f32 %v1120, %v216
        %v1126 = vmul.f32 %v1122, %v1122
        %v1127 = vmul.f32 %v1123, %v1123
        %v1128 = vmul.f32 %v1124, %v1124
        %v1129 = vmul.f32 %v1125, %v1125
        %v1130 = vsub.f32 0.0, %v1126
        %v1131 = vsub.f32 0.0, %v1127
        %v1132 = vsub.f32 0.0, %v1128
        %v1133 = vsub.f32 0.0, %v1129
        %v1134 = vmul.f32 %v1130, 1.442695
        %v1135 = vpow.pop %v1134
        %v1136 = vmul.f32 %v1131, 1.442695
        %v1137 = vpow.pop %v1136
        %v1138 = vmul.f32 %v1132, 1.442695
        %v1139 = vpow.pop %v1138
        %v1140 = vmul.f32 %v1133, 1.442695
        %v1141 = vpow.pop %v1140
        %v1142 = vadd.f32 %v1114, %v1135
        %v1143 = vadd.f32 %v1115, %v1137
        %v1144 = vadd.f32 %v1116, %v1139
        %v1145 = vadd.f32 %v1117, %v1141
        %1146 = vset.pattern.permute.xlu0 33
        %1147 = vperm.xlu0 %1146, %v191
        %v1148 = vpop.permute.xlu0 %1147
        %v1150 = vsub.f32 %v1148, %v213
        %v1151 = vsub.f32 %v1148, %v214
        %v1152 = vsub.f32 %v1148, %v215
        %v1153 = vsub.f32 %v1148, %v216
        %v1154 = vmul.f32 %v1150, %v1150
        %v1155 = vmul.f32 %v1151, %v1151
        %v1156 = vmul.f32 %v1152, %v1152
        %v1157 = vmul.f32 %v1153, %v1153
        %v1158 = vsub.f32 0.0, %v1154
        %v1159 = vsub.f32 0.0, %v1155
        %v1160 = vsub.f32 0.0, %v1156
        %v1161 = vsub.f32 0.0, %v1157
        %v1162 = vmul.f32 %v1158, 1.442695
        %v1163 = vpow.pop %v1162
        %v1164 = vmul.f32 %v1159, 1.442695
        %v1165 = vpow.pop %v1164
        %v1166 = vmul.f32 %v1160, 1.442695
        %v1167 = vpow.pop %v1166
        %v1168 = vmul.f32 %v1161, 1.442695
        %v1169 = vpow.pop %v1168
        %v1170 = vadd.f32 %v1142, %v1163
        %v1171 = vadd.f32 %v1143, %v1165
        %v1172 = vadd.f32 %v1144, %v1167
        %v1173 = vadd.f32 %v1145, %v1169
        %1174 = vset.pattern.permute.xlu0 34
        %1175 = vperm.xlu0 %1174, %v191
        %v1176 = vpop.permute.xlu0 %1175
        %v1178 = vsub.f32 %v1176, %v213
        %v1179 = vsub.f32 %v1176, %v214
        %v1180 = vsub.f32 %v1176, %v215
        %v1181 = vsub.f32 %v1176, %v216
        %v1182 = vmul.f32 %v1178, %v1178
        %v1183 = vmul.f32 %v1179, %v1179
        %v1184 = vmul.f32 %v1180, %v1180
        %v1185 = vmul.f32 %v1181, %v1181
        %v1186 = vsub.f32 0.0, %v1182
        %v1187 = vsub.f32 0.0, %v1183
        %v1188 = vsub.f32 0.0, %v1184
        %v1189 = vsub.f32 0.0, %v1185
        %v1190 = vmul.f32 %v1186, 1.442695
        %v1191 = vpow.pop %v1190
        %v1192 = vmul.f32 %v1187, 1.442695
        %v1193 = vpow.pop %v1192
        %v1194 = vmul.f32 %v1188, 1.442695
        %v1195 = vpow.pop %v1194
        %v1196 = vmul.f32 %v1189, 1.442695
        %v1197 = vpow.pop %v1196
        %v1198 = vadd.f32 %v1170, %v1191
        %v1199 = vadd.f32 %v1171, %v1193
        %v1200 = vadd.f32 %v1172, %v1195
        %v1201 = vadd.f32 %v1173, %v1197
        %1202 = vset.pattern.permute.xlu0 35
        %1203 = vperm.xlu0 %1202, %v191
        %v1204 = vpop.permute.xlu0 %1203
        %v1206 = vsub.f32 %v1204, %v213
        %v1207 = vsub.f32 %v1204, %v214
        %v1208 = vsub.f32 %v1204, %v215
        %v1209 = vsub.f32 %v1204, %v216
        %v1210 = vmul.f32 %v1206, %v1206
        %v1211 = vmul.f32 %v1207, %v1207
        %v1212 = vmul.f32 %v1208, %v1208
        %v1213 = vmul.f32 %v1209, %v1209
        %v1214 = vsub.f32 0.0, %v1210
        %v1215 = vsub.f32 0.0, %v1211
        %v1216 = vsub.f32 0.0, %v1212
        %v1217 = vsub.f32 0.0, %v1213
        %v1218 = vmul.f32 %v1214, 1.442695
        %v1219 = vpow.pop %v1218
        %v1220 = vmul.f32 %v1215, 1.442695
        %v1221 = vpow.pop %v1220
        %v1222 = vmul.f32 %v1216, 1.442695
        %v1223 = vpow.pop %v1222
        %v1224 = vmul.f32 %v1217, 1.442695
        %v1225 = vpow.pop %v1224
        %v1226 = vadd.f32 %v1198, %v1219
        %v1227 = vadd.f32 %v1199, %v1221
        %v1228 = vadd.f32 %v1200, %v1223
        %v1229 = vadd.f32 %v1201, %v1225
        %1230 = vset.pattern.permute.xlu0 36
        %1231 = vperm.xlu0 %1230, %v191
        %v1232 = vpop.permute.xlu0 %1231
        %v1234 = vsub.f32 %v1232, %v213
        %v1235 = vsub.f32 %v1232, %v214
        %v1236 = vsub.f32 %v1232, %v215
        %v1237 = vsub.f32 %v1232, %v216
        %v1238 = vmul.f32 %v1234, %v1234
        %v1239 = vmul.f32 %v1235, %v1235
        %v1240 = vmul.f32 %v1236, %v1236
        %v1241 = vmul.f32 %v1237, %v1237
        %v1242 = vsub.f32 0.0, %v1238
        %v1243 = vsub.f32 0.0, %v1239
        %v1244 = vsub.f32 0.0, %v1240
        %v1245 = vsub.f32 0.0, %v1241
        %v1246 = vmul.f32 %v1242, 1.442695
        %v1247 = vpow.pop %v1246
        %v1248 = vmul.f32 %v1243, 1.442695
        %v1249 = vpow.pop %v1248
        %v1250 = vmul.f32 %v1244, 1.442695
        %v1251 = vpow.pop %v1250
        %v1252 = vmul.f32 %v1245, 1.442695
        %v1253 = vpow.pop %v1252
        %v1254 = vadd.f32 %v1226, %v1247
        %v1255 = vadd.f32 %v1227, %v1249
        %v1256 = vadd.f32 %v1228, %v1251
        %v1257 = vadd.f32 %v1229, %v1253
        %1258 = vset.pattern.permute.xlu0 37
        %1259 = vperm.xlu0 %1258, %v191
        %v1260 = vpop.permute.xlu0 %1259
        %v1262 = vsub.f32 %v1260, %v213
        %v1263 = vsub.f32 %v1260, %v214
        %v1264 = vsub.f32 %v1260, %v215
        %v1265 = vsub.f32 %v1260, %v216
        %v1266 = vmul.f32 %v1262, %v1262
        %v1267 = vmul.f32 %v1263, %v1263
        %v1268 = vmul.f32 %v1264, %v1264
        %v1269 = vmul.f32 %v1265, %v1265
        %v1270 = vsub.f32 0.0, %v1266
        %v1271 = vsub.f32 0.0, %v1267
        %v1272 = vsub.f32 0.0, %v1268
        %v1273 = vsub.f32 0.0, %v1269
        %v1274 = vmul.f32 %v1270, 1.442695
        %v1275 = vpow.pop %v1274
        %v1276 = vmul.f32 %v1271, 1.442695
        %v1277 = vpow.pop %v1276
        %v1278 = vmul.f32 %v1272, 1.442695
        %v1279 = vpow.pop %v1278
        %v1280 = vmul.f32 %v1273, 1.442695
        %v1281 = vpow.pop %v1280
        %v1282 = vadd.f32 %v1254, %v1275
        %v1283 = vadd.f32 %v1255, %v1277
        %v1284 = vadd.f32 %v1256, %v1279
        %v1285 = vadd.f32 %v1257, %v1281
        %1286 = vset.pattern.permute.xlu0 38
        %1287 = vperm.xlu0 %1286, %v191
        %v1288 = vpop.permute.xlu0 %1287
        %v1290 = vsub.f32 %v1288, %v213
        %v1291 = vsub.f32 %v1288, %v214
        %v1292 = vsub.f32 %v1288, %v215
        %v1293 = vsub.f32 %v1288, %v216
        %v1294 = vmul.f32 %v1290, %v1290
        %v1295 = vmul.f32 %v1291, %v1291
        %v1296 = vmul.f32 %v1292, %v1292
        %v1297 = vmul.f32 %v1293, %v1293
        %v1298 = vsub.f32 0.0, %v1294
        %v1299 = vsub.f32 0.0, %v1295
        %v1300 = vsub.f32 0.0, %v1296
        %v1301 = vsub.f32 0.0, %v1297
        %v1302 = vmul.f32 %v1298, 1.442695
        %v1303 = vpow.pop %v1302
        %v1304 = vmul.f32 %v1299, 1.442695
        %v1305 = vpow.pop %v1304
        %v1306 = vmul.f32 %v1300, 1.442695
        %v1307 = vpow.pop %v1306
        %v1308 = vmul.f32 %v1301, 1.442695
        %v1309 = vpow.pop %v1308
        %v1310 = vadd.f32 %v1282, %v1303
        %v1311 = vadd.f32 %v1283, %v1305
        %v1312 = vadd.f32 %v1284, %v1307
        %v1313 = vadd.f32 %v1285, %v1309
        %1314 = vset.pattern.permute.xlu0 39
        %1315 = vperm.xlu0 %1314, %v191
        %v1316 = vpop.permute.xlu0 %1315
        %v1318 = vsub.f32 %v1316, %v213
        %v1319 = vsub.f32 %v1316, %v214
        %v1320 = vsub.f32 %v1316, %v215
        %v1321 = vsub.f32 %v1316, %v216
        %v1322 = vmul.f32 %v1318, %v1318
        %v1323 = vmul.f32 %v1319, %v1319
        %v1324 = vmul.f32 %v1320, %v1320
        %v1325 = vmul.f32 %v1321, %v1321
        %v1326 = vsub.f32 0.0, %v1322
        %v1327 = vsub.f32 0.0, %v1323
        %v1328 = vsub.f32 0.0, %v1324
        %v1329 = vsub.f32 0.0, %v1325
        %v1330 = vmul.f32 %v1326, 1.442695
        %v1331 = vpow.pop %v1330
        %v1332 = vmul.f32 %v1327, 1.442695
        %v1333 = vpow.pop %v1332
        %v1334 = vmul.f32 %v1328, 1.442695
        %v1335 = vpow.pop %v1334
        %v1336 = vmul.f32 %v1329, 1.442695
        %v1337 = vpow.pop %v1336
        %v1338 = vadd.f32 %v1310, %v1331
        %v1339 = vadd.f32 %v1311, %v1333
        %v1340 = vadd.f32 %v1312, %v1335
        %v1341 = vadd.f32 %v1313, %v1337
        %1342 = vset.pattern.permute.xlu0 40
        %1343 = vperm.xlu0 %1342, %v191
        %v1344 = vpop.permute.xlu0 %1343
        %v1346 = vsub.f32 %v1344, %v213
        %v1347 = vsub.f32 %v1344, %v214
        %v1348 = vsub.f32 %v1344, %v215
        %v1349 = vsub.f32 %v1344, %v216
        %v1350 = vmul.f32 %v1346, %v1346
        %v1351 = vmul.f32 %v1347, %v1347
        %v1352 = vmul.f32 %v1348, %v1348
        %v1353 = vmul.f32 %v1349, %v1349
        %v1354 = vsub.f32 0.0, %v1350
        %v1355 = vsub.f32 0.0, %v1351
        %v1356 = vsub.f32 0.0, %v1352
        %v1357 = vsub.f32 0.0, %v1353
        %v1358 = vmul.f32 %v1354, 1.442695
        %v1359 = vpow.pop %v1358
        %v1360 = vmul.f32 %v1355, 1.442695
        %v1361 = vpow.pop %v1360
        %v1362 = vmul.f32 %v1356, 1.442695
        %v1363 = vpow.pop %v1362
        %v1364 = vmul.f32 %v1357, 1.442695
        %v1365 = vpow.pop %v1364
        %v1366 = vadd.f32 %v1338, %v1359
        %v1367 = vadd.f32 %v1339, %v1361
        %v1368 = vadd.f32 %v1340, %v1363
        %v1369 = vadd.f32 %v1341, %v1365
        %1370 = vset.pattern.permute.xlu0 41
        %1371 = vperm.xlu0 %1370, %v191
        %v1372 = vpop.permute.xlu0 %1371
        %v1374 = vsub.f32 %v1372, %v213
        %v1375 = vsub.f32 %v1372, %v214
        %v1376 = vsub.f32 %v1372, %v215
        %v1377 = vsub.f32 %v1372, %v216
        %v1378 = vmul.f32 %v1374, %v1374
        %v1379 = vmul.f32 %v1375, %v1375
        %v1380 = vmul.f32 %v1376, %v1376
        %v1381 = vmul.f32 %v1377, %v1377
        %v1382 = vsub.f32 0.0, %v1378
        %v1383 = vsub.f32 0.0, %v1379
        %v1384 = vsub.f32 0.0, %v1380
        %v1385 = vsub.f32 0.0, %v1381
        %v1386 = vmul.f32 %v1382, 1.442695
        %v1387 = vpow.pop %v1386
        %v1388 = vmul.f32 %v1383, 1.442695
        %v1389 = vpow.pop %v1388
        %v1390 = vmul.f32 %v1384, 1.442695
        %v1391 = vpow.pop %v1390
        %v1392 = vmul.f32 %v1385, 1.442695
        %v1393 = vpow.pop %v1392
        %v1394 = vadd.f32 %v1366, %v1387
        %v1395 = vadd.f32 %v1367, %v1389
        %v1396 = vadd.f32 %v1368, %v1391
        %v1397 = vadd.f32 %v1369, %v1393
        %1398 = vset.pattern.permute.xlu0 42
        %1399 = vperm.xlu0 %1398, %v191
        %v1400 = vpop.permute.xlu0 %1399
        %v1402 = vsub.f32 %v1400, %v213
        %v1403 = vsub.f32 %v1400, %v214
        %v1404 = vsub.f32 %v1400, %v215
        %v1405 = vsub.f32 %v1400, %v216
        %v1406 = vmul.f32 %v1402, %v1402
        %v1407 = vmul.f32 %v1403, %v1403
        %v1408 = vmul.f32 %v1404, %v1404
        %v1409 = vmul.f32 %v1405, %v1405
        %v1410 = vsub.f32 0.0, %v1406
        %v1411 = vsub.f32 0.0, %v1407
        %v1412 = vsub.f32 0.0, %v1408
        %v1413 = vsub.f32 0.0, %v1409
        %v1414 = vmul.f32 %v1410, 1.442695
        %v1415 = vpow.pop %v1414
        %v1416 = vmul.f32 %v1411, 1.442695
        %v1417 = vpow.pop %v1416
        %v1418 = vmul.f32 %v1412, 1.442695
        %v1419 = vpow.pop %v1418
        %v1420 = vmul.f32 %v1413, 1.442695
        %v1421 = vpow.pop %v1420
        %v1422 = vadd.f32 %v1394, %v1415
        %v1423 = vadd.f32 %v1395, %v1417
        %v1424 = vadd.f32 %v1396, %v1419
        %v1425 = vadd.f32 %v1397, %v1421
        %1426 = vset.pattern.permute.xlu0 43
        %1427 = vperm.xlu0 %1426, %v191
        %v1428 = vpop.permute.xlu0 %1427
        %v1430 = vsub.f32 %v1428, %v213
        %v1431 = vsub.f32 %v1428, %v214
        %v1432 = vsub.f32 %v1428, %v215
        %v1433 = vsub.f32 %v1428, %v216
        %v1434 = vmul.f32 %v1430, %v1430
        %v1435 = vmul.f32 %v1431, %v1431
        %v1436 = vmul.f32 %v1432, %v1432
        %v1437 = vmul.f32 %v1433, %v1433
        %v1438 = vsub.f32 0.0, %v1434
        %v1439 = vsub.f32 0.0, %v1435
        %v1440 = vsub.f32 0.0, %v1436
        %v1441 = vsub.f32 0.0, %v1437
        %v1442 = vmul.f32 %v1438, 1.442695
        %v1443 = vpow.pop %v1442
        %v1444 = vmul.f32 %v1439, 1.442695
        %v1445 = vpow.pop %v1444
        %v1446 = vmul.f32 %v1440, 1.442695
        %v1447 = vpow.pop %v1446
        %v1448 = vmul.f32 %v1441, 1.442695
        %v1449 = vpow.pop %v1448
        %v1450 = vadd.f32 %v1422, %v1443
        %v1451 = vadd.f32 %v1423, %v1445
        %v1452 = vadd.f32 %v1424, %v1447
        %v1453 = vadd.f32 %v1425, %v1449
        %1454 = vset.pattern.permute.xlu0 44
        %1455 = vperm.xlu0 %1454, %v191
        %v1456 = vpop.permute.xlu0 %1455
        %v1458 = vsub.f32 %v1456, %v213
        %v1459 = vsub.f32 %v1456, %v214
        %v1460 = vsub.f32 %v1456, %v215
        %v1461 = vsub.f32 %v1456, %v216
        %v1462 = vmul.f32 %v1458, %v1458
        %v1463 = vmul.f32 %v1459, %v1459
        %v1464 = vmul.f32 %v1460, %v1460
        %v1465 = vmul.f32 %v1461, %v1461
        %v1466 = vsub.f32 0.0, %v1462
        %v1467 = vsub.f32 0.0, %v1463
        %v1468 = vsub.f32 0.0, %v1464
        %v1469 = vsub.f32 0.0, %v1465
        %v1470 = vmul.f32 %v1466, 1.442695
        %v1471 = vpow.pop %v1470
        %v1472 = vmul.f32 %v1467, 1.442695
        %v1473 = vpow.pop %v1472
        %v1474 = vmul.f32 %v1468, 1.442695
        %v1475 = vpow.pop %v1474
        %v1476 = vmul.f32 %v1469, 1.442695
        %v1477 = vpow.pop %v1476
        %v1478 = vadd.f32 %v1450, %v1471
        %v1479 = vadd.f32 %v1451, %v1473
        %v1480 = vadd.f32 %v1452, %v1475
        %v1481 = vadd.f32 %v1453, %v1477
        %1482 = vset.pattern.permute.xlu0 45
        %1483 = vperm.xlu0 %1482, %v191
        %v1484 = vpop.permute.xlu0 %1483
        %v1486 = vsub.f32 %v1484, %v213
        %v1487 = vsub.f32 %v1484, %v214
        %v1488 = vsub.f32 %v1484, %v215
        %v1489 = vsub.f32 %v1484, %v216
        %v1490 = vmul.f32 %v1486, %v1486
        %v1491 = vmul.f32 %v1487, %v1487
        %v1492 = vmul.f32 %v1488, %v1488
        %v1493 = vmul.f32 %v1489, %v1489
        %v1494 = vsub.f32 0.0, %v1490
        %v1495 = vsub.f32 0.0, %v1491
        %v1496 = vsub.f32 0.0, %v1492
        %v1497 = vsub.f32 0.0, %v1493
        %v1498 = vmul.f32 %v1494, 1.442695
        %v1499 = vpow.pop %v1498
        %v1500 = vmul.f32 %v1495, 1.442695
        %v1501 = vpow.pop %v1500
        %v1502 = vmul.f32 %v1496, 1.442695
        %v1503 = vpow.pop %v1502
        %v1504 = vmul.f32 %v1497, 1.442695
        %v1505 = vpow.pop %v1504
        %v1506 = vadd.f32 %v1478, %v1499
        %v1507 = vadd.f32 %v1479, %v1501
        %v1508 = vadd.f32 %v1480, %v1503
        %v1509 = vadd.f32 %v1481, %v1505
        %1510 = vset.pattern.permute.xlu0 46
        %1511 = vperm.xlu0 %1510, %v191
        %v1512 = vpop.permute.xlu0 %1511
        %v1514 = vsub.f32 %v1512, %v213
        %v1515 = vsub.f32 %v1512, %v214
        %v1516 = vsub.f32 %v1512, %v215
        %v1517 = vsub.f32 %v1512, %v216
        %v1518 = vmul.f32 %v1514, %v1514
        %v1519 = vmul.f32 %v1515, %v1515
        %v1520 = vmul.f32 %v1516, %v1516
        %v1521 = vmul.f32 %v1517, %v1517
        %v1522 = vsub.f32 0.0, %v1518
        %v1523 = vsub.f32 0.0, %v1519
        %v1524 = vsub.f32 0.0, %v1520
        %v1525 = vsub.f32 0.0, %v1521
        %v1526 = vmul.f32 %v1522, 1.442695
        %v1527 = vpow.pop %v1526
        %v1528 = vmul.f32 %v1523, 1.442695
        %v1529 = vpow.pop %v1528
        %v1530 = vmul.f32 %v1524, 1.442695
        %v1531 = vpow.pop %v1530
        %v1532 = vmul.f32 %v1525, 1.442695
        %v1533 = vpow.pop %v1532
        %v1534 = vadd.f32 %v1506, %v1527
        %v1535 = vadd.f32 %v1507, %v1529
        %v1536 = vadd.f32 %v1508, %v1531
        %v1537 = vadd.f32 %v1509, %v1533
        %1538 = vset.pattern.permute.xlu0 47
        %1539 = vperm.xlu0 %1538, %v191
        %v1540 = vpop.permute.xlu0 %1539
        %v1542 = vsub.f32 %v1540, %v213
        %v1543 = vsub.f32 %v1540, %v214
        %v1544 = vsub.f32 %v1540, %v215
        %v1545 = vsub.f32 %v1540, %v216
        %v1546 = vmul.f32 %v1542, %v1542
        %v1547 = vmul.f32 %v1543, %v1543
        %v1548 = vmul.f32 %v1544, %v1544
        %v1549 = vmul.f32 %v1545, %v1545
        %v1550 = vsub.f32 0.0, %v1546
        %v1551 = vsub.f32 0.0, %v1547
        %v1552 = vsub.f32 0.0, %v1548
        %v1553 = vsub.f32 0.0, %v1549
        %v1554 = vmul.f32 %v1550, 1.442695
        %v1555 = vpow.pop %v1554
        %v1556 = vmul.f32 %v1551, 1.442695
        %v1557 = vpow.pop %v1556
        %v1558 = vmul.f32 %v1552, 1.442695
        %v1559 = vpow.pop %v1558
        %v1560 = vmul.f32 %v1553, 1.442695
        %v1561 = vpow.pop %v1560
        %v1562 = vadd.f32 %v1534, %v1555
        %v1563 = vadd.f32 %v1535, %v1557
        %v1564 = vadd.f32 %v1536, %v1559
        %v1565 = vadd.f32 %v1537, %v1561
        %1566 = vset.pattern.permute.xlu0 48
        %1567 = vperm.xlu0 %1566, %v191
        %v1568 = vpop.permute.xlu0 %1567
        %v1570 = vsub.f32 %v1568, %v213
        %v1571 = vsub.f32 %v1568, %v214
        %v1572 = vsub.f32 %v1568, %v215
        %v1573 = vsub.f32 %v1568, %v216
        %v1574 = vmul.f32 %v1570, %v1570
        %v1575 = vmul.f32 %v1571, %v1571
        %v1576 = vmul.f32 %v1572, %v1572
        %v1577 = vmul.f32 %v1573, %v1573
        %v1578 = vsub.f32 0.0, %v1574
        %v1579 = vsub.f32 0.0, %v1575
        %v1580 = vsub.f32 0.0, %v1576
        %v1581 = vsub.f32 0.0, %v1577
        %v1582 = vmul.f32 %v1578, 1.442695
        %v1583 = vpow.pop %v1582
        %v1584 = vmul.f32 %v1579, 1.442695
        %v1585 = vpow.pop %v1584
        %v1586 = vmul.f32 %v1580, 1.442695
        %v1587 = vpow.pop %v1586
        %v1588 = vmul.f32 %v1581, 1.442695
        %v1589 = vpow.pop %v1588
        %v1590 = vadd.f32 %v1562, %v1583
        %v1591 = vadd.f32 %v1563, %v1585
        %v1592 = vadd.f32 %v1564, %v1587
        %v1593 = vadd.f32 %v1565, %v1589
        %1594 = vset.pattern.permute.xlu0 49
        %1595 = vperm.xlu0 %1594, %v191
        %v1596 = vpop.permute.xlu0 %1595
        %v1598 = vsub.f32 %v1596, %v213
        %v1599 = vsub.f32 %v1596, %v214
        %v1600 = vsub.f32 %v1596, %v215
        %v1601 = vsub.f32 %v1596, %v216
        %v1602 = vmul.f32 %v1598, %v1598
        %v1603 = vmul.f32 %v1599, %v1599
        %v1604 = vmul.f32 %v1600, %v1600
        %v1605 = vmul.f32 %v1601, %v1601
        %v1606 = vsub.f32 0.0, %v1602
        %v1607 = vsub.f32 0.0, %v1603
        %v1608 = vsub.f32 0.0, %v1604
        %v1609 = vsub.f32 0.0, %v1605
        %v1610 = vmul.f32 %v1606, 1.442695
        %v1611 = vpow.pop %v1610
        %v1612 = vmul.f32 %v1607, 1.442695
        %v1613 = vpow.pop %v1612
        %v1614 = vmul.f32 %v1608, 1.442695
        %v1615 = vpow.pop %v1614
        %v1616 = vmul.f32 %v1609, 1.442695
        %v1617 = vpow.pop %v1616
        %v1618 = vadd.f32 %v1590, %v1611
        %v1619 = vadd.f32 %v1591, %v1613
        %v1620 = vadd.f32 %v1592, %v1615
        %v1621 = vadd.f32 %v1593, %v1617
        %1622 = vset.pattern.permute.xlu0 50
        %1623 = vperm.xlu0 %1622, %v191
        %v1624 = vpop.permute.xlu0 %1623
        %v1626 = vsub.f32 %v1624, %v213
        %v1627 = vsub.f32 %v1624, %v214
        %v1628 = vsub.f32 %v1624, %v215
        %v1629 = vsub.f32 %v1624, %v216
        %v1630 = vmul.f32 %v1626, %v1626
        %v1631 = vmul.f32 %v1627, %v1627
        %v1632 = vmul.f32 %v1628, %v1628
        %v1633 = vmul.f32 %v1629, %v1629
        %v1634 = vsub.f32 0.0, %v1630
        %v1635 = vsub.f32 0.0, %v1631
        %v1636 = vsub.f32 0.0, %v1632
        %v1637 = vsub.f32 0.0, %v1633
        %v1638 = vmul.f32 %v1634, 1.442695
        %v1639 = vpow.pop %v1638
        %v1640 = vmul.f32 %v1635, 1.442695
        %v1641 = vpow.pop %v1640
        %v1642 = vmul.f32 %v1636, 1.442695
        %v1643 = vpow.pop %v1642
        %v1644 = vmul.f32 %v1637, 1.442695
        %v1645 = vpow.pop %v1644
        %v1646 = vadd.f32 %v1618, %v1639
        %v1647 = vadd.f32 %v1619, %v1641
        %v1648 = vadd.f32 %v1620, %v1643
        %v1649 = vadd.f32 %v1621, %v1645
        %1650 = vset.pattern.permute.xlu0 51
        %1651 = vperm.xlu0 %1650, %v191
        %v1652 = vpop.permute.xlu0 %1651
        %v1654 = vsub.f32 %v1652, %v213
        %v1655 = vsub.f32 %v1652, %v214
        %v1656 = vsub.f32 %v1652, %v215
        %v1657 = vsub.f32 %v1652, %v216
        %v1658 = vmul.f32 %v1654, %v1654
        %v1659 = vmul.f32 %v1655, %v1655
        %v1660 = vmul.f32 %v1656, %v1656
        %v1661 = vmul.f32 %v1657, %v1657
        %v1662 = vsub.f32 0.0, %v1658
        %v1663 = vsub.f32 0.0, %v1659
        %v1664 = vsub.f32 0.0, %v1660
        %v1665 = vsub.f32 0.0, %v1661
        %v1666 = vmul.f32 %v1662, 1.442695
        %v1667 = vpow.pop %v1666
        %v1668 = vmul.f32 %v1663, 1.442695
        %v1669 = vpow.pop %v1668
        %v1670 = vmul.f32 %v1664, 1.442695
        %v1671 = vpow.pop %v1670
        %v1672 = vmul.f32 %v1665, 1.442695
        %v1673 = vpow.pop %v1672
        %v1674 = vadd.f32 %v1646, %v1667
        %v1675 = vadd.f32 %v1647, %v1669
        %v1676 = vadd.f32 %v1648, %v1671
        %v1677 = vadd.f32 %v1649, %v1673
        %1678 = vset.pattern.permute.xlu0 52
        %1679 = vperm.xlu0 %1678, %v191
        %v1680 = vpop.permute.xlu0 %1679
        %v1682 = vsub.f32 %v1680, %v213
        %v1683 = vsub.f32 %v1680, %v214
        %v1684 = vsub.f32 %v1680, %v215
        %v1685 = vsub.f32 %v1680, %v216
        %v1686 = vmul.f32 %v1682, %v1682
        %v1687 = vmul.f32 %v1683, %v1683
        %v1688 = vmul.f32 %v1684, %v1684
        %v1689 = vmul.f32 %v1685, %v1685
        %v1690 = vsub.f32 0.0, %v1686
        %v1691 = vsub.f32 0.0, %v1687
        %v1692 = vsub.f32 0.0, %v1688
        %v1693 = vsub.f32 0.0, %v1689
        %v1694 = vmul.f32 %v1690, 1.442695
        %v1695 = vpow.pop %v1694
        %v1696 = vmul.f32 %v1691, 1.442695
        %v1697 = vpow.pop %v1696
        %v1698 = vmul.f32 %v1692, 1.442695
        %v1699 = vpow.pop %v1698
        %v1700 = vmul.f32 %v1693, 1.442695
        %v1701 = vpow.pop %v1700
        %v1702 = vadd.f32 %v1674, %v1695
        %v1703 = vadd.f32 %v1675, %v1697
        %v1704 = vadd.f32 %v1676, %v1699
        %v1705 = vadd.f32 %v1677, %v1701
        %1706 = vset.pattern.permute.xlu0 53
        %1707 = vperm.xlu0 %1706, %v191
        %v1708 = vpop.permute.xlu0 %1707
        %v1710 = vsub.f32 %v1708, %v213
        %v1711 = vsub.f32 %v1708, %v214
        %v1712 = vsub.f32 %v1708, %v215
        %v1713 = vsub.f32 %v1708, %v216
        %v1714 = vmul.f32 %v1710, %v1710
        %v1715 = vmul.f32 %v1711, %v1711
        %v1716 = vmul.f32 %v1712, %v1712
        %v1717 = vmul.f32 %v1713, %v1713
        %v1718 = vsub.f32 0.0, %v1714
        %v1719 = vsub.f32 0.0, %v1715
        %v1720 = vsub.f32 0.0, %v1716
        %v1721 = vsub.f32 0.0, %v1717
        %v1722 = vmul.f32 %v1718, 1.442695
        %v1723 = vpow.pop %v1722
        %v1724 = vmul.f32 %v1719, 1.442695
        %v1725 = vpow.pop %v1724
        %v1726 = vmul.f32 %v1720, 1.442695
        %v1727 = vpow.pop %v1726
        %v1728 = vmul.f32 %v1721, 1.442695
        %v1729 = vpow.pop %v1728
        %v1730 = vadd.f32 %v1702, %v1723
        %v1731 = vadd.f32 %v1703, %v1725
        %v1732 = vadd.f32 %v1704, %v1727
        %v1733 = vadd.f32 %v1705, %v1729
        %1734 = vset.pattern.permute.xlu0 54
        %1735 = vperm.xlu0 %1734, %v191
        %v1736 = vpop.permute.xlu0 %1735
        %v1738 = vsub.f32 %v1736, %v213
        %v1739 = vsub.f32 %v1736, %v214
        %v1740 = vsub.f32 %v1736, %v215
        %v1741 = vsub.f32 %v1736, %v216
        %v1742 = vmul.f32 %v1738, %v1738
        %v1743 = vmul.f32 %v1739, %v1739
        %v1744 = vmul.f32 %v1740, %v1740
        %v1745 = vmul.f32 %v1741, %v1741
        %v1746 = vsub.f32 0.0, %v1742
        %v1747 = vsub.f32 0.0, %v1743
        %v1748 = vsub.f32 0.0, %v1744
        %v1749 = vsub.f32 0.0, %v1745
        %v1750 = vmul.f32 %v1746, 1.442695
        %v1751 = vpow.pop %v1750
        %v1752 = vmul.f32 %v1747, 1.442695
        %v1753 = vpow.pop %v1752
        %v1754 = vmul.f32 %v1748, 1.442695
        %v1755 = vpow.pop %v1754
        %v1756 = vmul.f32 %v1749, 1.442695
        %v1757 = vpow.pop %v1756
        %v1758 = vadd.f32 %v1730, %v1751
        %v1759 = vadd.f32 %v1731, %v1753
        %v1760 = vadd.f32 %v1732, %v1755
        %v1761 = vadd.f32 %v1733, %v1757
        %1762 = vset.pattern.permute.xlu0 55
        %1763 = vperm.xlu0 %1762, %v191
        %v1764 = vpop.permute.xlu0 %1763
        %v1766 = vsub.f32 %v1764, %v213
        %v1767 = vsub.f32 %v1764, %v214
        %v1768 = vsub.f32 %v1764, %v215
        %v1769 = vsub.f32 %v1764, %v216
        %v1770 = vmul.f32 %v1766, %v1766
        %v1771 = vmul.f32 %v1767, %v1767
        %v1772 = vmul.f32 %v1768, %v1768
        %v1773 = vmul.f32 %v1769, %v1769
        %v1774 = vsub.f32 0.0, %v1770
        %v1775 = vsub.f32 0.0, %v1771
        %v1776 = vsub.f32 0.0, %v1772
        %v1777 = vsub.f32 0.0, %v1773
        %v1778 = vmul.f32 %v1774, 1.442695
        %v1779 = vpow.pop %v1778
        %v1780 = vmul.f32 %v1775, 1.442695
        %v1781 = vpow.pop %v1780
        %v1782 = vmul.f32 %v1776, 1.442695
        %v1783 = vpow.pop %v1782
        %v1784 = vmul.f32 %v1777, 1.442695
        %v1785 = vpow.pop %v1784
        %v1786 = vadd.f32 %v1758, %v1779
        %v1787 = vadd.f32 %v1759, %v1781
        %v1788 = vadd.f32 %v1760, %v1783
        %v1789 = vadd.f32 %v1761, %v1785
        %1790 = vset.pattern.permute.xlu0 56
        %1791 = vperm.xlu0 %1790, %v191
        %v1792 = vpop.permute.xlu0 %1791
        %v1794 = vsub.f32 %v1792, %v213
        %v1795 = vsub.f32 %v1792, %v214
        %v1796 = vsub.f32 %v1792, %v215
        %v1797 = vsub.f32 %v1792, %v216
        %v1798 = vmul.f32 %v1794, %v1794
        %v1799 = vmul.f32 %v1795, %v1795
        %v1800 = vmul.f32 %v1796, %v1796
        %v1801 = vmul.f32 %v1797, %v1797
        %v1802 = vsub.f32 0.0, %v1798
        %v1803 = vsub.f32 0.0, %v1799
        %v1804 = vsub.f32 0.0, %v1800
        %v1805 = vsub.f32 0.0, %v1801
        %v1806 = vmul.f32 %v1802, 1.442695
        %v1807 = vpow.pop %v1806
        %v1808 = vmul.f32 %v1803, 1.442695
        %v1809 = vpow.pop %v1808
        %v1810 = vmul.f32 %v1804, 1.442695
        %v1811 = vpow.pop %v1810
        %v1812 = vmul.f32 %v1805, 1.442695
        %v1813 = vpow.pop %v1812
        %v1814 = vadd.f32 %v1786, %v1807
        %v1815 = vadd.f32 %v1787, %v1809
        %v1816 = vadd.f32 %v1788, %v1811
        %v1817 = vadd.f32 %v1789, %v1813
        %1818 = vset.pattern.permute.xlu0 57
        %1819 = vperm.xlu0 %1818, %v191
        %v1820 = vpop.permute.xlu0 %1819
        %v1822 = vsub.f32 %v1820, %v213
        %v1823 = vsub.f32 %v1820, %v214
        %v1824 = vsub.f32 %v1820, %v215
        %v1825 = vsub.f32 %v1820, %v216
        %v1826 = vmul.f32 %v1822, %v1822
        %v1827 = vmul.f32 %v1823, %v1823
        %v1828 = vmul.f32 %v1824, %v1824
        %v1829 = vmul.f32 %v1825, %v1825
        %v1830 = vsub.f32 0.0, %v1826
        %v1831 = vsub.f32 0.0, %v1827
        %v1832 = vsub.f32 0.0, %v1828
        %v1833 = vsub.f32 0.0, %v1829
        %v1834 = vmul.f32 %v1830, 1.442695
        %v1835 = vpow.pop %v1834
        %v1836 = vmul.f32 %v1831, 1.442695
        %v1837 = vpow.pop %v1836
        %v1838 = vmul.f32 %v1832, 1.442695
        %v1839 = vpow.pop %v1838
        %v1840 = vmul.f32 %v1833, 1.442695
        %v1841 = vpow.pop %v1840
        %v1842 = vadd.f32 %v1814, %v1835
        %v1843 = vadd.f32 %v1815, %v1837
        %v1844 = vadd.f32 %v1816, %v1839
        %v1845 = vadd.f32 %v1817, %v1841
        %1846 = vset.pattern.permute.xlu0 58
        %1847 = vperm.xlu0 %1846, %v191
        %v1848 = vpop.permute.xlu0 %1847
        %v1850 = vsub.f32 %v1848, %v213
        %v1851 = vsub.f32 %v1848, %v214
        %v1852 = vsub.f32 %v1848, %v215
        %v1853 = vsub.f32 %v1848, %v216
        %v1854 = vmul.f32 %v1850, %v1850
        %v1855 = vmul.f32 %v1851, %v1851
        %v1856 = vmul.f32 %v1852, %v1852
        %v1857 = vmul.f32 %v1853, %v1853
        %v1858 = vsub.f32 0.0, %v1854
        %v1859 = vsub.f32 0.0, %v1855
        %v1860 = vsub.f32 0.0, %v1856
        %v1861 = vsub.f32 0.0, %v1857
        %v1862 = vmul.f32 %v1858, 1.442695
        %v1863 = vpow.pop %v1862
        %v1864 = vmul.f32 %v1859, 1.442695
        %v1865 = vpow.pop %v1864
        %v1866 = vmul.f32 %v1860, 1.442695
        %v1867 = vpow.pop %v1866
        %v1868 = vmul.f32 %v1861, 1.442695
        %v1869 = vpow.pop %v1868
        %v1870 = vadd.f32 %v1842, %v1863
        %v1871 = vadd.f32 %v1843, %v1865
        %v1872 = vadd.f32 %v1844, %v1867
        %v1873 = vadd.f32 %v1845, %v1869
        %1874 = vset.pattern.permute.xlu0 59
        %1875 = vperm.xlu0 %1874, %v191
        %v1876 = vpop.permute.xlu0 %1875
        %v1878 = vsub.f32 %v1876, %v213
        %v1879 = vsub.f32 %v1876, %v214
        %v1880 = vsub.f32 %v1876, %v215
        %v1881 = vsub.f32 %v1876, %v216
        %v1882 = vmul.f32 %v1878, %v1878
        %v1883 = vmul.f32 %v1879, %v1879
        %v1884 = vmul.f32 %v1880, %v1880
        %v1885 = vmul.f32 %v1881, %v1881
        %v1886 = vsub.f32 0.0, %v1882
        %v1887 = vsub.f32 0.0, %v1883
        %v1888 = vsub.f32 0.0, %v1884
        %v1889 = vsub.f32 0.0, %v1885
        %v1890 = vmul.f32 %v1886, 1.442695
        %v1891 = vpow.pop %v1890
        %v1892 = vmul.f32 %v1887, 1.442695
        %v1893 = vpow.pop %v1892
        %v1894 = vmul.f32 %v1888, 1.442695
        %v1895 = vpow.pop %v1894
        %v1896 = vmul.f32 %v1889, 1.442695
        %v1897 = vpow.pop %v1896
        %v1898 = vadd.f32 %v1870, %v1891
        %v1899 = vadd.f32 %v1871, %v1893
        %v1900 = vadd.f32 %v1872, %v1895
        %v1901 = vadd.f32 %v1873, %v1897
        %1902 = vset.pattern.permute.xlu0 60
        %1903 = vperm.xlu0 %1902, %v191
        %v1904 = vpop.permute.xlu0 %1903
        %v1906 = vsub.f32 %v1904, %v213
        %v1907 = vsub.f32 %v1904, %v214
        %v1908 = vsub.f32 %v1904, %v215
        %v1909 = vsub.f32 %v1904, %v216
        %v1910 = vmul.f32 %v1906, %v1906
        %v1911 = vmul.f32 %v1907, %v1907
        %v1912 = vmul.f32 %v1908, %v1908
        %v1913 = vmul.f32 %v1909, %v1909
        %v1914 = vsub.f32 0.0, %v1910
        %v1915 = vsub.f32 0.0, %v1911
        %v1916 = vsub.f32 0.0, %v1912
        %v1917 = vsub.f32 0.0, %v1913
        %v1918 = vmul.f32 %v1914, 1.442695
        %v1919 = vpow.pop %v1918
        %v1920 = vmul.f32 %v1915, 1.442695
        %v1921 = vpow.pop %v1920
        %v1922 = vmul.f32 %v1916, 1.442695
        %v1923 = vpow.pop %v1922
        %v1924 = vmul.f32 %v1917, 1.442695
        %v1925 = vpow.pop %v1924
        %v1926 = vadd.f32 %v1898, %v1919
        %v1927 = vadd.f32 %v1899, %v1921
        %v1928 = vadd.f32 %v1900, %v1923
        %v1929 = vadd.f32 %v1901, %v1925
        %1930 = vset.pattern.permute.xlu0 61
        %1931 = vperm.xlu0 %1930, %v191
        %v1932 = vpop.permute.xlu0 %1931
        %v1934 = vsub.f32 %v1932, %v213
        %v1935 = vsub.f32 %v1932, %v214
        %v1936 = vsub.f32 %v1932, %v215
        %v1937 = vsub.f32 %v1932, %v216
        %v1938 = vmul.f32 %v1934, %v1934
        %v1939 = vmul.f32 %v1935, %v1935
        %v1940 = vmul.f32 %v1936, %v1936
        %v1941 = vmul.f32 %v1937, %v1937
        %v1942 = vsub.f32 0.0, %v1938
        %v1943 = vsub.f32 0.0, %v1939
        %v1944 = vsub.f32 0.0, %v1940
        %v1945 = vsub.f32 0.0, %v1941
        %v1946 = vmul.f32 %v1942, 1.442695
        %v1947 = vpow.pop %v1946
        %v1948 = vmul.f32 %v1943, 1.442695
        %v1949 = vpow.pop %v1948
        %v1950 = vmul.f32 %v1944, 1.442695
        %v1951 = vpow.pop %v1950
        %v1952 = vmul.f32 %v1945, 1.442695
        %v1953 = vpow.pop %v1952
        %v1954 = vadd.f32 %v1926, %v1947
        %v1955 = vadd.f32 %v1927, %v1949
        %v1956 = vadd.f32 %v1928, %v1951
        %v1957 = vadd.f32 %v1929, %v1953
        %1958 = vset.pattern.permute.xlu0 62
        %1959 = vperm.xlu0 %1958, %v191
        %v1960 = vpop.permute.xlu0 %1959
        %v1962 = vsub.f32 %v1960, %v213
        %v1963 = vsub.f32 %v1960, %v214
        %v1964 = vsub.f32 %v1960, %v215
        %v1965 = vsub.f32 %v1960, %v216
        %v1966 = vmul.f32 %v1962, %v1962
        %v1967 = vmul.f32 %v1963, %v1963
        %v1968 = vmul.f32 %v1964, %v1964
        %v1969 = vmul.f32 %v1965, %v1965
        %v1970 = vsub.f32 0.0, %v1966
        %v1971 = vsub.f32 0.0, %v1967
        %v1972 = vsub.f32 0.0, %v1968
        %v1973 = vsub.f32 0.0, %v1969
        %v1974 = vmul.f32 %v1970, 1.442695
        %v1975 = vpow.pop %v1974
        %v1976 = vmul.f32 %v1971, 1.442695
        %v1977 = vpow.pop %v1976
        %v1978 = vmul.f32 %v1972, 1.442695
        %v1979 = vpow.pop %v1978
        %v1980 = vmul.f32 %v1973, 1.442695
        %v1981 = vpow.pop %v1980
        %v1982 = vadd.f32 %v1954, %v1975
        %v1983 = vadd.f32 %v1955, %v1977
        %v1984 = vadd.f32 %v1956, %v1979
        %v1985 = vadd.f32 %v1957, %v1981
        %1986 = vset.pattern.permute.xlu0 63
        %1987 = vperm.xlu0 %1986, %v191
        %v1988 = vpop.permute.xlu0 %1987
        %v1990 = vsub.f32 %v1988, %v213
        %v1991 = vsub.f32 %v1988, %v214
        %v1992 = vsub.f32 %v1988, %v215
        %v1993 = vsub.f32 %v1988, %v216
        %v1994 = vmul.f32 %v1990, %v1990
        %v1995 = vmul.f32 %v1991, %v1991
        %v1996 = vmul.f32 %v1992, %v1992
        %v1997 = vmul.f32 %v1993, %v1993
        %v1998 = vsub.f32 0.0, %v1994
        %v1999 = vsub.f32 0.0, %v1995
        %v2000 = vsub.f32 0.0, %v1996
        %v2001 = vsub.f32 0.0, %v1997
        %v2002 = vmul.f32 %v1998, 1.442695
        %v2003 = vpow.pop %v2002
        %v2004 = vmul.f32 %v1999, 1.442695
        %v2005 = vpow.pop %v2004
        %v2006 = vmul.f32 %v2000, 1.442695
        %v2007 = vpow.pop %v2006
        %v2008 = vmul.f32 %v2001, 1.442695
        %v2009 = vpow.pop %v2008
        %v2010 = vadd.f32 %v1982, %v2003
        %v2011 = vadd.f32 %v1983, %v2005
        %v2012 = vadd.f32 %v1984, %v2007
        %v2013 = vadd.f32 %v1985, %v2009
      $region37: #{meeloss.1} parent=31 // loop_footer
        %s196 = sadd.s32 %s194, 1
      $region38: #{meeloss.1} parent=31 // loop_footer_branch
        %193 = sbr.rel target = $region34
      $region39: #{meeloss.1} parent=31 // loop_exit
        _
      %s2014 = sshra.s32 %s14, 2
      %s2015 = sand.u32 %s14, 3
      %s2016 = sshra.s32 %s14, 2
      %s2017 = sand.u32 %s14, 3
      %s2018 = smul.u32 %s2014, 4
      %s2019 = smul.u32 %s2018, 4
      %s2020 = sadd.s32 %s2019, %s2017
      %s2021 = scalar_lea.vmem %s2, %s2020
      %v2022 = vld [vmem:[%s2021] ss:$4 sm:$0xf]
      %v2024 = vperm.slane %v2022, 0
      %v2025 = vperm.slane %v2022, 1
      %v2026 = vperm.slane %v2022, 2
      %v2027 = vperm.slane %v2022, 3
      %2033 = vset.pattern.permute.xlu0 0
      %2034 = vperm.xlu0 %2033, %v191
      %v2035 = vpop.permute.xlu0 %2034
      %v2037 = vsub.f32 %v2035, %v2024
      %v2038 = vsub.f32 %v2035, %v2025
      %v2039 = vsub.f32 %v2035, %v2026
      %v2040 = vsub.f32 %v2035, %v2027
      %v2041 = vmul.f32 %v2037, %v2037
      %v2042 = vmul.f32 %v2038, %v2038
      %v2043 = vmul.f32 %v2039, %v2039
      %v2044 = vmul.f32 %v2040, %v2040
      %v2045 = vsub.f32 0.0, %v2041
      %v2046 = vsub.f32 0.0, %v2042
      %v2047 = vsub.f32 0.0, %v2043
      %v2048 = vsub.f32 0.0, %v2044
      %v2049 = vmul.f32 %v2045, 1.442695
      %v2050 = vpow.pop %v2049
      %v2051 = vmul.f32 %v2046, 1.442695
      %v2052 = vpow.pop %v2051
      %v2053 = vmul.f32 %v2047, 1.442695
      %v2054 = vpow.pop %v2053
      %v2055 = vmul.f32 %v2048, 1.442695
      %v2056 = vpow.pop %v2055
      %v2057 = vadd.f32 %v2050, 0.0
      %v2058 = vadd.f32 %v2052, 0.0
      %v2059 = vadd.f32 %v2054, 0.0
      %v2060 = vadd.f32 %v2056, 0.0
      %2061 = vset.pattern.permute.xlu0 1
      %2062 = vperm.xlu0 %2061, %v191
      %v2063 = vpop.permute.xlu0 %2062
      %v2065 = vsub.f32 %v2063, %v2024
      %v2066 = vsub.f32 %v2063, %v2025
      %v2067 = vsub.f32 %v2063, %v2026
      %v2068 = vsub.f32 %v2063, %v2027
      %v2069 = vmul.f32 %v2065, %v2065
      %v2070 = vmul.f32 %v2066, %v2066
      %v2071 = vmul.f32 %v2067, %v2067
      %v2072 = vmul.f32 %v2068, %v2068
      %v2073 = vsub.f32 0.0, %v2069
      %v2074 = vsub.f32 0.0, %v2070
      %v2075 = vsub.f32 0.0, %v2071
      %v2076 = vsub.f32 0.0, %v2072
      %v2077 = vmul.f32 %v2073, 1.442695
      %v2078 = vpow.pop %v2077
      %v2079 = vmul.f32 %v2074, 1.442695
      %v2080 = vpow.pop %v2079
      %v2081 = vmul.f32 %v2075, 1.442695
      %v2082 = vpow.pop %v2081
      %v2083 = vmul.f32 %v2076, 1.442695
      %v2084 = vpow.pop %v2083
      %v2085 = vadd.f32 %v2057, %v2078
      %v2086 = vadd.f32 %v2058, %v2080
      %v2087 = vadd.f32 %v2059, %v2082
      %v2088 = vadd.f32 %v2060, %v2084
      %2089 = vset.pattern.permute.xlu0 2
      %2090 = vperm.xlu0 %2089, %v191
      %v2091 = vpop.permute.xlu0 %2090
      %v2093 = vsub.f32 %v2091, %v2024
      %v2094 = vsub.f32 %v2091, %v2025
      %v2095 = vsub.f32 %v2091, %v2026
      %v2096 = vsub.f32 %v2091, %v2027
      %v2097 = vmul.f32 %v2093, %v2093
      %v2098 = vmul.f32 %v2094, %v2094
      %v2099 = vmul.f32 %v2095, %v2095
      %v2100 = vmul.f32 %v2096, %v2096
      %v2101 = vsub.f32 0.0, %v2097
      %v2102 = vsub.f32 0.0, %v2098
      %v2103 = vsub.f32 0.0, %v2099
      %v2104 = vsub.f32 0.0, %v2100
      %v2105 = vmul.f32 %v2101, 1.442695
      %v2106 = vpow.pop %v2105
      %v2107 = vmul.f32 %v2102, 1.442695
      %v2108 = vpow.pop %v2107
      %v2109 = vmul.f32 %v2103, 1.442695
      %v2110 = vpow.pop %v2109
      %v2111 = vmul.f32 %v2104, 1.442695
      %v2112 = vpow.pop %v2111
      %v2113 = vadd.f32 %v2085, %v2106
      %v2114 = vadd.f32 %v2086, %v2108
      %v2115 = vadd.f32 %v2087, %v2110
      %v2116 = vadd.f32 %v2088, %v2112
      %2117 = vset.pattern.permute.xlu0 3
      %2118 = vperm.xlu0 %2117, %v191
      %v2119 = vpop.permute.xlu0 %2118
      %v2121 = vsub.f32 %v2119, %v2024
      %v2122 = vsub.f32 %v2119, %v2025
      %v2123 = vsub.f32 %v2119, %v2026
      %v2124 = vsub.f32 %v2119, %v2027
      %v2125 = vmul.f32 %v2121, %v2121
      %v2126 = vmul.f32 %v2122, %v2122
      %v2127 = vmul.f32 %v2123, %v2123
      %v2128 = vmul.f32 %v2124, %v2124
      %v2129 = vsub.f32 0.0, %v2125
      %v2130 = vsub.f32 0.0, %v2126
      %v2131 = vsub.f32 0.0, %v2127
      %v2132 = vsub.f32 0.0, %v2128
      %v2133 = vmul.f32 %v2129, 1.442695
      %v2134 = vpow.pop %v2133
      %v2135 = vmul.f32 %v2130, 1.442695
      %v2136 = vpow.pop %v2135
      %v2137 = vmul.f32 %v2131, 1.442695
      %v2138 = vpow.pop %v2137
      %v2139 = vmul.f32 %v2132, 1.442695
      %v2140 = vpow.pop %v2139
      %v2141 = vadd.f32 %v2113, %v2134
      %v2142 = vadd.f32 %v2114, %v2136
      %v2143 = vadd.f32 %v2115, %v2138
      %v2144 = vadd.f32 %v2116, %v2140
      %2145 = vset.pattern.permute.xlu0 4
      %2146 = vperm.xlu0 %2145, %v191
      %v2147 = vpop.permute.xlu0 %2146
      %v2149 = vsub.f32 %v2147, %v2024
      %v2150 = vsub.f32 %v2147, %v2025
      %v2151 = vsub.f32 %v2147, %v2026
      %v2152 = vsub.f32 %v2147, %v2027
      %v2153 = vmul.f32 %v2149, %v2149
      %v2154 = vmul.f32 %v2150, %v2150
      %v2155 = vmul.f32 %v2151, %v2151
      %v2156 = vmul.f32 %v2152, %v2152
      %v2157 = vsub.f32 0.0, %v2153
      %v2158 = vsub.f32 0.0, %v2154
      %v2159 = vsub.f32 0.0, %v2155
      %v2160 = vsub.f32 0.0, %v2156
      %v2161 = vmul.f32 %v2157, 1.442695
      %v2162 = vpow.pop %v2161
      %v2163 = vmul.f32 %v2158, 1.442695
      %v2164 = vpow.pop %v2163
      %v2165 = vmul.f32 %v2159, 1.442695
      %v2166 = vpow.pop %v2165
      %v2167 = vmul.f32 %v2160, 1.442695
      %v2168 = vpow.pop %v2167
      %v2169 = vadd.f32 %v2141, %v2162
      %v2170 = vadd.f32 %v2142, %v2164
      %v2171 = vadd.f32 %v2143, %v2166
      %v2172 = vadd.f32 %v2144, %v2168
      %2173 = vset.pattern.permute.xlu0 5
      %2174 = vperm.xlu0 %2173, %v191
      %v2175 = vpop.permute.xlu0 %2174
      %v2177 = vsub.f32 %v2175, %v2024
      %v2178 = vsub.f32 %v2175, %v2025
      %v2179 = vsub.f32 %v2175, %v2026
      %v2180 = vsub.f32 %v2175, %v2027
      %v2181 = vmul.f32 %v2177, %v2177
      %v2182 = vmul.f32 %v2178, %v2178
      %v2183 = vmul.f32 %v2179, %v2179
      %v2184 = vmul.f32 %v2180, %v2180
      %v2185 = vsub.f32 0.0, %v2181
      %v2186 = vsub.f32 0.0, %v2182
      %v2187 = vsub.f32 0.0, %v2183
      %v2188 = vsub.f32 0.0, %v2184
      %v2189 = vmul.f32 %v2185, 1.442695
      %v2190 = vpow.pop %v2189
      %v2191 = vmul.f32 %v2186, 1.442695
      %v2192 = vpow.pop %v2191
      %v2193 = vmul.f32 %v2187, 1.442695
      %v2194 = vpow.pop %v2193
      %v2195 = vmul.f32 %v2188, 1.442695
      %v2196 = vpow.pop %v2195
      %v2197 = vadd.f32 %v2169, %v2190
      %v2198 = vadd.f32 %v2170, %v2192
      %v2199 = vadd.f32 %v2171, %v2194
      %v2200 = vadd.f32 %v2172, %v2196
      %2201 = vset.pattern.permute.xlu0 6
      %2202 = vperm.xlu0 %2201, %v191
      %v2203 = vpop.permute.xlu0 %2202
      %v2205 = vsub.f32 %v2203, %v2024
      %v2206 = vsub.f32 %v2203, %v2025
      %v2207 = vsub.f32 %v2203, %v2026
      %v2208 = vsub.f32 %v2203, %v2027
      %v2209 = vmul.f32 %v2205, %v2205
      %v2210 = vmul.f32 %v2206, %v2206
      %v2211 = vmul.f32 %v2207, %v2207
      %v2212 = vmul.f32 %v2208, %v2208
      %v2213 = vsub.f32 0.0, %v2209
      %v2214 = vsub.f32 0.0, %v2210
      %v2215 = vsub.f32 0.0, %v2211
      %v2216 = vsub.f32 0.0, %v2212
      %v2217 = vmul.f32 %v2213, 1.442695
      %v2218 = vpow.pop %v2217
      %v2219 = vmul.f32 %v2214, 1.442695
      %v2220 = vpow.pop %v2219
      %v2221 = vmul.f32 %v2215, 1.442695
      %v2222 = vpow.pop %v2221
      %v2223 = vmul.f32 %v2216, 1.442695
      %v2224 = vpow.pop %v2223
      %v2225 = vadd.f32 %v2197, %v2218
      %v2226 = vadd.f32 %v2198, %v2220
      %v2227 = vadd.f32 %v2199, %v2222
      %v2228 = vadd.f32 %v2200, %v2224
      %2229 = vset.pattern.permute.xlu0 7
      %2230 = vperm.xlu0 %2229, %v191
      %v2231 = vpop.permute.xlu0 %2230
      %v2233 = vsub.f32 %v2231, %v2024
      %v2234 = vsub.f32 %v2231, %v2025
      %v2235 = vsub.f32 %v2231, %v2026
      %v2236 = vsub.f32 %v2231, %v2027
      %v2237 = vmul.f32 %v2233, %v2233
      %v2238 = vmul.f32 %v2234, %v2234
      %v2239 = vmul.f32 %v2235, %v2235
      %v2240 = vmul.f32 %v2236, %v2236
      %v2241 = vsub.f32 0.0, %v2237
      %v2242 = vsub.f32 0.0, %v2238
      %v2243 = vsub.f32 0.0, %v2239
      %v2244 = vsub.f32 0.0, %v2240
      %v2245 = vmul.f32 %v2241, 1.442695
      %v2246 = vpow.pop %v2245
      %v2247 = vmul.f32 %v2242, 1.442695
      %v2248 = vpow.pop %v2247
      %v2249 = vmul.f32 %v2243, 1.442695
      %v2250 = vpow.pop %v2249
      %v2251 = vmul.f32 %v2244, 1.442695
      %v2252 = vpow.pop %v2251
      %v2253 = vadd.f32 %v2225, %v2246
      %v2254 = vadd.f32 %v2226, %v2248
      %v2255 = vadd.f32 %v2227, %v2250
      %v2256 = vadd.f32 %v2228, %v2252
      %2257 = vset.pattern.permute.xlu0 8
      %2258 = vperm.xlu0 %2257, %v191
      %v2259 = vpop.permute.xlu0 %2258
      %v2261 = vsub.f32 %v2259, %v2024
      %v2262 = vsub.f32 %v2259, %v2025
      %v2263 = vsub.f32 %v2259, %v2026
      %v2264 = vsub.f32 %v2259, %v2027
      %v2265 = vmul.f32 %v2261, %v2261
      %v2266 = vmul.f32 %v2262, %v2262
      %v2267 = vmul.f32 %v2263, %v2263
      %v2268 = vmul.f32 %v2264, %v2264
      %v2269 = vsub.f32 0.0, %v2265
      %v2270 = vsub.f32 0.0, %v2266
      %v2271 = vsub.f32 0.0, %v2267
      %v2272 = vsub.f32 0.0, %v2268
      %v2273 = vmul.f32 %v2269, 1.442695
      %v2274 = vpow.pop %v2273
      %v2275 = vmul.f32 %v2270, 1.442695
      %v2276 = vpow.pop %v2275
      %v2277 = vmul.f32 %v2271, 1.442695
      %v2278 = vpow.pop %v2277
      %v2279 = vmul.f32 %v2272, 1.442695
      %v2280 = vpow.pop %v2279
      %v2281 = vadd.f32 %v2253, %v2274
      %v2282 = vadd.f32 %v2254, %v2276
      %v2283 = vadd.f32 %v2255, %v2278
      %v2284 = vadd.f32 %v2256, %v2280
      %2285 = vset.pattern.permute.xlu0 9
      %2286 = vperm.xlu0 %2285, %v191
      %v2287 = vpop.permute.xlu0 %2286
      %v2289 = vsub.f32 %v2287, %v2024
      %v2290 = vsub.f32 %v2287, %v2025
      %v2291 = vsub.f32 %v2287, %v2026
      %v2292 = vsub.f32 %v2287, %v2027
      %v2293 = vmul.f32 %v2289, %v2289
      %v2294 = vmul.f32 %v2290, %v2290
      %v2295 = vmul.f32 %v2291, %v2291
      %v2296 = vmul.f32 %v2292, %v2292
      %v2297 = vsub.f32 0.0, %v2293
      %v2298 = vsub.f32 0.0, %v2294
      %v2299 = vsub.f32 0.0, %v2295
      %v2300 = vsub.f32 0.0, %v2296
      %v2301 = vmul.f32 %v2297, 1.442695
      %v2302 = vpow.pop %v2301
      %v2303 = vmul.f32 %v2298, 1.442695
      %v2304 = vpow.pop %v2303
      %v2305 = vmul.f32 %v2299, 1.442695
      %v2306 = vpow.pop %v2305
      %v2307 = vmul.f32 %v2300, 1.442695
      %v2308 = vpow.pop %v2307
      %v2309 = vadd.f32 %v2281, %v2302
      %v2310 = vadd.f32 %v2282, %v2304
      %v2311 = vadd.f32 %v2283, %v2306
      %v2312 = vadd.f32 %v2284, %v2308
      %2313 = vset.pattern.permute.xlu0 10
      %2314 = vperm.xlu0 %2313, %v191
      %v2315 = vpop.permute.xlu0 %2314
      %v2317 = vsub.f32 %v2315, %v2024
      %v2318 = vsub.f32 %v2315, %v2025
      %v2319 = vsub.f32 %v2315, %v2026
      %v2320 = vsub.f32 %v2315, %v2027
      %v2321 = vmul.f32 %v2317, %v2317
      %v2322 = vmul.f32 %v2318, %v2318
      %v2323 = vmul.f32 %v2319, %v2319
      %v2324 = vmul.f32 %v2320, %v2320
      %v2325 = vsub.f32 0.0, %v2321
      %v2326 = vsub.f32 0.0, %v2322
      %v2327 = vsub.f32 0.0, %v2323
      %v2328 = vsub.f32 0.0, %v2324
      %v2329 = vmul.f32 %v2325, 1.442695
      %v2330 = vpow.pop %v2329
      %v2331 = vmul.f32 %v2326, 1.442695
      %v2332 = vpow.pop %v2331
      %v2333 = vmul.f32 %v2327, 1.442695
      %v2334 = vpow.pop %v2333
      %v2335 = vmul.f32 %v2328, 1.442695
      %v2336 = vpow.pop %v2335
      %v2337 = vadd.f32 %v2309, %v2330
      %v2338 = vadd.f32 %v2310, %v2332
      %v2339 = vadd.f32 %v2311, %v2334
      %v2340 = vadd.f32 %v2312, %v2336
      %2341 = vset.pattern.permute.xlu0 11
      %2342 = vperm.xlu0 %2341, %v191
      %v2343 = vpop.permute.xlu0 %2342
      %v2345 = vsub.f32 %v2343, %v2024
      %v2346 = vsub.f32 %v2343, %v2025
      %v2347 = vsub.f32 %v2343, %v2026
      %v2348 = vsub.f32 %v2343, %v2027
      %v2349 = vmul.f32 %v2345, %v2345
      %v2350 = vmul.f32 %v2346, %v2346
      %v2351 = vmul.f32 %v2347, %v2347
      %v2352 = vmul.f32 %v2348, %v2348
      %v2353 = vsub.f32 0.0, %v2349
      %v2354 = vsub.f32 0.0, %v2350
      %v2355 = vsub.f32 0.0, %v2351
      %v2356 = vsub.f32 0.0, %v2352
      %v2357 = vmul.f32 %v2353, 1.442695
      %v2358 = vpow.pop %v2357
      %v2359 = vmul.f32 %v2354, 1.442695
      %v2360 = vpow.pop %v2359
      %v2361 = vmul.f32 %v2355, 1.442695
      %v2362 = vpow.pop %v2361
      %v2363 = vmul.f32 %v2356, 1.442695
      %v2364 = vpow.pop %v2363
      %v2365 = vadd.f32 %v2337, %v2358
      %v2366 = vadd.f32 %v2338, %v2360
      %v2367 = vadd.f32 %v2339, %v2362
      %v2368 = vadd.f32 %v2340, %v2364
      %2369 = vset.pattern.permute.xlu0 12
      %2370 = vperm.xlu0 %2369, %v191
      %v2371 = vpop.permute.xlu0 %2370
      %v2373 = vsub.f32 %v2371, %v2024
      %v2374 = vsub.f32 %v2371, %v2025
      %v2375 = vsub.f32 %v2371, %v2026
      %v2376 = vsub.f32 %v2371, %v2027
      %v2377 = vmul.f32 %v2373, %v2373
      %v2378 = vmul.f32 %v2374, %v2374
      %v2379 = vmul.f32 %v2375, %v2375
      %v2380 = vmul.f32 %v2376, %v2376
      %v2381 = vsub.f32 0.0, %v2377
      %v2382 = vsub.f32 0.0, %v2378
      %v2383 = vsub.f32 0.0, %v2379
      %v2384 = vsub.f32 0.0, %v2380
      %v2385 = vmul.f32 %v2381, 1.442695
      %v2386 = vpow.pop %v2385
      %v2387 = vmul.f32 %v2382, 1.442695
      %v2388 = vpow.pop %v2387
      %v2389 = vmul.f32 %v2383, 1.442695
      %v2390 = vpow.pop %v2389
      %v2391 = vmul.f32 %v2384, 1.442695
      %v2392 = vpow.pop %v2391
      %v2393 = vadd.f32 %v2365, %v2386
      %v2394 = vadd.f32 %v2366, %v2388
      %v2395 = vadd.f32 %v2367, %v2390
      %v2396 = vadd.f32 %v2368, %v2392
      %2397 = vset.pattern.permute.xlu0 13
      %2398 = vperm.xlu0 %2397, %v191
      %v2399 = vpop.permute.xlu0 %2398
      %v2401 = vsub.f32 %v2399, %v2024
      %v2402 = vsub.f32 %v2399, %v2025
      %v2403 = vsub.f32 %v2399, %v2026
      %v2404 = vsub.f32 %v2399, %v2027
      %v2405 = vmul.f32 %v2401, %v2401
      %v2406 = vmul.f32 %v2402, %v2402
      %v2407 = vmul.f32 %v2403, %v2403
      %v2408 = vmul.f32 %v2404, %v2404
      %v2409 = vsub.f32 0.0, %v2405
      %v2410 = vsub.f32 0.0, %v2406
      %v2411 = vsub.f32 0.0, %v2407
      %v2412 = vsub.f32 0.0, %v2408
      %v2413 = vmul.f32 %v2409, 1.442695
      %v2414 = vpow.pop %v2413
      %v2415 = vmul.f32 %v2410, 1.442695
      %v2416 = vpow.pop %v2415
      %v2417 = vmul.f32 %v2411, 1.442695
      %v2418 = vpow.pop %v2417
      %v2419 = vmul.f32 %v2412, 1.442695
      %v2420 = vpow.pop %v2419
      %v2421 = vadd.f32 %v2393, %v2414
      %v2422 = vadd.f32 %v2394, %v2416
      %v2423 = vadd.f32 %v2395, %v2418
      %v2424 = vadd.f32 %v2396, %v2420
      %2425 = vset.pattern.permute.xlu0 14
      %2426 = vperm.xlu0 %2425, %v191
      %v2427 = vpop.permute.xlu0 %2426
      %v2429 = vsub.f32 %v2427, %v2024
      %v2430 = vsub.f32 %v2427, %v2025
      %v2431 = vsub.f32 %v2427, %v2026
      %v2432 = vsub.f32 %v2427, %v2027
      %v2433 = vmul.f32 %v2429, %v2429
      %v2434 = vmul.f32 %v2430, %v2430
      %v2435 = vmul.f32 %v2431, %v2431
      %v2436 = vmul.f32 %v2432, %v2432
      %v2437 = vsub.f32 0.0, %v2433
      %v2438 = vsub.f32 0.0, %v2434
      %v2439 = vsub.f32 0.0, %v2435
      %v2440 = vsub.f32 0.0, %v2436
      %v2441 = vmul.f32 %v2437, 1.442695
      %v2442 = vpow.pop %v2441
      %v2443 = vmul.f32 %v2438, 1.442695
      %v2444 = vpow.pop %v2443
      %v2445 = vmul.f32 %v2439, 1.442695
      %v2446 = vpow.pop %v2445
      %v2447 = vmul.f32 %v2440, 1.442695
      %v2448 = vpow.pop %v2447
      %v2449 = vadd.f32 %v2421, %v2442
      %v2450 = vadd.f32 %v2422, %v2444
      %v2451 = vadd.f32 %v2423, %v2446
      %v2452 = vadd.f32 %v2424, %v2448
      %2453 = vset.pattern.permute.xlu0 15
      %2454 = vperm.xlu0 %2453, %v191
      %v2455 = vpop.permute.xlu0 %2454
      %v2457 = vsub.f32 %v2455, %v2024
      %v2458 = vsub.f32 %v2455, %v2025
      %v2459 = vsub.f32 %v2455, %v2026
      %v2460 = vsub.f32 %v2455, %v2027
      %v2461 = vmul.f32 %v2457, %v2457
      %v2462 = vmul.f32 %v2458, %v2458
      %v2463 = vmul.f32 %v2459, %v2459
      %v2464 = vmul.f32 %v2460, %v2460
      %v2465 = vsub.f32 0.0, %v2461
      %v2466 = vsub.f32 0.0, %v2462
      %v2467 = vsub.f32 0.0, %v2463
      %v2468 = vsub.f32 0.0, %v2464
      %v2469 = vmul.f32 %v2465, 1.442695
      %v2470 = vpow.pop %v2469
      %v2471 = vmul.f32 %v2466, 1.442695
      %v2472 = vpow.pop %v2471
      %v2473 = vmul.f32 %v2467, 1.442695
      %v2474 = vpow.pop %v2473
      %v2475 = vmul.f32 %v2468, 1.442695
      %v2476 = vpow.pop %v2475
      %v2477 = vadd.f32 %v2449, %v2470
      %v2478 = vadd.f32 %v2450, %v2472
      %v2479 = vadd.f32 %v2451, %v2474
      %v2480 = vadd.f32 %v2452, %v2476
      %2481 = vset.pattern.permute.xlu0 16
      %2482 = vperm.xlu0 %2481, %v191
      %v2483 = vpop.permute.xlu0 %2482
      %v2485 = vsub.f32 %v2483, %v2024
      %v2486 = vsub.f32 %v2483, %v2025
      %v2487 = vsub.f32 %v2483, %v2026
      %v2488 = vsub.f32 %v2483, %v2027
      %v2489 = vmul.f32 %v2485, %v2485
      %v2490 = vmul.f32 %v2486, %v2486
      %v2491 = vmul.f32 %v2487, %v2487
      %v2492 = vmul.f32 %v2488, %v2488
      %v2493 = vsub.f32 0.0, %v2489
      %v2494 = vsub.f32 0.0, %v2490
      %v2495 = vsub.f32 0.0, %v2491
      %v2496 = vsub.f32 0.0, %v2492
      %v2497 = vmul.f32 %v2493, 1.442695
      %v2498 = vpow.pop %v2497
      %v2499 = vmul.f32 %v2494, 1.442695
      %v2500 = vpow.pop %v2499
      %v2501 = vmul.f32 %v2495, 1.442695
      %v2502 = vpow.pop %v2501
      %v2503 = vmul.f32 %v2496, 1.442695
      %v2504 = vpow.pop %v2503
      %v2505 = vadd.f32 %v2477, %v2498
      %v2506 = vadd.f32 %v2478, %v2500
      %v2507 = vadd.f32 %v2479, %v2502
      %v2508 = vadd.f32 %v2480, %v2504
      %2509 = vset.pattern.permute.xlu0 17
      %2510 = vperm.xlu0 %2509, %v191
      %v2511 = vpop.permute.xlu0 %2510
      %v2513 = vsub.f32 %v2511, %v2024
      %v2514 = vsub.f32 %v2511, %v2025
      %v2515 = vsub.f32 %v2511, %v2026
      %v2516 = vsub.f32 %v2511, %v2027
      %v2517 = vmul.f32 %v2513, %v2513
      %v2518 = vmul.f32 %v2514, %v2514
      %v2519 = vmul.f32 %v2515, %v2515
      %v2520 = vmul.f32 %v2516, %v2516
      %v2521 = vsub.f32 0.0, %v2517
      %v2522 = vsub.f32 0.0, %v2518
      %v2523 = vsub.f32 0.0, %v2519
      %v2524 = vsub.f32 0.0, %v2520
      %v2525 = vmul.f32 %v2521, 1.442695
      %v2526 = vpow.pop %v2525
      %v2527 = vmul.f32 %v2522, 1.442695
      %v2528 = vpow.pop %v2527
      %v2529 = vmul.f32 %v2523, 1.442695
      %v2530 = vpow.pop %v2529
      %v2531 = vmul.f32 %v2524, 1.442695
      %v2532 = vpow.pop %v2531
      %v2533 = vadd.f32 %v2505, %v2526
      %v2534 = vadd.f32 %v2506, %v2528
      %v2535 = vadd.f32 %v2507, %v2530
      %v2536 = vadd.f32 %v2508, %v2532
      %2537 = vset.pattern.permute.xlu0 18
      %2538 = vperm.xlu0 %2537, %v191
      %v2539 = vpop.permute.xlu0 %2538
      %v2541 = vsub.f32 %v2539, %v2024
      %v2542 = vsub.f32 %v2539, %v2025
      %v2543 = vsub.f32 %v2539, %v2026
      %v2544 = vsub.f32 %v2539, %v2027
      %v2545 = vmul.f32 %v2541, %v2541
      %v2546 = vmul.f32 %v2542, %v2542
      %v2547 = vmul.f32 %v2543, %v2543
      %v2548 = vmul.f32 %v2544, %v2544
      %v2549 = vsub.f32 0.0, %v2545
      %v2550 = vsub.f32 0.0, %v2546
      %v2551 = vsub.f32 0.0, %v2547
      %v2552 = vsub.f32 0.0, %v2548
      %v2553 = vmul.f32 %v2549, 1.442695
      %v2554 = vpow.pop %v2553
      %v2555 = vmul.f32 %v2550, 1.442695
      %v2556 = vpow.pop %v2555
      %v2557 = vmul.f32 %v2551, 1.442695
      %v2558 = vpow.pop %v2557
      %v2559 = vmul.f32 %v2552, 1.442695
      %v2560 = vpow.pop %v2559
      %v2561 = vadd.f32 %v2533, %v2554
      %v2562 = vadd.f32 %v2534, %v2556
      %v2563 = vadd.f32 %v2535, %v2558
      %v2564 = vadd.f32 %v2536, %v2560
      %2565 = vset.pattern.permute.xlu0 19
      %2566 = vperm.xlu0 %2565, %v191
      %v2567 = vpop.permute.xlu0 %2566
      %v2569 = vsub.f32 %v2567, %v2024
      %v2570 = vsub.f32 %v2567, %v2025
      %v2571 = vsub.f32 %v2567, %v2026
      %v2572 = vsub.f32 %v2567, %v2027
      %v2573 = vmul.f32 %v2569, %v2569
      %v2574 = vmul.f32 %v2570, %v2570
      %v2575 = vmul.f32 %v2571, %v2571
      %v2576 = vmul.f32 %v2572, %v2572
      %v2577 = vsub.f32 0.0, %v2573
      %v2578 = vsub.f32 0.0, %v2574
      %v2579 = vsub.f32 0.0, %v2575
      %v2580 = vsub.f32 0.0, %v2576
      %v2581 = vmul.f32 %v2577, 1.442695
      %v2582 = vpow.pop %v2581
      %v2583 = vmul.f32 %v2578, 1.442695
      %v2584 = vpow.pop %v2583
      %v2585 = vmul.f32 %v2579, 1.442695
      %v2586 = vpow.pop %v2585
      %v2587 = vmul.f32 %v2580, 1.442695
      %v2588 = vpow.pop %v2587
      %v2589 = vadd.f32 %v2561, %v2582
      %v2590 = vadd.f32 %v2562, %v2584
      %v2591 = vadd.f32 %v2563, %v2586
      %v2592 = vadd.f32 %v2564, %v2588
      %2593 = vset.pattern.permute.xlu0 20
      %2594 = vperm.xlu0 %2593, %v191
      %v2595 = vpop.permute.xlu0 %2594
      %v2597 = vsub.f32 %v2595, %v2024
      %v2598 = vsub.f32 %v2595, %v2025
      %v2599 = vsub.f32 %v2595, %v2026
      %v2600 = vsub.f32 %v2595, %v2027
      %v2601 = vmul.f32 %v2597, %v2597
      %v2602 = vmul.f32 %v2598, %v2598
      %v2603 = vmul.f32 %v2599, %v2599
      %v2604 = vmul.f32 %v2600, %v2600
      %v2605 = vsub.f32 0.0, %v2601
      %v2606 = vsub.f32 0.0, %v2602
      %v2607 = vsub.f32 0.0, %v2603
      %v2608 = vsub.f32 0.0, %v2604
      %v2609 = vmul.f32 %v2605, 1.442695
      %v2610 = vpow.pop %v2609
      %v2611 = vmul.f32 %v2606, 1.442695
      %v2612 = vpow.pop %v2611
      %v2613 = vmul.f32 %v2607, 1.442695
      %v2614 = vpow.pop %v2613
      %v2615 = vmul.f32 %v2608, 1.442695
      %v2616 = vpow.pop %v2615
      %v2617 = vadd.f32 %v2589, %v2610
      %v2618 = vadd.f32 %v2590, %v2612
      %v2619 = vadd.f32 %v2591, %v2614
      %v2620 = vadd.f32 %v2592, %v2616
      %2621 = vset.pattern.permute.xlu0 21
      %2622 = vperm.xlu0 %2621, %v191
      %v2623 = vpop.permute.xlu0 %2622
      %v2625 = vsub.f32 %v2623, %v2024
      %v2626 = vsub.f32 %v2623, %v2025
      %v2627 = vsub.f32 %v2623, %v2026
      %v2628 = vsub.f32 %v2623, %v2027
      %v2629 = vmul.f32 %v2625, %v2625
      %v2630 = vmul.f32 %v2626, %v2626
      %v2631 = vmul.f32 %v2627, %v2627
      %v2632 = vmul.f32 %v2628, %v2628
      %v2633 = vsub.f32 0.0, %v2629
      %v2634 = vsub.f32 0.0, %v2630
      %v2635 = vsub.f32 0.0, %v2631
      %v2636 = vsub.f32 0.0, %v2632
      %v2637 = vmul.f32 %v2633, 1.442695
      %v2638 = vpow.pop %v2637
      %v2639 = vmul.f32 %v2634, 1.442695
      %v2640 = vpow.pop %v2639
      %v2641 = vmul.f32 %v2635, 1.442695
      %v2642 = vpow.pop %v2641
      %v2643 = vmul.f32 %v2636, 1.442695
      %v2644 = vpow.pop %v2643
      %v2645 = vadd.f32 %v2617, %v2638
      %v2646 = vadd.f32 %v2618, %v2640
      %v2647 = vadd.f32 %v2619, %v2642
      %v2648 = vadd.f32 %v2620, %v2644
      %2649 = vset.pattern.permute.xlu0 22
      %2650 = vperm.xlu0 %2649, %v191
      %v2651 = vpop.permute.xlu0 %2650
      %v2653 = vsub.f32 %v2651, %v2024
      %v2654 = vsub.f32 %v2651, %v2025
      %v2655 = vsub.f32 %v2651, %v2026
      %v2656 = vsub.f32 %v2651, %v2027
      %v2657 = vmul.f32 %v2653, %v2653
      %v2658 = vmul.f32 %v2654, %v2654
      %v2659 = vmul.f32 %v2655, %v2655
      %v2660 = vmul.f32 %v2656, %v2656
      %v2661 = vsub.f32 0.0, %v2657
      %v2662 = vsub.f32 0.0, %v2658
      %v2663 = vsub.f32 0.0, %v2659
      %v2664 = vsub.f32 0.0, %v2660
      %v2665 = vmul.f32 %v2661, 1.442695
      %v2666 = vpow.pop %v2665
      %v2667 = vmul.f32 %v2662, 1.442695
      %v2668 = vpow.pop %v2667
      %v2669 = vmul.f32 %v2663, 1.442695
      %v2670 = vpow.pop %v2669
      %v2671 = vmul.f32 %v2664, 1.442695
      %v2672 = vpow.pop %v2671
      %v2673 = vadd.f32 %v2645, %v2666
      %v2674 = vadd.f32 %v2646, %v2668
      %v2675 = vadd.f32 %v2647, %v2670
      %v2676 = vadd.f32 %v2648, %v2672
      %2677 = vset.pattern.permute.xlu0 23
      %2678 = vperm.xlu0 %2677, %v191
      %v2679 = vpop.permute.xlu0 %2678
      %v2681 = vsub.f32 %v2679, %v2024
      %v2682 = vsub.f32 %v2679, %v2025
      %v2683 = vsub.f32 %v2679, %v2026
      %v2684 = vsub.f32 %v2679, %v2027
      %v2685 = vmul.f32 %v2681, %v2681
      %v2686 = vmul.f32 %v2682, %v2682
      %v2687 = vmul.f32 %v2683, %v2683
      %v2688 = vmul.f32 %v2684, %v2684
      %v2689 = vsub.f32 0.0, %v2685
      %v2690 = vsub.f32 0.0, %v2686
      %v2691 = vsub.f32 0.0, %v2687
      %v2692 = vsub.f32 0.0, %v2688
      %v2693 = vmul.f32 %v2689, 1.442695
      %v2694 = vpow.pop %v2693
      %v2695 = vmul.f32 %v2690, 1.442695
      %v2696 = vpow.pop %v2695
      %v2697 = vmul.f32 %v2691, 1.442695
      %v2698 = vpow.pop %v2697
      %v2699 = vmul.f32 %v2692, 1.442695
      %v2700 = vpow.pop %v2699
      %v2701 = vadd.f32 %v2673, %v2694
      %v2702 = vadd.f32 %v2674, %v2696
      %v2703 = vadd.f32 %v2675, %v2698
      %v2704 = vadd.f32 %v2676, %v2700
      %2705 = vset.pattern.permute.xlu0 24
      %2706 = vperm.xlu0 %2705, %v191
      %v2707 = vpop.permute.xlu0 %2706
      %v2709 = vsub.f32 %v2707, %v2024
      %v2710 = vsub.f32 %v2707, %v2025
      %v2711 = vsub.f32 %v2707, %v2026
      %v2712 = vsub.f32 %v2707, %v2027
      %v2713 = vmul.f32 %v2709, %v2709
      %v2714 = vmul.f32 %v2710, %v2710
      %v2715 = vmul.f32 %v2711, %v2711
      %v2716 = vmul.f32 %v2712, %v2712
      %v2717 = vsub.f32 0.0, %v2713
      %v2718 = vsub.f32 0.0, %v2714
      %v2719 = vsub.f32 0.0, %v2715
      %v2720 = vsub.f32 0.0, %v2716
      %v2721 = vmul.f32 %v2717, 1.442695
      %v2722 = vpow.pop %v2721
      %v2723 = vmul.f32 %v2718, 1.442695
      %v2724 = vpow.pop %v2723
      %v2725 = vmul.f32 %v2719, 1.442695
      %v2726 = vpow.pop %v2725
      %v2727 = vmul.f32 %v2720, 1.442695
      %v2728 = vpow.pop %v2727
      %v2729 = vadd.f32 %v2701, %v2722
      %v2730 = vadd.f32 %v2702, %v2724
      %v2731 = vadd.f32 %v2703, %v2726
      %v2732 = vadd.f32 %v2704, %v2728
      %2733 = vset.pattern.permute.xlu0 25
      %2734 = vperm.xlu0 %2733, %v191
      %v2735 = vpop.permute.xlu0 %2734
      %v2737 = vsub.f32 %v2735, %v2024
      %v2738 = vsub.f32 %v2735, %v2025
      %v2739 = vsub.f32 %v2735, %v2026
      %v2740 = vsub.f32 %v2735, %v2027
      %v2741 = vmul.f32 %v2737, %v2737
      %v2742 = vmul.f32 %v2738, %v2738
      %v2743 = vmul.f32 %v2739, %v2739
      %v2744 = vmul.f32 %v2740, %v2740
      %v2745 = vsub.f32 0.0, %v2741
      %v2746 = vsub.f32 0.0, %v2742
      %v2747 = vsub.f32 0.0, %v2743
      %v2748 = vsub.f32 0.0, %v2744
      %v2749 = vmul.f32 %v2745, 1.442695
      %v2750 = vpow.pop %v2749
      %v2751 = vmul.f32 %v2746, 1.442695
      %v2752 = vpow.pop %v2751
      %v2753 = vmul.f32 %v2747, 1.442695
      %v2754 = vpow.pop %v2753
      %v2755 = vmul.f32 %v2748, 1.442695
      %v2756 = vpow.pop %v2755
      %v2757 = vadd.f32 %v2729, %v2750
      %v2758 = vadd.f32 %v2730, %v2752
      %v2759 = vadd.f32 %v2731, %v2754
      %v2760 = vadd.f32 %v2732, %v2756
      %2761 = vset.pattern.permute.xlu0 26
      %2762 = vperm.xlu0 %2761, %v191
      %v2763 = vpop.permute.xlu0 %2762
      %v2765 = vsub.f32 %v2763, %v2024
      %v2766 = vsub.f32 %v2763, %v2025
      %v2767 = vsub.f32 %v2763, %v2026
      %v2768 = vsub.f32 %v2763, %v2027
      %v2769 = vmul.f32 %v2765, %v2765
      %v2770 = vmul.f32 %v2766, %v2766
      %v2771 = vmul.f32 %v2767, %v2767
      %v2772 = vmul.f32 %v2768, %v2768
      %v2773 = vsub.f32 0.0, %v2769
      %v2774 = vsub.f32 0.0, %v2770
      %v2775 = vsub.f32 0.0, %v2771
      %v2776 = vsub.f32 0.0, %v2772
      %v2777 = vmul.f32 %v2773, 1.442695
      %v2778 = vpow.pop %v2777
      %v2779 = vmul.f32 %v2774, 1.442695
      %v2780 = vpow.pop %v2779
      %v2781 = vmul.f32 %v2775, 1.442695
      %v2782 = vpow.pop %v2781
      %v2783 = vmul.f32 %v2776, 1.442695
      %v2784 = vpow.pop %v2783
      %v2785 = vadd.f32 %v2757, %v2778
      %v2786 = vadd.f32 %v2758, %v2780
      %v2787 = vadd.f32 %v2759, %v2782
      %v2788 = vadd.f32 %v2760, %v2784
      %2789 = vset.pattern.permute.xlu0 27
      %2790 = vperm.xlu0 %2789, %v191
      %v2791 = vpop.permute.xlu0 %2790
      %v2793 = vsub.f32 %v2791, %v2024
      %v2794 = vsub.f32 %v2791, %v2025
      %v2795 = vsub.f32 %v2791, %v2026
      %v2796 = vsub.f32 %v2791, %v2027
      %v2797 = vmul.f32 %v2793, %v2793
      %v2798 = vmul.f32 %v2794, %v2794
      %v2799 = vmul.f32 %v2795, %v2795
      %v2800 = vmul.f32 %v2796, %v2796
      %v2801 = vsub.f32 0.0, %v2797
      %v2802 = vsub.f32 0.0, %v2798
      %v2803 = vsub.f32 0.0, %v2799
      %v2804 = vsub.f32 0.0, %v2800
      %v2805 = vmul.f32 %v2801, 1.442695
      %v2806 = vpow.pop %v2805
      %v2807 = vmul.f32 %v2802, 1.442695
      %v2808 = vpow.pop %v2807
      %v2809 = vmul.f32 %v2803, 1.442695
      %v2810 = vpow.pop %v2809
      %v2811 = vmul.f32 %v2804, 1.442695
      %v2812 = vpow.pop %v2811
      %v2813 = vadd.f32 %v2785, %v2806
      %v2814 = vadd.f32 %v2786, %v2808
      %v2815 = vadd.f32 %v2787, %v2810
      %v2816 = vadd.f32 %v2788, %v2812
      %2817 = vset.pattern.permute.xlu0 28
      %2818 = vperm.xlu0 %2817, %v191
      %v2819 = vpop.permute.xlu0 %2818
      %v2821 = vsub.f32 %v2819, %v2024
      %v2822 = vsub.f32 %v2819, %v2025
      %v2823 = vsub.f32 %v2819, %v2026
      %v2824 = vsub.f32 %v2819, %v2027
      %v2825 = vmul.f32 %v2821, %v2821
      %v2826 = vmul.f32 %v2822, %v2822
      %v2827 = vmul.f32 %v2823, %v2823
      %v2828 = vmul.f32 %v2824, %v2824
      %v2829 = vsub.f32 0.0, %v2825
      %v2830 = vsub.f32 0.0, %v2826
      %v2831 = vsub.f32 0.0, %v2827
      %v2832 = vsub.f32 0.0, %v2828
      %v2833 = vmul.f32 %v2829, 1.442695
      %v2834 = vpow.pop %v2833
      %v2835 = vmul.f32 %v2830, 1.442695
      %v2836 = vpow.pop %v2835
      %v2837 = vmul.f32 %v2831, 1.442695
      %v2838 = vpow.pop %v2837
      %v2839 = vmul.f32 %v2832, 1.442695
      %v2840 = vpow.pop %v2839
      %v2841 = vadd.f32 %v2813, %v2834
      %v2842 = vadd.f32 %v2814, %v2836
      %v2843 = vadd.f32 %v2815, %v2838
      %v2844 = vadd.f32 %v2816, %v2840
      %2845 = vset.pattern.permute.xlu0 29
      %2846 = vperm.xlu0 %2845, %v191
      %v2847 = vpop.permute.xlu0 %2846
      %v2849 = vsub.f32 %v2847, %v2024
      %v2850 = vsub.f32 %v2847, %v2025
      %v2851 = vsub.f32 %v2847, %v2026
      %v2852 = vsub.f32 %v2847, %v2027
      %v2853 = vmul.f32 %v2849, %v2849
      %v2854 = vmul.f32 %v2850, %v2850
      %v2855 = vmul.f32 %v2851, %v2851
      %v2856 = vmul.f32 %v2852, %v2852
      %v2857 = vsub.f32 0.0, %v2853
      %v2858 = vsub.f32 0.0, %v2854
      %v2859 = vsub.f32 0.0, %v2855
      %v2860 = vsub.f32 0.0, %v2856
      %v2861 = vmul.f32 %v2857, 1.442695
      %v2862 = vpow.pop %v2861
      %v2863 = vmul.f32 %v2858, 1.442695
      %v2864 = vpow.pop %v2863
      %v2865 = vmul.f32 %v2859, 1.442695
      %v2866 = vpow.pop %v2865
      %v2867 = vmul.f32 %v2860, 1.442695
      %v2868 = vpow.pop %v2867
      %v2869 = vadd.f32 %v2841, %v2862
      %v2870 = vadd.f32 %v2842, %v2864
      %v2871 = vadd.f32 %v2843, %v2866
      %v2872 = vadd.f32 %v2844, %v2868
      %2873 = vset.pattern.permute.xlu0 30
      %2874 = vperm.xlu0 %2873, %v191
      %v2875 = vpop.permute.xlu0 %2874
      %v2877 = vsub.f32 %v2875, %v2024
      %v2878 = vsub.f32 %v2875, %v2025
      %v2879 = vsub.f32 %v2875, %v2026
      %v2880 = vsub.f32 %v2875, %v2027
      %v2881 = vmul.f32 %v2877, %v2877
      %v2882 = vmul.f32 %v2878, %v2878
      %v2883 = vmul.f32 %v2879, %v2879
      %v2884 = vmul.f32 %v2880, %v2880
      %v2885 = vsub.f32 0.0, %v2881
      %v2886 = vsub.f32 0.0, %v2882
      %v2887 = vsub.f32 0.0, %v2883
      %v2888 = vsub.f32 0.0, %v2884
      %v2889 = vmul.f32 %v2885, 1.442695
      %v2890 = vpow.pop %v2889
      %v2891 = vmul.f32 %v2886, 1.442695
      %v2892 = vpow.pop %v2891
      %v2893 = vmul.f32 %v2887, 1.442695
      %v2894 = vpow.pop %v2893
      %v2895 = vmul.f32 %v2888, 1.442695
      %v2896 = vpow.pop %v2895
      %v2897 = vadd.f32 %v2869, %v2890
      %v2898 = vadd.f32 %v2870, %v2892
      %v2899 = vadd.f32 %v2871, %v2894
      %v2900 = vadd.f32 %v2872, %v2896
      %2901 = vset.pattern.permute.xlu0 31
      %2902 = vperm.xlu0 %2901, %v191
      %v2903 = vpop.permute.xlu0 %2902
      %v2905 = vsub.f32 %v2903, %v2024
      %v2906 = vsub.f32 %v2903, %v2025
      %v2907 = vsub.f32 %v2903, %v2026
      %v2908 = vsub.f32 %v2903, %v2027
      %v2909 = vmul.f32 %v2905, %v2905
      %v2910 = vmul.f32 %v2906, %v2906
      %v2911 = vmul.f32 %v2907, %v2907
      %v2912 = vmul.f32 %v2908, %v2908
      %v2913 = vsub.f32 0.0, %v2909
      %v2914 = vsub.f32 0.0, %v2910
      %v2915 = vsub.f32 0.0, %v2911
      %v2916 = vsub.f32 0.0, %v2912
      %v2917 = vmul.f32 %v2913, 1.442695
      %v2918 = vpow.pop %v2917
      %v2919 = vmul.f32 %v2914, 1.442695
      %v2920 = vpow.pop %v2919
      %v2921 = vmul.f32 %v2915, 1.442695
      %v2922 = vpow.pop %v2921
      %v2923 = vmul.f32 %v2916, 1.442695
      %v2924 = vpow.pop %v2923
      %v2925 = vadd.f32 %v2897, %v2918
      %v2926 = vadd.f32 %v2898, %v2920
      %v2927 = vadd.f32 %v2899, %v2922
      %v2928 = vadd.f32 %v2900, %v2924
      %2929 = vset.pattern.permute.xlu0 32
      %2930 = vperm.xlu0 %2929, %v191
      %v2931 = vpop.permute.xlu0 %2930
      %v2933 = vsub.f32 %v2931, %v2024
      %v2934 = vsub.f32 %v2931, %v2025
      %v2935 = vsub.f32 %v2931, %v2026
      %v2936 = vsub.f32 %v2931, %v2027
      %v2937 = vmul.f32 %v2933, %v2933
      %v2938 = vmul.f32 %v2934, %v2934
      %v2939 = vmul.f32 %v2935, %v2935
      %v2940 = vmul.f32 %v2936, %v2936
      %v2941 = vsub.f32 0.0, %v2937
      %v2942 = vsub.f32 0.0, %v2938
      %v2943 = vsub.f32 0.0, %v2939
      %v2944 = vsub.f32 0.0, %v2940
      %v2945 = vmul.f32 %v2941, 1.442695
      %v2946 = vpow.pop %v2945
      %v2947 = vmul.f32 %v2942, 1.442695
      %v2948 = vpow.pop %v2947
      %v2949 = vmul.f32 %v2943, 1.442695
      %v2950 = vpow.pop %v2949
      %v2951 = vmul.f32 %v2944, 1.442695
      %v2952 = vpow.pop %v2951
      %v2953 = vadd.f32 %v2925, %v2946
      %v2954 = vadd.f32 %v2926, %v2948
      %v2955 = vadd.f32 %v2927, %v2950
      %v2956 = vadd.f32 %v2928, %v2952
      %2957 = vset.pattern.permute.xlu0 33
      %2958 = vperm.xlu0 %2957, %v191
      %v2959 = vpop.permute.xlu0 %2958
      %v2961 = vsub.f32 %v2959, %v2024
      %v2962 = vsub.f32 %v2959, %v2025
      %v2963 = vsub.f32 %v2959, %v2026
      %v2964 = vsub.f32 %v2959, %v2027
      %v2965 = vmul.f32 %v2961, %v2961
      %v2966 = vmul.f32 %v2962, %v2962
      %v2967 = vmul.f32 %v2963, %v2963
      %v2968 = vmul.f32 %v2964, %v2964
      %v2969 = vsub.f32 0.0, %v2965
      %v2970 = vsub.f32 0.0, %v2966
      %v2971 = vsub.f32 0.0, %v2967
      %v2972 = vsub.f32 0.0, %v2968
      %v2973 = vmul.f32 %v2969, 1.442695
      %v2974 = vpow.pop %v2973
      %v2975 = vmul.f32 %v2970, 1.442695
      %v2976 = vpow.pop %v2975
      %v2977 = vmul.f32 %v2971, 1.442695
      %v2978 = vpow.pop %v2977
      %v2979 = vmul.f32 %v2972, 1.442695
      %v2980 = vpow.pop %v2979
      %v2981 = vadd.f32 %v2953, %v2974
      %v2982 = vadd.f32 %v2954, %v2976
      %v2983 = vadd.f32 %v2955, %v2978
      %v2984 = vadd.f32 %v2956, %v2980
      %2985 = vset.pattern.permute.xlu0 34
      %2986 = vperm.xlu0 %2985, %v191
      %v2987 = vpop.permute.xlu0 %2986
      %v2989 = vsub.f32 %v2987, %v2024
      %v2990 = vsub.f32 %v2987, %v2025
      %v2991 = vsub.f32 %v2987, %v2026
      %v2992 = vsub.f32 %v2987, %v2027
      %v2993 = vmul.f32 %v2989, %v2989
      %v2994 = vmul.f32 %v2990, %v2990
      %v2995 = vmul.f32 %v2991, %v2991
      %v2996 = vmul.f32 %v2992, %v2992
      %v2997 = vsub.f32 0.0, %v2993
      %v2998 = vsub.f32 0.0, %v2994
      %v2999 = vsub.f32 0.0, %v2995
      %v3000 = vsub.f32 0.0, %v2996
      %v3001 = vmul.f32 %v2997, 1.442695
      %v3002 = vpow.pop %v3001
      %v3003 = vmul.f32 %v2998, 1.442695
      %v3004 = vpow.pop %v3003
      %v3005 = vmul.f32 %v2999, 1.442695
      %v3006 = vpow.pop %v3005
      %v3007 = vmul.f32 %v3000, 1.442695
      %v3008 = vpow.pop %v3007
      %v3009 = vadd.f32 %v2981, %v3002
      %v3010 = vadd.f32 %v2982, %v3004
      %v3011 = vadd.f32 %v2983, %v3006
      %v3012 = vadd.f32 %v2984, %v3008
      %3013 = vset.pattern.permute.xlu0 35
      %3014 = vperm.xlu0 %3013, %v191
      %v3015 = vpop.permute.xlu0 %3014
      %v3017 = vsub.f32 %v3015, %v2024
      %v3018 = vsub.f32 %v3015, %v2025
      %v3019 = vsub.f32 %v3015, %v2026
      %v3020 = vsub.f32 %v3015, %v2027
      %v3021 = vmul.f32 %v3017, %v3017
      %v3022 = vmul.f32 %v3018, %v3018
      %v3023 = vmul.f32 %v3019, %v3019
      %v3024 = vmul.f32 %v3020, %v3020
      %v3025 = vsub.f32 0.0, %v3021
      %v3026 = vsub.f32 0.0, %v3022
      %v3027 = vsub.f32 0.0, %v3023
      %v3028 = vsub.f32 0.0, %v3024
      %v3029 = vmul.f32 %v3025, 1.442695
      %v3030 = vpow.pop %v3029
      %v3031 = vmul.f32 %v3026, 1.442695
      %v3032 = vpow.pop %v3031
      %v3033 = vmul.f32 %v3027, 1.442695
      %v3034 = vpow.pop %v3033
      %v3035 = vmul.f32 %v3028, 1.442695
      %v3036 = vpow.pop %v3035
      %v3037 = vadd.f32 %v3009, %v3030
      %v3038 = vadd.f32 %v3010, %v3032
      %v3039 = vadd.f32 %v3011, %v3034
      %v3040 = vadd.f32 %v3012, %v3036
      %3041 = vset.pattern.permute.xlu0 36
      %3042 = vperm.xlu0 %3041, %v191
      %v3043 = vpop.permute.xlu0 %3042
      %v3045 = vsub.f32 %v3043, %v2024
      %v3046 = vsub.f32 %v3043, %v2025
      %v3047 = vsub.f32 %v3043, %v2026
      %v3048 = vsub.f32 %v3043, %v2027
      %v3049 = vmul.f32 %v3045, %v3045
      %v3050 = vmul.f32 %v3046, %v3046
      %v3051 = vmul.f32 %v3047, %v3047
      %v3052 = vmul.f32 %v3048, %v3048
      %v3053 = vsub.f32 0.0, %v3049
      %v3054 = vsub.f32 0.0, %v3050
      %v3055 = vsub.f32 0.0, %v3051
      %v3056 = vsub.f32 0.0, %v3052
      %v3057 = vmul.f32 %v3053, 1.442695
      %v3058 = vpow.pop %v3057
      %v3059 = vmul.f32 %v3054, 1.442695
      %v3060 = vpow.pop %v3059
      %v3061 = vmul.f32 %v3055, 1.442695
      %v3062 = vpow.pop %v3061
      %v3063 = vmul.f32 %v3056, 1.442695
      %v3064 = vpow.pop %v3063
      %v3065 = vadd.f32 %v3037, %v3058
      %v3066 = vadd.f32 %v3038, %v3060
      %v3067 = vadd.f32 %v3039, %v3062
      %v3068 = vadd.f32 %v3040, %v3064
      %3069 = vset.pattern.permute.xlu0 37
      %3070 = vperm.xlu0 %3069, %v191
      %v3071 = vpop.permute.xlu0 %3070
      %v3073 = vsub.f32 %v3071, %v2024
      %v3074 = vsub.f32 %v3071, %v2025
      %v3075 = vsub.f32 %v3071, %v2026
      %v3076 = vsub.f32 %v3071, %v2027
      %v3077 = vmul.f32 %v3073, %v3073
      %v3078 = vmul.f32 %v3074, %v3074
      %v3079 = vmul.f32 %v3075, %v3075
      %v3080 = vmul.f32 %v3076, %v3076
      %v3081 = vsub.f32 0.0, %v3077
      %v3082 = vsub.f32 0.0, %v3078
      %v3083 = vsub.f32 0.0, %v3079
      %v3084 = vsub.f32 0.0, %v3080
      %v3085 = vmul.f32 %v3081, 1.442695
      %v3086 = vpow.pop %v3085
      %v3087 = vmul.f32 %v3082, 1.442695
      %v3088 = vpow.pop %v3087
      %v3089 = vmul.f32 %v3083, 1.442695
      %v3090 = vpow.pop %v3089
      %v3091 = vmul.f32 %v3084, 1.442695
      %v3092 = vpow.pop %v3091
      %v3093 = vadd.f32 %v3065, %v3086
      %v3094 = vadd.f32 %v3066, %v3088
      %v3095 = vadd.f32 %v3067, %v3090
      %v3096 = vadd.f32 %v3068, %v3092
      %3097 = vset.pattern.permute.xlu0 38
      %3098 = vperm.xlu0 %3097, %v191
      %v3099 = vpop.permute.xlu0 %3098
      %v3101 = vsub.f32 %v3099, %v2024
      %v3102 = vsub.f32 %v3099, %v2025
      %v3103 = vsub.f32 %v3099, %v2026
      %v3104 = vsub.f32 %v3099, %v2027
      %v3105 = vmul.f32 %v3101, %v3101
      %v3106 = vmul.f32 %v3102, %v3102
      %v3107 = vmul.f32 %v3103, %v3103
      %v3108 = vmul.f32 %v3104, %v3104
      %v3109 = vsub.f32 0.0, %v3105
      %v3110 = vsub.f32 0.0, %v3106
      %v3111 = vsub.f32 0.0, %v3107
      %v3112 = vsub.f32 0.0, %v3108
      %v3113 = vmul.f32 %v3109, 1.442695
      %v3114 = vpow.pop %v3113
      %v3115 = vmul.f32 %v3110, 1.442695
      %v3116 = vpow.pop %v3115
      %v3117 = vmul.f32 %v3111, 1.442695
      %v3118 = vpow.pop %v3117
      %v3119 = vmul.f32 %v3112, 1.442695
      %v3120 = vpow.pop %v3119
      %v3121 = vadd.f32 %v3093, %v3114
      %v3122 = vadd.f32 %v3094, %v3116
      %v3123 = vadd.f32 %v3095, %v3118
      %v3124 = vadd.f32 %v3096, %v3120
      %3125 = vset.pattern.permute.xlu0 39
      %3126 = vperm.xlu0 %3125, %v191
      %v3127 = vpop.permute.xlu0 %3126
      %v3129 = vsub.f32 %v3127, %v2024
      %v3130 = vsub.f32 %v3127, %v2025
      %v3131 = vsub.f32 %v3127, %v2026
      %v3132 = vsub.f32 %v3127, %v2027
      %v3133 = vmul.f32 %v3129, %v3129
      %v3134 = vmul.f32 %v3130, %v3130
      %v3135 = vmul.f32 %v3131, %v3131
      %v3136 = vmul.f32 %v3132, %v3132
      %v3137 = vsub.f32 0.0, %v3133
      %v3138 = vsub.f32 0.0, %v3134
      %v3139 = vsub.f32 0.0, %v3135
      %v3140 = vsub.f32 0.0, %v3136
      %v3141 = vmul.f32 %v3137, 1.442695
      %v3142 = vpow.pop %v3141
      %v3143 = vmul.f32 %v3138, 1.442695
      %v3144 = vpow.pop %v3143
      %v3145 = vmul.f32 %v3139, 1.442695
      %v3146 = vpow.pop %v3145
      %v3147 = vmul.f32 %v3140, 1.442695
      %v3148 = vpow.pop %v3147
      %v3149 = vadd.f32 %v3121, %v3142
      %v3150 = vadd.f32 %v3122, %v3144
      %v3151 = vadd.f32 %v3123, %v3146
      %v3152 = vadd.f32 %v3124, %v3148
      %3153 = vset.pattern.permute.xlu0 40
      %3154 = vperm.xlu0 %3153, %v191
      %v3155 = vpop.permute.xlu0 %3154
      %v3157 = vsub.f32 %v3155, %v2024
      %v3158 = vsub.f32 %v3155, %v2025
      %v3159 = vsub.f32 %v3155, %v2026
      %v3160 = vsub.f32 %v3155, %v2027
      %v3161 = vmul.f32 %v3157, %v3157
      %v3162 = vmul.f32 %v3158, %v3158
      %v3163 = vmul.f32 %v3159, %v3159
      %v3164 = vmul.f32 %v3160, %v3160
      %v3165 = vsub.f32 0.0, %v3161
      %v3166 = vsub.f32 0.0, %v3162
      %v3167 = vsub.f32 0.0, %v3163
      %v3168 = vsub.f32 0.0, %v3164
      %v3169 = vmul.f32 %v3165, 1.442695
      %v3170 = vpow.pop %v3169
      %v3171 = vmul.f32 %v3166, 1.442695
      %v3172 = vpow.pop %v3171
      %v3173 = vmul.f32 %v3167, 1.442695
      %v3174 = vpow.pop %v3173
      %v3175 = vmul.f32 %v3168, 1.442695
      %v3176 = vpow.pop %v3175
      %v3177 = vadd.f32 %v3149, %v3170
      %v3178 = vadd.f32 %v3150, %v3172
      %v3179 = vadd.f32 %v3151, %v3174
      %v3180 = vadd.f32 %v3152, %v3176
      %3181 = vset.pattern.permute.xlu0 41
      %3182 = vperm.xlu0 %3181, %v191
      %v3183 = vpop.permute.xlu0 %3182
      %v3185 = vsub.f32 %v3183, %v2024
      %v3186 = vsub.f32 %v3183, %v2025
      %v3187 = vsub.f32 %v3183, %v2026
      %v3188 = vsub.f32 %v3183, %v2027
      %v3189 = vmul.f32 %v3185, %v3185
      %v3190 = vmul.f32 %v3186, %v3186
      %v3191 = vmul.f32 %v3187, %v3187
      %v3192 = vmul.f32 %v3188, %v3188
      %v3193 = vsub.f32 0.0, %v3189
      %v3194 = vsub.f32 0.0, %v3190
      %v3195 = vsub.f32 0.0, %v3191
      %v3196 = vsub.f32 0.0, %v3192
      %v3197 = vmul.f32 %v3193, 1.442695
      %v3198 = vpow.pop %v3197
      %v3199 = vmul.f32 %v3194, 1.442695
      %v3200 = vpow.pop %v3199
      %v3201 = vmul.f32 %v3195, 1.442695
      %v3202 = vpow.pop %v3201
      %v3203 = vmul.f32 %v3196, 1.442695
      %v3204 = vpow.pop %v3203
      %v3205 = vadd.f32 %v3177, %v3198
      %v3206 = vadd.f32 %v3178, %v3200
      %v3207 = vadd.f32 %v3179, %v3202
      %v3208 = vadd.f32 %v3180, %v3204
      %3209 = vset.pattern.permute.xlu0 42
      %3210 = vperm.xlu0 %3209, %v191
      %v3211 = vpop.permute.xlu0 %3210
      %v3213 = vsub.f32 %v3211, %v2024
      %v3214 = vsub.f32 %v3211, %v2025
      %v3215 = vsub.f32 %v3211, %v2026
      %v3216 = vsub.f32 %v3211, %v2027
      %v3217 = vmul.f32 %v3213, %v3213
      %v3218 = vmul.f32 %v3214, %v3214
      %v3219 = vmul.f32 %v3215, %v3215
      %v3220 = vmul.f32 %v3216, %v3216
      %v3221 = vsub.f32 0.0, %v3217
      %v3222 = vsub.f32 0.0, %v3218
      %v3223 = vsub.f32 0.0, %v3219
      %v3224 = vsub.f32 0.0, %v3220
      %v3225 = vmul.f32 %v3221, 1.442695
      %v3226 = vpow.pop %v3225
      %v3227 = vmul.f32 %v3222, 1.442695
      %v3228 = vpow.pop %v3227
      %v3229 = vmul.f32 %v3223, 1.442695
      %v3230 = vpow.pop %v3229
      %v3231 = vmul.f32 %v3224, 1.442695
      %v3232 = vpow.pop %v3231
      %v3233 = vadd.f32 %v3205, %v3226
      %v3234 = vadd.f32 %v3206, %v3228
      %v3235 = vadd.f32 %v3207, %v3230
      %v3236 = vadd.f32 %v3208, %v3232
      %3237 = vset.pattern.permute.xlu0 43
      %3238 = vperm.xlu0 %3237, %v191
      %v3239 = vpop.permute.xlu0 %3238
      %v3241 = vsub.f32 %v3239, %v2024
      %v3242 = vsub.f32 %v3239, %v2025
      %v3243 = vsub.f32 %v3239, %v2026
      %v3244 = vsub.f32 %v3239, %v2027
      %v3245 = vmul.f32 %v3241, %v3241
      %v3246 = vmul.f32 %v3242, %v3242
      %v3247 = vmul.f32 %v3243, %v3243
      %v3248 = vmul.f32 %v3244, %v3244
      %v3249 = vsub.f32 0.0, %v3245
      %v3250 = vsub.f32 0.0, %v3246
      %v3251 = vsub.f32 0.0, %v3247
      %v3252 = vsub.f32 0.0, %v3248
      %v3253 = vmul.f32 %v3249, 1.442695
      %v3254 = vpow.pop %v3253
      %v3255 = vmul.f32 %v3250, 1.442695
      %v3256 = vpow.pop %v3255
      %v3257 = vmul.f32 %v3251, 1.442695
      %v3258 = vpow.pop %v3257
      %v3259 = vmul.f32 %v3252, 1.442695
      %v3260 = vpow.pop %v3259
      %v3261 = vadd.f32 %v3233, %v3254
      %v3262 = vadd.f32 %v3234, %v3256
      %v3263 = vadd.f32 %v3235, %v3258
      %v3264 = vadd.f32 %v3236, %v3260
      %3265 = vset.pattern.permute.xlu0 44
      %3266 = vperm.xlu0 %3265, %v191
      %v3267 = vpop.permute.xlu0 %3266
      %v3269 = vsub.f32 %v3267, %v2024
      %v3270 = vsub.f32 %v3267, %v2025
      %v3271 = vsub.f32 %v3267, %v2026
      %v3272 = vsub.f32 %v3267, %v2027
      %v3273 = vmul.f32 %v3269, %v3269
      %v3274 = vmul.f32 %v3270, %v3270
      %v3275 = vmul.f32 %v3271, %v3271
      %v3276 = vmul.f32 %v3272, %v3272
      %v3277 = vsub.f32 0.0, %v3273
      %v3278 = vsub.f32 0.0, %v3274
      %v3279 = vsub.f32 0.0, %v3275
      %v3280 = vsub.f32 0.0, %v3276
      %v3281 = vmul.f32 %v3277, 1.442695
      %v3282 = vpow.pop %v3281
      %v3283 = vmul.f32 %v3278, 1.442695
      %v3284 = vpow.pop %v3283
      %v3285 = vmul.f32 %v3279, 1.442695
      %v3286 = vpow.pop %v3285
      %v3287 = vmul.f32 %v3280, 1.442695
      %v3288 = vpow.pop %v3287
      %v3289 = vadd.f32 %v3261, %v3282
      %v3290 = vadd.f32 %v3262, %v3284
      %v3291 = vadd.f32 %v3263, %v3286
      %v3292 = vadd.f32 %v3264, %v3288
      %3293 = vset.pattern.permute.xlu0 45
      %3294 = vperm.xlu0 %3293, %v191
      %v3295 = vpop.permute.xlu0 %3294
      %v3297 = vsub.f32 %v3295, %v2024
      %v3298 = vsub.f32 %v3295, %v2025
      %v3299 = vsub.f32 %v3295, %v2026
      %v3300 = vsub.f32 %v3295, %v2027
      %v3301 = vmul.f32 %v3297, %v3297
      %v3302 = vmul.f32 %v3298, %v3298
      %v3303 = vmul.f32 %v3299, %v3299
      %v3304 = vmul.f32 %v3300, %v3300
      %v3305 = vsub.f32 0.0, %v3301
      %v3306 = vsub.f32 0.0, %v3302
      %v3307 = vsub.f32 0.0, %v3303
      %v3308 = vsub.f32 0.0, %v3304
      %v3309 = vmul.f32 %v3305, 1.442695
      %v3310 = vpow.pop %v3309
      %v3311 = vmul.f32 %v3306, 1.442695
      %v3312 = vpow.pop %v3311
      %v3313 = vmul.f32 %v3307, 1.442695
      %v3314 = vpow.pop %v3313
      %v3315 = vmul.f32 %v3308, 1.442695
      %v3316 = vpow.pop %v3315
      %v3317 = vadd.f32 %v3289, %v3310
      %v3318 = vadd.f32 %v3290, %v3312
      %v3319 = vadd.f32 %v3291, %v3314
      %v3320 = vadd.f32 %v3292, %v3316
      %3321 = vset.pattern.permute.xlu0 46
      %3322 = vperm.xlu0 %3321, %v191
      %v3323 = vpop.permute.xlu0 %3322
      %v3325 = vsub.f32 %v3323, %v2024
      %v3326 = vsub.f32 %v3323, %v2025
      %v3327 = vsub.f32 %v3323, %v2026
      %v3328 = vsub.f32 %v3323, %v2027
      %v3329 = vmul.f32 %v3325, %v3325
      %v3330 = vmul.f32 %v3326, %v3326
      %v3331 = vmul.f32 %v3327, %v3327
      %v3332 = vmul.f32 %v3328, %v3328
      %v3333 = vsub.f32 0.0, %v3329
      %v3334 = vsub.f32 0.0, %v3330
      %v3335 = vsub.f32 0.0, %v3331
      %v3336 = vsub.f32 0.0, %v3332
      %v3337 = vmul.f32 %v3333, 1.442695
      %v3338 = vpow.pop %v3337
      %v3339 = vmul.f32 %v3334, 1.442695
      %v3340 = vpow.pop %v3339
      %v3341 = vmul.f32 %v3335, 1.442695
      %v3342 = vpow.pop %v3341
      %v3343 = vmul.f32 %v3336, 1.442695
      %v3344 = vpow.pop %v3343
      %v3345 = vadd.f32 %v3317, %v3338
      %v3346 = vadd.f32 %v3318, %v3340
      %v3347 = vadd.f32 %v3319, %v3342
      %v3348 = vadd.f32 %v3320, %v3344
      %3349 = vset.pattern.permute.xlu0 47
      %3350 = vperm.xlu0 %3349, %v191
      %v3351 = vpop.permute.xlu0 %3350
      %v3353 = vsub.f32 %v3351, %v2024
      %v3354 = vsub.f32 %v3351, %v2025
      %v3355 = vsub.f32 %v3351, %v2026
      %v3356 = vsub.f32 %v3351, %v2027
      %v3357 = vmul.f32 %v3353, %v3353
      %v3358 = vmul.f32 %v3354, %v3354
      %v3359 = vmul.f32 %v3355, %v3355
      %v3360 = vmul.f32 %v3356, %v3356
      %v3361 = vsub.f32 0.0, %v3357
      %v3362 = vsub.f32 0.0, %v3358
      %v3363 = vsub.f32 0.0, %v3359
      %v3364 = vsub.f32 0.0, %v3360
      %v3365 = vmul.f32 %v3361, 1.442695
      %v3366 = vpow.pop %v3365
      %v3367 = vmul.f32 %v3362, 1.442695
      %v3368 = vpow.pop %v3367
      %v3369 = vmul.f32 %v3363, 1.442695
      %v3370 = vpow.pop %v3369
      %v3371 = vmul.f32 %v3364, 1.442695
      %v3372 = vpow.pop %v3371
      %v3373 = vadd.f32 %v3345, %v3366
      %v3374 = vadd.f32 %v3346, %v3368
      %v3375 = vadd.f32 %v3347, %v3370
      %v3376 = vadd.f32 %v3348, %v3372
      %3377 = vset.pattern.permute.xlu0 48
      %3378 = vperm.xlu0 %3377, %v191
      %v3379 = vpop.permute.xlu0 %3378
      %v3381 = vsub.f32 %v3379, %v2024
      %v3382 = vsub.f32 %v3379, %v2025
      %v3383 = vsub.f32 %v3379, %v2026
      %v3384 = vsub.f32 %v3379, %v2027
      %v3385 = vmul.f32 %v3381, %v3381
      %v3386 = vmul.f32 %v3382, %v3382
      %v3387 = vmul.f32 %v3383, %v3383
      %v3388 = vmul.f32 %v3384, %v3384
      %v3389 = vsub.f32 0.0, %v3385
      %v3390 = vsub.f32 0.0, %v3386
      %v3391 = vsub.f32 0.0, %v3387
      %v3392 = vsub.f32 0.0, %v3388
      %v3393 = vmul.f32 %v3389, 1.442695
      %v3394 = vpow.pop %v3393
      %v3395 = vmul.f32 %v3390, 1.442695
      %v3396 = vpow.pop %v3395
      %v3397 = vmul.f32 %v3391, 1.442695
      %v3398 = vpow.pop %v3397
      %v3399 = vmul.f32 %v3392, 1.442695
      %v3400 = vpow.pop %v3399
      %v3401 = vadd.f32 %v3373, %v3394
      %v3402 = vadd.f32 %v3374, %v3396
      %v3403 = vadd.f32 %v3375, %v3398
      %v3404 = vadd.f32 %v3376, %v3400
      %3405 = vset.pattern.permute.xlu0 49
      %3406 = vperm.xlu0 %3405, %v191
      %v3407 = vpop.permute.xlu0 %3406
      %v3409 = vsub.f32 %v3407, %v2024
      %v3410 = vsub.f32 %v3407, %v2025
      %v3411 = vsub.f32 %v3407, %v2026
      %v3412 = vsub.f32 %v3407, %v2027
      %v3413 = vmul.f32 %v3409, %v3409
      %v3414 = vmul.f32 %v3410, %v3410
      %v3415 = vmul.f32 %v3411, %v3411
      %v3416 = vmul.f32 %v3412, %v3412
      %v3417 = vsub.f32 0.0, %v3413
      %v3418 = vsub.f32 0.0, %v3414
      %v3419 = vsub.f32 0.0, %v3415
      %v3420 = vsub.f32 0.0, %v3416
      %v3421 = vmul.f32 %v3417, 1.442695
      %v3422 = vpow.pop %v3421
      %v3423 = vmul.f32 %v3418, 1.442695
      %v3424 = vpow.pop %v3423
      %v3425 = vmul.f32 %v3419, 1.442695
      %v3426 = vpow.pop %v3425
      %v3427 = vmul.f32 %v3420, 1.442695
      %v3428 = vpow.pop %v3427
      %v3429 = vadd.f32 %v3401, %v3422
      %v3430 = vadd.f32 %v3402, %v3424
      %v3431 = vadd.f32 %v3403, %v3426
      %v3432 = vadd.f32 %v3404, %v3428
      %3433 = vset.pattern.permute.xlu0 50
      %3434 = vperm.xlu0 %3433, %v191
      %v3435 = vpop.permute.xlu0 %3434
      %v3437 = vsub.f32 %v3435, %v2024
      %v3438 = vsub.f32 %v3435, %v2025
      %v3439 = vsub.f32 %v3435, %v2026
      %v3440 = vsub.f32 %v3435, %v2027
      %v3441 = vmul.f32 %v3437, %v3437
      %v3442 = vmul.f32 %v3438, %v3438
      %v3443 = vmul.f32 %v3439, %v3439
      %v3444 = vmul.f32 %v3440, %v3440
      %v3445 = vsub.f32 0.0, %v3441
      %v3446 = vsub.f32 0.0, %v3442
      %v3447 = vsub.f32 0.0, %v3443
      %v3448 = vsub.f32 0.0, %v3444
      %v3449 = vmul.f32 %v3445, 1.442695
      %v3450 = vpow.pop %v3449
      %v3451 = vmul.f32 %v3446, 1.442695
      %v3452 = vpow.pop %v3451
      %v3453 = vmul.f32 %v3447, 1.442695
      %v3454 = vpow.pop %v3453
      %v3455 = vmul.f32 %v3448, 1.442695
      %v3456 = vpow.pop %v3455
      %v3457 = vadd.f32 %v3429, %v3450
      %v3458 = vadd.f32 %v3430, %v3452
      %v3459 = vadd.f32 %v3431, %v3454
      %v3460 = vadd.f32 %v3432, %v3456
      %3461 = vset.pattern.permute.xlu0 51
      %3462 = vperm.xlu0 %3461, %v191
      %v3463 = vpop.permute.xlu0 %3462
      %v3465 = vsub.f32 %v3463, %v2024
      %v3466 = vsub.f32 %v3463, %v2025
      %v3467 = vsub.f32 %v3463, %v2026
      %v3468 = vsub.f32 %v3463, %v2027
      %v3469 = vmul.f32 %v3465, %v3465
      %v3470 = vmul.f32 %v3466, %v3466
      %v3471 = vmul.f32 %v3467, %v3467
      %v3472 = vmul.f32 %v3468, %v3468
      %v3473 = vsub.f32 0.0, %v3469
      %v3474 = vsub.f32 0.0, %v3470
      %v3475 = vsub.f32 0.0, %v3471
      %v3476 = vsub.f32 0.0, %v3472
      %v3477 = vmul.f32 %v3473, 1.442695
      %v3478 = vpow.pop %v3477
      %v3479 = vmul.f32 %v3474, 1.442695
      %v3480 = vpow.pop %v3479
      %v3481 = vmul.f32 %v3475, 1.442695
      %v3482 = vpow.pop %v3481
      %v3483 = vmul.f32 %v3476, 1.442695
      %v3484 = vpow.pop %v3483
      %v3485 = vadd.f32 %v3457, %v3478
      %v3486 = vadd.f32 %v3458, %v3480
      %v3487 = vadd.f32 %v3459, %v3482
      %v3488 = vadd.f32 %v3460, %v3484
      %3489 = vset.pattern.permute.xlu0 52
      %3490 = vperm.xlu0 %3489, %v191
      %v3491 = vpop.permute.xlu0 %3490
      %v3493 = vsub.f32 %v3491, %v2024
      %v3494 = vsub.f32 %v3491, %v2025
      %v3495 = vsub.f32 %v3491, %v2026
      %v3496 = vsub.f32 %v3491, %v2027
      %v3497 = vmul.f32 %v3493, %v3493
      %v3498 = vmul.f32 %v3494, %v3494
      %v3499 = vmul.f32 %v3495, %v3495
      %v3500 = vmul.f32 %v3496, %v3496
      %v3501 = vsub.f32 0.0, %v3497
      %v3502 = vsub.f32 0.0, %v3498
      %v3503 = vsub.f32 0.0, %v3499
      %v3504 = vsub.f32 0.0, %v3500
      %v3505 = vmul.f32 %v3501, 1.442695
      %v3506 = vpow.pop %v3505
      %v3507 = vmul.f32 %v3502, 1.442695
      %v3508 = vpow.pop %v3507
      %v3509 = vmul.f32 %v3503, 1.442695
      %v3510 = vpow.pop %v3509
      %v3511 = vmul.f32 %v3504, 1.442695
      %v3512 = vpow.pop %v3511
      %v3513 = vadd.f32 %v3485, %v3506
      %v3514 = vadd.f32 %v3486, %v3508
      %v3515 = vadd.f32 %v3487, %v3510
      %v3516 = vadd.f32 %v3488, %v3512
      %3517 = vset.pattern.permute.xlu0 53
      %3518 = vperm.xlu0 %3517, %v191
      %v3519 = vpop.permute.xlu0 %3518
      %v3521 = vsub.f32 %v3519, %v2024
      %v3522 = vsub.f32 %v3519, %v2025
      %v3523 = vsub.f32 %v3519, %v2026
      %v3524 = vsub.f32 %v3519, %v2027
      %v3525 = vmul.f32 %v3521, %v3521
      %v3526 = vmul.f32 %v3522, %v3522
      %v3527 = vmul.f32 %v3523, %v3523
      %v3528 = vmul.f32 %v3524, %v3524
      %v3529 = vsub.f32 0.0, %v3525
      %v3530 = vsub.f32 0.0, %v3526
      %v3531 = vsub.f32 0.0, %v3527
      %v3532 = vsub.f32 0.0, %v3528
      %v3533 = vmul.f32 %v3529, 1.442695
      %v3534 = vpow.pop %v3533
      %v3535 = vmul.f32 %v3530, 1.442695
      %v3536 = vpow.pop %v3535
      %v3537 = vmul.f32 %v3531, 1.442695
      %v3538 = vpow.pop %v3537
      %v3539 = vmul.f32 %v3532, 1.442695
      %v3540 = vpow.pop %v3539
      %v3541 = vadd.f32 %v3513, %v3534
      %v3542 = vadd.f32 %v3514, %v3536
      %v3543 = vadd.f32 %v3515, %v3538
      %v3544 = vadd.f32 %v3516, %v3540
      %3545 = vset.pattern.permute.xlu0 54
      %3546 = vperm.xlu0 %3545, %v191
      %v3547 = vpop.permute.xlu0 %3546
      %v3549 = vsub.f32 %v3547, %v2024
      %v3550 = vsub.f32 %v3547, %v2025
      %v3551 = vsub.f32 %v3547, %v2026
      %v3552 = vsub.f32 %v3547, %v2027
      %v3553 = vmul.f32 %v3549, %v3549
      %v3554 = vmul.f32 %v3550, %v3550
      %v3555 = vmul.f32 %v3551, %v3551
      %v3556 = vmul.f32 %v3552, %v3552
      %v3557 = vsub.f32 0.0, %v3553
      %v3558 = vsub.f32 0.0, %v3554
      %v3559 = vsub.f32 0.0, %v3555
      %v3560 = vsub.f32 0.0, %v3556
      %v3561 = vmul.f32 %v3557, 1.442695
      %v3562 = vpow.pop %v3561
      %v3563 = vmul.f32 %v3558, 1.442695
      %v3564 = vpow.pop %v3563
      %v3565 = vmul.f32 %v3559, 1.442695
      %v3566 = vpow.pop %v3565
      %v3567 = vmul.f32 %v3560, 1.442695
      %v3568 = vpow.pop %v3567
      %v3569 = vadd.f32 %v3541, %v3562
      %v3570 = vadd.f32 %v3542, %v3564
      %v3571 = vadd.f32 %v3543, %v3566
      %v3572 = vadd.f32 %v3544, %v3568
      %3573 = vset.pattern.permute.xlu0 55
      %3574 = vperm.xlu0 %3573, %v191
      %v3575 = vpop.permute.xlu0 %3574
      %v3577 = vsub.f32 %v3575, %v2024
      %v3578 = vsub.f32 %v3575, %v2025
      %v3579 = vsub.f32 %v3575, %v2026
      %v3580 = vsub.f32 %v3575, %v2027
      %v3581 = vmul.f32 %v3577, %v3577
      %v3582 = vmul.f32 %v3578, %v3578
      %v3583 = vmul.f32 %v3579, %v3579
      %v3584 = vmul.f32 %v3580, %v3580
      %v3585 = vsub.f32 0.0, %v3581
      %v3586 = vsub.f32 0.0, %v3582
      %v3587 = vsub.f32 0.0, %v3583
      %v3588 = vsub.f32 0.0, %v3584
      %v3589 = vmul.f32 %v3585, 1.442695
      %v3590 = vpow.pop %v3589
      %v3591 = vmul.f32 %v3586, 1.442695
      %v3592 = vpow.pop %v3591
      %v3593 = vmul.f32 %v3587, 1.442695
      %v3594 = vpow.pop %v3593
      %v3595 = vmul.f32 %v3588, 1.442695
      %v3596 = vpow.pop %v3595
      %v3597 = vadd.f32 %v3569, %v3590
      %v3598 = vadd.f32 %v3570, %v3592
      %v3599 = vadd.f32 %v3571, %v3594
      %v3600 = vadd.f32 %v3572, %v3596
      %3601 = vset.pattern.permute.xlu0 56
      %3602 = vperm.xlu0 %3601, %v191
      %v3603 = vpop.permute.xlu0 %3602
      %v3605 = vsub.f32 %v3603, %v2024
      %v3606 = vsub.f32 %v3603, %v2025
      %v3607 = vsub.f32 %v3603, %v2026
      %v3608 = vsub.f32 %v3603, %v2027
      %v3609 = vmul.f32 %v3605, %v3605
      %v3610 = vmul.f32 %v3606, %v3606
      %v3611 = vmul.f32 %v3607, %v3607
      %v3612 = vmul.f32 %v3608, %v3608
      %v3613 = vsub.f32 0.0, %v3609
      %v3614 = vsub.f32 0.0, %v3610
      %v3615 = vsub.f32 0.0, %v3611
      %v3616 = vsub.f32 0.0, %v3612
      %v3617 = vmul.f32 %v3613, 1.442695
      %v3618 = vpow.pop %v3617
      %v3619 = vmul.f32 %v3614, 1.442695
      %v3620 = vpow.pop %v3619
      %v3621 = vmul.f32 %v3615, 1.442695
      %v3622 = vpow.pop %v3621
      %v3623 = vmul.f32 %v3616, 1.442695
      %v3624 = vpow.pop %v3623
      %v3625 = vadd.f32 %v3597, %v3618
      %v3626 = vadd.f32 %v3598, %v3620
      %v3627 = vadd.f32 %v3599, %v3622
      %v3628 = vadd.f32 %v3600, %v3624
      %3629 = vset.pattern.permute.xlu0 57
      %3630 = vperm.xlu0 %3629, %v191
      %v3631 = vpop.permute.xlu0 %3630
      %v3633 = vsub.f32 %v3631, %v2024
      %v3634 = vsub.f32 %v3631, %v2025
      %v3635 = vsub.f32 %v3631, %v2026
      %v3636 = vsub.f32 %v3631, %v2027
      %v3637 = vmul.f32 %v3633, %v3633
      %v3638 = vmul.f32 %v3634, %v3634
      %v3639 = vmul.f32 %v3635, %v3635
      %v3640 = vmul.f32 %v3636, %v3636
      %v3641 = vsub.f32 0.0, %v3637
      %v3642 = vsub.f32 0.0, %v3638
      %v3643 = vsub.f32 0.0, %v3639
      %v3644 = vsub.f32 0.0, %v3640
      %v3645 = vmul.f32 %v3641, 1.442695
      %v3646 = vpow.pop %v3645
      %v3647 = vmul.f32 %v3642, 1.442695
      %v3648 = vpow.pop %v3647
      %v3649 = vmul.f32 %v3643, 1.442695
      %v3650 = vpow.pop %v3649
      %v3651 = vmul.f32 %v3644, 1.442695
      %v3652 = vpow.pop %v3651
      %v3653 = vadd.f32 %v3625, %v3646
      %v3654 = vadd.f32 %v3626, %v3648
      %v3655 = vadd.f32 %v3627, %v3650
      %v3656 = vadd.f32 %v3628, %v3652
      %3657 = vset.pattern.permute.xlu0 58
      %3658 = vperm.xlu0 %3657, %v191
      %v3659 = vpop.permute.xlu0 %3658
      %v3661 = vsub.f32 %v3659, %v2024
      %v3662 = vsub.f32 %v3659, %v2025
      %v3663 = vsub.f32 %v3659, %v2026
      %v3664 = vsub.f32 %v3659, %v2027
      %v3665 = vmul.f32 %v3661, %v3661
      %v3666 = vmul.f32 %v3662, %v3662
      %v3667 = vmul.f32 %v3663, %v3663
      %v3668 = vmul.f32 %v3664, %v3664
      %v3669 = vsub.f32 0.0, %v3665
      %v3670 = vsub.f32 0.0, %v3666
      %v3671 = vsub.f32 0.0, %v3667
      %v3672 = vsub.f32 0.0, %v3668
      %v3673 = vmul.f32 %v3669, 1.442695
      %v3674 = vpow.pop %v3673
      %v3675 = vmul.f32 %v3670, 1.442695
      %v3676 = vpow.pop %v3675
      %v3677 = vmul.f32 %v3671, 1.442695
      %v3678 = vpow.pop %v3677
      %v3679 = vmul.f32 %v3672, 1.442695
      %v3680 = vpow.pop %v3679
      %v3681 = vadd.f32 %v3653, %v3674
      %v3682 = vadd.f32 %v3654, %v3676
      %v3683 = vadd.f32 %v3655, %v3678
      %v3684 = vadd.f32 %v3656, %v3680
      %3685 = vset.pattern.permute.xlu0 59
      %3686 = vperm.xlu0 %3685, %v191
      %v3687 = vpop.permute.xlu0 %3686
      %v3689 = vsub.f32 %v3687, %v2024
      %v3690 = vsub.f32 %v3687, %v2025
      %v3691 = vsub.f32 %v3687, %v2026
      %v3692 = vsub.f32 %v3687, %v2027
      %v3693 = vmul.f32 %v3689, %v3689
      %v3694 = vmul.f32 %v3690, %v3690
      %v3695 = vmul.f32 %v3691, %v3691
      %v3696 = vmul.f32 %v3692, %v3692
      %v3697 = vsub.f32 0.0, %v3693
      %v3698 = vsub.f32 0.0, %v3694
      %v3699 = vsub.f32 0.0, %v3695
      %v3700 = vsub.f32 0.0, %v3696
      %v3701 = vmul.f32 %v3697, 1.442695
      %v3702 = vpow.pop %v3701
      %v3703 = vmul.f32 %v3698, 1.442695
      %v3704 = vpow.pop %v3703
      %v3705 = vmul.f32 %v3699, 1.442695
      %v3706 = vpow.pop %v3705
      %v3707 = vmul.f32 %v3700, 1.442695
      %v3708 = vpow.pop %v3707
      %v3709 = vadd.f32 %v3681, %v3702
      %v3710 = vadd.f32 %v3682, %v3704
      %v3711 = vadd.f32 %v3683, %v3706
      %v3712 = vadd.f32 %v3684, %v3708
      %3713 = vset.pattern.permute.xlu0 60
      %3714 = vperm.xlu0 %3713, %v191
      %v3715 = vpop.permute.xlu0 %3714
      %v3717 = vsub.f32 %v3715, %v2024
      %v3718 = vsub.f32 %v3715, %v2025
      %v3719 = vsub.f32 %v3715, %v2026
      %v3720 = vsub.f32 %v3715, %v2027
      %v3721 = vmul.f32 %v3717, %v3717
      %v3722 = vmul.f32 %v3718, %v3718
      %v3723 = vmul.f32 %v3719, %v3719
      %v3724 = vmul.f32 %v3720, %v3720
      %v3725 = vsub.f32 0.0, %v3721
      %v3726 = vsub.f32 0.0, %v3722
      %v3727 = vsub.f32 0.0, %v3723
      %v3728 = vsub.f32 0.0, %v3724
      %v3729 = vmul.f32 %v3725, 1.442695
      %v3730 = vpow.pop %v3729
      %v3731 = vmul.f32 %v3726, 1.442695
      %v3732 = vpow.pop %v3731
      %v3733 = vmul.f32 %v3727, 1.442695
      %v3734 = vpow.pop %v3733
      %v3735 = vmul.f32 %v3728, 1.442695
      %v3736 = vpow.pop %v3735
      %v3737 = vadd.f32 %v3709, %v3730
      %v3738 = vadd.f32 %v3710, %v3732
      %v3739 = vadd.f32 %v3711, %v3734
      %v3740 = vadd.f32 %v3712, %v3736
      %3741 = vset.pattern.permute.xlu0 61
      %3742 = vperm.xlu0 %3741, %v191
      %v3743 = vpop.permute.xlu0 %3742
      %v3745 = vsub.f32 %v3743, %v2024
      %v3746 = vsub.f32 %v3743, %v2025
      %v3747 = vsub.f32 %v3743, %v2026
      %v3748 = vsub.f32 %v3743, %v2027
      %v3749 = vmul.f32 %v3745, %v3745
      %v3750 = vmul.f32 %v3746, %v3746
      %v3751 = vmul.f32 %v3747, %v3747
      %v3752 = vmul.f32 %v3748, %v3748
      %v3753 = vsub.f32 0.0, %v3749
      %v3754 = vsub.f32 0.0, %v3750
      %v3755 = vsub.f32 0.0, %v3751
      %v3756 = vsub.f32 0.0, %v3752
      %v3757 = vmul.f32 %v3753, 1.442695
      %v3758 = vpow.pop %v3757
      %v3759 = vmul.f32 %v3754, 1.442695
      %v3760 = vpow.pop %v3759
      %v3761 = vmul.f32 %v3755, 1.442695
      %v3762 = vpow.pop %v3761
      %v3763 = vmul.f32 %v3756, 1.442695
      %v3764 = vpow.pop %v3763
      %v3765 = vadd.f32 %v3737, %v3758
      %v3766 = vadd.f32 %v3738, %v3760
      %v3767 = vadd.f32 %v3739, %v3762
      %v3768 = vadd.f32 %v3740, %v3764
      %3769 = vset.pattern.permute.xlu0 62
      %3770 = vperm.xlu0 %3769, %v191
      %v3771 = vpop.permute.xlu0 %3770
      %v3773 = vsub.f32 %v3771, %v2024
      %v3774 = vsub.f32 %v3771, %v2025
      %v3775 = vsub.f32 %v3771, %v2026
      %v3776 = vsub.f32 %v3771, %v2027
      %v3777 = vmul.f32 %v3773, %v3773
      %v3778 = vmul.f32 %v3774, %v3774
      %v3779 = vmul.f32 %v3775, %v3775
      %v3780 = vmul.f32 %v3776, %v3776
      %v3781 = vsub.f32 0.0, %v3777
      %v3782 = vsub.f32 0.0, %v3778
      %v3783 = vsub.f32 0.0, %v3779
      %v3784 = vsub.f32 0.0, %v3780
      %v3785 = vmul.f32 %v3781, 1.442695
      %v3786 = vpow.pop %v3785
      %v3787 = vmul.f32 %v3782, 1.442695
      %v3788 = vpow.pop %v3787
      %v3789 = vmul.f32 %v3783, 1.442695
      %v3790 = vpow.pop %v3789
      %v3791 = vmul.f32 %v3784, 1.442695
      %v3792 = vpow.pop %v3791
      %v3793 = vadd.f32 %v3765, %v3786
      %v3794 = vadd.f32 %v3766, %v3788
      %v3795 = vadd.f32 %v3767, %v3790
      %v3796 = vadd.f32 %v3768, %v3792
      %3797 = vset.pattern.permute.xlu0 63
      %3798 = vperm.xlu0 %3797, %v191
      %v3799 = vpop.permute.xlu0 %3798
      %v3801 = vsub.f32 %v3799, %v2024
      %v3802 = vsub.f32 %v3799, %v2025
      %v3803 = vsub.f32 %v3799, %v2026
      %v3804 = vsub.f32 %v3799, %v2027
      %v3805 = vmul.f32 %v3801, %v3801
      %v3806 = vmul.f32 %v3802, %v3802
      %v3807 = vmul.f32 %v3803, %v3803
      %v3808 = vmul.f32 %v3804, %v3804
      %v3809 = vsub.f32 0.0, %v3805
      %v3810 = vsub.f32 0.0, %v3806
      %v3811 = vsub.f32 0.0, %v3807
      %v3812 = vsub.f32 0.0, %v3808
      %v3813 = vmul.f32 %v3809, 1.442695
      %v3814 = vpow.pop %v3813
      %v3815 = vmul.f32 %v3810, 1.442695
      %v3816 = vpow.pop %v3815
      %v3817 = vmul.f32 %v3811, 1.442695
      %v3818 = vpow.pop %v3817
      %v3819 = vmul.f32 %v3812, 1.442695
      %v3820 = vpow.pop %v3819
      %v3821 = vadd.f32 %v3793, %v3814
      %v3822 = vadd.f32 %v3794, %v3816
      %v3823 = vadd.f32 %v3795, %v3818
      %v3824 = vadd.f32 %v3796, %v3820
      %v3825 = vmul.f32 %v199, 2.0
      %v3826 = vmul.f32 %v200, 2.0
      %v3827 = vmul.f32 %v201, 2.0
      %v3828 = vmul.f32 %v202, 2.0
      %v3829 = vadd.f32 %v3821, %v3825
      %v3830 = vadd.f32 %v3822, %v3826
      %v3831 = vadd.f32 %v3823, %v3827
      %v3832 = vadd.f32 %v3824, %v3828
      %v3833 = vld [vmem:[%s184] sm:$0xff]
      %s3834 = ssub.s32 4, %s14
      // While loop
      $region40: #{meeloss.1} parent=31 // loop_pre_header
        _
      $region41: #{meeloss.1} parent=31 // loop_header
        %s3836 = sphi %s3834, %s3838
        %p3837 = scmp.ge.s32.totalorder %s3836, 4
        %v3841 = vphi 0.0, %v5652
        %v3842 = vphi 0.0, %v5653
        %v3843 = vphi 0.0, %v5654
        %v3844 = vphi 0.0, %v5655
      $region42: #{meeloss.1} parent=31 // loop_header_branch
        %3840 = sbr.rel (%p3837) target = $region46
      $region43: #{meeloss.1} parent=31 // loop_body
        %s3845 = sshra.s32 %s3836, 2
        %s3846 = sand.u32 %s3836, 3
        %s3847 = sshra.s32 %s3836, 2
        %s3848 = sand.u32 %s3836, 3
        %s3849 = smul.u32 %s3845, 4
        %s3850 = smul.u32 %s3849, 4
        %s3851 = sadd.s32 %s3850, %s3848
        %s3852 = scalar_lea.vmem %s2, %s3851
        %v3853 = vld [vmem:[%s3852] ss:$4 sm:$0xf]
        %v3855 = vperm.slane %v3853, 0
        %v3856 = vperm.slane %v3853, 1
        %v3857 = vperm.slane %v3853, 2
        %v3858 = vperm.slane %v3853, 3
        %3864 = vset.pattern.permute.xlu0 0
        %3865 = vperm.xlu0 %3864, %v3833
        %v3866 = vpop.permute.xlu0 %3865
        %v3868 = vsub.f32 %v3866, %v3855
        %v3869 = vsub.f32 %v3866, %v3856
        %v3870 = vsub.f32 %v3866, %v3857
        %v3871 = vsub.f32 %v3866, %v3858
        %v3872 = vmul.f32 %v3868, %v3868
        %v3873 = vmul.f32 %v3869, %v3869
        %v3874 = vmul.f32 %v3870, %v3870
        %v3875 = vmul.f32 %v3871, %v3871
        %v3876 = vsub.f32 0.0, %v3872
        %v3877 = vsub.f32 0.0, %v3873
        %v3878 = vsub.f32 0.0, %v3874
        %v3879 = vsub.f32 0.0, %v3875
        %v3880 = vmul.f32 %v3876, 1.442695
        %v3881 = vpow.pop %v3880
        %v3882 = vmul.f32 %v3877, 1.442695
        %v3883 = vpow.pop %v3882
        %v3884 = vmul.f32 %v3878, 1.442695
        %v3885 = vpow.pop %v3884
        %v3886 = vmul.f32 %v3879, 1.442695
        %v3887 = vpow.pop %v3886
        %v3888 = vadd.f32 %v3841, %v3881
        %v3889 = vadd.f32 %v3842, %v3883
        %v3890 = vadd.f32 %v3843, %v3885
        %v3891 = vadd.f32 %v3844, %v3887
        %3892 = vset.pattern.permute.xlu0 1
        %3893 = vperm.xlu0 %3892, %v3833
        %v3894 = vpop.permute.xlu0 %3893
        %v3896 = vsub.f32 %v3894, %v3855
        %v3897 = vsub.f32 %v3894, %v3856
        %v3898 = vsub.f32 %v3894, %v3857
        %v3899 = vsub.f32 %v3894, %v3858
        %v3900 = vmul.f32 %v3896, %v3896
        %v3901 = vmul.f32 %v3897, %v3897
        %v3902 = vmul.f32 %v3898, %v3898
        %v3903 = vmul.f32 %v3899, %v3899
        %v3904 = vsub.f32 0.0, %v3900
        %v3905 = vsub.f32 0.0, %v3901
        %v3906 = vsub.f32 0.0, %v3902
        %v3907 = vsub.f32 0.0, %v3903
        %v3908 = vmul.f32 %v3904, 1.442695
        %v3909 = vpow.pop %v3908
        %v3910 = vmul.f32 %v3905, 1.442695
        %v3911 = vpow.pop %v3910
        %v3912 = vmul.f32 %v3906, 1.442695
        %v3913 = vpow.pop %v3912
        %v3914 = vmul.f32 %v3907, 1.442695
        %v3915 = vpow.pop %v3914
        %v3916 = vadd.f32 %v3888, %v3909
        %v3917 = vadd.f32 %v3889, %v3911
        %v3918 = vadd.f32 %v3890, %v3913
        %v3919 = vadd.f32 %v3891, %v3915
        %3920 = vset.pattern.permute.xlu0 2
        %3921 = vperm.xlu0 %3920, %v3833
        %v3922 = vpop.permute.xlu0 %3921
        %v3924 = vsub.f32 %v3922, %v3855
        %v3925 = vsub.f32 %v3922, %v3856
        %v3926 = vsub.f32 %v3922, %v3857
        %v3927 = vsub.f32 %v3922, %v3858
        %v3928 = vmul.f32 %v3924, %v3924
        %v3929 = vmul.f32 %v3925, %v3925
        %v3930 = vmul.f32 %v3926, %v3926
        %v3931 = vmul.f32 %v3927, %v3927
        %v3932 = vsub.f32 0.0, %v3928
        %v3933 = vsub.f32 0.0, %v3929
        %v3934 = vsub.f32 0.0, %v3930
        %v3935 = vsub.f32 0.0, %v3931
        %v3936 = vmul.f32 %v3932, 1.442695
        %v3937 = vpow.pop %v3936
        %v3938 = vmul.f32 %v3933, 1.442695
        %v3939 = vpow.pop %v3938
        %v3940 = vmul.f32 %v3934, 1.442695
        %v3941 = vpow.pop %v3940
        %v3942 = vmul.f32 %v3935, 1.442695
        %v3943 = vpow.pop %v3942
        %v3944 = vadd.f32 %v3916, %v3937
        %v3945 = vadd.f32 %v3917, %v3939
        %v3946 = vadd.f32 %v3918, %v3941
        %v3947 = vadd.f32 %v3919, %v3943
        %3948 = vset.pattern.permute.xlu0 3
        %3949 = vperm.xlu0 %3948, %v3833
        %v3950 = vpop.permute.xlu0 %3949
        %v3952 = vsub.f32 %v3950, %v3855
        %v3953 = vsub.f32 %v3950, %v3856
        %v3954 = vsub.f32 %v3950, %v3857
        %v3955 = vsub.f32 %v3950, %v3858
        %v3956 = vmul.f32 %v3952, %v3952
        %v3957 = vmul.f32 %v3953, %v3953
        %v3958 = vmul.f32 %v3954, %v3954
        %v3959 = vmul.f32 %v3955, %v3955
        %v3960 = vsub.f32 0.0, %v3956
        %v3961 = vsub.f32 0.0, %v3957
        %v3962 = vsub.f32 0.0, %v3958
        %v3963 = vsub.f32 0.0, %v3959
        %v3964 = vmul.f32 %v3960, 1.442695
        %v3965 = vpow.pop %v3964
        %v3966 = vmul.f32 %v3961, 1.442695
        %v3967 = vpow.pop %v3966
        %v3968 = vmul.f32 %v3962, 1.442695
        %v3969 = vpow.pop %v3968
        %v3970 = vmul.f32 %v3963, 1.442695
        %v3971 = vpow.pop %v3970
        %v3972 = vadd.f32 %v3944, %v3965
        %v3973 = vadd.f32 %v3945, %v3967
        %v3974 = vadd.f32 %v3946, %v3969
        %v3975 = vadd.f32 %v3947, %v3971
        %3976 = vset.pattern.permute.xlu0 4
        %3977 = vperm.xlu0 %3976, %v3833
        %v3978 = vpop.permute.xlu0 %3977
        %v3980 = vsub.f32 %v3978, %v3855
        %v3981 = vsub.f32 %v3978, %v3856
        %v3982 = vsub.f32 %v3978, %v3857
        %v3983 = vsub.f32 %v3978, %v3858
        %v3984 = vmul.f32 %v3980, %v3980
        %v3985 = vmul.f32 %v3981, %v3981
        %v3986 = vmul.f32 %v3982, %v3982
        %v3987 = vmul.f32 %v3983, %v3983
        %v3988 = vsub.f32 0.0, %v3984
        %v3989 = vsub.f32 0.0, %v3985
        %v3990 = vsub.f32 0.0, %v3986
        %v3991 = vsub.f32 0.0, %v3987
        %v3992 = vmul.f32 %v3988, 1.442695
        %v3993 = vpow.pop %v3992
        %v3994 = vmul.f32 %v3989, 1.442695
        %v3995 = vpow.pop %v3994
        %v3996 = vmul.f32 %v3990, 1.442695
        %v3997 = vpow.pop %v3996
        %v3998 = vmul.f32 %v3991, 1.442695
        %v3999 = vpow.pop %v3998
        %v4000 = vadd.f32 %v3972, %v3993
        %v4001 = vadd.f32 %v3973, %v3995
        %v4002 = vadd.f32 %v3974, %v3997
        %v4003 = vadd.f32 %v3975, %v3999
        %4004 = vset.pattern.permute.xlu0 5
        %4005 = vperm.xlu0 %4004, %v3833
        %v4006 = vpop.permute.xlu0 %4005
        %v4008 = vsub.f32 %v4006, %v3855
        %v4009 = vsub.f32 %v4006, %v3856
        %v4010 = vsub.f32 %v4006, %v3857
        %v4011 = vsub.f32 %v4006, %v3858
        %v4012 = vmul.f32 %v4008, %v4008
        %v4013 = vmul.f32 %v4009, %v4009
        %v4014 = vmul.f32 %v4010, %v4010
        %v4015 = vmul.f32 %v4011, %v4011
        %v4016 = vsub.f32 0.0, %v4012
        %v4017 = vsub.f32 0.0, %v4013
        %v4018 = vsub.f32 0.0, %v4014
        %v4019 = vsub.f32 0.0, %v4015
        %v4020 = vmul.f32 %v4016, 1.442695
        %v4021 = vpow.pop %v4020
        %v4022 = vmul.f32 %v4017, 1.442695
        %v4023 = vpow.pop %v4022
        %v4024 = vmul.f32 %v4018, 1.442695
        %v4025 = vpow.pop %v4024
        %v4026 = vmul.f32 %v4019, 1.442695
        %v4027 = vpow.pop %v4026
        %v4028 = vadd.f32 %v4000, %v4021
        %v4029 = vadd.f32 %v4001, %v4023
        %v4030 = vadd.f32 %v4002, %v4025
        %v4031 = vadd.f32 %v4003, %v4027
        %4032 = vset.pattern.permute.xlu0 6
        %4033 = vperm.xlu0 %4032, %v3833
        %v4034 = vpop.permute.xlu0 %4033
        %v4036 = vsub.f32 %v4034, %v3855
        %v4037 = vsub.f32 %v4034, %v3856
        %v4038 = vsub.f32 %v4034, %v3857
        %v4039 = vsub.f32 %v4034, %v3858
        %v4040 = vmul.f32 %v4036, %v4036
        %v4041 = vmul.f32 %v4037, %v4037
        %v4042 = vmul.f32 %v4038, %v4038
        %v4043 = vmul.f32 %v4039, %v4039
        %v4044 = vsub.f32 0.0, %v4040
        %v4045 = vsub.f32 0.0, %v4041
        %v4046 = vsub.f32 0.0, %v4042
        %v4047 = vsub.f32 0.0, %v4043
        %v4048 = vmul.f32 %v4044, 1.442695
        %v4049 = vpow.pop %v4048
        %v4050 = vmul.f32 %v4045, 1.442695
        %v4051 = vpow.pop %v4050
        %v4052 = vmul.f32 %v4046, 1.442695
        %v4053 = vpow.pop %v4052
        %v4054 = vmul.f32 %v4047, 1.442695
        %v4055 = vpow.pop %v4054
        %v4056 = vadd.f32 %v4028, %v4049
        %v4057 = vadd.f32 %v4029, %v4051
        %v4058 = vadd.f32 %v4030, %v4053
        %v4059 = vadd.f32 %v4031, %v4055
        %4060 = vset.pattern.permute.xlu0 7
        %4061 = vperm.xlu0 %4060, %v3833
        %v4062 = vpop.permute.xlu0 %4061
        %v4064 = vsub.f32 %v4062, %v3855
        %v4065 = vsub.f32 %v4062, %v3856
        %v4066 = vsub.f32 %v4062, %v3857
        %v4067 = vsub.f32 %v4062, %v3858
        %v4068 = vmul.f32 %v4064, %v4064
        %v4069 = vmul.f32 %v4065, %v4065
        %v4070 = vmul.f32 %v4066, %v4066
        %v4071 = vmul.f32 %v4067, %v4067
        %v4072 = vsub.f32 0.0, %v4068
        %v4073 = vsub.f32 0.0, %v4069
        %v4074 = vsub.f32 0.0, %v4070
        %v4075 = vsub.f32 0.0, %v4071
        %v4076 = vmul.f32 %v4072, 1.442695
        %v4077 = vpow.pop %v4076
        %v4078 = vmul.f32 %v4073, 1.442695
        %v4079 = vpow.pop %v4078
        %v4080 = vmul.f32 %v4074, 1.442695
        %v4081 = vpow.pop %v4080
        %v4082 = vmul.f32 %v4075, 1.442695
        %v4083 = vpow.pop %v4082
        %v4084 = vadd.f32 %v4056, %v4077
        %v4085 = vadd.f32 %v4057, %v4079
        %v4086 = vadd.f32 %v4058, %v4081
        %v4087 = vadd.f32 %v4059, %v4083
        %4088 = vset.pattern.permute.xlu0 8
        %4089 = vperm.xlu0 %4088, %v3833
        %v4090 = vpop.permute.xlu0 %4089
        %v4092 = vsub.f32 %v4090, %v3855
        %v4093 = vsub.f32 %v4090, %v3856
        %v4094 = vsub.f32 %v4090, %v3857
        %v4095 = vsub.f32 %v4090, %v3858
        %v4096 = vmul.f32 %v4092, %v4092
        %v4097 = vmul.f32 %v4093, %v4093
        %v4098 = vmul.f32 %v4094, %v4094
        %v4099 = vmul.f32 %v4095, %v4095
        %v4100 = vsub.f32 0.0, %v4096
        %v4101 = vsub.f32 0.0, %v4097
        %v4102 = vsub.f32 0.0, %v4098
        %v4103 = vsub.f32 0.0, %v4099
        %v4104 = vmul.f32 %v4100, 1.442695
        %v4105 = vpow.pop %v4104
        %v4106 = vmul.f32 %v4101, 1.442695
        %v4107 = vpow.pop %v4106
        %v4108 = vmul.f32 %v4102, 1.442695
        %v4109 = vpow.pop %v4108
        %v4110 = vmul.f32 %v4103, 1.442695
        %v4111 = vpow.pop %v4110
        %v4112 = vadd.f32 %v4084, %v4105
        %v4113 = vadd.f32 %v4085, %v4107
        %v4114 = vadd.f32 %v4086, %v4109
        %v4115 = vadd.f32 %v4087, %v4111
        %4116 = vset.pattern.permute.xlu0 9
        %4117 = vperm.xlu0 %4116, %v3833
        %v4118 = vpop.permute.xlu0 %4117
        %v4120 = vsub.f32 %v4118, %v3855
        %v4121 = vsub.f32 %v4118, %v3856
        %v4122 = vsub.f32 %v4118, %v3857
        %v4123 = vsub.f32 %v4118, %v3858
        %v4124 = vmul.f32 %v4120, %v4120
        %v4125 = vmul.f32 %v4121, %v4121
        %v4126 = vmul.f32 %v4122, %v4122
        %v4127 = vmul.f32 %v4123, %v4123
        %v4128 = vsub.f32 0.0, %v4124
        %v4129 = vsub.f32 0.0, %v4125
        %v4130 = vsub.f32 0.0, %v4126
        %v4131 = vsub.f32 0.0, %v4127
        %v4132 = vmul.f32 %v4128, 1.442695
        %v4133 = vpow.pop %v4132
        %v4134 = vmul.f32 %v4129, 1.442695
        %v4135 = vpow.pop %v4134
        %v4136 = vmul.f32 %v4130, 1.442695
        %v4137 = vpow.pop %v4136
        %v4138 = vmul.f32 %v4131, 1.442695
        %v4139 = vpow.pop %v4138
        %v4140 = vadd.f32 %v4112, %v4133
        %v4141 = vadd.f32 %v4113, %v4135
        %v4142 = vadd.f32 %v4114, %v4137
        %v4143 = vadd.f32 %v4115, %v4139
        %4144 = vset.pattern.permute.xlu0 10
        %4145 = vperm.xlu0 %4144, %v3833
        %v4146 = vpop.permute.xlu0 %4145
        %v4148 = vsub.f32 %v4146, %v3855
        %v4149 = vsub.f32 %v4146, %v3856
        %v4150 = vsub.f32 %v4146, %v3857
        %v4151 = vsub.f32 %v4146, %v3858
        %v4152 = vmul.f32 %v4148, %v4148
        %v4153 = vmul.f32 %v4149, %v4149
        %v4154 = vmul.f32 %v4150, %v4150
        %v4155 = vmul.f32 %v4151, %v4151
        %v4156 = vsub.f32 0.0, %v4152
        %v4157 = vsub.f32 0.0, %v4153
        %v4158 = vsub.f32 0.0, %v4154
        %v4159 = vsub.f32 0.0, %v4155
        %v4160 = vmul.f32 %v4156, 1.442695
        %v4161 = vpow.pop %v4160
        %v4162 = vmul.f32 %v4157, 1.442695
        %v4163 = vpow.pop %v4162
        %v4164 = vmul.f32 %v4158, 1.442695
        %v4165 = vpow.pop %v4164
        %v4166 = vmul.f32 %v4159, 1.442695
        %v4167 = vpow.pop %v4166
        %v4168 = vadd.f32 %v4140, %v4161
        %v4169 = vadd.f32 %v4141, %v4163
        %v4170 = vadd.f32 %v4142, %v4165
        %v4171 = vadd.f32 %v4143, %v4167
        %4172 = vset.pattern.permute.xlu0 11
        %4173 = vperm.xlu0 %4172, %v3833
        %v4174 = vpop.permute.xlu0 %4173
        %v4176 = vsub.f32 %v4174, %v3855
        %v4177 = vsub.f32 %v4174, %v3856
        %v4178 = vsub.f32 %v4174, %v3857
        %v4179 = vsub.f32 %v4174, %v3858
        %v4180 = vmul.f32 %v4176, %v4176
        %v4181 = vmul.f32 %v4177, %v4177
        %v4182 = vmul.f32 %v4178, %v4178
        %v4183 = vmul.f32 %v4179, %v4179
        %v4184 = vsub.f32 0.0, %v4180
        %v4185 = vsub.f32 0.0, %v4181
        %v4186 = vsub.f32 0.0, %v4182
        %v4187 = vsub.f32 0.0, %v4183
        %v4188 = vmul.f32 %v4184, 1.442695
        %v4189 = vpow.pop %v4188
        %v4190 = vmul.f32 %v4185, 1.442695
        %v4191 = vpow.pop %v4190
        %v4192 = vmul.f32 %v4186, 1.442695
        %v4193 = vpow.pop %v4192
        %v4194 = vmul.f32 %v4187, 1.442695
        %v4195 = vpow.pop %v4194
        %v4196 = vadd.f32 %v4168, %v4189
        %v4197 = vadd.f32 %v4169, %v4191
        %v4198 = vadd.f32 %v4170, %v4193
        %v4199 = vadd.f32 %v4171, %v4195
        %4200 = vset.pattern.permute.xlu0 12
        %4201 = vperm.xlu0 %4200, %v3833
        %v4202 = vpop.permute.xlu0 %4201
        %v4204 = vsub.f32 %v4202, %v3855
        %v4205 = vsub.f32 %v4202, %v3856
        %v4206 = vsub.f32 %v4202, %v3857
        %v4207 = vsub.f32 %v4202, %v3858
        %v4208 = vmul.f32 %v4204, %v4204
        %v4209 = vmul.f32 %v4205, %v4205
        %v4210 = vmul.f32 %v4206, %v4206
        %v4211 = vmul.f32 %v4207, %v4207
        %v4212 = vsub.f32 0.0, %v4208
        %v4213 = vsub.f32 0.0, %v4209
        %v4214 = vsub.f32 0.0, %v4210
        %v4215 = vsub.f32 0.0, %v4211
        %v4216 = vmul.f32 %v4212, 1.442695
        %v4217 = vpow.pop %v4216
        %v4218 = vmul.f32 %v4213, 1.442695
        %v4219 = vpow.pop %v4218
        %v4220 = vmul.f32 %v4214, 1.442695
        %v4221 = vpow.pop %v4220
        %v4222 = vmul.f32 %v4215, 1.442695
        %v4223 = vpow.pop %v4222
        %v4224 = vadd.f32 %v4196, %v4217
        %v4225 = vadd.f32 %v4197, %v4219
        %v4226 = vadd.f32 %v4198, %v4221
        %v4227 = vadd.f32 %v4199, %v4223
        %4228 = vset.pattern.permute.xlu0 13
        %4229 = vperm.xlu0 %4228, %v3833
        %v4230 = vpop.permute.xlu0 %4229
        %v4232 = vsub.f32 %v4230, %v3855
        %v4233 = vsub.f32 %v4230, %v3856
        %v4234 = vsub.f32 %v4230, %v3857
        %v4235 = vsub.f32 %v4230, %v3858
        %v4236 = vmul.f32 %v4232, %v4232
        %v4237 = vmul.f32 %v4233, %v4233
        %v4238 = vmul.f32 %v4234, %v4234
        %v4239 = vmul.f32 %v4235, %v4235
        %v4240 = vsub.f32 0.0, %v4236
        %v4241 = vsub.f32 0.0, %v4237
        %v4242 = vsub.f32 0.0, %v4238
        %v4243 = vsub.f32 0.0, %v4239
        %v4244 = vmul.f32 %v4240, 1.442695
        %v4245 = vpow.pop %v4244
        %v4246 = vmul.f32 %v4241, 1.442695
        %v4247 = vpow.pop %v4246
        %v4248 = vmul.f32 %v4242, 1.442695
        %v4249 = vpow.pop %v4248
        %v4250 = vmul.f32 %v4243, 1.442695
        %v4251 = vpow.pop %v4250
        %v4252 = vadd.f32 %v4224, %v4245
        %v4253 = vadd.f32 %v4225, %v4247
        %v4254 = vadd.f32 %v4226, %v4249
        %v4255 = vadd.f32 %v4227, %v4251
        %4256 = vset.pattern.permute.xlu0 14
        %4257 = vperm.xlu0 %4256, %v3833
        %v4258 = vpop.permute.xlu0 %4257
        %v4260 = vsub.f32 %v4258, %v3855
        %v4261 = vsub.f32 %v4258, %v3856
        %v4262 = vsub.f32 %v4258, %v3857
        %v4263 = vsub.f32 %v4258, %v3858
        %v4264 = vmul.f32 %v4260, %v4260
        %v4265 = vmul.f32 %v4261, %v4261
        %v4266 = vmul.f32 %v4262, %v4262
        %v4267 = vmul.f32 %v4263, %v4263
        %v4268 = vsub.f32 0.0, %v4264
        %v4269 = vsub.f32 0.0, %v4265
        %v4270 = vsub.f32 0.0, %v4266
        %v4271 = vsub.f32 0.0, %v4267
        %v4272 = vmul.f32 %v4268, 1.442695
        %v4273 = vpow.pop %v4272
        %v4274 = vmul.f32 %v4269, 1.442695
        %v4275 = vpow.pop %v4274
        %v4276 = vmul.f32 %v4270, 1.442695
        %v4277 = vpow.pop %v4276
        %v4278 = vmul.f32 %v4271, 1.442695
        %v4279 = vpow.pop %v4278
        %v4280 = vadd.f32 %v4252, %v4273
        %v4281 = vadd.f32 %v4253, %v4275
        %v4282 = vadd.f32 %v4254, %v4277
        %v4283 = vadd.f32 %v4255, %v4279
        %4284 = vset.pattern.permute.xlu0 15
        %4285 = vperm.xlu0 %4284, %v3833
        %v4286 = vpop.permute.xlu0 %4285
        %v4288 = vsub.f32 %v4286, %v3855
        %v4289 = vsub.f32 %v4286, %v3856
        %v4290 = vsub.f32 %v4286, %v3857
        %v4291 = vsub.f32 %v4286, %v3858
        %v4292 = vmul.f32 %v4288, %v4288
        %v4293 = vmul.f32 %v4289, %v4289
        %v4294 = vmul.f32 %v4290, %v4290
        %v4295 = vmul.f32 %v4291, %v4291
        %v4296 = vsub.f32 0.0, %v4292
        %v4297 = vsub.f32 0.0, %v4293
        %v4298 = vsub.f32 0.0, %v4294
        %v4299 = vsub.f32 0.0, %v4295
        %v4300 = vmul.f32 %v4296, 1.442695
        %v4301 = vpow.pop %v4300
        %v4302 = vmul.f32 %v4297, 1.442695
        %v4303 = vpow.pop %v4302
        %v4304 = vmul.f32 %v4298, 1.442695
        %v4305 = vpow.pop %v4304
        %v4306 = vmul.f32 %v4299, 1.442695
        %v4307 = vpow.pop %v4306
        %v4308 = vadd.f32 %v4280, %v4301
        %v4309 = vadd.f32 %v4281, %v4303
        %v4310 = vadd.f32 %v4282, %v4305
        %v4311 = vadd.f32 %v4283, %v4307
        %4312 = vset.pattern.permute.xlu0 16
        %4313 = vperm.xlu0 %4312, %v3833
        %v4314 = vpop.permute.xlu0 %4313
        %v4316 = vsub.f32 %v4314, %v3855
        %v4317 = vsub.f32 %v4314, %v3856
        %v4318 = vsub.f32 %v4314, %v3857
        %v4319 = vsub.f32 %v4314, %v3858
        %v4320 = vmul.f32 %v4316, %v4316
        %v4321 = vmul.f32 %v4317, %v4317
        %v4322 = vmul.f32 %v4318, %v4318
        %v4323 = vmul.f32 %v4319, %v4319
        %v4324 = vsub.f32 0.0, %v4320
        %v4325 = vsub.f32 0.0, %v4321
        %v4326 = vsub.f32 0.0, %v4322
        %v4327 = vsub.f32 0.0, %v4323
        %v4328 = vmul.f32 %v4324, 1.442695
        %v4329 = vpow.pop %v4328
        %v4330 = vmul.f32 %v4325, 1.442695
        %v4331 = vpow.pop %v4330
        %v4332 = vmul.f32 %v4326, 1.442695
        %v4333 = vpow.pop %v4332
        %v4334 = vmul.f32 %v4327, 1.442695
        %v4335 = vpow.pop %v4334
        %v4336 = vadd.f32 %v4308, %v4329
        %v4337 = vadd.f32 %v4309, %v4331
        %v4338 = vadd.f32 %v4310, %v4333
        %v4339 = vadd.f32 %v4311, %v4335
        %4340 = vset.pattern.permute.xlu0 17
        %4341 = vperm.xlu0 %4340, %v3833
        %v4342 = vpop.permute.xlu0 %4341
        %v4344 = vsub.f32 %v4342, %v3855
        %v4345 = vsub.f32 %v4342, %v3856
        %v4346 = vsub.f32 %v4342, %v3857
        %v4347 = vsub.f32 %v4342, %v3858
        %v4348 = vmul.f32 %v4344, %v4344
        %v4349 = vmul.f32 %v4345, %v4345
        %v4350 = vmul.f32 %v4346, %v4346
        %v4351 = vmul.f32 %v4347, %v4347
        %v4352 = vsub.f32 0.0, %v4348
        %v4353 = vsub.f32 0.0, %v4349
        %v4354 = vsub.f32 0.0, %v4350
        %v4355 = vsub.f32 0.0, %v4351
        %v4356 = vmul.f32 %v4352, 1.442695
        %v4357 = vpow.pop %v4356
        %v4358 = vmul.f32 %v4353, 1.442695
        %v4359 = vpow.pop %v4358
        %v4360 = vmul.f32 %v4354, 1.442695
        %v4361 = vpow.pop %v4360
        %v4362 = vmul.f32 %v4355, 1.442695
        %v4363 = vpow.pop %v4362
        %v4364 = vadd.f32 %v4336, %v4357
        %v4365 = vadd.f32 %v4337, %v4359
        %v4366 = vadd.f32 %v4338, %v4361
        %v4367 = vadd.f32 %v4339, %v4363
        %4368 = vset.pattern.permute.xlu0 18
        %4369 = vperm.xlu0 %4368, %v3833
        %v4370 = vpop.permute.xlu0 %4369
        %v4372 = vsub.f32 %v4370, %v3855
        %v4373 = vsub.f32 %v4370, %v3856
        %v4374 = vsub.f32 %v4370, %v3857
        %v4375 = vsub.f32 %v4370, %v3858
        %v4376 = vmul.f32 %v4372, %v4372
        %v4377 = vmul.f32 %v4373, %v4373
        %v4378 = vmul.f32 %v4374, %v4374
        %v4379 = vmul.f32 %v4375, %v4375
        %v4380 = vsub.f32 0.0, %v4376
        %v4381 = vsub.f32 0.0, %v4377
        %v4382 = vsub.f32 0.0, %v4378
        %v4383 = vsub.f32 0.0, %v4379
        %v4384 = vmul.f32 %v4380, 1.442695
        %v4385 = vpow.pop %v4384
        %v4386 = vmul.f32 %v4381, 1.442695
        %v4387 = vpow.pop %v4386
        %v4388 = vmul.f32 %v4382, 1.442695
        %v4389 = vpow.pop %v4388
        %v4390 = vmul.f32 %v4383, 1.442695
        %v4391 = vpow.pop %v4390
        %v4392 = vadd.f32 %v4364, %v4385
        %v4393 = vadd.f32 %v4365, %v4387
        %v4394 = vadd.f32 %v4366, %v4389
        %v4395 = vadd.f32 %v4367, %v4391
        %4396 = vset.pattern.permute.xlu0 19
        %4397 = vperm.xlu0 %4396, %v3833
        %v4398 = vpop.permute.xlu0 %4397
        %v4400 = vsub.f32 %v4398, %v3855
        %v4401 = vsub.f32 %v4398, %v3856
        %v4402 = vsub.f32 %v4398, %v3857
        %v4403 = vsub.f32 %v4398, %v3858
        %v4404 = vmul.f32 %v4400, %v4400
        %v4405 = vmul.f32 %v4401, %v4401
        %v4406 = vmul.f32 %v4402, %v4402
        %v4407 = vmul.f32 %v4403, %v4403
        %v4408 = vsub.f32 0.0, %v4404
        %v4409 = vsub.f32 0.0, %v4405
        %v4410 = vsub.f32 0.0, %v4406
        %v4411 = vsub.f32 0.0, %v4407
        %v4412 = vmul.f32 %v4408, 1.442695
        %v4413 = vpow.pop %v4412
        %v4414 = vmul.f32 %v4409, 1.442695
        %v4415 = vpow.pop %v4414
        %v4416 = vmul.f32 %v4410, 1.442695
        %v4417 = vpow.pop %v4416
        %v4418 = vmul.f32 %v4411, 1.442695
        %v4419 = vpow.pop %v4418
        %v4420 = vadd.f32 %v4392, %v4413
        %v4421 = vadd.f32 %v4393, %v4415
        %v4422 = vadd.f32 %v4394, %v4417
        %v4423 = vadd.f32 %v4395, %v4419
        %4424 = vset.pattern.permute.xlu0 20
        %4425 = vperm.xlu0 %4424, %v3833
        %v4426 = vpop.permute.xlu0 %4425
        %v4428 = vsub.f32 %v4426, %v3855
        %v4429 = vsub.f32 %v4426, %v3856
        %v4430 = vsub.f32 %v4426, %v3857
        %v4431 = vsub.f32 %v4426, %v3858
        %v4432 = vmul.f32 %v4428, %v4428
        %v4433 = vmul.f32 %v4429, %v4429
        %v4434 = vmul.f32 %v4430, %v4430
        %v4435 = vmul.f32 %v4431, %v4431
        %v4436 = vsub.f32 0.0, %v4432
        %v4437 = vsub.f32 0.0, %v4433
        %v4438 = vsub.f32 0.0, %v4434
        %v4439 = vsub.f32 0.0, %v4435
        %v4440 = vmul.f32 %v4436, 1.442695
        %v4441 = vpow.pop %v4440
        %v4442 = vmul.f32 %v4437, 1.442695
        %v4443 = vpow.pop %v4442
        %v4444 = vmul.f32 %v4438, 1.442695
        %v4445 = vpow.pop %v4444
        %v4446 = vmul.f32 %v4439, 1.442695
        %v4447 = vpow.pop %v4446
        %v4448 = vadd.f32 %v4420, %v4441
        %v4449 = vadd.f32 %v4421, %v4443
        %v4450 = vadd.f32 %v4422, %v4445
        %v4451 = vadd.f32 %v4423, %v4447
        %4452 = vset.pattern.permute.xlu0 21
        %4453 = vperm.xlu0 %4452, %v3833
        %v4454 = vpop.permute.xlu0 %4453
        %v4456 = vsub.f32 %v4454, %v3855
        %v4457 = vsub.f32 %v4454, %v3856
        %v4458 = vsub.f32 %v4454, %v3857
        %v4459 = vsub.f32 %v4454, %v3858
        %v4460 = vmul.f32 %v4456, %v4456
        %v4461 = vmul.f32 %v4457, %v4457
        %v4462 = vmul.f32 %v4458, %v4458
        %v4463 = vmul.f32 %v4459, %v4459
        %v4464 = vsub.f32 0.0, %v4460
        %v4465 = vsub.f32 0.0, %v4461
        %v4466 = vsub.f32 0.0, %v4462
        %v4467 = vsub.f32 0.0, %v4463
        %v4468 = vmul.f32 %v4464, 1.442695
        %v4469 = vpow.pop %v4468
        %v4470 = vmul.f32 %v4465, 1.442695
        %v4471 = vpow.pop %v4470
        %v4472 = vmul.f32 %v4466, 1.442695
        %v4473 = vpow.pop %v4472
        %v4474 = vmul.f32 %v4467, 1.442695
        %v4475 = vpow.pop %v4474
        %v4476 = vadd.f32 %v4448, %v4469
        %v4477 = vadd.f32 %v4449, %v4471
        %v4478 = vadd.f32 %v4450, %v4473
        %v4479 = vadd.f32 %v4451, %v4475
        %4480 = vset.pattern.permute.xlu0 22
        %4481 = vperm.xlu0 %4480, %v3833
        %v4482 = vpop.permute.xlu0 %4481
        %v4484 = vsub.f32 %v4482, %v3855
        %v4485 = vsub.f32 %v4482, %v3856
        %v4486 = vsub.f32 %v4482, %v3857
        %v4487 = vsub.f32 %v4482, %v3858
        %v4488 = vmul.f32 %v4484, %v4484
        %v4489 = vmul.f32 %v4485, %v4485
        %v4490 = vmul.f32 %v4486, %v4486
        %v4491 = vmul.f32 %v4487, %v4487
        %v4492 = vsub.f32 0.0, %v4488
        %v4493 = vsub.f32 0.0, %v4489
        %v4494 = vsub.f32 0.0, %v4490
        %v4495 = vsub.f32 0.0, %v4491
        %v4496 = vmul.f32 %v4492, 1.442695
        %v4497 = vpow.pop %v4496
        %v4498 = vmul.f32 %v4493, 1.442695
        %v4499 = vpow.pop %v4498
        %v4500 = vmul.f32 %v4494, 1.442695
        %v4501 = vpow.pop %v4500
        %v4502 = vmul.f32 %v4495, 1.442695
        %v4503 = vpow.pop %v4502
        %v4504 = vadd.f32 %v4476, %v4497
        %v4505 = vadd.f32 %v4477, %v4499
        %v4506 = vadd.f32 %v4478, %v4501
        %v4507 = vadd.f32 %v4479, %v4503
        %4508 = vset.pattern.permute.xlu0 23
        %4509 = vperm.xlu0 %4508, %v3833
        %v4510 = vpop.permute.xlu0 %4509
        %v4512 = vsub.f32 %v4510, %v3855
        %v4513 = vsub.f32 %v4510, %v3856
        %v4514 = vsub.f32 %v4510, %v3857
        %v4515 = vsub.f32 %v4510, %v3858
        %v4516 = vmul.f32 %v4512, %v4512
        %v4517 = vmul.f32 %v4513, %v4513
        %v4518 = vmul.f32 %v4514, %v4514
        %v4519 = vmul.f32 %v4515, %v4515
        %v4520 = vsub.f32 0.0, %v4516
        %v4521 = vsub.f32 0.0, %v4517
        %v4522 = vsub.f32 0.0, %v4518
        %v4523 = vsub.f32 0.0, %v4519
        %v4524 = vmul.f32 %v4520, 1.442695
        %v4525 = vpow.pop %v4524
        %v4526 = vmul.f32 %v4521, 1.442695
        %v4527 = vpow.pop %v4526
        %v4528 = vmul.f32 %v4522, 1.442695
        %v4529 = vpow.pop %v4528
        %v4530 = vmul.f32 %v4523, 1.442695
        %v4531 = vpow.pop %v4530
        %v4532 = vadd.f32 %v4504, %v4525
        %v4533 = vadd.f32 %v4505, %v4527
        %v4534 = vadd.f32 %v4506, %v4529
        %v4535 = vadd.f32 %v4507, %v4531
        %4536 = vset.pattern.permute.xlu0 24
        %4537 = vperm.xlu0 %4536, %v3833
        %v4538 = vpop.permute.xlu0 %4537
        %v4540 = vsub.f32 %v4538, %v3855
        %v4541 = vsub.f32 %v4538, %v3856
        %v4542 = vsub.f32 %v4538, %v3857
        %v4543 = vsub.f32 %v4538, %v3858
        %v4544 = vmul.f32 %v4540, %v4540
        %v4545 = vmul.f32 %v4541, %v4541
        %v4546 = vmul.f32 %v4542, %v4542
        %v4547 = vmul.f32 %v4543, %v4543
        %v4548 = vsub.f32 0.0, %v4544
        %v4549 = vsub.f32 0.0, %v4545
        %v4550 = vsub.f32 0.0, %v4546
        %v4551 = vsub.f32 0.0, %v4547
        %v4552 = vmul.f32 %v4548, 1.442695
        %v4553 = vpow.pop %v4552
        %v4554 = vmul.f32 %v4549, 1.442695
        %v4555 = vpow.pop %v4554
        %v4556 = vmul.f32 %v4550, 1.442695
        %v4557 = vpow.pop %v4556
        %v4558 = vmul.f32 %v4551, 1.442695
        %v4559 = vpow.pop %v4558
        %v4560 = vadd.f32 %v4532, %v4553
        %v4561 = vadd.f32 %v4533, %v4555
        %v4562 = vadd.f32 %v4534, %v4557
        %v4563 = vadd.f32 %v4535, %v4559
        %4564 = vset.pattern.permute.xlu0 25
        %4565 = vperm.xlu0 %4564, %v3833
        %v4566 = vpop.permute.xlu0 %4565
        %v4568 = vsub.f32 %v4566, %v3855
        %v4569 = vsub.f32 %v4566, %v3856
        %v4570 = vsub.f32 %v4566, %v3857
        %v4571 = vsub.f32 %v4566, %v3858
        %v4572 = vmul.f32 %v4568, %v4568
        %v4573 = vmul.f32 %v4569, %v4569
        %v4574 = vmul.f32 %v4570, %v4570
        %v4575 = vmul.f32 %v4571, %v4571
        %v4576 = vsub.f32 0.0, %v4572
        %v4577 = vsub.f32 0.0, %v4573
        %v4578 = vsub.f32 0.0, %v4574
        %v4579 = vsub.f32 0.0, %v4575
        %v4580 = vmul.f32 %v4576, 1.442695
        %v4581 = vpow.pop %v4580
        %v4582 = vmul.f32 %v4577, 1.442695
        %v4583 = vpow.pop %v4582
        %v4584 = vmul.f32 %v4578, 1.442695
        %v4585 = vpow.pop %v4584
        %v4586 = vmul.f32 %v4579, 1.442695
        %v4587 = vpow.pop %v4586
        %v4588 = vadd.f32 %v4560, %v4581
        %v4589 = vadd.f32 %v4561, %v4583
        %v4590 = vadd.f32 %v4562, %v4585
        %v4591 = vadd.f32 %v4563, %v4587
        %4592 = vset.pattern.permute.xlu0 26
        %4593 = vperm.xlu0 %4592, %v3833
        %v4594 = vpop.permute.xlu0 %4593
        %v4596 = vsub.f32 %v4594, %v3855
        %v4597 = vsub.f32 %v4594, %v3856
        %v4598 = vsub.f32 %v4594, %v3857
        %v4599 = vsub.f32 %v4594, %v3858
        %v4600 = vmul.f32 %v4596, %v4596
        %v4601 = vmul.f32 %v4597, %v4597
        %v4602 = vmul.f32 %v4598, %v4598
        %v4603 = vmul.f32 %v4599, %v4599
        %v4604 = vsub.f32 0.0, %v4600
        %v4605 = vsub.f32 0.0, %v4601
        %v4606 = vsub.f32 0.0, %v4602
        %v4607 = vsub.f32 0.0, %v4603
        %v4608 = vmul.f32 %v4604, 1.442695
        %v4609 = vpow.pop %v4608
        %v4610 = vmul.f32 %v4605, 1.442695
        %v4611 = vpow.pop %v4610
        %v4612 = vmul.f32 %v4606, 1.442695
        %v4613 = vpow.pop %v4612
        %v4614 = vmul.f32 %v4607, 1.442695
        %v4615 = vpow.pop %v4614
        %v4616 = vadd.f32 %v4588, %v4609
        %v4617 = vadd.f32 %v4589, %v4611
        %v4618 = vadd.f32 %v4590, %v4613
        %v4619 = vadd.f32 %v4591, %v4615
        %4620 = vset.pattern.permute.xlu0 27
        %4621 = vperm.xlu0 %4620, %v3833
        %v4622 = vpop.permute.xlu0 %4621
        %v4624 = vsub.f32 %v4622, %v3855
        %v4625 = vsub.f32 %v4622, %v3856
        %v4626 = vsub.f32 %v4622, %v3857
        %v4627 = vsub.f32 %v4622, %v3858
        %v4628 = vmul.f32 %v4624, %v4624
        %v4629 = vmul.f32 %v4625, %v4625
        %v4630 = vmul.f32 %v4626, %v4626
        %v4631 = vmul.f32 %v4627, %v4627
        %v4632 = vsub.f32 0.0, %v4628
        %v4633 = vsub.f32 0.0, %v4629
        %v4634 = vsub.f32 0.0, %v4630
        %v4635 = vsub.f32 0.0, %v4631
        %v4636 = vmul.f32 %v4632, 1.442695
        %v4637 = vpow.pop %v4636
        %v4638 = vmul.f32 %v4633, 1.442695
        %v4639 = vpow.pop %v4638
        %v4640 = vmul.f32 %v4634, 1.442695
        %v4641 = vpow.pop %v4640
        %v4642 = vmul.f32 %v4635, 1.442695
        %v4643 = vpow.pop %v4642
        %v4644 = vadd.f32 %v4616, %v4637
        %v4645 = vadd.f32 %v4617, %v4639
        %v4646 = vadd.f32 %v4618, %v4641
        %v4647 = vadd.f32 %v4619, %v4643
        %4648 = vset.pattern.permute.xlu0 28
        %4649 = vperm.xlu0 %4648, %v3833
        %v4650 = vpop.permute.xlu0 %4649
        %v4652 = vsub.f32 %v4650, %v3855
        %v4653 = vsub.f32 %v4650, %v3856
        %v4654 = vsub.f32 %v4650, %v3857
        %v4655 = vsub.f32 %v4650, %v3858
        %v4656 = vmul.f32 %v4652, %v4652
        %v4657 = vmul.f32 %v4653, %v4653
        %v4658 = vmul.f32 %v4654, %v4654
        %v4659 = vmul.f32 %v4655, %v4655
        %v4660 = vsub.f32 0.0, %v4656
        %v4661 = vsub.f32 0.0, %v4657
        %v4662 = vsub.f32 0.0, %v4658
        %v4663 = vsub.f32 0.0, %v4659
        %v4664 = vmul.f32 %v4660, 1.442695
        %v4665 = vpow.pop %v4664
        %v4666 = vmul.f32 %v4661, 1.442695
        %v4667 = vpow.pop %v4666
        %v4668 = vmul.f32 %v4662, 1.442695
        %v4669 = vpow.pop %v4668
        %v4670 = vmul.f32 %v4663, 1.442695
        %v4671 = vpow.pop %v4670
        %v4672 = vadd.f32 %v4644, %v4665
        %v4673 = vadd.f32 %v4645, %v4667
        %v4674 = vadd.f32 %v4646, %v4669
        %v4675 = vadd.f32 %v4647, %v4671
        %4676 = vset.pattern.permute.xlu0 29
        %4677 = vperm.xlu0 %4676, %v3833
        %v4678 = vpop.permute.xlu0 %4677
        %v4680 = vsub.f32 %v4678, %v3855
        %v4681 = vsub.f32 %v4678, %v3856
        %v4682 = vsub.f32 %v4678, %v3857
        %v4683 = vsub.f32 %v4678, %v3858
        %v4684 = vmul.f32 %v4680, %v4680
        %v4685 = vmul.f32 %v4681, %v4681
        %v4686 = vmul.f32 %v4682, %v4682
        %v4687 = vmul.f32 %v4683, %v4683
        %v4688 = vsub.f32 0.0, %v4684
        %v4689 = vsub.f32 0.0, %v4685
        %v4690 = vsub.f32 0.0, %v4686
        %v4691 = vsub.f32 0.0, %v4687
        %v4692 = vmul.f32 %v4688, 1.442695
        %v4693 = vpow.pop %v4692
        %v4694 = vmul.f32 %v4689, 1.442695
        %v4695 = vpow.pop %v4694
        %v4696 = vmul.f32 %v4690, 1.442695
        %v4697 = vpow.pop %v4696
        %v4698 = vmul.f32 %v4691, 1.442695
        %v4699 = vpow.pop %v4698
        %v4700 = vadd.f32 %v4672, %v4693
        %v4701 = vadd.f32 %v4673, %v4695
        %v4702 = vadd.f32 %v4674, %v4697
        %v4703 = vadd.f32 %v4675, %v4699
        %4704 = vset.pattern.permute.xlu0 30
        %4705 = vperm.xlu0 %4704, %v3833
        %v4706 = vpop.permute.xlu0 %4705
        %v4708 = vsub.f32 %v4706, %v3855
        %v4709 = vsub.f32 %v4706, %v3856
        %v4710 = vsub.f32 %v4706, %v3857
        %v4711 = vsub.f32 %v4706, %v3858
        %v4712 = vmul.f32 %v4708, %v4708
        %v4713 = vmul.f32 %v4709, %v4709
        %v4714 = vmul.f32 %v4710, %v4710
        %v4715 = vmul.f32 %v4711, %v4711
        %v4716 = vsub.f32 0.0, %v4712
        %v4717 = vsub.f32 0.0, %v4713
        %v4718 = vsub.f32 0.0, %v4714
        %v4719 = vsub.f32 0.0, %v4715
        %v4720 = vmul.f32 %v4716, 1.442695
        %v4721 = vpow.pop %v4720
        %v4722 = vmul.f32 %v4717, 1.442695
        %v4723 = vpow.pop %v4722
        %v4724 = vmul.f32 %v4718, 1.442695
        %v4725 = vpow.pop %v4724
        %v4726 = vmul.f32 %v4719, 1.442695
        %v4727 = vpow.pop %v4726
        %v4728 = vadd.f32 %v4700, %v4721
        %v4729 = vadd.f32 %v4701, %v4723
        %v4730 = vadd.f32 %v4702, %v4725
        %v4731 = vadd.f32 %v4703, %v4727
        %4732 = vset.pattern.permute.xlu0 31
        %4733 = vperm.xlu0 %4732, %v3833
        %v4734 = vpop.permute.xlu0 %4733
        %v4736 = vsub.f32 %v4734, %v3855
        %v4737 = vsub.f32 %v4734, %v3856
        %v4738 = vsub.f32 %v4734, %v3857
        %v4739 = vsub.f32 %v4734, %v3858
        %v4740 = vmul.f32 %v4736, %v4736
        %v4741 = vmul.f32 %v4737, %v4737
        %v4742 = vmul.f32 %v4738, %v4738
        %v4743 = vmul.f32 %v4739, %v4739
        %v4744 = vsub.f32 0.0, %v4740
        %v4745 = vsub.f32 0.0, %v4741
        %v4746 = vsub.f32 0.0, %v4742
        %v4747 = vsub.f32 0.0, %v4743
        %v4748 = vmul.f32 %v4744, 1.442695
        %v4749 = vpow.pop %v4748
        %v4750 = vmul.f32 %v4745, 1.442695
        %v4751 = vpow.pop %v4750
        %v4752 = vmul.f32 %v4746, 1.442695
        %v4753 = vpow.pop %v4752
        %v4754 = vmul.f32 %v4747, 1.442695
        %v4755 = vpow.pop %v4754
        %v4756 = vadd.f32 %v4728, %v4749
        %v4757 = vadd.f32 %v4729, %v4751
        %v4758 = vadd.f32 %v4730, %v4753
        %v4759 = vadd.f32 %v4731, %v4755
        %4760 = vset.pattern.permute.xlu0 32
        %4761 = vperm.xlu0 %4760, %v3833
        %v4762 = vpop.permute.xlu0 %4761
        %v4764 = vsub.f32 %v4762, %v3855
        %v4765 = vsub.f32 %v4762, %v3856
        %v4766 = vsub.f32 %v4762, %v3857
        %v4767 = vsub.f32 %v4762, %v3858
        %v4768 = vmul.f32 %v4764, %v4764
        %v4769 = vmul.f32 %v4765, %v4765
        %v4770 = vmul.f32 %v4766, %v4766
        %v4771 = vmul.f32 %v4767, %v4767
        %v4772 = vsub.f32 0.0, %v4768
        %v4773 = vsub.f32 0.0, %v4769
        %v4774 = vsub.f32 0.0, %v4770
        %v4775 = vsub.f32 0.0, %v4771
        %v4776 = vmul.f32 %v4772, 1.442695
        %v4777 = vpow.pop %v4776
        %v4778 = vmul.f32 %v4773, 1.442695
        %v4779 = vpow.pop %v4778
        %v4780 = vmul.f32 %v4774, 1.442695
        %v4781 = vpow.pop %v4780
        %v4782 = vmul.f32 %v4775, 1.442695
        %v4783 = vpow.pop %v4782
        %v4784 = vadd.f32 %v4756, %v4777
        %v4785 = vadd.f32 %v4757, %v4779
        %v4786 = vadd.f32 %v4758, %v4781
        %v4787 = vadd.f32 %v4759, %v4783
        %4788 = vset.pattern.permute.xlu0 33
        %4789 = vperm.xlu0 %4788, %v3833
        %v4790 = vpop.permute.xlu0 %4789
        %v4792 = vsub.f32 %v4790, %v3855
        %v4793 = vsub.f32 %v4790, %v3856
        %v4794 = vsub.f32 %v4790, %v3857
        %v4795 = vsub.f32 %v4790, %v3858
        %v4796 = vmul.f32 %v4792, %v4792
        %v4797 = vmul.f32 %v4793, %v4793
        %v4798 = vmul.f32 %v4794, %v4794
        %v4799 = vmul.f32 %v4795, %v4795
        %v4800 = vsub.f32 0.0, %v4796
        %v4801 = vsub.f32 0.0, %v4797
        %v4802 = vsub.f32 0.0, %v4798
        %v4803 = vsub.f32 0.0, %v4799
        %v4804 = vmul.f32 %v4800, 1.442695
        %v4805 = vpow.pop %v4804
        %v4806 = vmul.f32 %v4801, 1.442695
        %v4807 = vpow.pop %v4806
        %v4808 = vmul.f32 %v4802, 1.442695
        %v4809 = vpow.pop %v4808
        %v4810 = vmul.f32 %v4803, 1.442695
        %v4811 = vpow.pop %v4810
        %v4812 = vadd.f32 %v4784, %v4805
        %v4813 = vadd.f32 %v4785, %v4807
        %v4814 = vadd.f32 %v4786, %v4809
        %v4815 = vadd.f32 %v4787, %v4811
        %4816 = vset.pattern.permute.xlu0 34
        %4817 = vperm.xlu0 %4816, %v3833
        %v4818 = vpop.permute.xlu0 %4817
        %v4820 = vsub.f32 %v4818, %v3855
        %v4821 = vsub.f32 %v4818, %v3856
        %v4822 = vsub.f32 %v4818, %v3857
        %v4823 = vsub.f32 %v4818, %v3858
        %v4824 = vmul.f32 %v4820, %v4820
        %v4825 = vmul.f32 %v4821, %v4821
        %v4826 = vmul.f32 %v4822, %v4822
        %v4827 = vmul.f32 %v4823, %v4823
        %v4828 = vsub.f32 0.0, %v4824
        %v4829 = vsub.f32 0.0, %v4825
        %v4830 = vsub.f32 0.0, %v4826
        %v4831 = vsub.f32 0.0, %v4827
        %v4832 = vmul.f32 %v4828, 1.442695
        %v4833 = vpow.pop %v4832
        %v4834 = vmul.f32 %v4829, 1.442695
        %v4835 = vpow.pop %v4834
        %v4836 = vmul.f32 %v4830, 1.442695
        %v4837 = vpow.pop %v4836
        %v4838 = vmul.f32 %v4831, 1.442695
        %v4839 = vpow.pop %v4838
        %v4840 = vadd.f32 %v4812, %v4833
        %v4841 = vadd.f32 %v4813, %v4835
        %v4842 = vadd.f32 %v4814, %v4837
        %v4843 = vadd.f32 %v4815, %v4839
        %4844 = vset.pattern.permute.xlu0 35
        %4845 = vperm.xlu0 %4844, %v3833
        %v4846 = vpop.permute.xlu0 %4845
        %v4848 = vsub.f32 %v4846, %v3855
        %v4849 = vsub.f32 %v4846, %v3856
        %v4850 = vsub.f32 %v4846, %v3857
        %v4851 = vsub.f32 %v4846, %v3858
        %v4852 = vmul.f32 %v4848, %v4848
        %v4853 = vmul.f32 %v4849, %v4849
        %v4854 = vmul.f32 %v4850, %v4850
        %v4855 = vmul.f32 %v4851, %v4851
        %v4856 = vsub.f32 0.0, %v4852
        %v4857 = vsub.f32 0.0, %v4853
        %v4858 = vsub.f32 0.0, %v4854
        %v4859 = vsub.f32 0.0, %v4855
        %v4860 = vmul.f32 %v4856, 1.442695
        %v4861 = vpow.pop %v4860
        %v4862 = vmul.f32 %v4857, 1.442695
        %v4863 = vpow.pop %v4862
        %v4864 = vmul.f32 %v4858, 1.442695
        %v4865 = vpow.pop %v4864
        %v4866 = vmul.f32 %v4859, 1.442695
        %v4867 = vpow.pop %v4866
        %v4868 = vadd.f32 %v4840, %v4861
        %v4869 = vadd.f32 %v4841, %v4863
        %v4870 = vadd.f32 %v4842, %v4865
        %v4871 = vadd.f32 %v4843, %v4867
        %4872 = vset.pattern.permute.xlu0 36
        %4873 = vperm.xlu0 %4872, %v3833
        %v4874 = vpop.permute.xlu0 %4873
        %v4876 = vsub.f32 %v4874, %v3855
        %v4877 = vsub.f32 %v4874, %v3856
        %v4878 = vsub.f32 %v4874, %v3857
        %v4879 = vsub.f32 %v4874, %v3858
        %v4880 = vmul.f32 %v4876, %v4876
        %v4881 = vmul.f32 %v4877, %v4877
        %v4882 = vmul.f32 %v4878, %v4878
        %v4883 = vmul.f32 %v4879, %v4879
        %v4884 = vsub.f32 0.0, %v4880
        %v4885 = vsub.f32 0.0, %v4881
        %v4886 = vsub.f32 0.0, %v4882
        %v4887 = vsub.f32 0.0, %v4883
        %v4888 = vmul.f32 %v4884, 1.442695
        %v4889 = vpow.pop %v4888
        %v4890 = vmul.f32 %v4885, 1.442695
        %v4891 = vpow.pop %v4890
        %v4892 = vmul.f32 %v4886, 1.442695
        %v4893 = vpow.pop %v4892
        %v4894 = vmul.f32 %v4887, 1.442695
        %v4895 = vpow.pop %v4894
        %v4896 = vadd.f32 %v4868, %v4889
        %v4897 = vadd.f32 %v4869, %v4891
        %v4898 = vadd.f32 %v4870, %v4893
        %v4899 = vadd.f32 %v4871, %v4895
        %4900 = vset.pattern.permute.xlu0 37
        %4901 = vperm.xlu0 %4900, %v3833
        %v4902 = vpop.permute.xlu0 %4901
        %v4904 = vsub.f32 %v4902, %v3855
        %v4905 = vsub.f32 %v4902, %v3856
        %v4906 = vsub.f32 %v4902, %v3857
        %v4907 = vsub.f32 %v4902, %v3858
        %v4908 = vmul.f32 %v4904, %v4904
        %v4909 = vmul.f32 %v4905, %v4905
        %v4910 = vmul.f32 %v4906, %v4906
        %v4911 = vmul.f32 %v4907, %v4907
        %v4912 = vsub.f32 0.0, %v4908
        %v4913 = vsub.f32 0.0, %v4909
        %v4914 = vsub.f32 0.0, %v4910
        %v4915 = vsub.f32 0.0, %v4911
        %v4916 = vmul.f32 %v4912, 1.442695
        %v4917 = vpow.pop %v4916
        %v4918 = vmul.f32 %v4913, 1.442695
        %v4919 = vpow.pop %v4918
        %v4920 = vmul.f32 %v4914, 1.442695
        %v4921 = vpow.pop %v4920
        %v4922 = vmul.f32 %v4915, 1.442695
        %v4923 = vpow.pop %v4922
        %v4924 = vadd.f32 %v4896, %v4917
        %v4925 = vadd.f32 %v4897, %v4919
        %v4926 = vadd.f32 %v4898, %v4921
        %v4927 = vadd.f32 %v4899, %v4923
        %4928 = vset.pattern.permute.xlu0 38
        %4929 = vperm.xlu0 %4928, %v3833
        %v4930 = vpop.permute.xlu0 %4929
        %v4932 = vsub.f32 %v4930, %v3855
        %v4933 = vsub.f32 %v4930, %v3856
        %v4934 = vsub.f32 %v4930, %v3857
        %v4935 = vsub.f32 %v4930, %v3858
        %v4936 = vmul.f32 %v4932, %v4932
        %v4937 = vmul.f32 %v4933, %v4933
        %v4938 = vmul.f32 %v4934, %v4934
        %v4939 = vmul.f32 %v4935, %v4935
        %v4940 = vsub.f32 0.0, %v4936
        %v4941 = vsub.f32 0.0, %v4937
        %v4942 = vsub.f32 0.0, %v4938
        %v4943 = vsub.f32 0.0, %v4939
        %v4944 = vmul.f32 %v4940, 1.442695
        %v4945 = vpow.pop %v4944
        %v4946 = vmul.f32 %v4941, 1.442695
        %v4947 = vpow.pop %v4946
        %v4948 = vmul.f32 %v4942, 1.442695
        %v4949 = vpow.pop %v4948
        %v4950 = vmul.f32 %v4943, 1.442695
        %v4951 = vpow.pop %v4950
        %v4952 = vadd.f32 %v4924, %v4945
        %v4953 = vadd.f32 %v4925, %v4947
        %v4954 = vadd.f32 %v4926, %v4949
        %v4955 = vadd.f32 %v4927, %v4951
        %4956 = vset.pattern.permute.xlu0 39
        %4957 = vperm.xlu0 %4956, %v3833
        %v4958 = vpop.permute.xlu0 %4957
        %v4960 = vsub.f32 %v4958, %v3855
        %v4961 = vsub.f32 %v4958, %v3856
        %v4962 = vsub.f32 %v4958, %v3857
        %v4963 = vsub.f32 %v4958, %v3858
        %v4964 = vmul.f32 %v4960, %v4960
        %v4965 = vmul.f32 %v4961, %v4961
        %v4966 = vmul.f32 %v4962, %v4962
        %v4967 = vmul.f32 %v4963, %v4963
        %v4968 = vsub.f32 0.0, %v4964
        %v4969 = vsub.f32 0.0, %v4965
        %v4970 = vsub.f32 0.0, %v4966
        %v4971 = vsub.f32 0.0, %v4967
        %v4972 = vmul.f32 %v4968, 1.442695
        %v4973 = vpow.pop %v4972
        %v4974 = vmul.f32 %v4969, 1.442695
        %v4975 = vpow.pop %v4974
        %v4976 = vmul.f32 %v4970, 1.442695
        %v4977 = vpow.pop %v4976
        %v4978 = vmul.f32 %v4971, 1.442695
        %v4979 = vpow.pop %v4978
        %v4980 = vadd.f32 %v4952, %v4973
        %v4981 = vadd.f32 %v4953, %v4975
        %v4982 = vadd.f32 %v4954, %v4977
        %v4983 = vadd.f32 %v4955, %v4979
        %4984 = vset.pattern.permute.xlu0 40
        %4985 = vperm.xlu0 %4984, %v3833
        %v4986 = vpop.permute.xlu0 %4985
        %v4988 = vsub.f32 %v4986, %v3855
        %v4989 = vsub.f32 %v4986, %v3856
        %v4990 = vsub.f32 %v4986, %v3857
        %v4991 = vsub.f32 %v4986, %v3858
        %v4992 = vmul.f32 %v4988, %v4988
        %v4993 = vmul.f32 %v4989, %v4989
        %v4994 = vmul.f32 %v4990, %v4990
        %v4995 = vmul.f32 %v4991, %v4991
        %v4996 = vsub.f32 0.0, %v4992
        %v4997 = vsub.f32 0.0, %v4993
        %v4998 = vsub.f32 0.0, %v4994
        %v4999 = vsub.f32 0.0, %v4995
        %v5000 = vmul.f32 %v4996, 1.442695
        %v5001 = vpow.pop %v5000
        %v5002 = vmul.f32 %v4997, 1.442695
        %v5003 = vpow.pop %v5002
        %v5004 = vmul.f32 %v4998, 1.442695
        %v5005 = vpow.pop %v5004
        %v5006 = vmul.f32 %v4999, 1.442695
        %v5007 = vpow.pop %v5006
        %v5008 = vadd.f32 %v4980, %v5001
        %v5009 = vadd.f32 %v4981, %v5003
        %v5010 = vadd.f32 %v4982, %v5005
        %v5011 = vadd.f32 %v4983, %v5007
        %5012 = vset.pattern.permute.xlu0 41
        %5013 = vperm.xlu0 %5012, %v3833
        %v5014 = vpop.permute.xlu0 %5013
        %v5016 = vsub.f32 %v5014, %v3855
        %v5017 = vsub.f32 %v5014, %v3856
        %v5018 = vsub.f32 %v5014, %v3857
        %v5019 = vsub.f32 %v5014, %v3858
        %v5020 = vmul.f32 %v5016, %v5016
        %v5021 = vmul.f32 %v5017, %v5017
        %v5022 = vmul.f32 %v5018, %v5018
        %v5023 = vmul.f32 %v5019, %v5019
        %v5024 = vsub.f32 0.0, %v5020
        %v5025 = vsub.f32 0.0, %v5021
        %v5026 = vsub.f32 0.0, %v5022
        %v5027 = vsub.f32 0.0, %v5023
        %v5028 = vmul.f32 %v5024, 1.442695
        %v5029 = vpow.pop %v5028
        %v5030 = vmul.f32 %v5025, 1.442695
        %v5031 = vpow.pop %v5030
        %v5032 = vmul.f32 %v5026, 1.442695
        %v5033 = vpow.pop %v5032
        %v5034 = vmul.f32 %v5027, 1.442695
        %v5035 = vpow.pop %v5034
        %v5036 = vadd.f32 %v5008, %v5029
        %v5037 = vadd.f32 %v5009, %v5031
        %v5038 = vadd.f32 %v5010, %v5033
        %v5039 = vadd.f32 %v5011, %v5035
        %5040 = vset.pattern.permute.xlu0 42
        %5041 = vperm.xlu0 %5040, %v3833
        %v5042 = vpop.permute.xlu0 %5041
        %v5044 = vsub.f32 %v5042, %v3855
        %v5045 = vsub.f32 %v5042, %v3856
        %v5046 = vsub.f32 %v5042, %v3857
        %v5047 = vsub.f32 %v5042, %v3858
        %v5048 = vmul.f32 %v5044, %v5044
        %v5049 = vmul.f32 %v5045, %v5045
        %v5050 = vmul.f32 %v5046, %v5046
        %v5051 = vmul.f32 %v5047, %v5047
        %v5052 = vsub.f32 0.0, %v5048
        %v5053 = vsub.f32 0.0, %v5049
        %v5054 = vsub.f32 0.0, %v5050
        %v5055 = vsub.f32 0.0, %v5051
        %v5056 = vmul.f32 %v5052, 1.442695
        %v5057 = vpow.pop %v5056
        %v5058 = vmul.f32 %v5053, 1.442695
        %v5059 = vpow.pop %v5058
        %v5060 = vmul.f32 %v5054, 1.442695
        %v5061 = vpow.pop %v5060
        %v5062 = vmul.f32 %v5055, 1.442695
        %v5063 = vpow.pop %v5062
        %v5064 = vadd.f32 %v5036, %v5057
        %v5065 = vadd.f32 %v5037, %v5059
        %v5066 = vadd.f32 %v5038, %v5061
        %v5067 = vadd.f32 %v5039, %v5063
        %5068 = vset.pattern.permute.xlu0 43
        %5069 = vperm.xlu0 %5068, %v3833
        %v5070 = vpop.permute.xlu0 %5069
        %v5072 = vsub.f32 %v5070, %v3855
        %v5073 = vsub.f32 %v5070, %v3856
        %v5074 = vsub.f32 %v5070, %v3857
        %v5075 = vsub.f32 %v5070, %v3858
        %v5076 = vmul.f32 %v5072, %v5072
        %v5077 = vmul.f32 %v5073, %v5073
        %v5078 = vmul.f32 %v5074, %v5074
        %v5079 = vmul.f32 %v5075, %v5075
        %v5080 = vsub.f32 0.0, %v5076
        %v5081 = vsub.f32 0.0, %v5077
        %v5082 = vsub.f32 0.0, %v5078
        %v5083 = vsub.f32 0.0, %v5079
        %v5084 = vmul.f32 %v5080, 1.442695
        %v5085 = vpow.pop %v5084
        %v5086 = vmul.f32 %v5081, 1.442695
        %v5087 = vpow.pop %v5086
        %v5088 = vmul.f32 %v5082, 1.442695
        %v5089 = vpow.pop %v5088
        %v5090 = vmul.f32 %v5083, 1.442695
        %v5091 = vpow.pop %v5090
        %v5092 = vadd.f32 %v5064, %v5085
        %v5093 = vadd.f32 %v5065, %v5087
        %v5094 = vadd.f32 %v5066, %v5089
        %v5095 = vadd.f32 %v5067, %v5091
        %5096 = vset.pattern.permute.xlu0 44
        %5097 = vperm.xlu0 %5096, %v3833
        %v5098 = vpop.permute.xlu0 %5097
        %v5100 = vsub.f32 %v5098, %v3855
        %v5101 = vsub.f32 %v5098, %v3856
        %v5102 = vsub.f32 %v5098, %v3857
        %v5103 = vsub.f32 %v5098, %v3858
        %v5104 = vmul.f32 %v5100, %v5100
        %v5105 = vmul.f32 %v5101, %v5101
        %v5106 = vmul.f32 %v5102, %v5102
        %v5107 = vmul.f32 %v5103, %v5103
        %v5108 = vsub.f32 0.0, %v5104
        %v5109 = vsub.f32 0.0, %v5105
        %v5110 = vsub.f32 0.0, %v5106
        %v5111 = vsub.f32 0.0, %v5107
        %v5112 = vmul.f32 %v5108, 1.442695
        %v5113 = vpow.pop %v5112
        %v5114 = vmul.f32 %v5109, 1.442695
        %v5115 = vpow.pop %v5114
        %v5116 = vmul.f32 %v5110, 1.442695
        %v5117 = vpow.pop %v5116
        %v5118 = vmul.f32 %v5111, 1.442695
        %v5119 = vpow.pop %v5118
        %v5120 = vadd.f32 %v5092, %v5113
        %v5121 = vadd.f32 %v5093, %v5115
        %v5122 = vadd.f32 %v5094, %v5117
        %v5123 = vadd.f32 %v5095, %v5119
        %5124 = vset.pattern.permute.xlu0 45
        %5125 = vperm.xlu0 %5124, %v3833
        %v5126 = vpop.permute.xlu0 %5125
        %v5128 = vsub.f32 %v5126, %v3855
        %v5129 = vsub.f32 %v5126, %v3856
        %v5130 = vsub.f32 %v5126, %v3857
        %v5131 = vsub.f32 %v5126, %v3858
        %v5132 = vmul.f32 %v5128, %v5128
        %v5133 = vmul.f32 %v5129, %v5129
        %v5134 = vmul.f32 %v5130, %v5130
        %v5135 = vmul.f32 %v5131, %v5131
        %v5136 = vsub.f32 0.0, %v5132
        %v5137 = vsub.f32 0.0, %v5133
        %v5138 = vsub.f32 0.0, %v5134
        %v5139 = vsub.f32 0.0, %v5135
        %v5140 = vmul.f32 %v5136, 1.442695
        %v5141 = vpow.pop %v5140
        %v5142 = vmul.f32 %v5137, 1.442695
        %v5143 = vpow.pop %v5142
        %v5144 = vmul.f32 %v5138, 1.442695
        %v5145 = vpow.pop %v5144
        %v5146 = vmul.f32 %v5139, 1.442695
        %v5147 = vpow.pop %v5146
        %v5148 = vadd.f32 %v5120, %v5141
        %v5149 = vadd.f32 %v5121, %v5143
        %v5150 = vadd.f32 %v5122, %v5145
        %v5151 = vadd.f32 %v5123, %v5147
        %5152 = vset.pattern.permute.xlu0 46
        %5153 = vperm.xlu0 %5152, %v3833
        %v5154 = vpop.permute.xlu0 %5153
        %v5156 = vsub.f32 %v5154, %v3855
        %v5157 = vsub.f32 %v5154, %v3856
        %v5158 = vsub.f32 %v5154, %v3857
        %v5159 = vsub.f32 %v5154, %v3858
        %v5160 = vmul.f32 %v5156, %v5156
        %v5161 = vmul.f32 %v5157, %v5157
        %v5162 = vmul.f32 %v5158, %v5158
        %v5163 = vmul.f32 %v5159, %v5159
        %v5164 = vsub.f32 0.0, %v5160
        %v5165 = vsub.f32 0.0, %v5161
        %v5166 = vsub.f32 0.0, %v5162
        %v5167 = vsub.f32 0.0, %v5163
        %v5168 = vmul.f32 %v5164, 1.442695
        %v5169 = vpow.pop %v5168
        %v5170 = vmul.f32 %v5165, 1.442695
        %v5171 = vpow.pop %v5170
        %v5172 = vmul.f32 %v5166, 1.442695
        %v5173 = vpow.pop %v5172
        %v5174 = vmul.f32 %v5167, 1.442695
        %v5175 = vpow.pop %v5174
        %v5176 = vadd.f32 %v5148, %v5169
        %v5177 = vadd.f32 %v5149, %v5171
        %v5178 = vadd.f32 %v5150, %v5173
        %v5179 = vadd.f32 %v5151, %v5175
        %5180 = vset.pattern.permute.xlu0 47
        %5181 = vperm.xlu0 %5180, %v3833
        %v5182 = vpop.permute.xlu0 %5181
        %v5184 = vsub.f32 %v5182, %v3855
        %v5185 = vsub.f32 %v5182, %v3856
        %v5186 = vsub.f32 %v5182, %v3857
        %v5187 = vsub.f32 %v5182, %v3858
        %v5188 = vmul.f32 %v5184, %v5184
        %v5189 = vmul.f32 %v5185, %v5185
        %v5190 = vmul.f32 %v5186, %v5186
        %v5191 = vmul.f32 %v5187, %v5187
        %v5192 = vsub.f32 0.0, %v5188
        %v5193 = vsub.f32 0.0, %v5189
        %v5194 = vsub.f32 0.0, %v5190
        %v5195 = vsub.f32 0.0, %v5191
        %v5196 = vmul.f32 %v5192, 1.442695
        %v5197 = vpow.pop %v5196
        %v5198 = vmul.f32 %v5193, 1.442695
        %v5199 = vpow.pop %v5198
        %v5200 = vmul.f32 %v5194, 1.442695
        %v5201 = vpow.pop %v5200
        %v5202 = vmul.f32 %v5195, 1.442695
        %v5203 = vpow.pop %v5202
        %v5204 = vadd.f32 %v5176, %v5197
        %v5205 = vadd.f32 %v5177, %v5199
        %v5206 = vadd.f32 %v5178, %v5201
        %v5207 = vadd.f32 %v5179, %v5203
        %5208 = vset.pattern.permute.xlu0 48
        %5209 = vperm.xlu0 %5208, %v3833
        %v5210 = vpop.permute.xlu0 %5209
        %v5212 = vsub.f32 %v5210, %v3855
        %v5213 = vsub.f32 %v5210, %v3856
        %v5214 = vsub.f32 %v5210, %v3857
        %v5215 = vsub.f32 %v5210, %v3858
        %v5216 = vmul.f32 %v5212, %v5212
        %v5217 = vmul.f32 %v5213, %v5213
        %v5218 = vmul.f32 %v5214, %v5214
        %v5219 = vmul.f32 %v5215, %v5215
        %v5220 = vsub.f32 0.0, %v5216
        %v5221 = vsub.f32 0.0, %v5217
        %v5222 = vsub.f32 0.0, %v5218
        %v5223 = vsub.f32 0.0, %v5219
        %v5224 = vmul.f32 %v5220, 1.442695
        %v5225 = vpow.pop %v5224
        %v5226 = vmul.f32 %v5221, 1.442695
        %v5227 = vpow.pop %v5226
        %v5228 = vmul.f32 %v5222, 1.442695
        %v5229 = vpow.pop %v5228
        %v5230 = vmul.f32 %v5223, 1.442695
        %v5231 = vpow.pop %v5230
        %v5232 = vadd.f32 %v5204, %v5225
        %v5233 = vadd.f32 %v5205, %v5227
        %v5234 = vadd.f32 %v5206, %v5229
        %v5235 = vadd.f32 %v5207, %v5231
        %5236 = vset.pattern.permute.xlu0 49
        %5237 = vperm.xlu0 %5236, %v3833
        %v5238 = vpop.permute.xlu0 %5237
        %v5240 = vsub.f32 %v5238, %v3855
        %v5241 = vsub.f32 %v5238, %v3856
        %v5242 = vsub.f32 %v5238, %v3857
        %v5243 = vsub.f32 %v5238, %v3858
        %v5244 = vmul.f32 %v5240, %v5240
        %v5245 = vmul.f32 %v5241, %v5241
        %v5246 = vmul.f32 %v5242, %v5242
        %v5247 = vmul.f32 %v5243, %v5243
        %v5248 = vsub.f32 0.0, %v5244
        %v5249 = vsub.f32 0.0, %v5245
        %v5250 = vsub.f32 0.0, %v5246
        %v5251 = vsub.f32 0.0, %v5247
        %v5252 = vmul.f32 %v5248, 1.442695
        %v5253 = vpow.pop %v5252
        %v5254 = vmul.f32 %v5249, 1.442695
        %v5255 = vpow.pop %v5254
        %v5256 = vmul.f32 %v5250, 1.442695
        %v5257 = vpow.pop %v5256
        %v5258 = vmul.f32 %v5251, 1.442695
        %v5259 = vpow.pop %v5258
        %v5260 = vadd.f32 %v5232, %v5253
        %v5261 = vadd.f32 %v5233, %v5255
        %v5262 = vadd.f32 %v5234, %v5257
        %v5263 = vadd.f32 %v5235, %v5259
        %5264 = vset.pattern.permute.xlu0 50
        %5265 = vperm.xlu0 %5264, %v3833
        %v5266 = vpop.permute.xlu0 %5265
        %v5268 = vsub.f32 %v5266, %v3855
        %v5269 = vsub.f32 %v5266, %v3856
        %v5270 = vsub.f32 %v5266, %v3857
        %v5271 = vsub.f32 %v5266, %v3858
        %v5272 = vmul.f32 %v5268, %v5268
        %v5273 = vmul.f32 %v5269, %v5269
        %v5274 = vmul.f32 %v5270, %v5270
        %v5275 = vmul.f32 %v5271, %v5271
        %v5276 = vsub.f32 0.0, %v5272
        %v5277 = vsub.f32 0.0, %v5273
        %v5278 = vsub.f32 0.0, %v5274
        %v5279 = vsub.f32 0.0, %v5275
        %v5280 = vmul.f32 %v5276, 1.442695
        %v5281 = vpow.pop %v5280
        %v5282 = vmul.f32 %v5277, 1.442695
        %v5283 = vpow.pop %v5282
        %v5284 = vmul.f32 %v5278, 1.442695
        %v5285 = vpow.pop %v5284
        %v5286 = vmul.f32 %v5279, 1.442695
        %v5287 = vpow.pop %v5286
        %v5288 = vadd.f32 %v5260, %v5281
        %v5289 = vadd.f32 %v5261, %v5283
        %v5290 = vadd.f32 %v5262, %v5285
        %v5291 = vadd.f32 %v5263, %v5287
        %5292 = vset.pattern.permute.xlu0 51
        %5293 = vperm.xlu0 %5292, %v3833
        %v5294 = vpop.permute.xlu0 %5293
        %v5296 = vsub.f32 %v5294, %v3855
        %v5297 = vsub.f32 %v5294, %v3856
        %v5298 = vsub.f32 %v5294, %v3857
        %v5299 = vsub.f32 %v5294, %v3858
        %v5300 = vmul.f32 %v5296, %v5296
        %v5301 = vmul.f32 %v5297, %v5297
        %v5302 = vmul.f32 %v5298, %v5298
        %v5303 = vmul.f32 %v5299, %v5299
        %v5304 = vsub.f32 0.0, %v5300
        %v5305 = vsub.f32 0.0, %v5301
        %v5306 = vsub.f32 0.0, %v5302
        %v5307 = vsub.f32 0.0, %v5303
        %v5308 = vmul.f32 %v5304, 1.442695
        %v5309 = vpow.pop %v5308
        %v5310 = vmul.f32 %v5305, 1.442695
        %v5311 = vpow.pop %v5310
        %v5312 = vmul.f32 %v5306, 1.442695
        %v5313 = vpow.pop %v5312
        %v5314 = vmul.f32 %v5307, 1.442695
        %v5315 = vpow.pop %v5314
        %v5316 = vadd.f32 %v5288, %v5309
        %v5317 = vadd.f32 %v5289, %v5311
        %v5318 = vadd.f32 %v5290, %v5313
        %v5319 = vadd.f32 %v5291, %v5315
        %5320 = vset.pattern.permute.xlu0 52
        %5321 = vperm.xlu0 %5320, %v3833
        %v5322 = vpop.permute.xlu0 %5321
        %v5324 = vsub.f32 %v5322, %v3855
        %v5325 = vsub.f32 %v5322, %v3856
        %v5326 = vsub.f32 %v5322, %v3857
        %v5327 = vsub.f32 %v5322, %v3858
        %v5328 = vmul.f32 %v5324, %v5324
        %v5329 = vmul.f32 %v5325, %v5325
        %v5330 = vmul.f32 %v5326, %v5326
        %v5331 = vmul.f32 %v5327, %v5327
        %v5332 = vsub.f32 0.0, %v5328
        %v5333 = vsub.f32 0.0, %v5329
        %v5334 = vsub.f32 0.0, %v5330
        %v5335 = vsub.f32 0.0, %v5331
        %v5336 = vmul.f32 %v5332, 1.442695
        %v5337 = vpow.pop %v5336
        %v5338 = vmul.f32 %v5333, 1.442695
        %v5339 = vpow.pop %v5338
        %v5340 = vmul.f32 %v5334, 1.442695
        %v5341 = vpow.pop %v5340
        %v5342 = vmul.f32 %v5335, 1.442695
        %v5343 = vpow.pop %v5342
        %v5344 = vadd.f32 %v5316, %v5337
        %v5345 = vadd.f32 %v5317, %v5339
        %v5346 = vadd.f32 %v5318, %v5341
        %v5347 = vadd.f32 %v5319, %v5343
        %5348 = vset.pattern.permute.xlu0 53
        %5349 = vperm.xlu0 %5348, %v3833
        %v5350 = vpop.permute.xlu0 %5349
        %v5352 = vsub.f32 %v5350, %v3855
        %v5353 = vsub.f32 %v5350, %v3856
        %v5354 = vsub.f32 %v5350, %v3857
        %v5355 = vsub.f32 %v5350, %v3858
        %v5356 = vmul.f32 %v5352, %v5352
        %v5357 = vmul.f32 %v5353, %v5353
        %v5358 = vmul.f32 %v5354, %v5354
        %v5359 = vmul.f32 %v5355, %v5355
        %v5360 = vsub.f32 0.0, %v5356
        %v5361 = vsub.f32 0.0, %v5357
        %v5362 = vsub.f32 0.0, %v5358
        %v5363 = vsub.f32 0.0, %v5359
        %v5364 = vmul.f32 %v5360, 1.442695
        %v5365 = vpow.pop %v5364
        %v5366 = vmul.f32 %v5361, 1.442695
        %v5367 = vpow.pop %v5366
        %v5368 = vmul.f32 %v5362, 1.442695
        %v5369 = vpow.pop %v5368
        %v5370 = vmul.f32 %v5363, 1.442695
        %v5371 = vpow.pop %v5370
        %v5372 = vadd.f32 %v5344, %v5365
        %v5373 = vadd.f32 %v5345, %v5367
        %v5374 = vadd.f32 %v5346, %v5369
        %v5375 = vadd.f32 %v5347, %v5371
        %5376 = vset.pattern.permute.xlu0 54
        %5377 = vperm.xlu0 %5376, %v3833
        %v5378 = vpop.permute.xlu0 %5377
        %v5380 = vsub.f32 %v5378, %v3855
        %v5381 = vsub.f32 %v5378, %v3856
        %v5382 = vsub.f32 %v5378, %v3857
        %v5383 = vsub.f32 %v5378, %v3858
        %v5384 = vmul.f32 %v5380, %v5380
        %v5385 = vmul.f32 %v5381, %v5381
        %v5386 = vmul.f32 %v5382, %v5382
        %v5387 = vmul.f32 %v5383, %v5383
        %v5388 = vsub.f32 0.0, %v5384
        %v5389 = vsub.f32 0.0, %v5385
        %v5390 = vsub.f32 0.0, %v5386
        %v5391 = vsub.f32 0.0, %v5387
        %v5392 = vmul.f32 %v5388, 1.442695
        %v5393 = vpow.pop %v5392
        %v5394 = vmul.f32 %v5389, 1.442695
        %v5395 = vpow.pop %v5394
        %v5396 = vmul.f32 %v5390, 1.442695
        %v5397 = vpow.pop %v5396
        %v5398 = vmul.f32 %v5391, 1.442695
        %v5399 = vpow.pop %v5398
        %v5400 = vadd.f32 %v5372, %v5393
        %v5401 = vadd.f32 %v5373, %v5395
        %v5402 = vadd.f32 %v5374, %v5397
        %v5403 = vadd.f32 %v5375, %v5399
        %5404 = vset.pattern.permute.xlu0 55
        %5405 = vperm.xlu0 %5404, %v3833
        %v5406 = vpop.permute.xlu0 %5405
        %v5408 = vsub.f32 %v5406, %v3855
        %v5409 = vsub.f32 %v5406, %v3856
        %v5410 = vsub.f32 %v5406, %v3857
        %v5411 = vsub.f32 %v5406, %v3858
        %v5412 = vmul.f32 %v5408, %v5408
        %v5413 = vmul.f32 %v5409, %v5409
        %v5414 = vmul.f32 %v5410, %v5410
        %v5415 = vmul.f32 %v5411, %v5411
        %v5416 = vsub.f32 0.0, %v5412
        %v5417 = vsub.f32 0.0, %v5413
        %v5418 = vsub.f32 0.0, %v5414
        %v5419 = vsub.f32 0.0, %v5415
        %v5420 = vmul.f32 %v5416, 1.442695
        %v5421 = vpow.pop %v5420
        %v5422 = vmul.f32 %v5417, 1.442695
        %v5423 = vpow.pop %v5422
        %v5424 = vmul.f32 %v5418, 1.442695
        %v5425 = vpow.pop %v5424
        %v5426 = vmul.f32 %v5419, 1.442695
        %v5427 = vpow.pop %v5426
        %v5428 = vadd.f32 %v5400, %v5421
        %v5429 = vadd.f32 %v5401, %v5423
        %v5430 = vadd.f32 %v5402, %v5425
        %v5431 = vadd.f32 %v5403, %v5427
        %5432 = vset.pattern.permute.xlu0 56
        %5433 = vperm.xlu0 %5432, %v3833
        %v5434 = vpop.permute.xlu0 %5433
        %v5436 = vsub.f32 %v5434, %v3855
        %v5437 = vsub.f32 %v5434, %v3856
        %v5438 = vsub.f32 %v5434, %v3857
        %v5439 = vsub.f32 %v5434, %v3858
        %v5440 = vmul.f32 %v5436, %v5436
        %v5441 = vmul.f32 %v5437, %v5437
        %v5442 = vmul.f32 %v5438, %v5438
        %v5443 = vmul.f32 %v5439, %v5439
        %v5444 = vsub.f32 0.0, %v5440
        %v5445 = vsub.f32 0.0, %v5441
        %v5446 = vsub.f32 0.0, %v5442
        %v5447 = vsub.f32 0.0, %v5443
        %v5448 = vmul.f32 %v5444, 1.442695
        %v5449 = vpow.pop %v5448
        %v5450 = vmul.f32 %v5445, 1.442695
        %v5451 = vpow.pop %v5450
        %v5452 = vmul.f32 %v5446, 1.442695
        %v5453 = vpow.pop %v5452
        %v5454 = vmul.f32 %v5447, 1.442695
        %v5455 = vpow.pop %v5454
        %v5456 = vadd.f32 %v5428, %v5449
        %v5457 = vadd.f32 %v5429, %v5451
        %v5458 = vadd.f32 %v5430, %v5453
        %v5459 = vadd.f32 %v5431, %v5455
        %5460 = vset.pattern.permute.xlu0 57
        %5461 = vperm.xlu0 %5460, %v3833
        %v5462 = vpop.permute.xlu0 %5461
        %v5464 = vsub.f32 %v5462, %v3855
        %v5465 = vsub.f32 %v5462, %v3856
        %v5466 = vsub.f32 %v5462, %v3857
        %v5467 = vsub.f32 %v5462, %v3858
        %v5468 = vmul.f32 %v5464, %v5464
        %v5469 = vmul.f32 %v5465, %v5465
        %v5470 = vmul.f32 %v5466, %v5466
        %v5471 = vmul.f32 %v5467, %v5467
        %v5472 = vsub.f32 0.0, %v5468
        %v5473 = vsub.f32 0.0, %v5469
        %v5474 = vsub.f32 0.0, %v5470
        %v5475 = vsub.f32 0.0, %v5471
        %v5476 = vmul.f32 %v5472, 1.442695
        %v5477 = vpow.pop %v5476
        %v5478 = vmul.f32 %v5473, 1.442695
        %v5479 = vpow.pop %v5478
        %v5480 = vmul.f32 %v5474, 1.442695
        %v5481 = vpow.pop %v5480
        %v5482 = vmul.f32 %v5475, 1.442695
        %v5483 = vpow.pop %v5482
        %v5484 = vadd.f32 %v5456, %v5477
        %v5485 = vadd.f32 %v5457, %v5479
        %v5486 = vadd.f32 %v5458, %v5481
        %v5487 = vadd.f32 %v5459, %v5483
        %5488 = vset.pattern.permute.xlu0 58
        %5489 = vperm.xlu0 %5488, %v3833
        %v5490 = vpop.permute.xlu0 %5489
        %v5492 = vsub.f32 %v5490, %v3855
        %v5493 = vsub.f32 %v5490, %v3856
        %v5494 = vsub.f32 %v5490, %v3857
        %v5495 = vsub.f32 %v5490, %v3858
        %v5496 = vmul.f32 %v5492, %v5492
        %v5497 = vmul.f32 %v5493, %v5493
        %v5498 = vmul.f32 %v5494, %v5494
        %v5499 = vmul.f32 %v5495, %v5495
        %v5500 = vsub.f32 0.0, %v5496
        %v5501 = vsub.f32 0.0, %v5497
        %v5502 = vsub.f32 0.0, %v5498
        %v5503 = vsub.f32 0.0, %v5499
        %v5504 = vmul.f32 %v5500, 1.442695
        %v5505 = vpow.pop %v5504
        %v5506 = vmul.f32 %v5501, 1.442695
        %v5507 = vpow.pop %v5506
        %v5508 = vmul.f32 %v5502, 1.442695
        %v5509 = vpow.pop %v5508
        %v5510 = vmul.f32 %v5503, 1.442695
        %v5511 = vpow.pop %v5510
        %v5512 = vadd.f32 %v5484, %v5505
        %v5513 = vadd.f32 %v5485, %v5507
        %v5514 = vadd.f32 %v5486, %v5509
        %v5515 = vadd.f32 %v5487, %v5511
        %5516 = vset.pattern.permute.xlu0 59
        %5517 = vperm.xlu0 %5516, %v3833
        %v5518 = vpop.permute.xlu0 %5517
        %v5520 = vsub.f32 %v5518, %v3855
        %v5521 = vsub.f32 %v5518, %v3856
        %v5522 = vsub.f32 %v5518, %v3857
        %v5523 = vsub.f32 %v5518, %v3858
        %v5524 = vmul.f32 %v5520, %v5520
        %v5525 = vmul.f32 %v5521, %v5521
        %v5526 = vmul.f32 %v5522, %v5522
        %v5527 = vmul.f32 %v5523, %v5523
        %v5528 = vsub.f32 0.0, %v5524
        %v5529 = vsub.f32 0.0, %v5525
        %v5530 = vsub.f32 0.0, %v5526
        %v5531 = vsub.f32 0.0, %v5527
        %v5532 = vmul.f32 %v5528, 1.442695
        %v5533 = vpow.pop %v5532
        %v5534 = vmul.f32 %v5529, 1.442695
        %v5535 = vpow.pop %v5534
        %v5536 = vmul.f32 %v5530, 1.442695
        %v5537 = vpow.pop %v5536
        %v5538 = vmul.f32 %v5531, 1.442695
        %v5539 = vpow.pop %v5538
        %v5540 = vadd.f32 %v5512, %v5533
        %v5541 = vadd.f32 %v5513, %v5535
        %v5542 = vadd.f32 %v5514, %v5537
        %v5543 = vadd.f32 %v5515, %v5539
        %5544 = vset.pattern.permute.xlu0 60
        %5545 = vperm.xlu0 %5544, %v3833
        %v5546 = vpop.permute.xlu0 %5545
        %v5548 = vsub.f32 %v5546, %v3855
        %v5549 = vsub.f32 %v5546, %v3856
        %v5550 = vsub.f32 %v5546, %v3857
        %v5551 = vsub.f32 %v5546, %v3858
        %v5552 = vmul.f32 %v5548, %v5548
        %v5553 = vmul.f32 %v5549, %v5549
        %v5554 = vmul.f32 %v5550, %v5550
        %v5555 = vmul.f32 %v5551, %v5551
        %v5556 = vsub.f32 0.0, %v5552
        %v5557 = vsub.f32 0.0, %v5553
        %v5558 = vsub.f32 0.0, %v5554
        %v5559 = vsub.f32 0.0, %v5555
        %v5560 = vmul.f32 %v5556, 1.442695
        %v5561 = vpow.pop %v5560
        %v5562 = vmul.f32 %v5557, 1.442695
        %v5563 = vpow.pop %v5562
        %v5564 = vmul.f32 %v5558, 1.442695
        %v5565 = vpow.pop %v5564
        %v5566 = vmul.f32 %v5559, 1.442695
        %v5567 = vpow.pop %v5566
        %v5568 = vadd.f32 %v5540, %v5561
        %v5569 = vadd.f32 %v5541, %v5563
        %v5570 = vadd.f32 %v5542, %v5565
        %v5571 = vadd.f32 %v5543, %v5567
        %5572 = vset.pattern.permute.xlu0 61
        %5573 = vperm.xlu0 %5572, %v3833
        %v5574 = vpop.permute.xlu0 %5573
        %v5576 = vsub.f32 %v5574, %v3855
        %v5577 = vsub.f32 %v5574, %v3856
        %v5578 = vsub.f32 %v5574, %v3857
        %v5579 = vsub.f32 %v5574, %v3858
        %v5580 = vmul.f32 %v5576, %v5576
        %v5581 = vmul.f32 %v5577, %v5577
        %v5582 = vmul.f32 %v5578, %v5578
        %v5583 = vmul.f32 %v5579, %v5579
        %v5584 = vsub.f32 0.0, %v5580
        %v5585 = vsub.f32 0.0, %v5581
        %v5586 = vsub.f32 0.0, %v5582
        %v5587 = vsub.f32 0.0, %v5583
        %v5588 = vmul.f32 %v5584, 1.442695
        %v5589 = vpow.pop %v5588
        %v5590 = vmul.f32 %v5585, 1.442695
        %v5591 = vpow.pop %v5590
        %v5592 = vmul.f32 %v5586, 1.442695
        %v5593 = vpow.pop %v5592
        %v5594 = vmul.f32 %v5587, 1.442695
        %v5595 = vpow.pop %v5594
        %v5596 = vadd.f32 %v5568, %v5589
        %v5597 = vadd.f32 %v5569, %v5591
        %v5598 = vadd.f32 %v5570, %v5593
        %v5599 = vadd.f32 %v5571, %v5595
        %5600 = vset.pattern.permute.xlu0 62
        %5601 = vperm.xlu0 %5600, %v3833
        %v5602 = vpop.permute.xlu0 %5601
        %v5604 = vsub.f32 %v5602, %v3855
        %v5605 = vsub.f32 %v5602, %v3856
        %v5606 = vsub.f32 %v5602, %v3857
        %v5607 = vsub.f32 %v5602, %v3858
        %v5608 = vmul.f32 %v5604, %v5604
        %v5609 = vmul.f32 %v5605, %v5605
        %v5610 = vmul.f32 %v5606, %v5606
        %v5611 = vmul.f32 %v5607, %v5607
        %v5612 = vsub.f32 0.0, %v5608
        %v5613 = vsub.f32 0.0, %v5609
        %v5614 = vsub.f32 0.0, %v5610
        %v5615 = vsub.f32 0.0, %v5611
        %v5616 = vmul.f32 %v5612, 1.442695
        %v5617 = vpow.pop %v5616
        %v5618 = vmul.f32 %v5613, 1.442695
        %v5619 = vpow.pop %v5618
        %v5620 = vmul.f32 %v5614, 1.442695
        %v5621 = vpow.pop %v5620
        %v5622 = vmul.f32 %v5615, 1.442695
        %v5623 = vpow.pop %v5622
        %v5624 = vadd.f32 %v5596, %v5617
        %v5625 = vadd.f32 %v5597, %v5619
        %v5626 = vadd.f32 %v5598, %v5621
        %v5627 = vadd.f32 %v5599, %v5623
        %5628 = vset.pattern.permute.xlu0 63
        %5629 = vperm.xlu0 %5628, %v3833
        %v5630 = vpop.permute.xlu0 %5629
        %v5632 = vsub.f32 %v5630, %v3855
        %v5633 = vsub.f32 %v5630, %v3856
        %v5634 = vsub.f32 %v5630, %v3857
        %v5635 = vsub.f32 %v5630, %v3858
        %v5636 = vmul.f32 %v5632, %v5632
        %v5637 = vmul.f32 %v5633, %v5633
        %v5638 = vmul.f32 %v5634, %v5634
        %v5639 = vmul.f32 %v5635, %v5635
        %v5640 = vsub.f32 0.0, %v5636
        %v5641 = vsub.f32 0.0, %v5637
        %v5642 = vsub.f32 0.0, %v5638
        %v5643 = vsub.f32 0.0, %v5639
        %v5644 = vmul.f32 %v5640, 1.442695
        %v5645 = vpow.pop %v5644
        %v5646 = vmul.f32 %v5641, 1.442695
        %v5647 = vpow.pop %v5646
        %v5648 = vmul.f32 %v5642, 1.442695
        %v5649 = vpow.pop %v5648
        %v5650 = vmul.f32 %v5643, 1.442695
        %v5651 = vpow.pop %v5650
        %v5652 = vadd.f32 %v5624, %v5645
        %v5653 = vadd.f32 %v5625, %v5647
        %v5654 = vadd.f32 %v5626, %v5649
        %v5655 = vadd.f32 %v5627, %v5651
      $region44: #{meeloss.1} parent=31 // loop_footer
        %s3838 = sadd.s32 %s3836, 1
      $region45: #{meeloss.1} parent=31 // loop_footer_branch
        %3835 = sbr.rel target = $region41
      $region46: #{meeloss.1} parent=31 // loop_exit
        _
      %s5656 = sshra.s32 %s190, 2
      %s5657 = sand.u32 %s190, 3
      %s5658 = sshra.s32 %s190, 2
      %s5659 = sand.u32 %s190, 3
      %s5660 = smul.u32 %s5656, 4
      %s5661 = smul.u32 %s5660, 4
      %s5662 = sadd.s32 %s5661, %s5659
      %s5663 = scalar_lea.vmem %s2, %s5662
      %v5664 = vld [vmem:[%s5663] ss:$4 sm:$0xf]
      %v5666 = vperm.slane %v5664, 0
      %v5667 = vperm.slane %v5664, 1
      %v5668 = vperm.slane %v5664, 2
      %v5669 = vperm.slane %v5664, 3
      %5675 = vset.pattern.permute.xlu0 0
      %5676 = vperm.xlu0 %5675, %v3833
      %v5677 = vpop.permute.xlu0 %5676
      %v5679 = vsub.f32 %v5677, %v5666
      %v5680 = vsub.f32 %v5677, %v5667
      %v5681 = vsub.f32 %v5677, %v5668
      %v5682 = vsub.f32 %v5677, %v5669
      %v5683 = vmul.f32 %v5679, %v5679
      %v5684 = vmul.f32 %v5680, %v5680
      %v5685 = vmul.f32 %v5681, %v5681
      %v5686 = vmul.f32 %v5682, %v5682
      %v5687 = vsub.f32 0.0, %v5683
      %v5688 = vsub.f32 0.0, %v5684
      %v5689 = vsub.f32 0.0, %v5685
      %v5690 = vsub.f32 0.0, %v5686
      %v5691 = vmul.f32 %v5687, 1.442695
      %v5692 = vpow.pop %v5691
      %v5693 = vmul.f32 %v5688, 1.442695
      %v5694 = vpow.pop %v5693
      %v5695 = vmul.f32 %v5689, 1.442695
      %v5696 = vpow.pop %v5695
      %v5697 = vmul.f32 %v5690, 1.442695
      %v5698 = vpow.pop %v5697
      %v5699 = vadd.f32 %v5692, 0.0
      %v5700 = vadd.f32 %v5694, 0.0
      %v5701 = vadd.f32 %v5696, 0.0
      %v5702 = vadd.f32 %v5698, 0.0
      %5703 = vset.pattern.permute.xlu0 1
      %5704 = vperm.xlu0 %5703, %v3833
      %v5705 = vpop.permute.xlu0 %5704
      %v5707 = vsub.f32 %v5705, %v5666
      %v5708 = vsub.f32 %v5705, %v5667
      %v5709 = vsub.f32 %v5705, %v5668
      %v5710 = vsub.f32 %v5705, %v5669
      %v5711 = vmul.f32 %v5707, %v5707
      %v5712 = vmul.f32 %v5708, %v5708
      %v5713 = vmul.f32 %v5709, %v5709
      %v5714 = vmul.f32 %v5710, %v5710
      %v5715 = vsub.f32 0.0, %v5711
      %v5716 = vsub.f32 0.0, %v5712
      %v5717 = vsub.f32 0.0, %v5713
      %v5718 = vsub.f32 0.0, %v5714
      %v5719 = vmul.f32 %v5715, 1.442695
      %v5720 = vpow.pop %v5719
      %v5721 = vmul.f32 %v5716, 1.442695
      %v5722 = vpow.pop %v5721
      %v5723 = vmul.f32 %v5717, 1.442695
      %v5724 = vpow.pop %v5723
      %v5725 = vmul.f32 %v5718, 1.442695
      %v5726 = vpow.pop %v5725
      %v5727 = vadd.f32 %v5699, %v5720
      %v5728 = vadd.f32 %v5700, %v5722
      %v5729 = vadd.f32 %v5701, %v5724
      %v5730 = vadd.f32 %v5702, %v5726
      %5731 = vset.pattern.permute.xlu0 2
      %5732 = vperm.xlu0 %5731, %v3833
      %v5733 = vpop.permute.xlu0 %5732
      %v5735 = vsub.f32 %v5733, %v5666
      %v5736 = vsub.f32 %v5733, %v5667
      %v5737 = vsub.f32 %v5733, %v5668
      %v5738 = vsub.f32 %v5733, %v5669
      %v5739 = vmul.f32 %v5735, %v5735
      %v5740 = vmul.f32 %v5736, %v5736
      %v5741 = vmul.f32 %v5737, %v5737
      %v5742 = vmul.f32 %v5738, %v5738
      %v5743 = vsub.f32 0.0, %v5739
      %v5744 = vsub.f32 0.0, %v5740
      %v5745 = vsub.f32 0.0, %v5741
      %v5746 = vsub.f32 0.0, %v5742
      %v5747 = vmul.f32 %v5743, 1.442695
      %v5748 = vpow.pop %v5747
      %v5749 = vmul.f32 %v5744, 1.442695
      %v5750 = vpow.pop %v5749
      %v5751 = vmul.f32 %v5745, 1.442695
      %v5752 = vpow.pop %v5751
      %v5753 = vmul.f32 %v5746, 1.442695
      %v5754 = vpow.pop %v5753
      %v5755 = vadd.f32 %v5727, %v5748
      %v5756 = vadd.f32 %v5728, %v5750
      %v5757 = vadd.f32 %v5729, %v5752
      %v5758 = vadd.f32 %v5730, %v5754
      %5759 = vset.pattern.permute.xlu0 3
      %5760 = vperm.xlu0 %5759, %v3833
      %v5761 = vpop.permute.xlu0 %5760
      %v5763 = vsub.f32 %v5761, %v5666
      %v5764 = vsub.f32 %v5761, %v5667
      %v5765 = vsub.f32 %v5761, %v5668
      %v5766 = vsub.f32 %v5761, %v5669
      %v5767 = vmul.f32 %v5763, %v5763
      %v5768 = vmul.f32 %v5764, %v5764
      %v5769 = vmul.f32 %v5765, %v5765
      %v5770 = vmul.f32 %v5766, %v5766
      %v5771 = vsub.f32 0.0, %v5767
      %v5772 = vsub.f32 0.0, %v5768
      %v5773 = vsub.f32 0.0, %v5769
      %v5774 = vsub.f32 0.0, %v5770
      %v5775 = vmul.f32 %v5771, 1.442695
      %v5776 = vpow.pop %v5775
      %v5777 = vmul.f32 %v5772, 1.442695
      %v5778 = vpow.pop %v5777
      %v5779 = vmul.f32 %v5773, 1.442695
      %v5780 = vpow.pop %v5779
      %v5781 = vmul.f32 %v5774, 1.442695
      %v5782 = vpow.pop %v5781
      %v5783 = vadd.f32 %v5755, %v5776
      %v5784 = vadd.f32 %v5756, %v5778
      %v5785 = vadd.f32 %v5757, %v5780
      %v5786 = vadd.f32 %v5758, %v5782
      %5787 = vset.pattern.permute.xlu0 4
      %5788 = vperm.xlu0 %5787, %v3833
      %v5789 = vpop.permute.xlu0 %5788
      %v5791 = vsub.f32 %v5789, %v5666
      %v5792 = vsub.f32 %v5789, %v5667
      %v5793 = vsub.f32 %v5789, %v5668
      %v5794 = vsub.f32 %v5789, %v5669
      %v5795 = vmul.f32 %v5791, %v5791
      %v5796 = vmul.f32 %v5792, %v5792
      %v5797 = vmul.f32 %v5793, %v5793
      %v5798 = vmul.f32 %v5794, %v5794
      %v5799 = vsub.f32 0.0, %v5795
      %v5800 = vsub.f32 0.0, %v5796
      %v5801 = vsub.f32 0.0, %v5797
      %v5802 = vsub.f32 0.0, %v5798
      %v5803 = vmul.f32 %v5799, 1.442695
      %v5804 = vpow.pop %v5803
      %v5805 = vmul.f32 %v5800, 1.442695
      %v5806 = vpow.pop %v5805
      %v5807 = vmul.f32 %v5801, 1.442695
      %v5808 = vpow.pop %v5807
      %v5809 = vmul.f32 %v5802, 1.442695
      %v5810 = vpow.pop %v5809
      %v5811 = vadd.f32 %v5783, %v5804
      %v5812 = vadd.f32 %v5784, %v5806
      %v5813 = vadd.f32 %v5785, %v5808
      %v5814 = vadd.f32 %v5786, %v5810
      %5815 = vset.pattern.permute.xlu0 5
      %5816 = vperm.xlu0 %5815, %v3833
      %v5817 = vpop.permute.xlu0 %5816
      %v5819 = vsub.f32 %v5817, %v5666
      %v5820 = vsub.f32 %v5817, %v5667
      %v5821 = vsub.f32 %v5817, %v5668
      %v5822 = vsub.f32 %v5817, %v5669
      %v5823 = vmul.f32 %v5819, %v5819
      %v5824 = vmul.f32 %v5820, %v5820
      %v5825 = vmul.f32 %v5821, %v5821
      %v5826 = vmul.f32 %v5822, %v5822
      %v5827 = vsub.f32 0.0, %v5823
      %v5828 = vsub.f32 0.0, %v5824
      %v5829 = vsub.f32 0.0, %v5825
      %v5830 = vsub.f32 0.0, %v5826
      %v5831 = vmul.f32 %v5827, 1.442695
      %v5832 = vpow.pop %v5831
      %v5833 = vmul.f32 %v5828, 1.442695
      %v5834 = vpow.pop %v5833
      %v5835 = vmul.f32 %v5829, 1.442695
      %v5836 = vpow.pop %v5835
      %v5837 = vmul.f32 %v5830, 1.442695
      %v5838 = vpow.pop %v5837
      %v5839 = vadd.f32 %v5811, %v5832
      %v5840 = vadd.f32 %v5812, %v5834
      %v5841 = vadd.f32 %v5813, %v5836
      %v5842 = vadd.f32 %v5814, %v5838
      %5843 = vset.pattern.permute.xlu0 6
      %5844 = vperm.xlu0 %5843, %v3833
      %v5845 = vpop.permute.xlu0 %5844
      %v5847 = vsub.f32 %v5845, %v5666
      %v5848 = vsub.f32 %v5845, %v5667
      %v5849 = vsub.f32 %v5845, %v5668
      %v5850 = vsub.f32 %v5845, %v5669
      %v5851 = vmul.f32 %v5847, %v5847
      %v5852 = vmul.f32 %v5848, %v5848
      %v5853 = vmul.f32 %v5849, %v5849
      %v5854 = vmul.f32 %v5850, %v5850
      %v5855 = vsub.f32 0.0, %v5851
      %v5856 = vsub.f32 0.0, %v5852
      %v5857 = vsub.f32 0.0, %v5853
      %v5858 = vsub.f32 0.0, %v5854
      %v5859 = vmul.f32 %v5855, 1.442695
      %v5860 = vpow.pop %v5859
      %v5861 = vmul.f32 %v5856, 1.442695
      %v5862 = vpow.pop %v5861
      %v5863 = vmul.f32 %v5857, 1.442695
      %v5864 = vpow.pop %v5863
      %v5865 = vmul.f32 %v5858, 1.442695
      %v5866 = vpow.pop %v5865
      %v5867 = vadd.f32 %v5839, %v5860
      %v5868 = vadd.f32 %v5840, %v5862
      %v5869 = vadd.f32 %v5841, %v5864
      %v5870 = vadd.f32 %v5842, %v5866
      %5871 = vset.pattern.permute.xlu0 7
      %5872 = vperm.xlu0 %5871, %v3833
      %v5873 = vpop.permute.xlu0 %5872
      %v5875 = vsub.f32 %v5873, %v5666
      %v5876 = vsub.f32 %v5873, %v5667
      %v5877 = vsub.f32 %v5873, %v5668
      %v5878 = vsub.f32 %v5873, %v5669
      %v5879 = vmul.f32 %v5875, %v5875
      %v5880 = vmul.f32 %v5876, %v5876
      %v5881 = vmul.f32 %v5877, %v5877
      %v5882 = vmul.f32 %v5878, %v5878
      %v5883 = vsub.f32 0.0, %v5879
      %v5884 = vsub.f32 0.0, %v5880
      %v5885 = vsub.f32 0.0, %v5881
      %v5886 = vsub.f32 0.0, %v5882
      %v5887 = vmul.f32 %v5883, 1.442695
      %v5888 = vpow.pop %v5887
      %v5889 = vmul.f32 %v5884, 1.442695
      %v5890 = vpow.pop %v5889
      %v5891 = vmul.f32 %v5885, 1.442695
      %v5892 = vpow.pop %v5891
      %v5893 = vmul.f32 %v5886, 1.442695
      %v5894 = vpow.pop %v5893
      %v5895 = vadd.f32 %v5867, %v5888
      %v5896 = vadd.f32 %v5868, %v5890
      %v5897 = vadd.f32 %v5869, %v5892
      %v5898 = vadd.f32 %v5870, %v5894
      %5899 = vset.pattern.permute.xlu0 8
      %5900 = vperm.xlu0 %5899, %v3833
      %v5901 = vpop.permute.xlu0 %5900
      %v5903 = vsub.f32 %v5901, %v5666
      %v5904 = vsub.f32 %v5901, %v5667
      %v5905 = vsub.f32 %v5901, %v5668
      %v5906 = vsub.f32 %v5901, %v5669
      %v5907 = vmul.f32 %v5903, %v5903
      %v5908 = vmul.f32 %v5904, %v5904
      %v5909 = vmul.f32 %v5905, %v5905
      %v5910 = vmul.f32 %v5906, %v5906
      %v5911 = vsub.f32 0.0, %v5907
      %v5912 = vsub.f32 0.0, %v5908
      %v5913 = vsub.f32 0.0, %v5909
      %v5914 = vsub.f32 0.0, %v5910
      %v5915 = vmul.f32 %v5911, 1.442695
      %v5916 = vpow.pop %v5915
      %v5917 = vmul.f32 %v5912, 1.442695
      %v5918 = vpow.pop %v5917
      %v5919 = vmul.f32 %v5913, 1.442695
      %v5920 = vpow.pop %v5919
      %v5921 = vmul.f32 %v5914, 1.442695
      %v5922 = vpow.pop %v5921
      %v5923 = vadd.f32 %v5895, %v5916
      %v5924 = vadd.f32 %v5896, %v5918
      %v5925 = vadd.f32 %v5897, %v5920
      %v5926 = vadd.f32 %v5898, %v5922
      %5927 = vset.pattern.permute.xlu0 9
      %5928 = vperm.xlu0 %5927, %v3833
      %v5929 = vpop.permute.xlu0 %5928
      %v5931 = vsub.f32 %v5929, %v5666
      %v5932 = vsub.f32 %v5929, %v5667
      %v5933 = vsub.f32 %v5929, %v5668
      %v5934 = vsub.f32 %v5929, %v5669
      %v5935 = vmul.f32 %v5931, %v5931
      %v5936 = vmul.f32 %v5932, %v5932
      %v5937 = vmul.f32 %v5933, %v5933
      %v5938 = vmul.f32 %v5934, %v5934
      %v5939 = vsub.f32 0.0, %v5935
      %v5940 = vsub.f32 0.0, %v5936
      %v5941 = vsub.f32 0.0, %v5937
      %v5942 = vsub.f32 0.0, %v5938
      %v5943 = vmul.f32 %v5939, 1.442695
      %v5944 = vpow.pop %v5943
      %v5945 = vmul.f32 %v5940, 1.442695
      %v5946 = vpow.pop %v5945
      %v5947 = vmul.f32 %v5941, 1.442695
      %v5948 = vpow.pop %v5947
      %v5949 = vmul.f32 %v5942, 1.442695
      %v5950 = vpow.pop %v5949
      %v5951 = vadd.f32 %v5923, %v5944
      %v5952 = vadd.f32 %v5924, %v5946
      %v5953 = vadd.f32 %v5925, %v5948
      %v5954 = vadd.f32 %v5926, %v5950
      %5955 = vset.pattern.permute.xlu0 10
      %5956 = vperm.xlu0 %5955, %v3833
      %v5957 = vpop.permute.xlu0 %5956
      %v5959 = vsub.f32 %v5957, %v5666
      %v5960 = vsub.f32 %v5957, %v5667
      %v5961 = vsub.f32 %v5957, %v5668
      %v5962 = vsub.f32 %v5957, %v5669
      %v5963 = vmul.f32 %v5959, %v5959
      %v5964 = vmul.f32 %v5960, %v5960
      %v5965 = vmul.f32 %v5961, %v5961
      %v5966 = vmul.f32 %v5962, %v5962
      %v5967 = vsub.f32 0.0, %v5963
      %v5968 = vsub.f32 0.0, %v5964
      %v5969 = vsub.f32 0.0, %v5965
      %v5970 = vsub.f32 0.0, %v5966
      %v5971 = vmul.f32 %v5967, 1.442695
      %v5972 = vpow.pop %v5971
      %v5973 = vmul.f32 %v5968, 1.442695
      %v5974 = vpow.pop %v5973
      %v5975 = vmul.f32 %v5969, 1.442695
      %v5976 = vpow.pop %v5975
      %v5977 = vmul.f32 %v5970, 1.442695
      %v5978 = vpow.pop %v5977
      %v5979 = vadd.f32 %v5951, %v5972
      %v5980 = vadd.f32 %v5952, %v5974
      %v5981 = vadd.f32 %v5953, %v5976
      %v5982 = vadd.f32 %v5954, %v5978
      %5983 = vset.pattern.permute.xlu0 11
      %5984 = vperm.xlu0 %5983, %v3833
      %v5985 = vpop.permute.xlu0 %5984
      %v5987 = vsub.f32 %v5985, %v5666
      %v5988 = vsub.f32 %v5985, %v5667
      %v5989 = vsub.f32 %v5985, %v5668
      %v5990 = vsub.f32 %v5985, %v5669
      %v5991 = vmul.f32 %v5987, %v5987
      %v5992 = vmul.f32 %v5988, %v5988
      %v5993 = vmul.f32 %v5989, %v5989
      %v5994 = vmul.f32 %v5990, %v5990
      %v5995 = vsub.f32 0.0, %v5991
      %v5996 = vsub.f32 0.0, %v5992
      %v5997 = vsub.f32 0.0, %v5993
      %v5998 = vsub.f32 0.0, %v5994
      %v5999 = vmul.f32 %v5995, 1.442695
      %v6000 = vpow.pop %v5999
      %v6001 = vmul.f32 %v5996, 1.442695
      %v6002 = vpow.pop %v6001
      %v6003 = vmul.f32 %v5997, 1.442695
      %v6004 = vpow.pop %v6003
      %v6005 = vmul.f32 %v5998, 1.442695
      %v6006 = vpow.pop %v6005
      %v6007 = vadd.f32 %v5979, %v6000
      %v6008 = vadd.f32 %v5980, %v6002
      %v6009 = vadd.f32 %v5981, %v6004
      %v6010 = vadd.f32 %v5982, %v6006
      %6011 = vset.pattern.permute.xlu0 12
      %6012 = vperm.xlu0 %6011, %v3833
      %v6013 = vpop.permute.xlu0 %6012
      %v6015 = vsub.f32 %v6013, %v5666
      %v6016 = vsub.f32 %v6013, %v5667
      %v6017 = vsub.f32 %v6013, %v5668
      %v6018 = vsub.f32 %v6013, %v5669
      %v6019 = vmul.f32 %v6015, %v6015
      %v6020 = vmul.f32 %v6016, %v6016
      %v6021 = vmul.f32 %v6017, %v6017
      %v6022 = vmul.f32 %v6018, %v6018
      %v6023 = vsub.f32 0.0, %v6019
      %v6024 = vsub.f32 0.0, %v6020
      %v6025 = vsub.f32 0.0, %v6021
      %v6026 = vsub.f32 0.0, %v6022
      %v6027 = vmul.f32 %v6023, 1.442695
      %v6028 = vpow.pop %v6027
      %v6029 = vmul.f32 %v6024, 1.442695
      %v6030 = vpow.pop %v6029
      %v6031 = vmul.f32 %v6025, 1.442695
      %v6032 = vpow.pop %v6031
      %v6033 = vmul.f32 %v6026, 1.442695
      %v6034 = vpow.pop %v6033
      %v6035 = vadd.f32 %v6007, %v6028
      %v6036 = vadd.f32 %v6008, %v6030
      %v6037 = vadd.f32 %v6009, %v6032
      %v6038 = vadd.f32 %v6010, %v6034
      %6039 = vset.pattern.permute.xlu0 13
      %6040 = vperm.xlu0 %6039, %v3833
      %v6041 = vpop.permute.xlu0 %6040
      %v6043 = vsub.f32 %v6041, %v5666
      %v6044 = vsub.f32 %v6041, %v5667
      %v6045 = vsub.f32 %v6041, %v5668
      %v6046 = vsub.f32 %v6041, %v5669
      %v6047 = vmul.f32 %v6043, %v6043
      %v6048 = vmul.f32 %v6044, %v6044
      %v6049 = vmul.f32 %v6045, %v6045
      %v6050 = vmul.f32 %v6046, %v6046
      %v6051 = vsub.f32 0.0, %v6047
      %v6052 = vsub.f32 0.0, %v6048
      %v6053 = vsub.f32 0.0, %v6049
      %v6054 = vsub.f32 0.0, %v6050
      %v6055 = vmul.f32 %v6051, 1.442695
      %v6056 = vpow.pop %v6055
      %v6057 = vmul.f32 %v6052, 1.442695
      %v6058 = vpow.pop %v6057
      %v6059 = vmul.f32 %v6053, 1.442695
      %v6060 = vpow.pop %v6059
      %v6061 = vmul.f32 %v6054, 1.442695
      %v6062 = vpow.pop %v6061
      %v6063 = vadd.f32 %v6035, %v6056
      %v6064 = vadd.f32 %v6036, %v6058
      %v6065 = vadd.f32 %v6037, %v6060
      %v6066 = vadd.f32 %v6038, %v6062
      %6067 = vset.pattern.permute.xlu0 14
      %6068 = vperm.xlu0 %6067, %v3833
      %v6069 = vpop.permute.xlu0 %6068
      %v6071 = vsub.f32 %v6069, %v5666
      %v6072 = vsub.f32 %v6069, %v5667
      %v6073 = vsub.f32 %v6069, %v5668
      %v6074 = vsub.f32 %v6069, %v5669
      %v6075 = vmul.f32 %v6071, %v6071
      %v6076 = vmul.f32 %v6072, %v6072
      %v6077 = vmul.f32 %v6073, %v6073
      %v6078 = vmul.f32 %v6074, %v6074
      %v6079 = vsub.f32 0.0, %v6075
      %v6080 = vsub.f32 0.0, %v6076
      %v6081 = vsub.f32 0.0, %v6077
      %v6082 = vsub.f32 0.0, %v6078
      %v6083 = vmul.f32 %v6079, 1.442695
      %v6084 = vpow.pop %v6083
      %v6085 = vmul.f32 %v6080, 1.442695
      %v6086 = vpow.pop %v6085
      %v6087 = vmul.f32 %v6081, 1.442695
      %v6088 = vpow.pop %v6087
      %v6089 = vmul.f32 %v6082, 1.442695
      %v6090 = vpow.pop %v6089
      %v6091 = vadd.f32 %v6063, %v6084
      %v6092 = vadd.f32 %v6064, %v6086
      %v6093 = vadd.f32 %v6065, %v6088
      %v6094 = vadd.f32 %v6066, %v6090
      %6095 = vset.pattern.permute.xlu0 15
      %6096 = vperm.xlu0 %6095, %v3833
      %v6097 = vpop.permute.xlu0 %6096
      %v6099 = vsub.f32 %v6097, %v5666
      %v6100 = vsub.f32 %v6097, %v5667
      %v6101 = vsub.f32 %v6097, %v5668
      %v6102 = vsub.f32 %v6097, %v5669
      %v6103 = vmul.f32 %v6099, %v6099
      %v6104 = vmul.f32 %v6100, %v6100
      %v6105 = vmul.f32 %v6101, %v6101
      %v6106 = vmul.f32 %v6102, %v6102
      %v6107 = vsub.f32 0.0, %v6103
      %v6108 = vsub.f32 0.0, %v6104
      %v6109 = vsub.f32 0.0, %v6105
      %v6110 = vsub.f32 0.0, %v6106
      %v6111 = vmul.f32 %v6107, 1.442695
      %v6112 = vpow.pop %v6111
      %v6113 = vmul.f32 %v6108, 1.442695
      %v6114 = vpow.pop %v6113
      %v6115 = vmul.f32 %v6109, 1.442695
      %v6116 = vpow.pop %v6115
      %v6117 = vmul.f32 %v6110, 1.442695
      %v6118 = vpow.pop %v6117
      %v6119 = vadd.f32 %v6091, %v6112
      %v6120 = vadd.f32 %v6092, %v6114
      %v6121 = vadd.f32 %v6093, %v6116
      %v6122 = vadd.f32 %v6094, %v6118
      %6123 = vset.pattern.permute.xlu0 16
      %6124 = vperm.xlu0 %6123, %v3833
      %v6125 = vpop.permute.xlu0 %6124
      %v6127 = vsub.f32 %v6125, %v5666
      %v6128 = vsub.f32 %v6125, %v5667
      %v6129 = vsub.f32 %v6125, %v5668
      %v6130 = vsub.f32 %v6125, %v5669
      %v6131 = vmul.f32 %v6127, %v6127
      %v6132 = vmul.f32 %v6128, %v6128
      %v6133 = vmul.f32 %v6129, %v6129
      %v6134 = vmul.f32 %v6130, %v6130
      %v6135 = vsub.f32 0.0, %v6131
      %v6136 = vsub.f32 0.0, %v6132
      %v6137 = vsub.f32 0.0, %v6133
      %v6138 = vsub.f32 0.0, %v6134
      %v6139 = vmul.f32 %v6135, 1.442695
      %v6140 = vpow.pop %v6139
      %v6141 = vmul.f32 %v6136, 1.442695
      %v6142 = vpow.pop %v6141
      %v6143 = vmul.f32 %v6137, 1.442695
      %v6144 = vpow.pop %v6143
      %v6145 = vmul.f32 %v6138, 1.442695
      %v6146 = vpow.pop %v6145
      %v6147 = vadd.f32 %v6119, %v6140
      %v6148 = vadd.f32 %v6120, %v6142
      %v6149 = vadd.f32 %v6121, %v6144
      %v6150 = vadd.f32 %v6122, %v6146
      %6151 = vset.pattern.permute.xlu0 17
      %6152 = vperm.xlu0 %6151, %v3833
      %v6153 = vpop.permute.xlu0 %6152
      %v6155 = vsub.f32 %v6153, %v5666
      %v6156 = vsub.f32 %v6153, %v5667
      %v6157 = vsub.f32 %v6153, %v5668
      %v6158 = vsub.f32 %v6153, %v5669
      %v6159 = vmul.f32 %v6155, %v6155
      %v6160 = vmul.f32 %v6156, %v6156
      %v6161 = vmul.f32 %v6157, %v6157
      %v6162 = vmul.f32 %v6158, %v6158
      %v6163 = vsub.f32 0.0, %v6159
      %v6164 = vsub.f32 0.0, %v6160
      %v6165 = vsub.f32 0.0, %v6161
      %v6166 = vsub.f32 0.0, %v6162
      %v6167 = vmul.f32 %v6163, 1.442695
      %v6168 = vpow.pop %v6167
      %v6169 = vmul.f32 %v6164, 1.442695
      %v6170 = vpow.pop %v6169
      %v6171 = vmul.f32 %v6165, 1.442695
      %v6172 = vpow.pop %v6171
      %v6173 = vmul.f32 %v6166, 1.442695
      %v6174 = vpow.pop %v6173
      %v6175 = vadd.f32 %v6147, %v6168
      %v6176 = vadd.f32 %v6148, %v6170
      %v6177 = vadd.f32 %v6149, %v6172
      %v6178 = vadd.f32 %v6150, %v6174
      %6179 = vset.pattern.permute.xlu0 18
      %6180 = vperm.xlu0 %6179, %v3833
      %v6181 = vpop.permute.xlu0 %6180
      %v6183 = vsub.f32 %v6181, %v5666
      %v6184 = vsub.f32 %v6181, %v5667
      %v6185 = vsub.f32 %v6181, %v5668
      %v6186 = vsub.f32 %v6181, %v5669
      %v6187 = vmul.f32 %v6183, %v6183
      %v6188 = vmul.f32 %v6184, %v6184
      %v6189 = vmul.f32 %v6185, %v6185
      %v6190 = vmul.f32 %v6186, %v6186
      %v6191 = vsub.f32 0.0, %v6187
      %v6192 = vsub.f32 0.0, %v6188
      %v6193 = vsub.f32 0.0, %v6189
      %v6194 = vsub.f32 0.0, %v6190
      %v6195 = vmul.f32 %v6191, 1.442695
      %v6196 = vpow.pop %v6195
      %v6197 = vmul.f32 %v6192, 1.442695
      %v6198 = vpow.pop %v6197
      %v6199 = vmul.f32 %v6193, 1.442695
      %v6200 = vpow.pop %v6199
      %v6201 = vmul.f32 %v6194, 1.442695
      %v6202 = vpow.pop %v6201
      %v6203 = vadd.f32 %v6175, %v6196
      %v6204 = vadd.f32 %v6176, %v6198
      %v6205 = vadd.f32 %v6177, %v6200
      %v6206 = vadd.f32 %v6178, %v6202
      %6207 = vset.pattern.permute.xlu0 19
      %6208 = vperm.xlu0 %6207, %v3833
      %v6209 = vpop.permute.xlu0 %6208
      %v6211 = vsub.f32 %v6209, %v5666
      %v6212 = vsub.f32 %v6209, %v5667
      %v6213 = vsub.f32 %v6209, %v5668
      %v6214 = vsub.f32 %v6209, %v5669
      %v6215 = vmul.f32 %v6211, %v6211
      %v6216 = vmul.f32 %v6212, %v6212
      %v6217 = vmul.f32 %v6213, %v6213
      %v6218 = vmul.f32 %v6214, %v6214
      %v6219 = vsub.f32 0.0, %v6215
      %v6220 = vsub.f32 0.0, %v6216
      %v6221 = vsub.f32 0.0, %v6217
      %v6222 = vsub.f32 0.0, %v6218
      %v6223 = vmul.f32 %v6219, 1.442695
      %v6224 = vpow.pop %v6223
      %v6225 = vmul.f32 %v6220, 1.442695
      %v6226 = vpow.pop %v6225
      %v6227 = vmul.f32 %v6221, 1.442695
      %v6228 = vpow.pop %v6227
      %v6229 = vmul.f32 %v6222, 1.442695
      %v6230 = vpow.pop %v6229
      %v6231 = vadd.f32 %v6203, %v6224
      %v6232 = vadd.f32 %v6204, %v6226
      %v6233 = vadd.f32 %v6205, %v6228
      %v6234 = vadd.f32 %v6206, %v6230
      %6235 = vset.pattern.permute.xlu0 20
      %6236 = vperm.xlu0 %6235, %v3833
      %v6237 = vpop.permute.xlu0 %6236
      %v6239 = vsub.f32 %v6237, %v5666
      %v6240 = vsub.f32 %v6237, %v5667
      %v6241 = vsub.f32 %v6237, %v5668
      %v6242 = vsub.f32 %v6237, %v5669
      %v6243 = vmul.f32 %v6239, %v6239
      %v6244 = vmul.f32 %v6240, %v6240
      %v6245 = vmul.f32 %v6241, %v6241
      %v6246 = vmul.f32 %v6242, %v6242
      %v6247 = vsub.f32 0.0, %v6243
      %v6248 = vsub.f32 0.0, %v6244
      %v6249 = vsub.f32 0.0, %v6245
      %v6250 = vsub.f32 0.0, %v6246
      %v6251 = vmul.f32 %v6247, 1.442695
      %v6252 = vpow.pop %v6251
      %v6253 = vmul.f32 %v6248, 1.442695
      %v6254 = vpow.pop %v6253
      %v6255 = vmul.f32 %v6249, 1.442695
      %v6256 = vpow.pop %v6255
      %v6257 = vmul.f32 %v6250, 1.442695
      %v6258 = vpow.pop %v6257
      %v6259 = vadd.f32 %v6231, %v6252
      %v6260 = vadd.f32 %v6232, %v6254
      %v6261 = vadd.f32 %v6233, %v6256
      %v6262 = vadd.f32 %v6234, %v6258
      %6263 = vset.pattern.permute.xlu0 21
      %6264 = vperm.xlu0 %6263, %v3833
      %v6265 = vpop.permute.xlu0 %6264
      %v6267 = vsub.f32 %v6265, %v5666
      %v6268 = vsub.f32 %v6265, %v5667
      %v6269 = vsub.f32 %v6265, %v5668
      %v6270 = vsub.f32 %v6265, %v5669
      %v6271 = vmul.f32 %v6267, %v6267
      %v6272 = vmul.f32 %v6268, %v6268
      %v6273 = vmul.f32 %v6269, %v6269
      %v6274 = vmul.f32 %v6270, %v6270
      %v6275 = vsub.f32 0.0, %v6271
      %v6276 = vsub.f32 0.0, %v6272
      %v6277 = vsub.f32 0.0, %v6273
      %v6278 = vsub.f32 0.0, %v6274
      %v6279 = vmul.f32 %v6275, 1.442695
      %v6280 = vpow.pop %v6279
      %v6281 = vmul.f32 %v6276, 1.442695
      %v6282 = vpow.pop %v6281
      %v6283 = vmul.f32 %v6277, 1.442695
      %v6284 = vpow.pop %v6283
      %v6285 = vmul.f32 %v6278, 1.442695
      %v6286 = vpow.pop %v6285
      %v6287 = vadd.f32 %v6259, %v6280
      %v6288 = vadd.f32 %v6260, %v6282
      %v6289 = vadd.f32 %v6261, %v6284
      %v6290 = vadd.f32 %v6262, %v6286
      %6291 = vset.pattern.permute.xlu0 22
      %6292 = vperm.xlu0 %6291, %v3833
      %v6293 = vpop.permute.xlu0 %6292
      %v6295 = vsub.f32 %v6293, %v5666
      %v6296 = vsub.f32 %v6293, %v5667
      %v6297 = vsub.f32 %v6293, %v5668
      %v6298 = vsub.f32 %v6293, %v5669
      %v6299 = vmul.f32 %v6295, %v6295
      %v6300 = vmul.f32 %v6296, %v6296
      %v6301 = vmul.f32 %v6297, %v6297
      %v6302 = vmul.f32 %v6298, %v6298
      %v6303 = vsub.f32 0.0, %v6299
      %v6304 = vsub.f32 0.0, %v6300
      %v6305 = vsub.f32 0.0, %v6301
      %v6306 = vsub.f32 0.0, %v6302
      %v6307 = vmul.f32 %v6303, 1.442695
      %v6308 = vpow.pop %v6307
      %v6309 = vmul.f32 %v6304, 1.442695
      %v6310 = vpow.pop %v6309
      %v6311 = vmul.f32 %v6305, 1.442695
      %v6312 = vpow.pop %v6311
      %v6313 = vmul.f32 %v6306, 1.442695
      %v6314 = vpow.pop %v6313
      %v6315 = vadd.f32 %v6287, %v6308
      %v6316 = vadd.f32 %v6288, %v6310
      %v6317 = vadd.f32 %v6289, %v6312
      %v6318 = vadd.f32 %v6290, %v6314
      %6319 = vset.pattern.permute.xlu0 23
      %6320 = vperm.xlu0 %6319, %v3833
      %v6321 = vpop.permute.xlu0 %6320
      %v6323 = vsub.f32 %v6321, %v5666
      %v6324 = vsub.f32 %v6321, %v5667
      %v6325 = vsub.f32 %v6321, %v5668
      %v6326 = vsub.f32 %v6321, %v5669
      %v6327 = vmul.f32 %v6323, %v6323
      %v6328 = vmul.f32 %v6324, %v6324
      %v6329 = vmul.f32 %v6325, %v6325
      %v6330 = vmul.f32 %v6326, %v6326
      %v6331 = vsub.f32 0.0, %v6327
      %v6332 = vsub.f32 0.0, %v6328
      %v6333 = vsub.f32 0.0, %v6329
      %v6334 = vsub.f32 0.0, %v6330
      %v6335 = vmul.f32 %v6331, 1.442695
      %v6336 = vpow.pop %v6335
      %v6337 = vmul.f32 %v6332, 1.442695
      %v6338 = vpow.pop %v6337
      %v6339 = vmul.f32 %v6333, 1.442695
      %v6340 = vpow.pop %v6339
      %v6341 = vmul.f32 %v6334, 1.442695
      %v6342 = vpow.pop %v6341
      %v6343 = vadd.f32 %v6315, %v6336
      %v6344 = vadd.f32 %v6316, %v6338
      %v6345 = vadd.f32 %v6317, %v6340
      %v6346 = vadd.f32 %v6318, %v6342
      %6347 = vset.pattern.permute.xlu0 24
      %6348 = vperm.xlu0 %6347, %v3833
      %v6349 = vpop.permute.xlu0 %6348
      %v6351 = vsub.f32 %v6349, %v5666
      %v6352 = vsub.f32 %v6349, %v5667
      %v6353 = vsub.f32 %v6349, %v5668
      %v6354 = vsub.f32 %v6349, %v5669
      %v6355 = vmul.f32 %v6351, %v6351
      %v6356 = vmul.f32 %v6352, %v6352
      %v6357 = vmul.f32 %v6353, %v6353
      %v6358 = vmul.f32 %v6354, %v6354
      %v6359 = vsub.f32 0.0, %v6355
      %v6360 = vsub.f32 0.0, %v6356
      %v6361 = vsub.f32 0.0, %v6357
      %v6362 = vsub.f32 0.0, %v6358
      %v6363 = vmul.f32 %v6359, 1.442695
      %v6364 = vpow.pop %v6363
      %v6365 = vmul.f32 %v6360, 1.442695
      %v6366 = vpow.pop %v6365
      %v6367 = vmul.f32 %v6361, 1.442695
      %v6368 = vpow.pop %v6367
      %v6369 = vmul.f32 %v6362, 1.442695
      %v6370 = vpow.pop %v6369
      %v6371 = vadd.f32 %v6343, %v6364
      %v6372 = vadd.f32 %v6344, %v6366
      %v6373 = vadd.f32 %v6345, %v6368
      %v6374 = vadd.f32 %v6346, %v6370
      %6375 = vset.pattern.permute.xlu0 25
      %6376 = vperm.xlu0 %6375, %v3833
      %v6377 = vpop.permute.xlu0 %6376
      %v6379 = vsub.f32 %v6377, %v5666
      %v6380 = vsub.f32 %v6377, %v5667
      %v6381 = vsub.f32 %v6377, %v5668
      %v6382 = vsub.f32 %v6377, %v5669
      %v6383 = vmul.f32 %v6379, %v6379
      %v6384 = vmul.f32 %v6380, %v6380
      %v6385 = vmul.f32 %v6381, %v6381
      %v6386 = vmul.f32 %v6382, %v6382
      %v6387 = vsub.f32 0.0, %v6383
      %v6388 = vsub.f32 0.0, %v6384
      %v6389 = vsub.f32 0.0, %v6385
      %v6390 = vsub.f32 0.0, %v6386
      %v6391 = vmul.f32 %v6387, 1.442695
      %v6392 = vpow.pop %v6391
      %v6393 = vmul.f32 %v6388, 1.442695
      %v6394 = vpow.pop %v6393
      %v6395 = vmul.f32 %v6389, 1.442695
      %v6396 = vpow.pop %v6395
      %v6397 = vmul.f32 %v6390, 1.442695
      %v6398 = vpow.pop %v6397
      %v6399 = vadd.f32 %v6371, %v6392
      %v6400 = vadd.f32 %v6372, %v6394
      %v6401 = vadd.f32 %v6373, %v6396
      %v6402 = vadd.f32 %v6374, %v6398
      %6403 = vset.pattern.permute.xlu0 26
      %6404 = vperm.xlu0 %6403, %v3833
      %v6405 = vpop.permute.xlu0 %6404
      %v6407 = vsub.f32 %v6405, %v5666
      %v6408 = vsub.f32 %v6405, %v5667
      %v6409 = vsub.f32 %v6405, %v5668
      %v6410 = vsub.f32 %v6405, %v5669
      %v6411 = vmul.f32 %v6407, %v6407
      %v6412 = vmul.f32 %v6408, %v6408
      %v6413 = vmul.f32 %v6409, %v6409
      %v6414 = vmul.f32 %v6410, %v6410
      %v6415 = vsub.f32 0.0, %v6411
      %v6416 = vsub.f32 0.0, %v6412
      %v6417 = vsub.f32 0.0, %v6413
      %v6418 = vsub.f32 0.0, %v6414
      %v6419 = vmul.f32 %v6415, 1.442695
      %v6420 = vpow.pop %v6419
      %v6421 = vmul.f32 %v6416, 1.442695
      %v6422 = vpow.pop %v6421
      %v6423 = vmul.f32 %v6417, 1.442695
      %v6424 = vpow.pop %v6423
      %v6425 = vmul.f32 %v6418, 1.442695
      %v6426 = vpow.pop %v6425
      %v6427 = vadd.f32 %v6399, %v6420
      %v6428 = vadd.f32 %v6400, %v6422
      %v6429 = vadd.f32 %v6401, %v6424
      %v6430 = vadd.f32 %v6402, %v6426
      %6431 = vset.pattern.permute.xlu0 27
      %6432 = vperm.xlu0 %6431, %v3833
      %v6433 = vpop.permute.xlu0 %6432
      %v6435 = vsub.f32 %v6433, %v5666
      %v6436 = vsub.f32 %v6433, %v5667
      %v6437 = vsub.f32 %v6433, %v5668
      %v6438 = vsub.f32 %v6433, %v5669
      %v6439 = vmul.f32 %v6435, %v6435
      %v6440 = vmul.f32 %v6436, %v6436
      %v6441 = vmul.f32 %v6437, %v6437
      %v6442 = vmul.f32 %v6438, %v6438
      %v6443 = vsub.f32 0.0, %v6439
      %v6444 = vsub.f32 0.0, %v6440
      %v6445 = vsub.f32 0.0, %v6441
      %v6446 = vsub.f32 0.0, %v6442
      %v6447 = vmul.f32 %v6443, 1.442695
      %v6448 = vpow.pop %v6447
      %v6449 = vmul.f32 %v6444, 1.442695
      %v6450 = vpow.pop %v6449
      %v6451 = vmul.f32 %v6445, 1.442695
      %v6452 = vpow.pop %v6451
      %v6453 = vmul.f32 %v6446, 1.442695
      %v6454 = vpow.pop %v6453
      %v6455 = vadd.f32 %v6427, %v6448
      %v6456 = vadd.f32 %v6428, %v6450
      %v6457 = vadd.f32 %v6429, %v6452
      %v6458 = vadd.f32 %v6430, %v6454
      %6459 = vset.pattern.permute.xlu0 28
      %6460 = vperm.xlu0 %6459, %v3833
      %v6461 = vpop.permute.xlu0 %6460
      %v6463 = vsub.f32 %v6461, %v5666
      %v6464 = vsub.f32 %v6461, %v5667
      %v6465 = vsub.f32 %v6461, %v5668
      %v6466 = vsub.f32 %v6461, %v5669
      %v6467 = vmul.f32 %v6463, %v6463
      %v6468 = vmul.f32 %v6464, %v6464
      %v6469 = vmul.f32 %v6465, %v6465
      %v6470 = vmul.f32 %v6466, %v6466
      %v6471 = vsub.f32 0.0, %v6467
      %v6472 = vsub.f32 0.0, %v6468
      %v6473 = vsub.f32 0.0, %v6469
      %v6474 = vsub.f32 0.0, %v6470
      %v6475 = vmul.f32 %v6471, 1.442695
      %v6476 = vpow.pop %v6475
      %v6477 = vmul.f32 %v6472, 1.442695
      %v6478 = vpow.pop %v6477
      %v6479 = vmul.f32 %v6473, 1.442695
      %v6480 = vpow.pop %v6479
      %v6481 = vmul.f32 %v6474, 1.442695
      %v6482 = vpow.pop %v6481
      %v6483 = vadd.f32 %v6455, %v6476
      %v6484 = vadd.f32 %v6456, %v6478
      %v6485 = vadd.f32 %v6457, %v6480
      %v6486 = vadd.f32 %v6458, %v6482
      %6487 = vset.pattern.permute.xlu0 29
      %6488 = vperm.xlu0 %6487, %v3833
      %v6489 = vpop.permute.xlu0 %6488
      %v6491 = vsub.f32 %v6489, %v5666
      %v6492 = vsub.f32 %v6489, %v5667
      %v6493 = vsub.f32 %v6489, %v5668
      %v6494 = vsub.f32 %v6489, %v5669
      %v6495 = vmul.f32 %v6491, %v6491
      %v6496 = vmul.f32 %v6492, %v6492
      %v6497 = vmul.f32 %v6493, %v6493
      %v6498 = vmul.f32 %v6494, %v6494
      %v6499 = vsub.f32 0.0, %v6495
      %v6500 = vsub.f32 0.0, %v6496
      %v6501 = vsub.f32 0.0, %v6497
      %v6502 = vsub.f32 0.0, %v6498
      %v6503 = vmul.f32 %v6499, 1.442695
      %v6504 = vpow.pop %v6503
      %v6505 = vmul.f32 %v6500, 1.442695
      %v6506 = vpow.pop %v6505
      %v6507 = vmul.f32 %v6501, 1.442695
      %v6508 = vpow.pop %v6507
      %v6509 = vmul.f32 %v6502, 1.442695
      %v6510 = vpow.pop %v6509
      %v6511 = vadd.f32 %v6483, %v6504
      %v6512 = vadd.f32 %v6484, %v6506
      %v6513 = vadd.f32 %v6485, %v6508
      %v6514 = vadd.f32 %v6486, %v6510
      %6515 = vset.pattern.permute.xlu0 30
      %6516 = vperm.xlu0 %6515, %v3833
      %v6517 = vpop.permute.xlu0 %6516
      %v6519 = vsub.f32 %v6517, %v5666
      %v6520 = vsub.f32 %v6517, %v5667
      %v6521 = vsub.f32 %v6517, %v5668
      %v6522 = vsub.f32 %v6517, %v5669
      %v6523 = vmul.f32 %v6519, %v6519
      %v6524 = vmul.f32 %v6520, %v6520
      %v6525 = vmul.f32 %v6521, %v6521
      %v6526 = vmul.f32 %v6522, %v6522
      %v6527 = vsub.f32 0.0, %v6523
      %v6528 = vsub.f32 0.0, %v6524
      %v6529 = vsub.f32 0.0, %v6525
      %v6530 = vsub.f32 0.0, %v6526
      %v6531 = vmul.f32 %v6527, 1.442695
      %v6532 = vpow.pop %v6531
      %v6533 = vmul.f32 %v6528, 1.442695
      %v6534 = vpow.pop %v6533
      %v6535 = vmul.f32 %v6529, 1.442695
      %v6536 = vpow.pop %v6535
      %v6537 = vmul.f32 %v6530, 1.442695
      %v6538 = vpow.pop %v6537
      %v6539 = vadd.f32 %v6511, %v6532
      %v6540 = vadd.f32 %v6512, %v6534
      %v6541 = vadd.f32 %v6513, %v6536
      %v6542 = vadd.f32 %v6514, %v6538
      %6543 = vset.pattern.permute.xlu0 31
      %6544 = vperm.xlu0 %6543, %v3833
      %v6545 = vpop.permute.xlu0 %6544
      %v6547 = vsub.f32 %v6545, %v5666
      %v6548 = vsub.f32 %v6545, %v5667
      %v6549 = vsub.f32 %v6545, %v5668
      %v6550 = vsub.f32 %v6545, %v5669
      %v6551 = vmul.f32 %v6547, %v6547
      %v6552 = vmul.f32 %v6548, %v6548
      %v6553 = vmul.f32 %v6549, %v6549
      %v6554 = vmul.f32 %v6550, %v6550
      %v6555 = vsub.f32 0.0, %v6551
      %v6556 = vsub.f32 0.0, %v6552
      %v6557 = vsub.f32 0.0, %v6553
      %v6558 = vsub.f32 0.0, %v6554
      %v6559 = vmul.f32 %v6555, 1.442695
      %v6560 = vpow.pop %v6559
      %v6561 = vmul.f32 %v6556, 1.442695
      %v6562 = vpow.pop %v6561
      %v6563 = vmul.f32 %v6557, 1.442695
      %v6564 = vpow.pop %v6563
      %v6565 = vmul.f32 %v6558, 1.442695
      %v6566 = vpow.pop %v6565
      %v6567 = vadd.f32 %v6539, %v6560
      %v6568 = vadd.f32 %v6540, %v6562
      %v6569 = vadd.f32 %v6541, %v6564
      %v6570 = vadd.f32 %v6542, %v6566
      %6571 = vset.pattern.permute.xlu0 32
      %6572 = vperm.xlu0 %6571, %v3833
      %v6573 = vpop.permute.xlu0 %6572
      %v6575 = vsub.f32 %v6573, %v5666
      %v6576 = vsub.f32 %v6573, %v5667
      %v6577 = vsub.f32 %v6573, %v5668
      %v6578 = vsub.f32 %v6573, %v5669
      %v6579 = vmul.f32 %v6575, %v6575
      %v6580 = vmul.f32 %v6576, %v6576
      %v6581 = vmul.f32 %v6577, %v6577
      %v6582 = vmul.f32 %v6578, %v6578
      %v6583 = vsub.f32 0.0, %v6579
      %v6584 = vsub.f32 0.0, %v6580
      %v6585 = vsub.f32 0.0, %v6581
      %v6586 = vsub.f32 0.0, %v6582
      %v6587 = vmul.f32 %v6583, 1.442695
      %v6588 = vpow.pop %v6587
      %v6589 = vmul.f32 %v6584, 1.442695
      %v6590 = vpow.pop %v6589
      %v6591 = vmul.f32 %v6585, 1.442695
      %v6592 = vpow.pop %v6591
      %v6593 = vmul.f32 %v6586, 1.442695
      %v6594 = vpow.pop %v6593
      %v6595 = vadd.f32 %v6567, %v6588
      %v6596 = vadd.f32 %v6568, %v6590
      %v6597 = vadd.f32 %v6569, %v6592
      %v6598 = vadd.f32 %v6570, %v6594
      %6599 = vset.pattern.permute.xlu0 33
      %6600 = vperm.xlu0 %6599, %v3833
      %v6601 = vpop.permute.xlu0 %6600
      %v6603 = vsub.f32 %v6601, %v5666
      %v6604 = vsub.f32 %v6601, %v5667
      %v6605 = vsub.f32 %v6601, %v5668
      %v6606 = vsub.f32 %v6601, %v5669
      %v6607 = vmul.f32 %v6603, %v6603
      %v6608 = vmul.f32 %v6604, %v6604
      %v6609 = vmul.f32 %v6605, %v6605
      %v6610 = vmul.f32 %v6606, %v6606
      %v6611 = vsub.f32 0.0, %v6607
      %v6612 = vsub.f32 0.0, %v6608
      %v6613 = vsub.f32 0.0, %v6609
      %v6614 = vsub.f32 0.0, %v6610
      %v6615 = vmul.f32 %v6611, 1.442695
      %v6616 = vpow.pop %v6615
      %v6617 = vmul.f32 %v6612, 1.442695
      %v6618 = vpow.pop %v6617
      %v6619 = vmul.f32 %v6613, 1.442695
      %v6620 = vpow.pop %v6619
      %v6621 = vmul.f32 %v6614, 1.442695
      %v6622 = vpow.pop %v6621
      %v6623 = vadd.f32 %v6595, %v6616
      %v6624 = vadd.f32 %v6596, %v6618
      %v6625 = vadd.f32 %v6597, %v6620
      %v6626 = vadd.f32 %v6598, %v6622
      %6627 = vset.pattern.permute.xlu0 34
      %6628 = vperm.xlu0 %6627, %v3833
      %v6629 = vpop.permute.xlu0 %6628
      %v6631 = vsub.f32 %v6629, %v5666
      %v6632 = vsub.f32 %v6629, %v5667
      %v6633 = vsub.f32 %v6629, %v5668
      %v6634 = vsub.f32 %v6629, %v5669
      %v6635 = vmul.f32 %v6631, %v6631
      %v6636 = vmul.f32 %v6632, %v6632
      %v6637 = vmul.f32 %v6633, %v6633
      %v6638 = vmul.f32 %v6634, %v6634
      %v6639 = vsub.f32 0.0, %v6635
      %v6640 = vsub.f32 0.0, %v6636
      %v6641 = vsub.f32 0.0, %v6637
      %v6642 = vsub.f32 0.0, %v6638
      %v6643 = vmul.f32 %v6639, 1.442695
      %v6644 = vpow.pop %v6643
      %v6645 = vmul.f32 %v6640, 1.442695
      %v6646 = vpow.pop %v6645
      %v6647 = vmul.f32 %v6641, 1.442695
      %v6648 = vpow.pop %v6647
      %v6649 = vmul.f32 %v6642, 1.442695
      %v6650 = vpow.pop %v6649
      %v6651 = vadd.f32 %v6623, %v6644
      %v6652 = vadd.f32 %v6624, %v6646
      %v6653 = vadd.f32 %v6625, %v6648
      %v6654 = vadd.f32 %v6626, %v6650
      %6655 = vset.pattern.permute.xlu0 35
      %6656 = vperm.xlu0 %6655, %v3833
      %v6657 = vpop.permute.xlu0 %6656
      %v6659 = vsub.f32 %v6657, %v5666
      %v6660 = vsub.f32 %v6657, %v5667
      %v6661 = vsub.f32 %v6657, %v5668
      %v6662 = vsub.f32 %v6657, %v5669
      %v6663 = vmul.f32 %v6659, %v6659
      %v6664 = vmul.f32 %v6660, %v6660
      %v6665 = vmul.f32 %v6661, %v6661
      %v6666 = vmul.f32 %v6662, %v6662
      %v6667 = vsub.f32 0.0, %v6663
      %v6668 = vsub.f32 0.0, %v6664
      %v6669 = vsub.f32 0.0, %v6665
      %v6670 = vsub.f32 0.0, %v6666
      %v6671 = vmul.f32 %v6667, 1.442695
      %v6672 = vpow.pop %v6671
      %v6673 = vmul.f32 %v6668, 1.442695
      %v6674 = vpow.pop %v6673
      %v6675 = vmul.f32 %v6669, 1.442695
      %v6676 = vpow.pop %v6675
      %v6677 = vmul.f32 %v6670, 1.442695
      %v6678 = vpow.pop %v6677
      %v6679 = vadd.f32 %v6651, %v6672
      %v6680 = vadd.f32 %v6652, %v6674
      %v6681 = vadd.f32 %v6653, %v6676
      %v6682 = vadd.f32 %v6654, %v6678
      %6683 = vset.pattern.permute.xlu0 36
      %6684 = vperm.xlu0 %6683, %v3833
      %v6685 = vpop.permute.xlu0 %6684
      %v6687 = vsub.f32 %v6685, %v5666
      %v6688 = vsub.f32 %v6685, %v5667
      %v6689 = vsub.f32 %v6685, %v5668
      %v6690 = vsub.f32 %v6685, %v5669
      %v6691 = vmul.f32 %v6687, %v6687
      %v6692 = vmul.f32 %v6688, %v6688
      %v6693 = vmul.f32 %v6689, %v6689
      %v6694 = vmul.f32 %v6690, %v6690
      %v6695 = vsub.f32 0.0, %v6691
      %v6696 = vsub.f32 0.0, %v6692
      %v6697 = vsub.f32 0.0, %v6693
      %v6698 = vsub.f32 0.0, %v6694
      %v6699 = vmul.f32 %v6695, 1.442695
      %v6700 = vpow.pop %v6699
      %v6701 = vmul.f32 %v6696, 1.442695
      %v6702 = vpow.pop %v6701
      %v6703 = vmul.f32 %v6697, 1.442695
      %v6704 = vpow.pop %v6703
      %v6705 = vmul.f32 %v6698, 1.442695
      %v6706 = vpow.pop %v6705
      %v6707 = vadd.f32 %v6679, %v6700
      %v6708 = vadd.f32 %v6680, %v6702
      %v6709 = vadd.f32 %v6681, %v6704
      %v6710 = vadd.f32 %v6682, %v6706
      %6711 = vset.pattern.permute.xlu0 37
      %6712 = vperm.xlu0 %6711, %v3833
      %v6713 = vpop.permute.xlu0 %6712
      %v6715 = vsub.f32 %v6713, %v5666
      %v6716 = vsub.f32 %v6713, %v5667
      %v6717 = vsub.f32 %v6713, %v5668
      %v6718 = vsub.f32 %v6713, %v5669
      %v6719 = vmul.f32 %v6715, %v6715
      %v6720 = vmul.f32 %v6716, %v6716
      %v6721 = vmul.f32 %v6717, %v6717
      %v6722 = vmul.f32 %v6718, %v6718
      %v6723 = vsub.f32 0.0, %v6719
      %v6724 = vsub.f32 0.0, %v6720
      %v6725 = vsub.f32 0.0, %v6721
      %v6726 = vsub.f32 0.0, %v6722
      %v6727 = vmul.f32 %v6723, 1.442695
      %v6728 = vpow.pop %v6727
      %v6729 = vmul.f32 %v6724, 1.442695
      %v6730 = vpow.pop %v6729
      %v6731 = vmul.f32 %v6725, 1.442695
      %v6732 = vpow.pop %v6731
      %v6733 = vmul.f32 %v6726, 1.442695
      %v6734 = vpow.pop %v6733
      %v6735 = vadd.f32 %v6707, %v6728
      %v6736 = vadd.f32 %v6708, %v6730
      %v6737 = vadd.f32 %v6709, %v6732
      %v6738 = vadd.f32 %v6710, %v6734
      %6739 = vset.pattern.permute.xlu0 38
      %6740 = vperm.xlu0 %6739, %v3833
      %v6741 = vpop.permute.xlu0 %6740
      %v6743 = vsub.f32 %v6741, %v5666
      %v6744 = vsub.f32 %v6741, %v5667
      %v6745 = vsub.f32 %v6741, %v5668
      %v6746 = vsub.f32 %v6741, %v5669
      %v6747 = vmul.f32 %v6743, %v6743
      %v6748 = vmul.f32 %v6744, %v6744
      %v6749 = vmul.f32 %v6745, %v6745
      %v6750 = vmul.f32 %v6746, %v6746
      %v6751 = vsub.f32 0.0, %v6747
      %v6752 = vsub.f32 0.0, %v6748
      %v6753 = vsub.f32 0.0, %v6749
      %v6754 = vsub.f32 0.0, %v6750
      %v6755 = vmul.f32 %v6751, 1.442695
      %v6756 = vpow.pop %v6755
      %v6757 = vmul.f32 %v6752, 1.442695
      %v6758 = vpow.pop %v6757
      %v6759 = vmul.f32 %v6753, 1.442695
      %v6760 = vpow.pop %v6759
      %v6761 = vmul.f32 %v6754, 1.442695
      %v6762 = vpow.pop %v6761
      %v6763 = vadd.f32 %v6735, %v6756
      %v6764 = vadd.f32 %v6736, %v6758
      %v6765 = vadd.f32 %v6737, %v6760
      %v6766 = vadd.f32 %v6738, %v6762
      %6767 = vset.pattern.permute.xlu0 39
      %6768 = vperm.xlu0 %6767, %v3833
      %v6769 = vpop.permute.xlu0 %6768
      %v6771 = vsub.f32 %v6769, %v5666
      %v6772 = vsub.f32 %v6769, %v5667
      %v6773 = vsub.f32 %v6769, %v5668
      %v6774 = vsub.f32 %v6769, %v5669
      %v6775 = vmul.f32 %v6771, %v6771
      %v6776 = vmul.f32 %v6772, %v6772
      %v6777 = vmul.f32 %v6773, %v6773
      %v6778 = vmul.f32 %v6774, %v6774
      %v6779 = vsub.f32 0.0, %v6775
      %v6780 = vsub.f32 0.0, %v6776
      %v6781 = vsub.f32 0.0, %v6777
      %v6782 = vsub.f32 0.0, %v6778
      %v6783 = vmul.f32 %v6779, 1.442695
      %v6784 = vpow.pop %v6783
      %v6785 = vmul.f32 %v6780, 1.442695
      %v6786 = vpow.pop %v6785
      %v6787 = vmul.f32 %v6781, 1.442695
      %v6788 = vpow.pop %v6787
      %v6789 = vmul.f32 %v6782, 1.442695
      %v6790 = vpow.pop %v6789
      %v6791 = vadd.f32 %v6763, %v6784
      %v6792 = vadd.f32 %v6764, %v6786
      %v6793 = vadd.f32 %v6765, %v6788
      %v6794 = vadd.f32 %v6766, %v6790
      %6795 = vset.pattern.permute.xlu0 40
      %6796 = vperm.xlu0 %6795, %v3833
      %v6797 = vpop.permute.xlu0 %6796
      %v6799 = vsub.f32 %v6797, %v5666
      %v6800 = vsub.f32 %v6797, %v5667
      %v6801 = vsub.f32 %v6797, %v5668
      %v6802 = vsub.f32 %v6797, %v5669
      %v6803 = vmul.f32 %v6799, %v6799
      %v6804 = vmul.f32 %v6800, %v6800
      %v6805 = vmul.f32 %v6801, %v6801
      %v6806 = vmul.f32 %v6802, %v6802
      %v6807 = vsub.f32 0.0, %v6803
      %v6808 = vsub.f32 0.0, %v6804
      %v6809 = vsub.f32 0.0, %v6805
      %v6810 = vsub.f32 0.0, %v6806
      %v6811 = vmul.f32 %v6807, 1.442695
      %v6812 = vpow.pop %v6811
      %v6813 = vmul.f32 %v6808, 1.442695
      %v6814 = vpow.pop %v6813
      %v6815 = vmul.f32 %v6809, 1.442695
      %v6816 = vpow.pop %v6815
      %v6817 = vmul.f32 %v6810, 1.442695
      %v6818 = vpow.pop %v6817
      %v6819 = vadd.f32 %v6791, %v6812
      %v6820 = vadd.f32 %v6792, %v6814
      %v6821 = vadd.f32 %v6793, %v6816
      %v6822 = vadd.f32 %v6794, %v6818
      %6823 = vset.pattern.permute.xlu0 41
      %6824 = vperm.xlu0 %6823, %v3833
      %v6825 = vpop.permute.xlu0 %6824
      %v6827 = vsub.f32 %v6825, %v5666
      %v6828 = vsub.f32 %v6825, %v5667
      %v6829 = vsub.f32 %v6825, %v5668
      %v6830 = vsub.f32 %v6825, %v5669
      %v6831 = vmul.f32 %v6827, %v6827
      %v6832 = vmul.f32 %v6828, %v6828
      %v6833 = vmul.f32 %v6829, %v6829
      %v6834 = vmul.f32 %v6830, %v6830
      %v6835 = vsub.f32 0.0, %v6831
      %v6836 = vsub.f32 0.0, %v6832
      %v6837 = vsub.f32 0.0, %v6833
      %v6838 = vsub.f32 0.0, %v6834
      %v6839 = vmul.f32 %v6835, 1.442695
      %v6840 = vpow.pop %v6839
      %v6841 = vmul.f32 %v6836, 1.442695
      %v6842 = vpow.pop %v6841
      %v6843 = vmul.f32 %v6837, 1.442695
      %v6844 = vpow.pop %v6843
      %v6845 = vmul.f32 %v6838, 1.442695
      %v6846 = vpow.pop %v6845
      %v6847 = vadd.f32 %v6819, %v6840
      %v6848 = vadd.f32 %v6820, %v6842
      %v6849 = vadd.f32 %v6821, %v6844
      %v6850 = vadd.f32 %v6822, %v6846
      %6851 = vset.pattern.permute.xlu0 42
      %6852 = vperm.xlu0 %6851, %v3833
      %v6853 = vpop.permute.xlu0 %6852
      %v6855 = vsub.f32 %v6853, %v5666
      %v6856 = vsub.f32 %v6853, %v5667
      %v6857 = vsub.f32 %v6853, %v5668
      %v6858 = vsub.f32 %v6853, %v5669
      %v6859 = vmul.f32 %v6855, %v6855
      %v6860 = vmul.f32 %v6856, %v6856
      %v6861 = vmul.f32 %v6857, %v6857
      %v6862 = vmul.f32 %v6858, %v6858
      %v6863 = vsub.f32 0.0, %v6859
      %v6864 = vsub.f32 0.0, %v6860
      %v6865 = vsub.f32 0.0, %v6861
      %v6866 = vsub.f32 0.0, %v6862
      %v6867 = vmul.f32 %v6863, 1.442695
      %v6868 = vpow.pop %v6867
      %v6869 = vmul.f32 %v6864, 1.442695
      %v6870 = vpow.pop %v6869
      %v6871 = vmul.f32 %v6865, 1.442695
      %v6872 = vpow.pop %v6871
      %v6873 = vmul.f32 %v6866, 1.442695
      %v6874 = vpow.pop %v6873
      %v6875 = vadd.f32 %v6847, %v6868
      %v6876 = vadd.f32 %v6848, %v6870
      %v6877 = vadd.f32 %v6849, %v6872
      %v6878 = vadd.f32 %v6850, %v6874
      %6879 = vset.pattern.permute.xlu0 43
      %6880 = vperm.xlu0 %6879, %v3833
      %v6881 = vpop.permute.xlu0 %6880
      %v6883 = vsub.f32 %v6881, %v5666
      %v6884 = vsub.f32 %v6881, %v5667
      %v6885 = vsub.f32 %v6881, %v5668
      %v6886 = vsub.f32 %v6881, %v5669
      %v6887 = vmul.f32 %v6883, %v6883
      %v6888 = vmul.f32 %v6884, %v6884
      %v6889 = vmul.f32 %v6885, %v6885
      %v6890 = vmul.f32 %v6886, %v6886
      %v6891 = vsub.f32 0.0, %v6887
      %v6892 = vsub.f32 0.0, %v6888
      %v6893 = vsub.f32 0.0, %v6889
      %v6894 = vsub.f32 0.0, %v6890
      %v6895 = vmul.f32 %v6891, 1.442695
      %v6896 = vpow.pop %v6895
      %v6897 = vmul.f32 %v6892, 1.442695
      %v6898 = vpow.pop %v6897
      %v6899 = vmul.f32 %v6893, 1.442695
      %v6900 = vpow.pop %v6899
      %v6901 = vmul.f32 %v6894, 1.442695
      %v6902 = vpow.pop %v6901
      %v6903 = vadd.f32 %v6875, %v6896
      %v6904 = vadd.f32 %v6876, %v6898
      %v6905 = vadd.f32 %v6877, %v6900
      %v6906 = vadd.f32 %v6878, %v6902
      %6907 = vset.pattern.permute.xlu0 44
      %6908 = vperm.xlu0 %6907, %v3833
      %v6909 = vpop.permute.xlu0 %6908
      %v6911 = vsub.f32 %v6909, %v5666
      %v6912 = vsub.f32 %v6909, %v5667
      %v6913 = vsub.f32 %v6909, %v5668
      %v6914 = vsub.f32 %v6909, %v5669
      %v6915 = vmul.f32 %v6911, %v6911
      %v6916 = vmul.f32 %v6912, %v6912
      %v6917 = vmul.f32 %v6913, %v6913
      %v6918 = vmul.f32 %v6914, %v6914
      %v6919 = vsub.f32 0.0, %v6915
      %v6920 = vsub.f32 0.0, %v6916
      %v6921 = vsub.f32 0.0, %v6917
      %v6922 = vsub.f32 0.0, %v6918
      %v6923 = vmul.f32 %v6919, 1.442695
      %v6924 = vpow.pop %v6923
      %v6925 = vmul.f32 %v6920, 1.442695
      %v6926 = vpow.pop %v6925
      %v6927 = vmul.f32 %v6921, 1.442695
      %v6928 = vpow.pop %v6927
      %v6929 = vmul.f32 %v6922, 1.442695
      %v6930 = vpow.pop %v6929
      %v6931 = vadd.f32 %v6903, %v6924
      %v6932 = vadd.f32 %v6904, %v6926
      %v6933 = vadd.f32 %v6905, %v6928
      %v6934 = vadd.f32 %v6906, %v6930
      %6935 = vset.pattern.permute.xlu0 45
      %6936 = vperm.xlu0 %6935, %v3833
      %v6937 = vpop.permute.xlu0 %6936
      %v6939 = vsub.f32 %v6937, %v5666
      %v6940 = vsub.f32 %v6937, %v5667
      %v6941 = vsub.f32 %v6937, %v5668
      %v6942 = vsub.f32 %v6937, %v5669
      %v6943 = vmul.f32 %v6939, %v6939
      %v6944 = vmul.f32 %v6940, %v6940
      %v6945 = vmul.f32 %v6941, %v6941
      %v6946 = vmul.f32 %v6942, %v6942
      %v6947 = vsub.f32 0.0, %v6943
      %v6948 = vsub.f32 0.0, %v6944
      %v6949 = vsub.f32 0.0, %v6945
      %v6950 = vsub.f32 0.0, %v6946
      %v6951 = vmul.f32 %v6947, 1.442695
      %v6952 = vpow.pop %v6951
      %v6953 = vmul.f32 %v6948, 1.442695
      %v6954 = vpow.pop %v6953
      %v6955 = vmul.f32 %v6949, 1.442695
      %v6956 = vpow.pop %v6955
      %v6957 = vmul.f32 %v6950, 1.442695
      %v6958 = vpow.pop %v6957
      %v6959 = vadd.f32 %v6931, %v6952
      %v6960 = vadd.f32 %v6932, %v6954
      %v6961 = vadd.f32 %v6933, %v6956
      %v6962 = vadd.f32 %v6934, %v6958
      %6963 = vset.pattern.permute.xlu0 46
      %6964 = vperm.xlu0 %6963, %v3833
      %v6965 = vpop.permute.xlu0 %6964
      %v6967 = vsub.f32 %v6965, %v5666
      %v6968 = vsub.f32 %v6965, %v5667
      %v6969 = vsub.f32 %v6965, %v5668
      %v6970 = vsub.f32 %v6965, %v5669
      %v6971 = vmul.f32 %v6967, %v6967
      %v6972 = vmul.f32 %v6968, %v6968
      %v6973 = vmul.f32 %v6969, %v6969
      %v6974 = vmul.f32 %v6970, %v6970
      %v6975 = vsub.f32 0.0, %v6971
      %v6976 = vsub.f32 0.0, %v6972
      %v6977 = vsub.f32 0.0, %v6973
      %v6978 = vsub.f32 0.0, %v6974
      %v6979 = vmul.f32 %v6975, 1.442695
      %v6980 = vpow.pop %v6979
      %v6981 = vmul.f32 %v6976, 1.442695
      %v6982 = vpow.pop %v6981
      %v6983 = vmul.f32 %v6977, 1.442695
      %v6984 = vpow.pop %v6983
      %v6985 = vmul.f32 %v6978, 1.442695
      %v6986 = vpow.pop %v6985
      %v6987 = vadd.f32 %v6959, %v6980
      %v6988 = vadd.f32 %v6960, %v6982
      %v6989 = vadd.f32 %v6961, %v6984
      %v6990 = vadd.f32 %v6962, %v6986
      %6991 = vset.pattern.permute.xlu0 47
      %6992 = vperm.xlu0 %6991, %v3833
      %v6993 = vpop.permute.xlu0 %6992
      %v6995 = vsub.f32 %v6993, %v5666
      %v6996 = vsub.f32 %v6993, %v5667
      %v6997 = vsub.f32 %v6993, %v5668
      %v6998 = vsub.f32 %v6993, %v5669
      %v6999 = vmul.f32 %v6995, %v6995
      %v7000 = vmul.f32 %v6996, %v6996
      %v7001 = vmul.f32 %v6997, %v6997
      %v7002 = vmul.f32 %v6998, %v6998
      %v7003 = vsub.f32 0.0, %v6999
      %v7004 = vsub.f32 0.0, %v7000
      %v7005 = vsub.f32 0.0, %v7001
      %v7006 = vsub.f32 0.0, %v7002
      %v7007 = vmul.f32 %v7003, 1.442695
      %v7008 = vpow.pop %v7007
      %v7009 = vmul.f32 %v7004, 1.442695
      %v7010 = vpow.pop %v7009
      %v7011 = vmul.f32 %v7005, 1.442695
      %v7012 = vpow.pop %v7011
      %v7013 = vmul.f32 %v7006, 1.442695
      %v7014 = vpow.pop %v7013
      %v7015 = vadd.f32 %v6987, %v7008
      %v7016 = vadd.f32 %v6988, %v7010
      %v7017 = vadd.f32 %v6989, %v7012
      %v7018 = vadd.f32 %v6990, %v7014
      %7019 = vset.pattern.permute.xlu0 48
      %7020 = vperm.xlu0 %7019, %v3833
      %v7021 = vpop.permute.xlu0 %7020
      %v7023 = vsub.f32 %v7021, %v5666
      %v7024 = vsub.f32 %v7021, %v5667
      %v7025 = vsub.f32 %v7021, %v5668
      %v7026 = vsub.f32 %v7021, %v5669
      %v7027 = vmul.f32 %v7023, %v7023
      %v7028 = vmul.f32 %v7024, %v7024
      %v7029 = vmul.f32 %v7025, %v7025
      %v7030 = vmul.f32 %v7026, %v7026
      %v7031 = vsub.f32 0.0, %v7027
      %v7032 = vsub.f32 0.0, %v7028
      %v7033 = vsub.f32 0.0, %v7029
      %v7034 = vsub.f32 0.0, %v7030
      %v7035 = vmul.f32 %v7031, 1.442695
      %v7036 = vpow.pop %v7035
      %v7037 = vmul.f32 %v7032, 1.442695
      %v7038 = vpow.pop %v7037
      %v7039 = vmul.f32 %v7033, 1.442695
      %v7040 = vpow.pop %v7039
      %v7041 = vmul.f32 %v7034, 1.442695
      %v7042 = vpow.pop %v7041
      %v7043 = vadd.f32 %v7015, %v7036
      %v7044 = vadd.f32 %v7016, %v7038
      %v7045 = vadd.f32 %v7017, %v7040
      %v7046 = vadd.f32 %v7018, %v7042
      %7047 = vset.pattern.permute.xlu0 49
      %7048 = vperm.xlu0 %7047, %v3833
      %v7049 = vpop.permute.xlu0 %7048
      %v7051 = vsub.f32 %v7049, %v5666
      %v7052 = vsub.f32 %v7049, %v5667
      %v7053 = vsub.f32 %v7049, %v5668
      %v7054 = vsub.f32 %v7049, %v5669
      %v7055 = vmul.f32 %v7051, %v7051
      %v7056 = vmul.f32 %v7052, %v7052
      %v7057 = vmul.f32 %v7053, %v7053
      %v7058 = vmul.f32 %v7054, %v7054
      %v7059 = vsub.f32 0.0, %v7055
      %v7060 = vsub.f32 0.0, %v7056
      %v7061 = vsub.f32 0.0, %v7057
      %v7062 = vsub.f32 0.0, %v7058
      %v7063 = vmul.f32 %v7059, 1.442695
      %v7064 = vpow.pop %v7063
      %v7065 = vmul.f32 %v7060, 1.442695
      %v7066 = vpow.pop %v7065
      %v7067 = vmul.f32 %v7061, 1.442695
      %v7068 = vpow.pop %v7067
      %v7069 = vmul.f32 %v7062, 1.442695
      %v7070 = vpow.pop %v7069
      %v7071 = vadd.f32 %v7043, %v7064
      %v7072 = vadd.f32 %v7044, %v7066
      %v7073 = vadd.f32 %v7045, %v7068
      %v7074 = vadd.f32 %v7046, %v7070
      %7075 = vset.pattern.permute.xlu0 50
      %7076 = vperm.xlu0 %7075, %v3833
      %v7077 = vpop.permute.xlu0 %7076
      %v7079 = vsub.f32 %v7077, %v5666
      %v7080 = vsub.f32 %v7077, %v5667
      %v7081 = vsub.f32 %v7077, %v5668
      %v7082 = vsub.f32 %v7077, %v5669
      %v7083 = vmul.f32 %v7079, %v7079
      %v7084 = vmul.f32 %v7080, %v7080
      %v7085 = vmul.f32 %v7081, %v7081
      %v7086 = vmul.f32 %v7082, %v7082
      %v7087 = vsub.f32 0.0, %v7083
      %v7088 = vsub.f32 0.0, %v7084
      %v7089 = vsub.f32 0.0, %v7085
      %v7090 = vsub.f32 0.0, %v7086
      %v7091 = vmul.f32 %v7087, 1.442695
      %v7092 = vpow.pop %v7091
      %v7093 = vmul.f32 %v7088, 1.442695
      %v7094 = vpow.pop %v7093
      %v7095 = vmul.f32 %v7089, 1.442695
      %v7096 = vpow.pop %v7095
      %v7097 = vmul.f32 %v7090, 1.442695
      %v7098 = vpow.pop %v7097
      %v7099 = vadd.f32 %v7071, %v7092
      %v7100 = vadd.f32 %v7072, %v7094
      %v7101 = vadd.f32 %v7073, %v7096
      %v7102 = vadd.f32 %v7074, %v7098
      %7103 = vset.pattern.permute.xlu0 51
      %7104 = vperm.xlu0 %7103, %v3833
      %v7105 = vpop.permute.xlu0 %7104
      %v7107 = vsub.f32 %v7105, %v5666
      %v7108 = vsub.f32 %v7105, %v5667
      %v7109 = vsub.f32 %v7105, %v5668
      %v7110 = vsub.f32 %v7105, %v5669
      %v7111 = vmul.f32 %v7107, %v7107
      %v7112 = vmul.f32 %v7108, %v7108
      %v7113 = vmul.f32 %v7109, %v7109
      %v7114 = vmul.f32 %v7110, %v7110
      %v7115 = vsub.f32 0.0, %v7111
      %v7116 = vsub.f32 0.0, %v7112
      %v7117 = vsub.f32 0.0, %v7113
      %v7118 = vsub.f32 0.0, %v7114
      %v7119 = vmul.f32 %v7115, 1.442695
      %v7120 = vpow.pop %v7119
      %v7121 = vmul.f32 %v7116, 1.442695
      %v7122 = vpow.pop %v7121
      %v7123 = vmul.f32 %v7117, 1.442695
      %v7124 = vpow.pop %v7123
      %v7125 = vmul.f32 %v7118, 1.442695
      %v7126 = vpow.pop %v7125
      %v7127 = vadd.f32 %v7099, %v7120
      %v7128 = vadd.f32 %v7100, %v7122
      %v7129 = vadd.f32 %v7101, %v7124
      %v7130 = vadd.f32 %v7102, %v7126
      %7131 = vset.pattern.permute.xlu0 52
      %7132 = vperm.xlu0 %7131, %v3833
      %v7133 = vpop.permute.xlu0 %7132
      %v7135 = vsub.f32 %v7133, %v5666
      %v7136 = vsub.f32 %v7133, %v5667
      %v7137 = vsub.f32 %v7133, %v5668
      %v7138 = vsub.f32 %v7133, %v5669
      %v7139 = vmul.f32 %v7135, %v7135
      %v7140 = vmul.f32 %v7136, %v7136
      %v7141 = vmul.f32 %v7137, %v7137
      %v7142 = vmul.f32 %v7138, %v7138
      %v7143 = vsub.f32 0.0, %v7139
      %v7144 = vsub.f32 0.0, %v7140
      %v7145 = vsub.f32 0.0, %v7141
      %v7146 = vsub.f32 0.0, %v7142
      %v7147 = vmul.f32 %v7143, 1.442695
      %v7148 = vpow.pop %v7147
      %v7149 = vmul.f32 %v7144, 1.442695
      %v7150 = vpow.pop %v7149
      %v7151 = vmul.f32 %v7145, 1.442695
      %v7152 = vpow.pop %v7151
      %v7153 = vmul.f32 %v7146, 1.442695
      %v7154 = vpow.pop %v7153
      %v7155 = vadd.f32 %v7127, %v7148
      %v7156 = vadd.f32 %v7128, %v7150
      %v7157 = vadd.f32 %v7129, %v7152
      %v7158 = vadd.f32 %v7130, %v7154
      %7159 = vset.pattern.permute.xlu0 53
      %7160 = vperm.xlu0 %7159, %v3833
      %v7161 = vpop.permute.xlu0 %7160
      %v7163 = vsub.f32 %v7161, %v5666
      %v7164 = vsub.f32 %v7161, %v5667
      %v7165 = vsub.f32 %v7161, %v5668
      %v7166 = vsub.f32 %v7161, %v5669
      %v7167 = vmul.f32 %v7163, %v7163
      %v7168 = vmul.f32 %v7164, %v7164
      %v7169 = vmul.f32 %v7165, %v7165
      %v7170 = vmul.f32 %v7166, %v7166
      %v7171 = vsub.f32 0.0, %v7167
      %v7172 = vsub.f32 0.0, %v7168
      %v7173 = vsub.f32 0.0, %v7169
      %v7174 = vsub.f32 0.0, %v7170
      %v7175 = vmul.f32 %v7171, 1.442695
      %v7176 = vpow.pop %v7175
      %v7177 = vmul.f32 %v7172, 1.442695
      %v7178 = vpow.pop %v7177
      %v7179 = vmul.f32 %v7173, 1.442695
      %v7180 = vpow.pop %v7179
      %v7181 = vmul.f32 %v7174, 1.442695
      %v7182 = vpow.pop %v7181
      %v7183 = vadd.f32 %v7155, %v7176
      %v7184 = vadd.f32 %v7156, %v7178
      %v7185 = vadd.f32 %v7157, %v7180
      %v7186 = vadd.f32 %v7158, %v7182
      %7187 = vset.pattern.permute.xlu0 54
      %7188 = vperm.xlu0 %7187, %v3833
      %v7189 = vpop.permute.xlu0 %7188
      %v7191 = vsub.f32 %v7189, %v5666
      %v7192 = vsub.f32 %v7189, %v5667
      %v7193 = vsub.f32 %v7189, %v5668
      %v7194 = vsub.f32 %v7189, %v5669
      %v7195 = vmul.f32 %v7191, %v7191
      %v7196 = vmul.f32 %v7192, %v7192
      %v7197 = vmul.f32 %v7193, %v7193
      %v7198 = vmul.f32 %v7194, %v7194
      %v7199 = vsub.f32 0.0, %v7195
      %v7200 = vsub.f32 0.0, %v7196
      %v7201 = vsub.f32 0.0, %v7197
      %v7202 = vsub.f32 0.0, %v7198
      %v7203 = vmul.f32 %v7199, 1.442695
      %v7204 = vpow.pop %v7203
      %v7205 = vmul.f32 %v7200, 1.442695
      %v7206 = vpow.pop %v7205
      %v7207 = vmul.f32 %v7201, 1.442695
      %v7208 = vpow.pop %v7207
      %v7209 = vmul.f32 %v7202, 1.442695
      %v7210 = vpow.pop %v7209
      %v7211 = vadd.f32 %v7183, %v7204
      %v7212 = vadd.f32 %v7184, %v7206
      %v7213 = vadd.f32 %v7185, %v7208
      %v7214 = vadd.f32 %v7186, %v7210
      %7215 = vset.pattern.permute.xlu0 55
      %7216 = vperm.xlu0 %7215, %v3833
      %v7217 = vpop.permute.xlu0 %7216
      %v7219 = vsub.f32 %v7217, %v5666
      %v7220 = vsub.f32 %v7217, %v5667
      %v7221 = vsub.f32 %v7217, %v5668
      %v7222 = vsub.f32 %v7217, %v5669
      %v7223 = vmul.f32 %v7219, %v7219
      %v7224 = vmul.f32 %v7220, %v7220
      %v7225 = vmul.f32 %v7221, %v7221
      %v7226 = vmul.f32 %v7222, %v7222
      %v7227 = vsub.f32 0.0, %v7223
      %v7228 = vsub.f32 0.0, %v7224
      %v7229 = vsub.f32 0.0, %v7225
      %v7230 = vsub.f32 0.0, %v7226
      %v7231 = vmul.f32 %v7227, 1.442695
      %v7232 = vpow.pop %v7231
      %v7233 = vmul.f32 %v7228, 1.442695
      %v7234 = vpow.pop %v7233
      %v7235 = vmul.f32 %v7229, 1.442695
      %v7236 = vpow.pop %v7235
      %v7237 = vmul.f32 %v7230, 1.442695
      %v7238 = vpow.pop %v7237
      %v7239 = vadd.f32 %v7211, %v7232
      %v7240 = vadd.f32 %v7212, %v7234
      %v7241 = vadd.f32 %v7213, %v7236
      %v7242 = vadd.f32 %v7214, %v7238
      %7243 = vset.pattern.permute.xlu0 56
      %7244 = vperm.xlu0 %7243, %v3833
      %v7245 = vpop.permute.xlu0 %7244
      %v7247 = vsub.f32 %v7245, %v5666
      %v7248 = vsub.f32 %v7245, %v5667
      %v7249 = vsub.f32 %v7245, %v5668
      %v7250 = vsub.f32 %v7245, %v5669
      %v7251 = vmul.f32 %v7247, %v7247
      %v7252 = vmul.f32 %v7248, %v7248
      %v7253 = vmul.f32 %v7249, %v7249
      %v7254 = vmul.f32 %v7250, %v7250
      %v7255 = vsub.f32 0.0, %v7251
      %v7256 = vsub.f32 0.0, %v7252
      %v7257 = vsub.f32 0.0, %v7253
      %v7258 = vsub.f32 0.0, %v7254
      %v7259 = vmul.f32 %v7255, 1.442695
      %v7260 = vpow.pop %v7259
      %v7261 = vmul.f32 %v7256, 1.442695
      %v7262 = vpow.pop %v7261
      %v7263 = vmul.f32 %v7257, 1.442695
      %v7264 = vpow.pop %v7263
      %v7265 = vmul.f32 %v7258, 1.442695
      %v7266 = vpow.pop %v7265
      %v7267 = vadd.f32 %v7239, %v7260
      %v7268 = vadd.f32 %v7240, %v7262
      %v7269 = vadd.f32 %v7241, %v7264
      %v7270 = vadd.f32 %v7242, %v7266
      %7271 = vset.pattern.permute.xlu0 57
      %7272 = vperm.xlu0 %7271, %v3833
      %v7273 = vpop.permute.xlu0 %7272
      %v7275 = vsub.f32 %v7273, %v5666
      %v7276 = vsub.f32 %v7273, %v5667
      %v7277 = vsub.f32 %v7273, %v5668
      %v7278 = vsub.f32 %v7273, %v5669
      %v7279 = vmul.f32 %v7275, %v7275
      %v7280 = vmul.f32 %v7276, %v7276
      %v7281 = vmul.f32 %v7277, %v7277
      %v7282 = vmul.f32 %v7278, %v7278
      %v7283 = vsub.f32 0.0, %v7279
      %v7284 = vsub.f32 0.0, %v7280
      %v7285 = vsub.f32 0.0, %v7281
      %v7286 = vsub.f32 0.0, %v7282
      %v7287 = vmul.f32 %v7283, 1.442695
      %v7288 = vpow.pop %v7287
      %v7289 = vmul.f32 %v7284, 1.442695
      %v7290 = vpow.pop %v7289
      %v7291 = vmul.f32 %v7285, 1.442695
      %v7292 = vpow.pop %v7291
      %v7293 = vmul.f32 %v7286, 1.442695
      %v7294 = vpow.pop %v7293
      %v7295 = vadd.f32 %v7267, %v7288
      %v7296 = vadd.f32 %v7268, %v7290
      %v7297 = vadd.f32 %v7269, %v7292
      %v7298 = vadd.f32 %v7270, %v7294
      %7299 = vset.pattern.permute.xlu0 58
      %7300 = vperm.xlu0 %7299, %v3833
      %v7301 = vpop.permute.xlu0 %7300
      %v7303 = vsub.f32 %v7301, %v5666
      %v7304 = vsub.f32 %v7301, %v5667
      %v7305 = vsub.f32 %v7301, %v5668
      %v7306 = vsub.f32 %v7301, %v5669
      %v7307 = vmul.f32 %v7303, %v7303
      %v7308 = vmul.f32 %v7304, %v7304
      %v7309 = vmul.f32 %v7305, %v7305
      %v7310 = vmul.f32 %v7306, %v7306
      %v7311 = vsub.f32 0.0, %v7307
      %v7312 = vsub.f32 0.0, %v7308
      %v7313 = vsub.f32 0.0, %v7309
      %v7314 = vsub.f32 0.0, %v7310
      %v7315 = vmul.f32 %v7311, 1.442695
      %v7316 = vpow.pop %v7315
      %v7317 = vmul.f32 %v7312, 1.442695
      %v7318 = vpow.pop %v7317
      %v7319 = vmul.f32 %v7313, 1.442695
      %v7320 = vpow.pop %v7319
      %v7321 = vmul.f32 %v7314, 1.442695
      %v7322 = vpow.pop %v7321
      %v7323 = vadd.f32 %v7295, %v7316
      %v7324 = vadd.f32 %v7296, %v7318
      %v7325 = vadd.f32 %v7297, %v7320
      %v7326 = vadd.f32 %v7298, %v7322
      %7327 = vset.pattern.permute.xlu0 59
      %7328 = vperm.xlu0 %7327, %v3833
      %v7329 = vpop.permute.xlu0 %7328
      %v7331 = vsub.f32 %v7329, %v5666
      %v7332 = vsub.f32 %v7329, %v5667
      %v7333 = vsub.f32 %v7329, %v5668
      %v7334 = vsub.f32 %v7329, %v5669
      %v7335 = vmul.f32 %v7331, %v7331
      %v7336 = vmul.f32 %v7332, %v7332
      %v7337 = vmul.f32 %v7333, %v7333
      %v7338 = vmul.f32 %v7334, %v7334
      %v7339 = vsub.f32 0.0, %v7335
      %v7340 = vsub.f32 0.0, %v7336
      %v7341 = vsub.f32 0.0, %v7337
      %v7342 = vsub.f32 0.0, %v7338
      %v7343 = vmul.f32 %v7339, 1.442695
      %v7344 = vpow.pop %v7343
      %v7345 = vmul.f32 %v7340, 1.442695
      %v7346 = vpow.pop %v7345
      %v7347 = vmul.f32 %v7341, 1.442695
      %v7348 = vpow.pop %v7347
      %v7349 = vmul.f32 %v7342, 1.442695
      %v7350 = vpow.pop %v7349
      %v7351 = vadd.f32 %v7323, %v7344
      %v7352 = vadd.f32 %v7324, %v7346
      %v7353 = vadd.f32 %v7325, %v7348
      %v7354 = vadd.f32 %v7326, %v7350
      %7355 = vset.pattern.permute.xlu0 60
      %7356 = vperm.xlu0 %7355, %v3833
      %v7357 = vpop.permute.xlu0 %7356
      %v7359 = vsub.f32 %v7357, %v5666
      %v7360 = vsub.f32 %v7357, %v5667
      %v7361 = vsub.f32 %v7357, %v5668
      %v7362 = vsub.f32 %v7357, %v5669
      %v7363 = vmul.f32 %v7359, %v7359
      %v7364 = vmul.f32 %v7360, %v7360
      %v7365 = vmul.f32 %v7361, %v7361
      %v7366 = vmul.f32 %v7362, %v7362
      %v7367 = vsub.f32 0.0, %v7363
      %v7368 = vsub.f32 0.0, %v7364
      %v7369 = vsub.f32 0.0, %v7365
      %v7370 = vsub.f32 0.0, %v7366
      %v7371 = vmul.f32 %v7367, 1.442695
      %v7372 = vpow.pop %v7371
      %v7373 = vmul.f32 %v7368, 1.442695
      %v7374 = vpow.pop %v7373
      %v7375 = vmul.f32 %v7369, 1.442695
      %v7376 = vpow.pop %v7375
      %v7377 = vmul.f32 %v7370, 1.442695
      %v7378 = vpow.pop %v7377
      %v7379 = vadd.f32 %v7351, %v7372
      %v7380 = vadd.f32 %v7352, %v7374
      %v7381 = vadd.f32 %v7353, %v7376
      %v7382 = vadd.f32 %v7354, %v7378
      %7383 = vset.pattern.permute.xlu0 61
      %7384 = vperm.xlu0 %7383, %v3833
      %v7385 = vpop.permute.xlu0 %7384
      %v7387 = vsub.f32 %v7385, %v5666
      %v7388 = vsub.f32 %v7385, %v5667
      %v7389 = vsub.f32 %v7385, %v5668
      %v7390 = vsub.f32 %v7385, %v5669
      %v7391 = vmul.f32 %v7387, %v7387
      %v7392 = vmul.f32 %v7388, %v7388
      %v7393 = vmul.f32 %v7389, %v7389
      %v7394 = vmul.f32 %v7390, %v7390
      %v7395 = vsub.f32 0.0, %v7391
      %v7396 = vsub.f32 0.0, %v7392
      %v7397 = vsub.f32 0.0, %v7393
      %v7398 = vsub.f32 0.0, %v7394
      %v7399 = vmul.f32 %v7395, 1.442695
      %v7400 = vpow.pop %v7399
      %v7401 = vmul.f32 %v7396, 1.442695
      %v7402 = vpow.pop %v7401
      %v7403 = vmul.f32 %v7397, 1.442695
      %v7404 = vpow.pop %v7403
      %v7405 = vmul.f32 %v7398, 1.442695
      %v7406 = vpow.pop %v7405
      %v7407 = vadd.f32 %v7379, %v7400
      %v7408 = vadd.f32 %v7380, %v7402
      %v7409 = vadd.f32 %v7381, %v7404
      %v7410 = vadd.f32 %v7382, %v7406
      %7411 = vset.pattern.permute.xlu0 62
      %7412 = vperm.xlu0 %7411, %v3833
      %v7413 = vpop.permute.xlu0 %7412
      %v7415 = vsub.f32 %v7413, %v5666
      %v7416 = vsub.f32 %v7413, %v5667
      %v7417 = vsub.f32 %v7413, %v5668
      %v7418 = vsub.f32 %v7413, %v5669
      %v7419 = vmul.f32 %v7415, %v7415
      %v7420 = vmul.f32 %v7416, %v7416
      %v7421 = vmul.f32 %v7417, %v7417
      %v7422 = vmul.f32 %v7418, %v7418
      %v7423 = vsub.f32 0.0, %v7419
      %v7424 = vsub.f32 0.0, %v7420
      %v7425 = vsub.f32 0.0, %v7421
      %v7426 = vsub.f32 0.0, %v7422
      %v7427 = vmul.f32 %v7423, 1.442695
      %v7428 = vpow.pop %v7427
      %v7429 = vmul.f32 %v7424, 1.442695
      %v7430 = vpow.pop %v7429
      %v7431 = vmul.f32 %v7425, 1.442695
      %v7432 = vpow.pop %v7431
      %v7433 = vmul.f32 %v7426, 1.442695
      %v7434 = vpow.pop %v7433
      %v7435 = vadd.f32 %v7407, %v7428
      %v7436 = vadd.f32 %v7408, %v7430
      %v7437 = vadd.f32 %v7409, %v7432
      %v7438 = vadd.f32 %v7410, %v7434
      %7439 = vset.pattern.permute.xlu0 63
      %7440 = vperm.xlu0 %7439, %v3833
      %v7441 = vpop.permute.xlu0 %7440
      %v7443 = vsub.f32 %v7441, %v5666
      %v7444 = vsub.f32 %v7441, %v5667
      %v7445 = vsub.f32 %v7441, %v5668
      %v7446 = vsub.f32 %v7441, %v5669
      %v7447 = vmul.f32 %v7443, %v7443
      %v7448 = vmul.f32 %v7444, %v7444
      %v7449 = vmul.f32 %v7445, %v7445
      %v7450 = vmul.f32 %v7446, %v7446
      %v7451 = vsub.f32 0.0, %v7447
      %v7452 = vsub.f32 0.0, %v7448
      %v7453 = vsub.f32 0.0, %v7449
      %v7454 = vsub.f32 0.0, %v7450
      %v7455 = vmul.f32 %v7451, 1.442695
      %v7456 = vpow.pop %v7455
      %v7457 = vmul.f32 %v7452, 1.442695
      %v7458 = vpow.pop %v7457
      %v7459 = vmul.f32 %v7453, 1.442695
      %v7460 = vpow.pop %v7459
      %v7461 = vmul.f32 %v7454, 1.442695
      %v7462 = vpow.pop %v7461
      %v7463 = vadd.f32 %v7435, %v7456
      %v7464 = vadd.f32 %v7436, %v7458
      %v7465 = vadd.f32 %v7437, %v7460
      %v7466 = vadd.f32 %v7438, %v7462
      %v7467 = vmul.f32 %v3841, 2.0
      %v7468 = vmul.f32 %v3842, 2.0
      %v7469 = vmul.f32 %v3843, 2.0
      %v7470 = vmul.f32 %v3844, 2.0
      %v7471 = vadd.f32 %v7463, %v7467
      %v7472 = vadd.f32 %v7464, %v7468
      %v7473 = vadd.f32 %v7465, %v7469
      %v7474 = vadd.f32 %v7466, %v7470
      %v7475 = vadd.f32 %v3829, %v7471
      %v7476 = vadd.f32 %v3830, %v7472
      %v7477 = vadd.f32 %v3831, %v7473
      %v7478 = vadd.f32 %v3832, %v7474
      %v7479 = vadd.f32 %v7475, %v7476
      %v7480 = vadd.f32 %v7479, %v7477
      %v7481 = vadd.f32 %v7480, %v7478
      %7482 = vst [vmem:[%s189] sm:$0xff] %v7481
      %p7483 = scmp.lt.s32.totalorder %s14, 1
      %s7484 = scalar_select %p7483, %s14, 1
      %s7485 = smul.addr %s7484, 8
      %s7486 = scalar_lea.vmem %s3, %s7485
      // Predicated region
      $region47: #{meeloss.1} parent=31 // pred_check
        %p7487 = pneg %p107
      $region48: #{meeloss.1} parent=31 // pred_check_branch
        %7489 = sbr.rel (%p7487) target = $region50
      $region49: #{meeloss.1} parent=31 // pred_region
        _
      $region50: #{meeloss.1} parent=31 // pred_fallthru
        _
    $region32: #{meeloss.1} parent=5 // pred_fallthru
      _
    %p7490 = scmp.le.s32.totalorder 2, %s9
    // Predicated region
    $region51: #{meeloss.1} parent=5 // pred_check
      %p7491 = pneg %p7490
    $region52: #{meeloss.1} parent=5 // pred_check_branch
      %7493 = sbr.rel (%p7491) target = $region54
    $region53: #{meeloss.1} parent=5 // pred_region
      %s7494 = ssub.s32 %s9, 2
      // Predicated region
      $region55: #{meeloss.1} parent=53 // pred_check
        %p7495 = pneg %p113
      $region56: #{meeloss.1} parent=53 // pred_check_branch
        %7497 = sbr.rel (%p7495) target = $region58
      $region57: #{meeloss.1} parent=53 // pred_region
        %p7498 = scmp.lt.s32.totalorder %s15, 1
        %s7499 = scalar_select %p7498, %s15, 1
        %s7500 = smul.addr %s7499, 8
        %s7501 = scalar_lea.vmem %s3, %s7500
      $region58: #{meeloss.1} parent=53 // pred_fallthru
        _
    $region54: #{meeloss.1} parent=5 // pred_fallthru
      _
  $region6: #{meeloss.1} parent=0 // loop_footer
    %s13 = sadd.s32 1, %s9
  $region7: #{meeloss.1} parent=0 // loop_footer_branch
    %8 = sbr.rel target = $region3
  $region8: #{meeloss.1} parent=0 // loop_exit
    _

</llo_original>
